<compile_context>
chip_gen: v7x
topology: tpu7x:2x2x1
jax: 0.10.0
libtpu: 0.0.40
codegen_flags: <defaults>
</compile_context>

<pallas_src>
import jax
import jax.numpy as jnp
from jax.experimental import pallas as pl
from jax.experimental.pallas import tpu as pltpu

COMPUTE_DTYPE = jnp.bfloat16       # MXU operand dtype (accumulation is f32)
TILE_M = 512                       # max row tile (VMEM-safe on v5e/v6e/v7x)
NUM_CLASSES = 10
FC2_PAD = 128                      # pad fc2's N=10 up to a full lane width
VMEM_LIMIT_BYTES = 32 * 1024 * 1024


# ---------------------------------------------------------------------------
# Pallas kernels
# ---------------------------------------------------------------------------
def _conv_relu_pool_kernel(p00_ref, p01_ref, p10_ref, p11_ref,
                           w_ref, b_ref, o_ref):
    """Fused conv (4 pooling-offset im2col matmuls) + bias + ReLU + 2x2 max.

    Each p??_ref holds the im2col rows of one pooling-window offset, so
    maxpool(relu(conv + b)) == relu(max_i(p_i @ W) + b) (bias constant over the
    window, ReLU monotone).  The pre-pool activation never leaves VMEM.
    """
    w = w_ref[...]

    def mm(p_ref):
        return jnp.dot(p_ref[...], w, preferred_element_type=jnp.float32)

    m = jnp.maximum(jnp.maximum(mm(p00_ref), mm(p01_ref)),
                    jnp.maximum(mm(p10_ref), mm(p11_ref)))
    o_ref[...] = jnp.maximum(m + b_ref[...], 0.0).astype(o_ref.dtype)


def _fc_fused_kernel(x_ref, w1_ref, b1_ref, w2_ref, b2_ref, o_ref):
    """o = (relu(x @ W1 + b1)) @ W2 + b2 — fc1 activation never leaves VMEM."""
    h = jnp.dot(x_ref[...], w1_ref[...], preferred_element_type=jnp.float32)
    h = jnp.maximum(h + b1_ref[...], 0.0)
    # TODO(synk): nn.Dropout(0.5) is identity at inference (eval semantics);
    # training-mode RNG dropout is not implemented.
    acc = jnp.dot(h.astype(COMPUTE_DTYPE), w2_ref[...],
                  preferred_element_type=jnp.float32)
    o_ref[...] = (acc + b2_ref[...]).astype(o_ref.dtype)


# ---------------------------------------------------------------------------
# Fused conv + ReLU + 2x2 max-pool layer
# ---------------------------------------------------------------------------
def _conv_tile_rows(rows_per_img, batch):
    """Row tile = whole images, <= TILE_M rows, keeping >=2 grid steps when
    batch >= 2 so the 'parallel' axis can split across v7x's two TensorCores
    and input/output pipelining engages."""
    imgs = max(1, TILE_M // rows_per_img)
    if batch >= 2:
        imgs = min(imgs, max(1, batch // 2))
    imgs = min(imgs, batch)
    return rows_per_img * imgs


def conv2d_relu_pool(x, wmat, bias_row, *, ksize):
    """x: (B, H, W, Cin) NHWC.  wmat: pre-prepared (KH*KW*Cin, Cout) bf16.
    bias_row: (1, Cout) f32.  VALID conv, stride 1, then ReLU + 2x2/2 max-pool.
    Returns (B, PH, PW, Cout) bf16 NHWC."""
    B, H, W, Cin = x.shape
    K, Cout = wmat.shape
    KH = KW = ksize
    assert K == KH * KW * Cin
    OH, OW = H - KH + 1, W - KW + 1
    assert OH % 2 == 0 and OW % 2 == 0
    PH, PW = OH // 2, OW // 2

    xc = x.astype(COMPUTE_DTYPE)

    # TODO(synk): build these im2col views inside the kernel from the raw NHWC
    # tile (strided pl.ds slices on a VMEM ref) to cut patch HBM traffic; the
    # small, non-lane-aligned spatial dims (12/4 pixels, 32/64 channels) make
    # that relayout-heavy to lower, so the gather stays in the XLA wrapper.
    def patches(dy, dx):
        # im2col restricted to output pixels (2*pr + dy, 2*pc + dx).
        cols = [xc[:, dy + kh: dy + kh + 2 * PH - 1: 2,
                    dx + kw: dx + kw + 2 * PW - 1: 2, :]
                for kh in range(KH) for kw in range(KW)]
        p = jnp.stack(cols, axis=3)                 # (B, PH, PW, KH*KW, Cin)
        return p.reshape(B * PH * PW, KH * KW * Cin)

    ps = [patches(dy, dx) for dy in (0, 1) for dx in (0, 1)]
    M = B * PH * PW
    N = Cout
    tm = _conv_tile_rows(PH * PW, B)

    patch_spec = pl.BlockSpec((tm, K), lambda i: (i, 0))
    cost = pl.CostEstimate(
        flops=4 * 2 * M * K * N,
        transcendentals=0,
        bytes_accessed=4 * M * K * 2 + K * N * 2 + N * 4 + M * N * 2)

    out = pl.pallas_call(
        _conv_relu_pool_kernel,
        out_shape=jax.ShapeDtypeStruct((M, N), COMPUTE_DTYPE),
        grid=(pl.cdiv(M, tm),),
        in_specs=[patch_spec, patch_spec, patch_spec, patch_spec,
                  pl.BlockSpec((K, N), lambda i: (0, 0)),   # weight (resident)
                  pl.BlockSpec((1, N), lambda i: (0, 0))],  # bias   (resident)
        out_specs=pl.BlockSpec((tm, N), lambda i: (i, 0)),
        compiler_params=pltpu.CompilerParams(
            dimension_semantics=("parallel",),
            vmem_limit_bytes=VMEM_LIMIT_BYTES),
        cost_estimate=cost,
    )(*ps, wmat, bias_row)

    # TODO(synk): a lane-dense (tm//2, 2*Cout) output store (same row-major
    # layout) would avoid masked vst.msk partial stores; skipped because the
    # in-kernel (tm, Cout)->(tm//2, 2*Cout) relayout is a lowering risk and the
    # conv outputs here are tiny.
    # Rows are ordered (b, pr, pc); contiguous (free) reshape back to NHWC.
    return out.reshape(B, PH, PW, Cout)


# ---------------------------------------------------------------------------
# Fused fc1 + ReLU + fc2 (both weight blocks stay resident in VMEM)
# ---------------------------------------------------------------------------
def fc1_fc2_fused(x, w1, b1, w2, b2):
    """x: (M, 1024) bf16; w1: (1024, 1024) bf16; w2: (1024, 128) bf16 (padded);
    biases f32 (1, N).  Returns (M, 128) f32 logits (slice [:, :10] outside)."""
    M, K1 = x.shape
    K1b, N1 = w1.shape
    K2, N2 = w2.shape
    assert K1 == K1b and N1 == K2
    tm = M if M <= 256 else 256
    cost = pl.CostEstimate(
        flops=2 * M * K1 * N1 + 2 * M * K2 * N2,
        transcendentals=0,
        bytes_accessed=(M * K1 * 2 + K1 * N1 * 2 + K2 * N2 * 2
                        + (N1 + N2) * 4 + M * N2 * 4))
    return pl.pallas_call(
        _fc_fused_kernel,
        out_shape=jax.ShapeDtypeStruct((M, N2), jnp.float32),
        grid=(pl.cdiv(M, tm),),
        in_specs=[
            pl.BlockSpec((tm, K1), lambda i: (i, 0)),   # activations: M-tiled
            pl.BlockSpec((K1, N1), lambda i: (0, 0)),   # fc1 weight (resident)
            pl.BlockSpec((1, N1), lambda i: (0, 0)),    # fc1 bias
            pl.BlockSpec((K2, N2), lambda i: (0, 0)),   # fc2 weight (resident)
            pl.BlockSpec((1, N2), lambda i: (0, 0)),    # fc2 bias
        ],
        out_specs=pl.BlockSpec((tm, N2), lambda i: (i, 0)),
        compiler_params=pltpu.CompilerParams(
            dimension_semantics=("parallel",),
            vmem_limit_bytes=VMEM_LIMIT_BYTES),
        cost_estimate=cost,
    )(x, w1, b1, w2, b2)


# ---------------------------------------------------------------------------
# One-time (offline) parameter preparation
# ---------------------------------------------------------------------------
def prepare_params(params):
    """Convert PyTorch-layout f32 params into kernel-ready layout, once:
      * conv weights -> im2col (KH*KW*Cin, Cout) bf16 matrices,
      * fc1 rows permuted from NCHW-flatten (c,h,w) to NHWC-flatten (h,w,c)
        order (so no runtime flatten transpose is needed), cast bf16,
      * fc2 weight/bias zero-padded N=10 -> 128 (lane-dense output store),
      * biases reshaped to f32 (1, N) rows."""
    c1 = params["conv1_w"]                      # (32, 1, 5, 5)  PyTorch OIHW
    c2 = params["conv2_w"]                      # (64, 32, 5, 5)
    conv1_wm = jnp.transpose(c1, (2, 3, 1, 0)).reshape(-1, c1.shape[0])
    conv2_wm = jnp.transpose(c2, (2, 3, 1, 0)).reshape(-1, c2.shape[0])

    # fc1 rows: PyTorch flattens (C=64, H=4, W=4); our activations flatten as
    # (H, W, C).  perm[j_nhwc] = i_nchw.
    C, Hp, Wp = 64, 4, 4
    j = jnp.arange(C * Hp * Wp)
    h, w, c = j // (Wp * C), (j // C) % Wp, j % C
    perm = c * (Hp * Wp) + h * Wp + w
    fc1_wm = params["fc1_w"][perm, :]

    fc2_wm = jnp.pad(params["fc2_w"], ((0, 0), (0, FC2_PAD - NUM_CLASSES)))
    fc2_bp = jnp.pad(params["fc2_b"], (0, FC2_PAD - NUM_CLASSES))

    f32row = lambda b: b.astype(jnp.float32).reshape(1, -1)
    return {
        "conv1_wm": conv1_wm.astype(COMPUTE_DTYPE),
        "conv1_b":  f32row(params["conv1_b"]),
        "conv2_wm": conv2_wm.astype(COMPUTE_DTYPE),
        "conv2_b":  f32row(params["conv2_b"]),
        "fc1_wm":   fc1_wm.astype(COMPUTE_DTYPE),
        "fc1_b":    f32row(params["fc1_b"]),
        "fc2_wm":   fc2_wm.astype(COMPUTE_DTYPE),
        "fc2_b":    f32row(fc2_bp),
    }


# ---------------------------------------------------------------------------
# Full forward pass (3 pallas_calls, no runtime weight casts/pads/transposes)
# ---------------------------------------------------------------------------
def cnn_forward(x_nchw, prep):
    x = jnp.transpose(x_nchw, (0, 2, 3, 1)).astype(COMPUTE_DTYPE)    # -> NHWC
    x = conv2d_relu_pool(x, prep["conv1_wm"], prep["conv1_b"], ksize=5)  # (B,12,12,32)
    x = conv2d_relu_pool(x, prep["conv2_wm"], prep["conv2_b"], ksize=5)  # (B,4,4,64)
    B = x.shape[0]
    x = x.reshape(B, 4 * 4 * 64)     # NHWC flatten; fc1 rows pre-permuted to match
    logits = fc1_fc2_fused(x, prep["fc1_wm"], prep["fc1_b"],
                           prep["fc2_wm"], prep["fc2_b"])
    return logits[:, :NUM_CLASSES]                                   # (B, 10)


# ---------------------------------------------------------------------------
# Pure-JAX f32 reference (exact PyTorch forward semantics) + params
# ---------------------------------------------------------------------------
def cnn_reference(x_nchw, params):
    def conv(x, w, b):
        y = jax.lax.conv_general_dilated(
            x, w, (1, 1), "VALID",
            dimension_numbers=("NCHW", "OIHW", "NCHW"))
        return y + b.reshape(1, -1, 1, 1)

    def pool(x):
        return jax.lax.reduce_window(x, -jnp.inf, jax.lax.max,
                                     (1, 1, 2, 2), (1, 1, 2, 2), "VALID")

    x = pool(jax.nn.relu(conv(x_nchw, params["conv1_w"], params["conv1_b"])))
    x = pool(jax.nn.relu(conv(x, params["conv2_w"], params["conv2_b"])))
    x = x.reshape(x.shape[0], -1)            # NCHW flatten, as torch .view
    x = jax.nn.relu(x @ params["fc1_w"] + params["fc1_b"])
    return x @ params["fc2_w"] + params["fc2_b"]


def init_params(key):
    ks = jax.random.split(key, 8)
    s = 0.05
    return {
        "conv1_w": s * jax.random.normal(ks[0], (32, 1, 5, 5), jnp.float32),
        "conv1_b": s * jax.random.normal(ks[1], (32,), jnp.float32),
        "conv2_w": s * jax.random.normal(ks[2], (64, 32, 5, 5), jnp.float32),
        "conv2_b": s * jax.random.normal(ks[3], (64,), jnp.float32),
        "fc1_w":   s * jax.random.normal(ks[4], (1024, 1024), jnp.float32),  # (in, out)
        "fc1_b":   s * jax.random.normal(ks[5], (1024,), jnp.float32),
        "fc2_w":   s * jax.random.normal(ks[6], (1024, 10), jnp.float32),    # (in, out)
        "fc2_b":   s * jax.random.normal(ks[7], (10,), jnp.float32),
    }


if __name__ == "__main__":
    key = jax.random.PRNGKey(0)
    k_x, k_p = jax.random.split(key)
    # MNIST-shaped input so that view(-1, 1024) is exact: (B, 1, 28, 28)
    x = jax.random.normal(k_x, (2, 1, 28, 28), jnp.float32)
    params = init_params(k_p)
    prep = prepare_params(params)            # one-time offline weight prep

    out = jax.jit(cnn_forward)(x, prep)
    out = jax.block_until_ready(out)
    assert out.shape == (2, 10), out.shape
    assert bool(jnp.all(jnp.isfinite(out)))

    # Parity vs. the PyTorch-semantics f32 reference (guards the fc1 row
    # permutation and the fused conv/pool path); loose tol for bf16 operands.
    ref = cnn_reference(x, params)
    err = float(jnp.max(jnp.abs(out - ref)))
    assert err < 2.5e-1, f"parity check failed: max abs err = {err}"
    print("KERNEL_OK")
</pallas_src>

<mosaic_0001>
module attributes {stable_mosaic.version = 11 : i64} {
  func.func @_conv_relu_pool_kernel(%arg0: i32, %arg1: memref<144x25xbf16, #tpu.memory_space<vmem>>, %arg2: memref<144x25xbf16, #tpu.memory_space<vmem>>, %arg3: memref<144x25xbf16, #tpu.memory_space<vmem>>, %arg4: memref<144x25xbf16, #tpu.memory_space<vmem>>, %arg5: memref<25x32xbf16, #tpu.memory_space<vmem>>, %arg6: memref<1x32xf32, #tpu.memory_space<vmem>>, %arg7: memref<144x32xbf16, #tpu.memory_space<vmem>>) attributes {dimension_semantics = [#tpu.dimension_semantics<parallel>], iteration_bounds = array<i64: 2>, scalar_prefetch = 0 : i64, scratch_operands = 0 : i64, tpu.core_type = #tpu.core_type<tc>, window_params = [{transform_indices = @transform_0, window_bounds = array<i64: 144, 25>}, {transform_indices = @transform_1, window_bounds = array<i64: 144, 25>}, {transform_indices = @transform_2, window_bounds = array<i64: 144, 25>}, {transform_indices = @transform_3, window_bounds = array<i64: 144, 25>}, {pipeline_mode = #tpu.pipeline_mode<synchronous>, transform_indices = @transform_4, window_bounds = array<i64: 25, 32>}, {pipeline_mode = #tpu.pipeline_mode<synchronous>, transform_indices = @transform_5, window_bounds = array<i64: 1, 32>}, {transform_indices = @transform_6, window_bounds = array<i64: 144, 32>}]} {
    %c0 = arith.constant 0 : index
    %c0_0 = arith.constant 0 : index
    %0 = vector.load %arg5[%c0, %c0_0] : memref<25x32xbf16, #tpu.memory_space<vmem>>, vector<25x32xbf16>
    %c0_1 = arith.constant 0 : index
    %c0_2 = arith.constant 0 : index
    %1 = vector.load %arg1[%c0_1, %c0_2] : memref<144x25xbf16, #tpu.memory_space<vmem>>, vector<144x25xbf16>
    %cst = arith.constant dense<0.000000e+00> : vector<144x32xf32>
    %2 = tpu.matmul %1, %0, %cst {dimension_numbers = #tpu.dot_dimension_numbers<[1], [0], [0], [1], [0, 0, 1, 1], [], []>} : vector<144x25xbf16>, vector<25x32xbf16>, vector<144x32xf32> -> vector<144x32xf32>
    %c0_3 = arith.constant 0 : index
    %c0_4 = arith.constant 0 : index
    %3 = vector.load %arg2[%c0_3, %c0_4] : memref<144x25xbf16, #tpu.memory_space<vmem>>, vector<144x25xbf16>
    %cst_5 = arith.constant dense<0.000000e+00> : vector<144x32xf32>
    %4 = tpu.matmul %3, %0, %cst_5 {dimension_numbers = #tpu.dot_dimension_numbers<[1], [0], [0], [1], [0, 0, 1, 1], [], []>} : vector<144x25xbf16>, vector<25x32xbf16>, vector<144x32xf32> -> vector<144x32xf32>
    %5 = arith.maximumf %2, %4 : vector<144x32xf32>
    %c0_6 = arith.constant 0 : index
    %c0_7 = arith.constant 0 : index
    %6 = vector.load %arg3[%c0_6, %c0_7] : memref<144x25xbf16, #tpu.memory_space<vmem>>, vector<144x25xbf16>
    %cst_8 = arith.constant dense<0.000000e+00> : vector<144x32xf32>
    %7 = tpu.matmul %6, %0, %cst_8 {dimension_numbers = #tpu.dot_dimension_numbers<[1], [0], [0], [1], [0, 0, 1, 1], [], []>} : vector<144x25xbf16>, vector<25x32xbf16>, vector<144x32xf32> -> vector<144x32xf32>
    %c0_9 = arith.constant 0 : index
    %c0_10 = arith.constant 0 : index
    %8 = vector.load %arg4[%c0_9, %c0_10] : memref<144x25xbf16, #tpu.memory_space<vmem>>, vector<144x25xbf16>
    %cst_11 = arith.constant dense<0.000000e+00> : vector<144x32xf32>
    %9 = tpu.matmul %8, %0, %cst_11 {dimension_numbers = #tpu.dot_dimension_numbers<[1], [0], [0], [1], [0, 0, 1, 1], [], []>} : vector<144x25xbf16>, vector<25x32xbf16>, vector<144x32xf32> -> vector<144x32xf32>
    %10 = arith.maximumf %7, %9 : vector<144x32xf32>
    %11 = arith.maximumf %5, %10 : vector<144x32xf32>
    %c0_12 = arith.constant 0 : index
    %c0_13 = arith.constant 0 : index
    %12 = vector.load %arg6[%c0_12, %c0_13] : memref<1x32xf32, #tpu.memory_space<vmem>>, vector<1x32xf32>
    %13 = vector.broadcast %12 : vector<1x32xf32> to vector<144x32xf32>
    %14 = arith.addf %11, %13 : vector<144x32xf32>
    %cst_14 = arith.constant 0.000000e+00 : f32
    %15 = vector.broadcast %cst_14 : f32 to vector<144x32xf32>
    %16 = arith.maximumf %14, %15 : vector<144x32xf32>
    %17 = arith.truncf %16 : vector<144x32xf32> to vector<144x32xbf16>
    %c0_15 = arith.constant 0 : index
    %c0_16 = arith.constant 0 : index
    %18 = vector.load %arg7[%c0_15, %c0_16] : memref<144x32xbf16, #tpu.memory_space<vmem>>, vector<144x32xbf16>
    tpu.vector_store %arg7[%c0_15, %c0_16], %17 {strides = array<i32>} : memref<144x32xbf16, #tpu.memory_space<vmem>>, vector<144x32xbf16>,
    return
  }
  func.func @transform_0(%arg0: i32) -> (i32, i32) {
    %c0_i32 = arith.constant 0 : i32
    %c0_i32_0 = arith.constant 0 : i32
    return %arg0, %c0_i32 : i32, i32
  }
  func.func @transform_1(%arg0: i32) -> (i32, i32) {
    %c0_i32 = arith.constant 0 : i32
    %c0_i32_0 = arith.constant 0 : i32
    return %arg0, %c0_i32 : i32, i32
  }
  func.func @transform_2(%arg0: i32) -> (i32, i32) {
    %c0_i32 = arith.constant 0 : i32
    %c0_i32_0 = arith.constant 0 : i32
    return %arg0, %c0_i32 : i32, i32
  }
  func.func @transform_3(%arg0: i32) -> (i32, i32) {
    %c0_i32 = arith.constant 0 : i32
    %c0_i32_0 = arith.constant 0 : i32
    return %arg0, %c0_i32 : i32, i32
  }
  func.func @transform_4(%arg0: i32) -> (i32, i32) {
    %c0_i32 = arith.constant 0 : i32
    %c0_i32_0 = arith.constant 0 : i32
    %c0_i32_1 = arith.constant 0 : i32
    return %c0_i32, %c0_i32_0 : i32, i32
  }
  func.func @transform_5(%arg0: i32) -> (i32, i32) {
    %c0_i32 = arith.constant 0 : i32
    %c0_i32_0 = arith.constant 0 : i32
    %c0_i32_1 = arith.constant 0 : i32
    return %c0_i32, %c0_i32_0 : i32, i32
  }
  func.func @transform_6(%arg0: i32) -> (i32, i32) {
    %c0_i32 = arith.constant 0 : i32
    %c0_i32_0 = arith.constant 0 : i32
    return %arg0, %c0_i32 : i32, i32
  }
}

module attributes {stable_mosaic.version = 11 : i64} {
  func.func @_conv_relu_pool_kernel(%arg0: i32, %arg1: memref<16x800xbf16, #tpu.memory_space<vmem>>, %arg2: memref<16x800xbf16, #tpu.memory_space<vmem>>, %arg3: memref<16x800xbf16, #tpu.memory_space<vmem>>, %arg4: memref<16x800xbf16, #tpu.memory_space<vmem>>, %arg5: memref<800x64xbf16, #tpu.memory_space<vmem>>, %arg6: memref<1x64xf32, #tpu.memory_space<vmem>>, %arg7: memref<16x64xbf16, #tpu.memory_space<vmem>>) attributes {dimension_semantics = [#tpu.dimension_semantics<parallel>], iteration_bounds = array<i64: 2>, scalar_prefetch = 0 : i64, scratch_operands = 0 : i64, tpu.core_type = #tpu.core_type<tc>, window_params = [{transform_indices = @transform_0, window_bounds = array<i64: 16, 800>}, {transform_indices = @transform_1, window_bounds = array<i64: 16, 800>}, {transform_indices = @transform_2, window_bounds = array<i64: 16, 800>}, {transform_indices = @transform_3, window_bounds = array<i64: 16, 800>}, {pipeline_mode = #tpu.pipeline_mode<synchronous>, transform_indices = @transform_4, window_bounds = array<i64: 800, 64>}, {pipeline_mode = #tpu.pipeline_mode<synchronous>, transform_indices = @transform_5, window_bounds = array<i64: 1, 64>}, {transform_indices = @transform_6, window_bounds = array<i64: 16, 64>}]} {
    %c0 = arith.constant 0 : index
    %c0_0 = arith.constant 0 : index
    %0 = vector.load %arg5[%c0, %c0_0] : memref<800x64xbf16, #tpu.memory_space<vmem>>, vector<800x64xbf16>
    %c0_1 = arith.constant 0 : index
    %c0_2 = arith.constant 0 : index
    %1 = vector.load %arg1[%c0_1, %c0_2] : memref<16x800xbf16, #tpu.memory_space<vmem>>, vector<16x800xbf16>
    %cst = arith.constant dense<0.000000e+00> : vector<16x64xf32>
    %2 = tpu.matmul %1, %0, %cst {dimension_numbers = #tpu.dot_dimension_numbers<[1], [0], [0], [1], [0, 0, 1, 1], [], []>} : vector<16x800xbf16>, vector<800x64xbf16>, vector<16x64xf32> -> vector<16x64xf32>
    %c0_3 = arith.constant 0 : index
    %c0_4 = arith.constant 0 : index
    %3 = vector.load %arg2[%c0_3, %c0_4] : memref<16x800xbf16, #tpu.memory_space<vmem>>, vector<16x800xbf16>
    %cst_5 = arith.constant dense<0.000000e+00> : vector<16x64xf32>
    %4 = tpu.matmul %3, %0, %cst_5 {dimension_numbers = #tpu.dot_dimension_numbers<[1], [0], [0], [1], [0, 0, 1, 1], [], []>} : vector<16x800xbf16>, vector<800x64xbf16>, vector<16x64xf32> -> vector<16x64xf32>
    %5 = arith.maximumf %2, %4 : vector<16x64xf32>
    %c0_6 = arith.constant 0 : index
    %c0_7 = arith.constant 0 : index
    %6 = vector.load %arg3[%c0_6, %c0_7] : memref<16x800xbf16, #tpu.memory_space<vmem>>, vector<16x800xbf16>
    %cst_8 = arith.constant dense<0.000000e+00> : vector<16x64xf32>
    %7 = tpu.matmul %6, %0, %cst_8 {dimension_numbers = #tpu.dot_dimension_numbers<[1], [0], [0], [1], [0, 0, 1, 1], [], []>} : vector<16x800xbf16>, vector<800x64xbf16>, vector<16x64xf32> -> vector<16x64xf32>
    %c0_9 = arith.constant 0 : index
    %c0_10 = arith.constant 0 : index
    %8 = vector.load %arg4[%c0_9, %c0_10] : memref<16x800xbf16, #tpu.memory_space<vmem>>, vector<16x800xbf16>
    %cst_11 = arith.constant dense<0.000000e+00> : vector<16x64xf32>
    %9 = tpu.matmul %8, %0, %cst_11 {dimension_numbers = #tpu.dot_dimension_numbers<[1], [0], [0], [1], [0, 0, 1, 1], [], []>} : vector<16x800xbf16>, vector<800x64xbf16>, vector<16x64xf32> -> vector<16x64xf32>
    %10 = arith.maximumf %7, %9 : vector<16x64xf32>
    %11 = arith.maximumf %5, %10 : vector<16x64xf32>
    %c0_12 = arith.constant 0 : index
    %c0_13 = arith.constant 0 : index
    %12 = vector.load %arg6[%c0_12, %c0_13] : memref<1x64xf32, #tpu.memory_space<vmem>>, vector<1x64xf32>
    %13 = vector.broadcast %12 : vector<1x64xf32> to vector<16x64xf32>
    %14 = arith.addf %11, %13 : vector<16x64xf32>
    %cst_14 = arith.constant 0.000000e+00 : f32
    %15 = vector.broadcast %cst_14 : f32 to vector<16x64xf32>
    %16 = arith.maximumf %14, %15 : vector<16x64xf32>
    %17 = arith.truncf %16 : vector<16x64xf32> to vector<16x64xbf16>
    %c0_15 = arith.constant 0 : index
    %c0_16 = arith.constant 0 : index
    %18 = vector.load %arg7[%c0_15, %c0_16] : memref<16x64xbf16, #tpu.memory_space<vmem>>, vector<16x64xbf16>
    tpu.vector_store %arg7[%c0_15, %c0_16], %17 {strides = array<i32>} : memref<16x64xbf16, #tpu.memory_space<vmem>>, vector<16x64xbf16>,
    return
  }
  func.func @transform_0(%arg0: i32) -> (i32, i32) {
    %c0_i32 = arith.constant 0 : i32
    %c0_i32_0 = arith.constant 0 : i32
    return %arg0, %c0_i32 : i32, i32
  }
  func.func @transform_1(%arg0: i32) -> (i32, i32) {
    %c0_i32 = arith.constant 0 : i32
    %c0_i32_0 = arith.constant 0 : i32
    return %arg0, %c0_i32 : i32, i32
  }
  func.func @transform_2(%arg0: i32) -> (i32, i32) {
    %c0_i32 = arith.constant 0 : i32
    %c0_i32_0 = arith.constant 0 : i32
    return %arg0, %c0_i32 : i32, i32
  }
  func.func @transform_3(%arg0: i32) -> (i32, i32) {
    %c0_i32 = arith.constant 0 : i32
    %c0_i32_0 = arith.constant 0 : i32
    return %arg0, %c0_i32 : i32, i32
  }
  func.func @transform_4(%arg0: i32) -> (i32, i32) {
    %c0_i32 = arith.constant 0 : i32
    %c0_i32_0 = arith.constant 0 : i32
    %c0_i32_1 = arith.constant 0 : i32
    return %c0_i32, %c0_i32_0 : i32, i32
  }
  func.func @transform_5(%arg0: i32) -> (i32, i32) {
    %c0_i32 = arith.constant 0 : i32
    %c0_i32_0 = arith.constant 0 : i32
    %c0_i32_1 = arith.constant 0 : i32
    return %c0_i32, %c0_i32_0 : i32, i32
  }
  func.func @transform_6(%arg0: i32) -> (i32, i32) {
    %c0_i32 = arith.constant 0 : i32
    %c0_i32_0 = arith.constant 0 : i32
    return %arg0, %c0_i32 : i32, i32
  }
}

module attributes {stable_mosaic.version = 11 : i64} {
  func.func @_fc_fused_kernel(%arg0: i32, %arg1: memref<2x1024xbf16, #tpu.memory_space<vmem>>, %arg2: memref<1024x1024xbf16, #tpu.memory_space<vmem>>, %arg3: memref<1x1024xf32, #tpu.memory_space<vmem>>, %arg4: memref<1024x128xbf16, #tpu.memory_space<vmem>>, %arg5: memref<1x128xf32, #tpu.memory_space<vmem>>, %arg6: memref<2x128xf32, #tpu.memory_space<vmem>>) attributes {dimension_semantics = [#tpu.dimension_semantics<parallel>], iteration_bounds = array<i64: 1>, scalar_prefetch = 0 : i64, scratch_operands = 0 : i64, tpu.core_type = #tpu.core_type<tc>, window_params = [{transform_indices = @transform_0, window_bounds = array<i64: 2, 1024>}, {pipeline_mode = #tpu.pipeline_mode<synchronous>, transform_indices = @transform_1, window_bounds = array<i64: 1024, 1024>}, {pipeline_mode = #tpu.pipeline_mode<synchronous>, transform_indices = @transform_2, window_bounds = array<i64: 1, 1024>}, {pipeline_mode = #tpu.pipeline_mode<synchronous>, transform_indices = @transform_3, window_bounds = array<i64: 1024, 128>}, {pipeline_mode = #tpu.pipeline_mode<synchronous>, transform_indices = @transform_4, window_bounds = array<i64: 1, 128>}, {transform_indices = @transform_5, window_bounds = array<i64: 2, 128>}]} {
    %c0 = arith.constant 0 : index
    %c0_0 = arith.constant 0 : index
    %0 = vector.load %arg1[%c0, %c0_0] : memref<2x1024xbf16, #tpu.memory_space<vmem>>, vector<2x1024xbf16>
    %c0_1 = arith.constant 0 : index
    %c0_2 = arith.constant 0 : index
    %1 = vector.load %arg2[%c0_1, %c0_2] : memref<1024x1024xbf16, #tpu.memory_space<vmem>>, vector<1024x1024xbf16>
    %cst = arith.constant dense<0.000000e+00> : vector<2x1024xf32>
    %2 = tpu.matmul %0, %1, %cst {dimension_numbers = #tpu.dot_dimension_numbers<[1], [0], [0], [1], [0, 0, 1, 1], [], []>} : vector<2x1024xbf16>, vector<1024x1024xbf16>, vector<2x1024xf32> -> vector<2x1024xf32>
    %c0_3 = arith.constant 0 : index
    %c0_4 = arith.constant 0 : index
    %3 = vector.load %arg3[%c0_3, %c0_4] : memref<1x1024xf32, #tpu.memory_space<vmem>>, vector<1x1024xf32>
    %4 = vector.broadcast %3 : vector<1x1024xf32> to vector<2x1024xf32>
    %5 = arith.addf %2, %4 : vector<2x1024xf32>
    %cst_5 = arith.constant 0.000000e+00 : f32
    %6 = vector.broadcast %cst_5 : f32 to vector<2x1024xf32>
    %7 = arith.maximumf %5, %6 : vector<2x1024xf32>
    %8 = arith.truncf %7 : vector<2x1024xf32> to vector<2x1024xbf16>
    %c0_6 = arith.constant 0 : index
    %c0_7 = arith.constant 0 : index
    %9 = vector.load %arg4[%c0_6, %c0_7] : memref<1024x128xbf16, #tpu.memory_space<vmem>>, vector<1024x128xbf16>
    %cst_8 = arith.constant dense<0.000000e+00> : vector<2x128xf32>
    %10 = tpu.matmul %8, %9, %cst_8 {dimension_numbers = #tpu.dot_dimension_numbers<[1], [0], [0], [1], [0, 0, 1, 1], [], []>} : vector<2x1024xbf16>, vector<1024x128xbf16>, vector<2x128xf32> -> vector<2x128xf32>
    %c0_9 = arith.constant 0 : index
    %c0_10 = arith.constant 0 : index
    %11 = vector.load %arg5[%c0_9, %c0_10] : memref<1x128xf32, #tpu.memory_space<vmem>>, vector<1x128xf32>
    %12 = vector.broadcast %11 : vector<1x128xf32> to vector<2x128xf32>
    %13 = arith.addf %10, %12 : vector<2x128xf32>
    %c0_11 = arith.constant 0 : index
    %c0_12 = arith.constant 0 : index
    %14 = vector.load %arg6[%c0_11, %c0_12] : memref<2x128xf32, #tpu.memory_space<vmem>>, vector<2x128xf32>
    tpu.vector_store %arg6[%c0_11, %c0_12], %13 {strides = array<i32>} : memref<2x128xf32, #tpu.memory_space<vmem>>, vector<2x128xf32>,
    return
  }
  func.func @transform_0(%arg0: i32) -> (i32, i32) {
    %c0_i32 = arith.constant 0 : i32
    %c0_i32_0 = arith.constant 0 : i32
    return %arg0, %c0_i32 : i32, i32
  }
  func.func @transform_1(%arg0: i32) -> (i32, i32) {
    %c0_i32 = arith.constant 0 : i32
    %c0_i32_0 = arith.constant 0 : i32
    %c0_i32_1 = arith.constant 0 : i32
    return %c0_i32, %c0_i32_0 : i32, i32
  }
  func.func @transform_2(%arg0: i32) -> (i32, i32) {
    %c0_i32 = arith.constant 0 : i32
    %c0_i32_0 = arith.constant 0 : i32
    %c0_i32_1 = arith.constant 0 : i32
    return %c0_i32, %c0_i32_0 : i32, i32
  }
  func.func @transform_3(%arg0: i32) -> (i32, i32) {
    %c0_i32 = arith.constant 0 : i32
    %c0_i32_0 = arith.constant 0 : i32
    %c0_i32_1 = arith.constant 0 : i32
    return %c0_i32, %c0_i32_0 : i32, i32
  }
  func.func @transform_4(%arg0: i32) -> (i32, i32) {
    %c0_i32 = arith.constant 0 : i32
    %c0_i32_0 = arith.constant 0 : i32
    %c0_i32_1 = arith.constant 0 : i32
    return %c0_i32, %c0_i32_0 : i32, i32
  }
  func.func @transform_5(%arg0: i32) -> (i32, i32) {
    %c0_i32 = arith.constant 0 : i32
    %c0_i32_0 = arith.constant 0 : i32
    return %arg0, %c0_i32 : i32, i32
  }
}

</mosaic_0001>

<llo_original>
// kernel: cnn_forward.3
$region0: #{cnn_forward.3}
  #allocation0 [shape = 'u32[]', space=smem, size = 0x4, offset = 0x4, fixed_abs, tag = 'smem constant byte address 0x4 - core index']
  #allocation1 [shape = 'u32[144,128]{1,0:T(1,128)}', space=vmem, size = 0x12000, scoped, tag = 'internal scratch']
  %s0 = inlined_call_operand.vmem [shape: bf16[288,25], index: 0, kind: input, shape index: {}]
  %s1 = inlined_call_operand.vmem [shape: bf16[288,25], index: 1, kind: input, shape index: {}]
  %s2 = inlined_call_operand.vmem [shape: bf16[288,25], index: 2, kind: input, shape index: {}]
  %s3 = inlined_call_operand.vmem [shape: bf16[288,25], index: 3, kind: input, shape index: {}]
  %s4 = inlined_call_operand.hbm [shape: bf16[25,32], index: 4, kind: input, shape index: {}]
  %s5 = inlined_call_operand.hbm [shape: f32[1,32], index: 5, kind: input, shape index: {}]
  %s6 = inlined_call_operand.vmem [shape: bf16[288,32], index: 6, kind: output, shape index: {}]
  %s7 = sld [smem:[#allocation0]]
  $region65: #{cnn_forward.3} parent=0
    _
  %s9 = ssub.s32 1, %s7
  %s10 = scalar_select 0, %s9, %s7
  $region1: #{cnn_forward.3} parent=0
    #allocation2 [shape = 'u8[8192]{0}', space=vmem, size = 0x2000, scoped, tag = 'input window, operand 4, single buffered']
    #allocation3 [shape = 's32[2]{0}', space=sflag, size = 0x8, scoped, tag = 'scoped memory for cnn_forward.3']
    #allocation4 [shape = 'u8[512]{0}', space=vmem, size = 0x400, scoped, tag = 'input window, operand 5, single buffered']
    #allocation5 [shape = 's32[1]{0}', space=sflag, size = 0x4, scoped, tag = 'scoped memory for cnn_forward.3']
    %11 = vsyncpa [#allocation3], 0
    %12 = vsyncpa [#allocation5], 0
    loop: start=0, step=1, limit=4
    $region2: #{cnn_forward.3} parent=1 // loop_pre_header
      _
    $region3: #{cnn_forward.3} parent=1 // loop_header
      %s14 = sphi 0, %s18
      %p15 = scmp.ge.s32.totalorder %s14, 4
      %s24 = sphi 0, %s26
      %s27 = sphi 0, %s24
      %s28 = sphi 0, %s27
      %s44 = sphi 0, %s28
      %s50 = sphi 0, %s52
      %s53 = sphi 0, %s50
      %s54 = sphi 0, %s53
      %s70 = sphi 0, %s54
      %s76 = sphi 0, %s78
      %s79 = sphi 0, %s76
      %s80 = sphi 0, %s79
      %s96 = sphi 0, %s80
      %s102 = sphi 0, %s104
      %s105 = sphi 0, %s102
      %s106 = sphi 0, %s105
      %s122 = sphi 0, %s106
      %s126 = sphi 0, %s126
      %s128 = sphi 0, %s126
      %s129 = sphi 0, %s128
      %s143 = sphi 0, %s129
      %s147 = sphi 0, %s147
      %s149 = sphi 0, %s147
      %s150 = sphi 0, %s149
      %s164 = sphi 0, %s150
      %s170 = sphi 0, %s172
      %s173 = sphi 0, %s170
      %s174 = sphi 0, %s173
      %s190 = sphi 0, %s174
    $region4: #{cnn_forward.3} parent=1 // loop_header_branch
      %17 = sbr.rel (%p15) target = $region8
    $region5: #{cnn_forward.3} parent=1 // loop_body
      %s19 = ssub.s32 %s14, 1
      %s20 = ssub.s32 %s14, 2
      %s21 = sadd.s32 %s14, 1
      %s22 = ssub.s32 %s14, %s21
      %p23 = scmp.eq.s32.totalorder %s22, 0
      %s25 = sadd.s32 %s24, 1
      %s26 = scalar_select %p23, %s24, %s25
      %p29 = pneg %p23
      %p30 = scmp.eq.s32.totalorder %s14, 1
      %p31 = por %p29, %p30
      %p32 = scmp.ne.s32.totalorder %s24, %s27
      %p33 = scmp.eq.s32.totalorder %s14, 0
      %p34 = por %p32, %p33
      %p35 = scmp.ne.s32.totalorder %s24, %s27
      %p36 = scmp.eq.s32.totalorder %s19, 1
      %p37 = por %p35, %p36
      %p38 = scmp.ne.s32.totalorder %s27, %s28
      %p39 = scmp.eq.s32.totalorder %s19, 0
      %p40 = por %p38, %p39
      %p41 = scmp.ne.s32.totalorder %s27, %s28
      %p42 = scmp.eq.s32.totalorder %s20, 1
      %p43 = por %p41, %p42
      %p45 = scmp.ne.s32.totalorder %s28, %s44
      %p46 = scmp.eq.s32.totalorder %s20, 0
      %p47 = por %p45, %p46
      %s48 = ssub.s32 %s14, %s21
      %p49 = scmp.eq.s32.totalorder %s48, 0
      %s51 = sadd.s32 %s50, 1
      %s52 = scalar_select %p49, %s50, %s51
      %p55 = pneg %p49
      %p56 = scmp.eq.s32.totalorder %s14, 1
      %p57 = por %p55, %p56
      %p58 = scmp.ne.s32.totalorder %s50, %s53
      %p59 = scmp.eq.s32.totalorder %s14, 0
      %p60 = por %p58, %p59
      %p61 = scmp.ne.s32.totalorder %s50, %s53
      %p62 = scmp.eq.s32.totalorder %s19, 1
      %p63 = por %p61, %p62
      %p64 = scmp.ne.s32.totalorder %s53, %s54
      %p65 = scmp.eq.s32.totalorder %s19, 0
      %p66 = por %p64, %p65
      %p67 = scmp.ne.s32.totalorder %s53, %s54
      %p68 = scmp.eq.s32.totalorder %s20, 1
      %p69 = por %p67, %p68
      %p71 = scmp.ne.s32.totalorder %s54, %s70
      %p72 = scmp.eq.s32.totalorder %s20, 0
      %p73 = por %p71, %p72
      %s74 = ssub.s32 %s14, %s21
      %p75 = scmp.eq.s32.totalorder %s74, 0
      %s77 = sadd.s32 %s76, 1
      %s78 = scalar_select %p75, %s76, %s77
      %p81 = pneg %p75
      %p82 = scmp.eq.s32.totalorder %s14, 1
      %p83 = por %p81, %p82
      %p84 = scmp.ne.s32.totalorder %s76, %s79
      %p85 = scmp.eq.s32.totalorder %s14, 0
      %p86 = por %p84, %p85
      %p87 = scmp.ne.s32.totalorder %s76, %s79
      %p88 = scmp.eq.s32.totalorder %s19, 1
      %p89 = por %p87, %p88
      %p90 = scmp.ne.s32.totalorder %s79, %s80
      %p91 = scmp.eq.s32.totalorder %s19, 0
      %p92 = por %p90, %p91
      %p93 = scmp.ne.s32.totalorder %s79, %s80
      %p94 = scmp.eq.s32.totalorder %s20, 1
      %p95 = por %p93, %p94
      %p97 = scmp.ne.s32.totalorder %s80, %s96
      %p98 = scmp.eq.s32.totalorder %s20, 0
      %p99 = por %p97, %p98
      %s100 = ssub.s32 %s14, %s21
      %p101 = scmp.eq.s32.totalorder %s100, 0
      %s103 = sadd.s32 %s102, 1
      %s104 = scalar_select %p101, %s102, %s103
      %p107 = pneg %p101
      %p108 = scmp.eq.s32.totalorder %s14, 1
      %p109 = por %p107, %p108
      %p110 = scmp.ne.s32.totalorder %s102, %s105
      %p111 = scmp.eq.s32.totalorder %s14, 0
      %p112 = por %p110, %p111
      %p113 = scmp.ne.s32.totalorder %s102, %s105
      %p114 = scmp.eq.s32.totalorder %s19, 1
      %p115 = por %p113, %p114
      %p116 = scmp.ne.s32.totalorder %s105, %s106
      %p117 = scmp.eq.s32.totalorder %s19, 0
      %p118 = por %p116, %p117
      %p119 = scmp.ne.s32.totalorder %s105, %s106
      %p120 = scmp.eq.s32.totalorder %s20, 1
      %p121 = por %p119, %p120
      %p123 = scmp.ne.s32.totalorder %s106, %s122
      %p124 = scmp.eq.s32.totalorder %s20, 0
      %p125 = por %p123, %p124
      %s127 = sadd.s32 %s126, 1
      %p130 = scmp.eq.s32.totalorder %s14, 1
      %p131 = scmp.ne.s32.totalorder %s126, %s128
      %p132 = scmp.eq.s32.totalorder %s14, 0
      %p133 = por %p131, %p132
      %p134 = scmp.ne.s32.totalorder %s126, %s128
      %p135 = scmp.eq.s32.totalorder %s19, 1
      %p136 = por %p134, %p135
      %p137 = scmp.ne.s32.totalorder %s128, %s129
      %p138 = scmp.eq.s32.totalorder %s19, 0
      %p139 = por %p137, %p138
      %p140 = scmp.ne.s32.totalorder %s128, %s129
      %p141 = scmp.eq.s32.totalorder %s20, 1
      %p142 = por %p140, %p141
      %p144 = scmp.ne.s32.totalorder %s129, %s143
      %p145 = scmp.eq.s32.totalorder %s20, 0
      %p146 = por %p144, %p145
      %s148 = sadd.s32 %s147, 1
      %p151 = scmp.eq.s32.totalorder %s14, 1
      %p152 = scmp.ne.s32.totalorder %s147, %s149
      %p153 = scmp.eq.s32.totalorder %s14, 0
      %p154 = por %p152, %p153
      %p155 = scmp.ne.s32.totalorder %s147, %s149
      %p156 = scmp.eq.s32.totalorder %s19, 1
      %p157 = por %p155, %p156
      %p158 = scmp.ne.s32.totalorder %s149, %s150
      %p159 = scmp.eq.s32.totalorder %s19, 0
      %p160 = por %p158, %p159
      %p161 = scmp.ne.s32.totalorder %s149, %s150
      %p162 = scmp.eq.s32.totalorder %s20, 1
      %p163 = por %p161, %p162
      %p165 = scmp.ne.s32.totalorder %s150, %s164
      %p166 = scmp.eq.s32.totalorder %s20, 0
      %p167 = por %p165, %p166
      %s168 = ssub.s32 %s14, %s21
      %p169 = scmp.eq.s32.totalorder %s168, 0
      %s171 = sadd.s32 %s170, 1
      %s172 = scalar_select %p169, %s170, %s171
      %p175 = pneg %p169
      %p176 = scmp.eq.s32.totalorder %s14, 1
      %p177 = por %p175, %p176
      %p178 = scmp.ne.s32.totalorder %s170, %s173
      %p179 = scmp.eq.s32.totalorder %s14, 0
      %p180 = por %p178, %p179
      %p181 = scmp.ne.s32.totalorder %s170, %s173
      %p182 = scmp.eq.s32.totalorder %s19, 1
      %p183 = por %p181, %p182
      %p184 = scmp.ne.s32.totalorder %s173, %s174
      %p185 = scmp.eq.s32.totalorder %s19, 0
      %p186 = por %p184, %p185
      %p187 = scmp.ne.s32.totalorder %s173, %s174
      %p188 = scmp.eq.s32.totalorder %s20, 1
      %p189 = por %p187, %p188
      %p191 = scmp.ne.s32.totalorder %s174, %s190
      %p192 = scmp.eq.s32.totalorder %s20, 0
      %p193 = por %p191, %p192
      %p194 = scmp.le.s32.totalorder 1, %s14
      %p195 = scmp.lt.s32.totalorder %s14, 3
      %p196 = pnand %p194, %p195
      %p197 = pneg %p196
      // Predicated region
      $region9: #{cnn_forward.3} parent=5 // pred_check
        _
      $region10: #{cnn_forward.3} parent=5 // pred_check_branch
        %199 = sbr.rel (%p196) target = $region12
      $region11: #{cnn_forward.3} parent=5 // pred_region
        %s200 = ssub.s32 %s14, 1
        // Predicated region
        $region13: #{cnn_forward.3} parent=11 // pred_check
          %p201 = pneg %p139
        $region14: #{cnn_forward.3} parent=11 // pred_check_branch
          %203 = sbr.rel (%p201) target = $region16
        $region15: #{cnn_forward.3} parent=11 // pred_region
          %s205 = ssub.s32 256, 256
          %206 = vsyncadd [#allocation3], %s205
          %s207 = sshll.u32 [#allocation2], 4
          %s208 = int_to_ptr.vmem [resolvable:$true] %s207
          %213 = dma.hbm_to_vmem [thread:$0]  %s4, 256, %s208, [#allocation3], 64, 64, 4
        $region16: #{cnn_forward.3} parent=11 // pred_fallthru
          _
        // Predicated region
        $region17: #{cnn_forward.3} parent=11 // pred_check
          %p214 = pneg %p160
        $region18: #{cnn_forward.3} parent=11 // pred_check_branch
          %216 = sbr.rel (%p214) target = $region20
        $region19: #{cnn_forward.3} parent=11 // pred_region
          %s218 = ssub.s32 16, 16
          %219 = vsyncadd [#allocation5], %s218
          %s221 = sshll.u32 [#allocation4], 4
          %s222 = int_to_ptr.vmem [resolvable:$true] %s221
          %224 = dma.hbm_to_vmem [thread:$0]  %s5, 16, %s222, [#allocation5]
        $region20: #{cnn_forward.3} parent=11 // pred_fallthru
          _
      $region12: #{cnn_forward.3} parent=5 // pred_fallthru
        _
      %p225 = scmp.lt.s32.totalorder %s14, 2
      // Predicated region
      $region21: #{cnn_forward.3} parent=5 // pred_check
        %p226 = pneg %p225
      $region22: #{cnn_forward.3} parent=5 // pred_check_branch
        %228 = sbr.rel (%p226) target = $region24
      $region23: #{cnn_forward.3} parent=5 // pred_region
        // Predicated region
        $region25: #{cnn_forward.3} parent=23 // pred_check
          %p229 = pneg %p34
        $region26: #{cnn_forward.3} parent=23 // pred_check_branch
          %231 = sbr.rel (%p229) target = $region28
        $region27: #{cnn_forward.3} parent=23 // pred_region
          %s232 = smul.u32 18, %s14
          %p233 = scmp.lt.s32.totalorder %s232, 35
          %s234 = scalar_select %p233, %s232, 35
          %s235 = smul.addr %s234, 4
          %s236 = scalar_lea.vmem %s0, %s235
          %s237 = smul.u32 18, %s14
        $region28: #{cnn_forward.3} parent=23 // pred_fallthru
          _
        // Predicated region
        $region29: #{cnn_forward.3} parent=23 // pred_check
          %p238 = pneg %p60
        $region30: #{cnn_forward.3} parent=23 // pred_check_branch
          %240 = sbr.rel (%p238) target = $region32
        $region31: #{cnn_forward.3} parent=23 // pred_region
          %s241 = smul.u32 18, %s14
          %p242 = scmp.lt.s32.totalorder %s241, 35
          %s243 = scalar_select %p242, %s241, 35
          %s244 = smul.addr %s243, 4
          %s245 = scalar_lea.vmem %s1, %s244
          %s246 = smul.u32 18, %s14
        $region32: #{cnn_forward.3} parent=23 // pred_fallthru
          _
        // Predicated region
        $region33: #{cnn_forward.3} parent=23 // pred_check
          %p247 = pneg %p86
        $region34: #{cnn_forward.3} parent=23 // pred_check_branch
          %249 = sbr.rel (%p247) target = $region36
        $region35: #{cnn_forward.3} parent=23 // pred_region
          %s250 = smul.u32 18, %s14
          %p251 = scmp.lt.s32.totalorder %s250, 35
          %s252 = scalar_select %p251, %s250, 35
          %s253 = smul.addr %s252, 4
          %s254 = scalar_lea.vmem %s2, %s253
          %s255 = smul.u32 18, %s14
        $region36: #{cnn_forward.3} parent=23 // pred_fallthru
          _
        // Predicated region
        $region37: #{cnn_forward.3} parent=23 // pred_check
          %p256 = pneg %p112
        $region38: #{cnn_forward.3} parent=23 // pred_check_branch
          %258 = sbr.rel (%p256) target = $region40
        $region39: #{cnn_forward.3} parent=23 // pred_region
          %s259 = smul.u32 18, %s14
          %p260 = scmp.lt.s32.totalorder %s259, 35
          %s261 = scalar_select %p260, %s259, 35
          %s262 = smul.addr %s261, 4
          %s263 = scalar_lea.vmem %s3, %s262
          %s264 = smul.u32 18, %s14
        $region40: #{cnn_forward.3} parent=23 // pred_fallthru
          _
      $region24: #{cnn_forward.3} parent=5 // pred_fallthru
        _
      %p265 = scmp.le.s32.totalorder 1, %s14
      %p266 = scmp.lt.s32.totalorder %s14, 3
      %p267 = pnand %p265, %p266
      %p268 = pneg %p267
      // Predicated region
      $region41: #{cnn_forward.3} parent=5 // pred_check
        _
      $region42: #{cnn_forward.3} parent=5 // pred_check_branch
        %270 = sbr.rel (%p267) target = $region44
      $region43: #{cnn_forward.3} parent=5 // pred_region
        %s271 = ssub.s32 %s14, 1
        // Predicated region
        $region45: #{cnn_forward.3} parent=43 // pred_check
          %p272 = pneg %p139
        $region46: #{cnn_forward.3} parent=43 // pred_check_branch
          %274 = sbr.rel (%p272) target = $region48
        $region47: #{cnn_forward.3} parent=43 // pred_region
          %275 = dma.done [#allocation3], 256
        $region48: #{cnn_forward.3} parent=43 // pred_fallthru
          _
        // Predicated region
        $region49: #{cnn_forward.3} parent=43 // pred_check
          %p276 = pneg %p160
        $region50: #{cnn_forward.3} parent=43 // pred_check_branch
          %278 = sbr.rel (%p276) target = $region52
        $region51: #{cnn_forward.3} parent=43 // pred_region
          %279 = dma.done [#allocation5], 16
        $region52: #{cnn_forward.3} parent=43 // pred_fallthru
          _
        %s280 = smul.u32 18, %s19
        %p281 = scmp.lt.s32.totalorder %s280, 35
        %s282 = scalar_select %p281, %s280, 35
        %s283 = smul.addr %s282, 4
        %s284 = scalar_lea.vmem %s0, %s283
        %p285 = pneg %p40
        %p286 = pneg %p37
        %s287 = smul.u32 18, %s19
        %p288 = scmp.lt.s32.totalorder %s287, 35
        %s289 = scalar_select %p288, %s287, 35
        %s290 = smul.addr %s289, 4
        %s291 = scalar_lea.vmem %s1, %s290
        %p292 = pneg %p66
        %p293 = pneg %p63
        %s294 = smul.u32 18, %s19
        %p295 = scmp.lt.s32.totalorder %s294, 35
        %s296 = scalar_select %p295, %s294, 35
        %s297 = smul.addr %s296, 4
        %s298 = scalar_lea.vmem %s2, %s297
        %p299 = pneg %p92
        %p300 = pneg %p89
        %s301 = smul.u32 18, %s19
        %p302 = scmp.lt.s32.totalorder %s301, 35
        %s303 = scalar_select %p302, %s301, 35
        %s304 = smul.addr %s303, 4
        %s305 = scalar_lea.vmem %s3, %s304
        %p306 = pneg %p118
        %p307 = pneg %p115
        %p308 = pneg %p139
        %p309 = pneg %p136
        %p310 = pneg %p160
        %p311 = pneg %p157
        %p312 = pneg %p186
        %p313 = pneg %p183
        %s314 = smul.u32 18, %s19
        %p315 = scmp.lt.s32.totalorder %s314, 35
        %s316 = scalar_select %p315, %s314, 35
        %s317 = smul.addr %s316, 4
        %s318 = scalar_lea.vmem %s6, %s317
        %s319 = smul.u32 18, %s19
        %p320 = scmp.lt.s32.totalorder %s319, 35
        %s321 = scalar_select %p320, %s319, 35
        %s322 = smul.addr %s321, 4
        %s323 = scalar_lea.vmem %s0, %s322
        %s324 = smul.u32 18, %s19
        %s325 = smul.u32 18, %s19
        %p326 = scmp.lt.s32.totalorder %s325, 35
        %s327 = scalar_select %p326, %s325, 35
        %s328 = smul.addr %s327, 4
        %s329 = scalar_lea.vmem %s1, %s328
        %s330 = smul.u32 18, %s19
        %s331 = smul.u32 18, %s19
        %p332 = scmp.lt.s32.totalorder %s331, 35
        %s333 = scalar_select %p332, %s331, 35
        %s334 = smul.addr %s333, 4
        %s335 = scalar_lea.vmem %s2, %s334
        %s336 = smul.u32 18, %s19
        %s337 = smul.u32 18, %s19
        %p338 = scmp.lt.s32.totalorder %s337, 35
        %s339 = scalar_select %p338, %s337, 35
        %s340 = smul.addr %s339, 4
        %s341 = scalar_lea.vmem %s3, %s340
        %s342 = smul.u32 18, %s19
        %s343 = smul.u32 18, %s19
        %p344 = scmp.lt.s32.totalorder %s343, 35
        %s345 = scalar_select %p344, %s343, 35
        %s346 = smul.addr %s345, 4
        %s347 = scalar_lea.vmem %s6, %s346
        %s348 = smul.u32 18, %s19
        %v350 = vld [vmem:[#allocation2] sm:$0xf]
        %v351 = vld [vmem:[#allocation2 + $0x4] sm:$0xf]
        %v352 = vld [vmem:[#allocation2 + $0x8] sm:$0xf]
        %v353 = vld [vmem:[#allocation2 + $0xc] sm:$0x1]
        %v354 = vld [vmem:[%s323] sm:$0xf]
        %v355 = vld [vmem:[%s323 + $0x4] sm:$0xf]
        %v356 = vld [vmem:[%s323 + $0x8] sm:$0xf]
        %v357 = vld [vmem:[%s323 + $0xc] sm:$0xf]
        %v358 = vld [vmem:[%s323 + $0x10] sm:$0xf]
        %v359 = vld [vmem:[%s323 + $0x14] sm:$0xf]
        %v360 = vld [vmem:[%s323 + $0x18] sm:$0xf]
        %v361 = vld [vmem:[%s323 + $0x1c] sm:$0xf]
        %v362 = vld [vmem:[%s323 + $0x20] sm:$0xf]
        %v363 = vld [vmem:[%s323 + $0x24] sm:$0xf]
        %v364 = vld [vmem:[%s323 + $0x28] sm:$0xf]
        %v365 = vld [vmem:[%s323 + $0x2c] sm:$0xf]
        %v366 = vld [vmem:[%s323 + $0x30] sm:$0xf]
        %v367 = vld [vmem:[%s323 + $0x34] sm:$0xf]
        %v368 = vld [vmem:[%s323 + $0x38] sm:$0xf]
        %v369 = vld [vmem:[%s323 + $0x3c] sm:$0xf]
        %v370 = vld [vmem:[%s323 + $0x40] sm:$0xf]
        %v371 = vld [vmem:[%s323 + $0x44] sm:$0xf]
        %v390 = vunpack.c.l.b16 %v354
        %v391 = vunpack.c.l.b16 %v355
        %v392 = vunpack.c.l.b16 %v356
        %v393 = vunpack.c.l.b16 %v357
        %v394 = vunpack.c.l.b16 %v358
        %v395 = vunpack.c.l.b16 %v359
        %v396 = vunpack.c.l.b16 %v360
        %v397 = vunpack.c.l.b16 %v361
        %v398 = vunpack.c.l.b16 %v362
        %v399 = vunpack.c.l.b16 %v363
        %v400 = vunpack.c.l.b16 %v364
        %v401 = vunpack.c.l.b16 %v365
        %v402 = vunpack.c.l.b16 %v366
        %v403 = vunpack.c.l.b16 %v367
        %v404 = vunpack.c.l.b16 %v368
        %v405 = vunpack.c.l.b16 %v369
        %v406 = vunpack.c.l.b16 %v370
        %v407 = vunpack.c.l.b16 %v371
        %v408 = vpack.c.b16 %v391, %v390
        %v409 = vpack.c.b16 %v393, %v392
        %v410 = vpack.c.b16 %v395, %v394
        %v411 = vpack.c.b16 %v397, %v396
        %v412 = vpack.c.b16 %v399, %v398
        %v413 = vpack.c.b16 %v401, %v400
        %v414 = vpack.c.b16 %v403, %v402
        %v415 = vpack.c.b16 %v405, %v404
        %v416 = vpack.c.b16 %v407, %v406
        %v421 = vunpack.c.l.b16 %v350
        %v422 = vunpack.c.l.b16 %v351
        %v423 = vunpack.c.l.b16 %v352
        %v424 = vunpack.c.l.b16 %v353
        %v425 = vpack.c.b16 %v422, %v421
        %v426 = vpack.c.b16 %v424, %v423
        %vm428 = vcmask 203776
        %v430 = vsel %vm428, %v408, 0
        %v433 = vsel %vm428, %v409, 0
        %v436 = vsel %vm428, %v410, 0
        %v439 = vsel %vm428, %v411, 0
        %v442 = vsel %vm428, %v412, 0
        %v445 = vsel %vm428, %v413, 0
        %v448 = vsel %vm428, %v414, 0
        %v451 = vsel %vm428, %v415, 0
        %v454 = vsel %vm428, %v416, 0
        %vm456 = vcmask 1043456
        %vm457 = vcmask 1044480
        %v458 = vsel %vm456, 4294967295, 65535
        %v459 = vsel %vm457, %v458, 0
        %v461 = vand.u32 %v426, %v459
        %463 = vmatprep.subr.bf16.mxu0 0
        %464 = vmatpush1.bf16.msra.mxu0 %v425
        %465 = vmatprep.subr.bf16.mxu0 0
        %466 = vmatpush1.bf16.msra.mxu0 %v461
        %467 = vmatprep.subr.bf16.mxu0 0
        %468 = vmatpush1.bf16.msra.mxu0 0
        %469 = vmatprep.subr.bf16.mxu0 0
        %470 = vmatpush1.bf16.msra.mxu0 0
        %471 = vmatprep.subr.bf16.mxu0 0
        %472 = vmatpush1.bf16.msra.mxu0 0
        %473 = vmatprep.subr.bf16.mxu0 0
        %474 = vmatpush1.bf16.msra.mxu0 0
        %475 = vmatprep.subr.bf16.mxu0 0
        %476 = vmatpush1.bf16.msra.mxu0 0
        %477 = vmatprep.subr.bf16.mxu0 0
        %478 = vmatpush1.bf16.msra.mxu0 0
        %479 = vmatprep.subr.bf16.mxu0 0
        %480 = vmatpush1.bf16.msra.mxu0 0
        %481 = vmatprep.subr.bf16.mxu0 0
        %482 = vmatpush1.bf16.msra.mxu0 0
        %483 = vmatprep.subr.bf16.mxu0 0
        %484 = vmatpush1.bf16.msra.mxu0 0
        %485 = vmatprep.subr.bf16.mxu0 0
        %486 = vmatpush1.bf16.msra.mxu0 0
        %487 = vmatprep.subr.bf16.mxu0 0
        %488 = vmatpush1.bf16.msra.mxu0 0
        %489 = vmatprep.subr.bf16.mxu0 0
        %490 = vmatpush1.bf16.msra.mxu0 0
        %491 = vmatprep.subr.bf16.mxu0 0
        %492 = vmatpush1.bf16.msra.mxu0 0
        %493 = vmatprep.subr.bf16.mxu0 0
        %494 = vmatpush1.bf16.msra.mxu0 0
        %495 = vmatprep.mubr.bf16.mxu0 0
        %496 = vmatmul.mubr.bf16.gmra.mrb[0].mxu0 %v430
        %v497 = vpop.f32.mrb[0].mxu0
        %v498 = vadd.f32 0.0, %v497
        %v499 = vpop.f32.mrb[0].mxu0
        %v500 = vpop.f32.mrb[0].mxu0
        %v501 = vadd.f32 0.0, %v500
        %v502 = vpop.f32.mrb[0].mxu0
        %503 = vmatprep.mubr.bf16.mxu0 0
        %504 = vmatmul.mubr.bf16.gmra.mrb[0].mxu0 %v433
        %v505 = vpop.f32.mrb[0].mxu0
        %v506 = vadd.f32 0.0, %v505
        %v507 = vpop.f32.mrb[0].mxu0
        %v508 = vpop.f32.mrb[0].mxu0
        %v509 = vadd.f32 0.0, %v508
        %v510 = vpop.f32.mrb[0].mxu0
        %511 = vmatprep.mubr.bf16.mxu0 0
        %512 = vmatmul.mubr.bf16.gmra.mrb[0].mxu0 %v436
        %v513 = vpop.f32.mrb[0].mxu0
        %v514 = vadd.f32 0.0, %v513
        %v515 = vpop.f32.mrb[0].mxu0
        %v516 = vpop.f32.mrb[0].mxu0
        %v517 = vadd.f32 0.0, %v516
        %v518 = vpop.f32.mrb[0].mxu0
        %519 = vmatprep.mubr.bf16.mxu0 0
        %520 = vmatmul.mubr.bf16.gmra.mrb[0].mxu0 %v439
        %v521 = vpop.f32.mrb[0].mxu0
        %v522 = vadd.f32 0.0, %v521
        %v523 = vpop.f32.mrb[0].mxu0
        %v524 = vpop.f32.mrb[0].mxu0
        %v525 = vadd.f32 0.0, %v524
        %v526 = vpop.f32.mrb[0].mxu0
        %527 = vmatprep.mubr.bf16.mxu0 0
        %528 = vmatmul.mubr.bf16.gmra.mrb[0].mxu0 %v442
        %v529 = vpop.f32.mrb[0].mxu0
        %v530 = vadd.f32 0.0, %v529
        %v531 = vpop.f32.mrb[0].mxu0
        %v532 = vpop.f32.mrb[0].mxu0
        %v533 = vadd.f32 0.0, %v532
        %v534 = vpop.f32.mrb[0].mxu0
        %535 = vmatprep.mubr.bf16.mxu0 0
        %536 = vmatmul.mubr.bf16.gmra.mrb[0].mxu0 %v445
        %v537 = vpop.f32.mrb[0].mxu0
        %v538 = vadd.f32 0.0, %v537
        %v539 = vpop.f32.mrb[0].mxu0
        %v540 = vpop.f32.mrb[0].mxu0
        %v541 = vadd.f32 0.0, %v540
        %v542 = vpop.f32.mrb[0].mxu0
        %543 = vmatprep.mubr.bf16.mxu0 0
        %544 = vmatmul.mubr.bf16.gmra.mrb[0].mxu0 %v448
        %v545 = vpop.f32.mrb[0].mxu0
        %v546 = vadd.f32 0.0, %v545
        %v547 = vpop.f32.mrb[0].mxu0
        %v548 = vpop.f32.mrb[0].mxu0
        %v549 = vadd.f32 0.0, %v548
        %v550 = vpop.f32.mrb[0].mxu0
        %551 = vmatprep.mubr.bf16.mxu0 0
        %552 = vmatmul.mubr.bf16.gmra.mrb[0].mxu0 %v451
        %v553 = vpop.f32.mrb[0].mxu0
        %v554 = vadd.f32 0.0, %v553
        %v555 = vpop.f32.mrb[0].mxu0
        %v556 = vpop.f32.mrb[0].mxu0
        %v557 = vadd.f32 0.0, %v556
        %v558 = vpop.f32.mrb[0].mxu0
        %559 = vmatprep.mubr.bf16.mxu0 0
        %560 = vmatmul.mubr.bf16.gmra.mrb[0].mxu0 %v454
        %v561 = vpop.f32.mrb[0].mxu0
        %v562 = vadd.f32 0.0, %v561
        %v563 = vpop.f32.mrb[0].mxu0
        %v564 = vpop.f32.mrb[0].mxu0
        %v565 = vadd.f32 0.0, %v564
        %v566 = vpop.f32.mrb[0].mxu0
        %567 = vdwg.mxu0
        %v568 = vld [vmem:[%s329] sm:$0xf]
        %v569 = vld [vmem:[%s329 + $0x4] sm:$0xf]
        %v570 = vld [vmem:[%s329 + $0x8] sm:$0xf]
        %v571 = vld [vmem:[%s329 + $0xc] sm:$0xf]
        %v572 = vld [vmem:[%s329 + $0x10] sm:$0xf]
        %v573 = vld [vmem:[%s329 + $0x14] sm:$0xf]
        %v574 = vld [vmem:[%s329 + $0x18] sm:$0xf]
        %v575 = vld [vmem:[%s329 + $0x1c] sm:$0xf]
        %v576 = vld [vmem:[%s329 + $0x20] sm:$0xf]
        %v577 = vld [vmem:[%s329 + $0x24] sm:$0xf]
        %v578 = vld [vmem:[%s329 + $0x28] sm:$0xf]
        %v579 = vld [vmem:[%s329 + $0x2c] sm:$0xf]
        %v580 = vld [vmem:[%s329 + $0x30] sm:$0xf]
        %v581 = vld [vmem:[%s329 + $0x34] sm:$0xf]
        %v582 = vld [vmem:[%s329 + $0x38] sm:$0xf]
        %v583 = vld [vmem:[%s329 + $0x3c] sm:$0xf]
        %v584 = vld [vmem:[%s329 + $0x40] sm:$0xf]
        %v585 = vld [vmem:[%s329 + $0x44] sm:$0xf]
        %v604 = vunpack.c.l.b16 %v568
        %v605 = vunpack.c.l.b16 %v569
        %v606 = vunpack.c.l.b16 %v570
        %v607 = vunpack.c.l.b16 %v571
        %v608 = vunpack.c.l.b16 %v572
        %v609 = vunpack.c.l.b16 %v573
        %v610 = vunpack.c.l.b16 %v574
        %v611 = vunpack.c.l.b16 %v575
        %v612 = vunpack.c.l.b16 %v576
        %v613 = vunpack.c.l.b16 %v577
        %v614 = vunpack.c.l.b16 %v578
        %v615 = vunpack.c.l.b16 %v579
        %v616 = vunpack.c.l.b16 %v580
        %v617 = vunpack.c.l.b16 %v581
        %v618 = vunpack.c.l.b16 %v582
        %v619 = vunpack.c.l.b16 %v583
        %v620 = vunpack.c.l.b16 %v584
        %v621 = vunpack.c.l.b16 %v585
        %v622 = vpack.c.b16 %v605, %v604
        %v623 = vpack.c.b16 %v607, %v606
        %v624 = vpack.c.b16 %v609, %v608
        %v625 = vpack.c.b16 %v611, %v610
        %v626 = vpack.c.b16 %v613, %v612
        %v627 = vpack.c.b16 %v615, %v614
        %v628 = vpack.c.b16 %v617, %v616
        %v629 = vpack.c.b16 %v619, %v618
        %v630 = vpack.c.b16 %v621, %v620
        %v632 = vsel %vm428, %v622, 0
        %v635 = vsel %vm428, %v623, 0
        %v638 = vsel %vm428, %v624, 0
        %v641 = vsel %vm428, %v625, 0
        %v644 = vsel %vm428, %v626, 0
        %v647 = vsel %vm428, %v627, 0
        %v650 = vsel %vm428, %v628, 0
        %v653 = vsel %vm428, %v629, 0
        %v656 = vsel %vm428, %v630, 0
        %658 = vmatprep.subr.bf16.mxu0 0
        %659 = vmatpush1.bf16.msra.mxu0 %v425
        %660 = vmatprep.subr.bf16.mxu0 0
        %661 = vmatpush1.bf16.msra.mxu0 %v461
        %662 = vmatprep.subr.bf16.mxu0 0
        %663 = vmatpush1.bf16.msra.mxu0 0
        %664 = vmatprep.subr.bf16.mxu0 0
        %665 = vmatpush1.bf16.msra.mxu0 0
        %666 = vmatprep.subr.bf16.mxu0 0
        %667 = vmatpush1.bf16.msra.mxu0 0
        %668 = vmatprep.subr.bf16.mxu0 0
        %669 = vmatpush1.bf16.msra.mxu0 0
        %670 = vmatprep.subr.bf16.mxu0 0
        %671 = vmatpush1.bf16.msra.mxu0 0
        %672 = vmatprep.subr.bf16.mxu0 0
        %673 = vmatpush1.bf16.msra.mxu0 0
        %674 = vmatprep.subr.bf16.mxu0 0
        %675 = vmatpush1.bf16.msra.mxu0 0
        %676 = vmatprep.subr.bf16.mxu0 0
        %677 = vmatpush1.bf16.msra.mxu0 0
        %678 = vmatprep.subr.bf16.mxu0 0
        %679 = vmatpush1.bf16.msra.mxu0 0
        %680 = vmatprep.subr.bf16.mxu0 0
        %681 = vmatpush1.bf16.msra.mxu0 0
        %682 = vmatprep.subr.bf16.mxu0 0
        %683 = vmatpush1.bf16.msra.mxu0 0
        %684 = vmatprep.subr.bf16.mxu0 0
        %685 = vmatpush1.bf16.msra.mxu0 0
        %686 = vmatprep.subr.bf16.mxu0 0
        %687 = vmatpush1.bf16.msra.mxu0 0
        %688 = vmatprep.subr.bf16.mxu0 0
        %689 = vmatpush1.bf16.msra.mxu0 0
        %690 = vmatprep.mubr.bf16.mxu0 0
        %691 = vmatmul.mubr.bf16.gmra.mrb[0].mxu0 %v632
        %v692 = vpop.f32.mrb[0].mxu0
        %v693 = vadd.f32 0.0, %v692
        %v694 = vpop.f32.mrb[0].mxu0
        %v695 = vpop.f32.mrb[0].mxu0
        %v696 = vadd.f32 0.0, %v695
        %v697 = vpop.f32.mrb[0].mxu0
        %698 = vmatprep.mubr.bf16.mxu0 0
        %699 = vmatmul.mubr.bf16.gmra.mrb[0].mxu0 %v635
        %v700 = vpop.f32.mrb[0].mxu0
        %v701 = vadd.f32 0.0, %v700
        %v702 = vpop.f32.mrb[0].mxu0
        %v703 = vpop.f32.mrb[0].mxu0
        %v704 = vadd.f32 0.0, %v703
        %v705 = vpop.f32.mrb[0].mxu0
        %706 = vmatprep.mubr.bf16.mxu0 0
        %707 = vmatmul.mubr.bf16.gmra.mrb[0].mxu0 %v638
        %v708 = vpop.f32.mrb[0].mxu0
        %v709 = vadd.f32 0.0, %v708
        %v710 = vpop.f32.mrb[0].mxu0
        %v711 = vpop.f32.mrb[0].mxu0
        %v712 = vadd.f32 0.0, %v711
        %v713 = vpop.f32.mrb[0].mxu0
        %714 = vmatprep.mubr.bf16.mxu0 0
        %715 = vmatmul.mubr.bf16.gmra.mrb[0].mxu0 %v641
        %v716 = vpop.f32.mrb[0].mxu0
        %v717 = vadd.f32 0.0, %v716
        %v718 = vpop.f32.mrb[0].mxu0
        %v719 = vpop.f32.mrb[0].mxu0
        %v720 = vadd.f32 0.0, %v719
        %v721 = vpop.f32.mrb[0].mxu0
        %722 = vmatprep.mubr.bf16.mxu0 0
        %723 = vmatmul.mubr.bf16.gmra.mrb[0].mxu0 %v644
        %v724 = vpop.f32.mrb[0].mxu0
        %v725 = vadd.f32 0.0, %v724
        %v726 = vpop.f32.mrb[0].mxu0
        %v727 = vpop.f32.mrb[0].mxu0
        %v728 = vadd.f32 0.0, %v727
        %v729 = vpop.f32.mrb[0].mxu0
        %730 = vmatprep.mubr.bf16.mxu0 0
        %731 = vmatmul.mubr.bf16.gmra.mrb[0].mxu0 %v647
        %v732 = vpop.f32.mrb[0].mxu0
        %v733 = vadd.f32 0.0, %v732
        %v734 = vpop.f32.mrb[0].mxu0
        %v735 = vpop.f32.mrb[0].mxu0
        %v736 = vadd.f32 0.0, %v735
        %v737 = vpop.f32.mrb[0].mxu0
        %738 = vmatprep.mubr.bf16.mxu0 0
        %739 = vmatmul.mubr.bf16.gmra.mrb[0].mxu0 %v650
        %v740 = vpop.f32.mrb[0].mxu0
        %v741 = vadd.f32 0.0, %v740
        %v742 = vpop.f32.mrb[0].mxu0
        %v743 = vpop.f32.mrb[0].mxu0
        %v744 = vadd.f32 0.0, %v743
        %v745 = vpop.f32.mrb[0].mxu0
        %746 = vmatprep.mubr.bf16.mxu0 0
        %747 = vmatmul.mubr.bf16.gmra.mrb[0].mxu0 %v653
        %v748 = vpop.f32.mrb[0].mxu0
        %v749 = vadd.f32 0.0, %v748
        %v750 = vpop.f32.mrb[0].mxu0
        %v751 = vpop.f32.mrb[0].mxu0
        %v752 = vadd.f32 0.0, %v751
        %v753 = vpop.f32.mrb[0].mxu0
        %754 = vmatprep.mubr.bf16.mxu0 0
        %755 = vmatmul.mubr.bf16.gmra.mrb[0].mxu0 %v656
        %v756 = vpop.f32.mrb[0].mxu0
        %v757 = vadd.f32 0.0, %v756
        %v758 = vpop.f32.mrb[0].mxu0
        %v759 = vpop.f32.mrb[0].mxu0
        %v760 = vadd.f32 0.0, %v759
        %v761 = vpop.f32.mrb[0].mxu0
        %762 = vdwg.mxu0
        %v763 = vmax.f32 %v498, %v693
        %v764 = vmax.f32 %v501, %v696
        %v765 = vmax.f32 %v506, %v701
        %v766 = vmax.f32 %v509, %v704
        %v767 = vmax.f32 %v514, %v709
        %v768 = vmax.f32 %v517, %v712
        %v769 = vmax.f32 %v522, %v717
        %v770 = vmax.f32 %v525, %v720
        %v771 = vmax.f32 %v530, %v725
        %v772 = vmax.f32 %v533, %v728
        %v773 = vmax.f32 %v538, %v733
        %v774 = vmax.f32 %v541, %v736
        %v775 = vmax.f32 %v546, %v741
        %v776 = vmax.f32 %v549, %v744
        %v777 = vmax.f32 %v554, %v749
        %v778 = vmax.f32 %v557, %v752
        %v779 = vmax.f32 %v562, %v757
        %v780 = vmax.f32 %v565, %v760
        %v781 = vld [vmem:[%s335] sm:$0xf]
        %v782 = vld [vmem:[%s335 + $0x4] sm:$0xf]
        %v783 = vld [vmem:[%s335 + $0x8] sm:$0xf]
        %v784 = vld [vmem:[%s335 + $0xc] sm:$0xf]
        %v785 = vld [vmem:[%s335 + $0x10] sm:$0xf]
        %v786 = vld [vmem:[%s335 + $0x14] sm:$0xf]
        %v787 = vld [vmem:[%s335 + $0x18] sm:$0xf]
        %v788 = vld [vmem:[%s335 + $0x1c] sm:$0xf]
        %v789 = vld [vmem:[%s335 + $0x20] sm:$0xf]
        %v790 = vld [vmem:[%s335 + $0x24] sm:$0xf]
        %v791 = vld [vmem:[%s335 + $0x28] sm:$0xf]
        %v792 = vld [vmem:[%s335 + $0x2c] sm:$0xf]
        %v793 = vld [vmem:[%s335 + $0x30] sm:$0xf]
        %v794 = vld [vmem:[%s335 + $0x34] sm:$0xf]
        %v795 = vld [vmem:[%s335 + $0x38] sm:$0xf]
        %v796 = vld [vmem:[%s335 + $0x3c] sm:$0xf]
        %v797 = vld [vmem:[%s335 + $0x40] sm:$0xf]
        %v798 = vld [vmem:[%s335 + $0x44] sm:$0xf]
        %v817 = vunpack.c.l.b16 %v781
        %v818 = vunpack.c.l.b16 %v782
        %v819 = vunpack.c.l.b16 %v783
        %v820 = vunpack.c.l.b16 %v784
        %v821 = vunpack.c.l.b16 %v785
        %v822 = vunpack.c.l.b16 %v786
        %v823 = vunpack.c.l.b16 %v787
        %v824 = vunpack.c.l.b16 %v788
        %v825 = vunpack.c.l.b16 %v789
        %v826 = vunpack.c.l.b16 %v790
        %v827 = vunpack.c.l.b16 %v791
        %v828 = vunpack.c.l.b16 %v792
        %v829 = vunpack.c.l.b16 %v793
        %v830 = vunpack.c.l.b16 %v794
        %v831 = vunpack.c.l.b16 %v795
        %v832 = vunpack.c.l.b16 %v796
        %v833 = vunpack.c.l.b16 %v797
        %v834 = vunpack.c.l.b16 %v798
        %v835 = vpack.c.b16 %v818, %v817
        %v836 = vpack.c.b16 %v820, %v819
        %v837 = vpack.c.b16 %v822, %v821
        %v838 = vpack.c.b16 %v824, %v823
        %v839 = vpack.c.b16 %v826, %v825
        %v840 = vpack.c.b16 %v828, %v827
        %v841 = vpack.c.b16 %v830, %v829
        %v842 = vpack.c.b16 %v832, %v831
        %v843 = vpack.c.b16 %v834, %v833
        %v845 = vsel %vm428, %v835, 0
        %v848 = vsel %vm428, %v836, 0
        %v851 = vsel %vm428, %v837, 0
        %v854 = vsel %vm428, %v838, 0
        %v857 = vsel %vm428, %v839, 0
        %v860 = vsel %vm428, %v840, 0
        %v863 = vsel %vm428, %v841, 0
        %v866 = vsel %vm428, %v842, 0
        %v869 = vsel %vm428, %v843, 0
        %871 = vmatprep.subr.bf16.mxu0 0
        %872 = vmatpush1.bf16.msra.mxu0 %v425
        %873 = vmatprep.subr.bf16.mxu0 0
        %874 = vmatpush1.bf16.msra.mxu0 %v461
        %875 = vmatprep.subr.bf16.mxu0 0
        %876 = vmatpush1.bf16.msra.mxu0 0
        %877 = vmatprep.subr.bf16.mxu0 0
        %878 = vmatpush1.bf16.msra.mxu0 0
        %879 = vmatprep.subr.bf16.mxu0 0
        %880 = vmatpush1.bf16.msra.mxu0 0
        %881 = vmatprep.subr.bf16.mxu0 0
        %882 = vmatpush1.bf16.msra.mxu0 0
        %883 = vmatprep.subr.bf16.mxu0 0
        %884 = vmatpush1.bf16.msra.mxu0 0
        %885 = vmatprep.subr.bf16.mxu0 0
        %886 = vmatpush1.bf16.msra.mxu0 0
        %887 = vmatprep.subr.bf16.mxu0 0
        %888 = vmatpush1.bf16.msra.mxu0 0
        %889 = vmatprep.subr.bf16.mxu0 0
        %890 = vmatpush1.bf16.msra.mxu0 0
        %891 = vmatprep.subr.bf16.mxu0 0
        %892 = vmatpush1.bf16.msra.mxu0 0
        %893 = vmatprep.subr.bf16.mxu0 0
        %894 = vmatpush1.bf16.msra.mxu0 0
        %895 = vmatprep.subr.bf16.mxu0 0
        %896 = vmatpush1.bf16.msra.mxu0 0
        %897 = vmatprep.subr.bf16.mxu0 0
        %898 = vmatpush1.bf16.msra.mxu0 0
        %899 = vmatprep.subr.bf16.mxu0 0
        %900 = vmatpush1.bf16.msra.mxu0 0
        %901 = vmatprep.subr.bf16.mxu0 0
        %902 = vmatpush1.bf16.msra.mxu0 0
        %903 = vmatprep.mubr.bf16.mxu0 0
        %904 = vmatmul.mubr.bf16.gmra.mrb[0].mxu0 %v845
        %v905 = vpop.f32.mrb[0].mxu0
        %v906 = vadd.f32 0.0, %v905
        %v907 = vpop.f32.mrb[0].mxu0
        %v908 = vpop.f32.mrb[0].mxu0
        %v909 = vadd.f32 0.0, %v908
        %v910 = vpop.f32.mrb[0].mxu0
        %911 = vmatprep.mubr.bf16.mxu0 0
        %912 = vmatmul.mubr.bf16.gmra.mrb[0].mxu0 %v848
        %v913 = vpop.f32.mrb[0].mxu0
        %v914 = vadd.f32 0.0, %v913
        %v915 = vpop.f32.mrb[0].mxu0
        %v916 = vpop.f32.mrb[0].mxu0
        %v917 = vadd.f32 0.0, %v916
        %v918 = vpop.f32.mrb[0].mxu0
        %919 = vmatprep.mubr.bf16.mxu0 0
        %920 = vmatmul.mubr.bf16.gmra.mrb[0].mxu0 %v851
        %v921 = vpop.f32.mrb[0].mxu0
        %v922 = vadd.f32 0.0, %v921
        %v923 = vpop.f32.mrb[0].mxu0
        %v924 = vpop.f32.mrb[0].mxu0
        %v925 = vadd.f32 0.0, %v924
        %v926 = vpop.f32.mrb[0].mxu0
        %927 = vmatprep.mubr.bf16.mxu0 0
        %928 = vmatmul.mubr.bf16.gmra.mrb[0].mxu0 %v854
        %v929 = vpop.f32.mrb[0].mxu0
        %v930 = vadd.f32 0.0, %v929
        %v931 = vpop.f32.mrb[0].mxu0
        %v932 = vpop.f32.mrb[0].mxu0
        %v933 = vadd.f32 0.0, %v932
        %v934 = vpop.f32.mrb[0].mxu0
        %935 = vmatprep.mubr.bf16.mxu0 0
        %936 = vmatmul.mubr.bf16.gmra.mrb[0].mxu0 %v857
        %v937 = vpop.f32.mrb[0].mxu0
        %v938 = vadd.f32 0.0, %v937
        %v939 = vpop.f32.mrb[0].mxu0
        %v940 = vpop.f32.mrb[0].mxu0
        %v941 = vadd.f32 0.0, %v940
        %v942 = vpop.f32.mrb[0].mxu0
        %943 = vmatprep.mubr.bf16.mxu0 0
        %944 = vmatmul.mubr.bf16.gmra.mrb[0].mxu0 %v860
        %v945 = vpop.f32.mrb[0].mxu0
        %v946 = vadd.f32 0.0, %v945
        %v947 = vpop.f32.mrb[0].mxu0
        %v948 = vpop.f32.mrb[0].mxu0
        %v949 = vadd.f32 0.0, %v948
        %v950 = vpop.f32.mrb[0].mxu0
        %951 = vmatprep.mubr.bf16.mxu0 0
        %952 = vmatmul.mubr.bf16.gmra.mrb[0].mxu0 %v863
        %v953 = vpop.f32.mrb[0].mxu0
        %v954 = vadd.f32 0.0, %v953
        %v955 = vpop.f32.mrb[0].mxu0
        %v956 = vpop.f32.mrb[0].mxu0
        %v957 = vadd.f32 0.0, %v956
        %v958 = vpop.f32.mrb[0].mxu0
        %959 = vmatprep.mubr.bf16.mxu0 0
        %960 = vmatmul.mubr.bf16.gmra.mrb[0].mxu0 %v866
        %v961 = vpop.f32.mrb[0].mxu0
        %v962 = vadd.f32 0.0, %v961
        %v963 = vpop.f32.mrb[0].mxu0
        %v964 = vpop.f32.mrb[0].mxu0
        %v965 = vadd.f32 0.0, %v964
        %v966 = vpop.f32.mrb[0].mxu0
        %967 = vmatprep.mubr.bf16.mxu0 0
        %968 = vmatmul.mubr.bf16.gmra.mrb[0].mxu0 %v869
        %v969 = vpop.f32.mrb[0].mxu0
        %v970 = vadd.f32 0.0, %v969
        %v971 = vpop.f32.mrb[0].mxu0
        %v972 = vpop.f32.mrb[0].mxu0
        %v973 = vadd.f32 0.0, %v972
        %v974 = vpop.f32.mrb[0].mxu0
        %975 = vdwg.mxu0
        %v976 = vld [vmem:[%s341] sm:$0xf]
        %v977 = vld [vmem:[%s341 + $0x4] sm:$0xf]
        %v978 = vld [vmem:[%s341 + $0x8] sm:$0xf]
        %v979 = vld [vmem:[%s341 + $0xc] sm:$0xf]
        %v980 = vld [vmem:[%s341 + $0x10] sm:$0xf]
        %v981 = vld [vmem:[%s341 + $0x14] sm:$0xf]
        %v982 = vld [vmem:[%s341 + $0x18] sm:$0xf]
        %v983 = vld [vmem:[%s341 + $0x1c] sm:$0xf]
        %v984 = vld [vmem:[%s341 + $0x20] sm:$0xf]
        %v985 = vld [vmem:[%s341 + $0x24] sm:$0xf]
        %v986 = vld [vmem:[%s341 + $0x28] sm:$0xf]
        %v987 = vld [vmem:[%s341 + $0x2c] sm:$0xf]
        %v988 = vld [vmem:[%s341 + $0x30] sm:$0xf]
        %v989 = vld [vmem:[%s341 + $0x34] sm:$0xf]
        %v990 = vld [vmem:[%s341 + $0x38] sm:$0xf]
        %v991 = vld [vmem:[%s341 + $0x3c] sm:$0xf]
        %v992 = vld [vmem:[%s341 + $0x40] sm:$0xf]
        %v993 = vld [vmem:[%s341 + $0x44] sm:$0xf]
        %v1012 = vunpack.c.l.b16 %v976
        %v1013 = vunpack.c.l.b16 %v977
        %v1014 = vunpack.c.l.b16 %v978
        %v1015 = vunpack.c.l.b16 %v979
        %v1016 = vunpack.c.l.b16 %v980
        %v1017 = vunpack.c.l.b16 %v981
        %v1018 = vunpack.c.l.b16 %v982
        %v1019 = vunpack.c.l.b16 %v983
        %v1020 = vunpack.c.l.b16 %v984
        %v1021 = vunpack.c.l.b16 %v985
        %v1022 = vunpack.c.l.b16 %v986
        %v1023 = vunpack.c.l.b16 %v987
        %v1024 = vunpack.c.l.b16 %v988
        %v1025 = vunpack.c.l.b16 %v989
        %v1026 = vunpack.c.l.b16 %v990
        %v1027 = vunpack.c.l.b16 %v991
        %v1028 = vunpack.c.l.b16 %v992
        %v1029 = vunpack.c.l.b16 %v993
        %v1030 = vpack.c.b16 %v1013, %v1012
        %v1031 = vpack.c.b16 %v1015, %v1014
        %v1032 = vpack.c.b16 %v1017, %v1016
        %v1033 = vpack.c.b16 %v1019, %v1018
        %v1034 = vpack.c.b16 %v1021, %v1020
        %v1035 = vpack.c.b16 %v1023, %v1022
        %v1036 = vpack.c.b16 %v1025, %v1024
        %v1037 = vpack.c.b16 %v1027, %v1026
        %v1038 = vpack.c.b16 %v1029, %v1028
        %v1040 = vsel %vm428, %v1030, 0
        %v1043 = vsel %vm428, %v1031, 0
        %v1046 = vsel %vm428, %v1032, 0
        %v1049 = vsel %vm428, %v1033, 0
        %v1052 = vsel %vm428, %v1034, 0
        %v1055 = vsel %vm428, %v1035, 0
        %v1058 = vsel %vm428, %v1036, 0
        %v1061 = vsel %vm428, %v1037, 0
        %v1064 = vsel %vm428, %v1038, 0
        %1066 = vmatprep.subr.bf16.mxu0 0
        %1067 = vmatpush1.bf16.msra.mxu0 %v425
        %1068 = vmatprep.subr.bf16.mxu0 0
        %1069 = vmatpush1.bf16.msra.mxu0 %v461
        %1070 = vmatprep.subr.bf16.mxu0 0
        %1071 = vmatpush1.bf16.msra.mxu0 0
        %1072 = vmatprep.subr.bf16.mxu0 0
        %1073 = vmatpush1.bf16.msra.mxu0 0
        %1074 = vmatprep.subr.bf16.mxu0 0
        %1075 = vmatpush1.bf16.msra.mxu0 0
        %1076 = vmatprep.subr.bf16.mxu0 0
        %1077 = vmatpush1.bf16.msra.mxu0 0
        %1078 = vmatprep.subr.bf16.mxu0 0
        %1079 = vmatpush1.bf16.msra.mxu0 0
        %1080 = vmatprep.subr.bf16.mxu0 0
        %1081 = vmatpush1.bf16.msra.mxu0 0
        %1082 = vmatprep.subr.bf16.mxu0 0
        %1083 = vmatpush1.bf16.msra.mxu0 0
        %1084 = vmatprep.subr.bf16.mxu0 0
        %1085 = vmatpush1.bf16.msra.mxu0 0
        %1086 = vmatprep.subr.bf16.mxu0 0
        %1087 = vmatpush1.bf16.msra.mxu0 0
        %1088 = vmatprep.subr.bf16.mxu0 0
        %1089 = vmatpush1.bf16.msra.mxu0 0
        %1090 = vmatprep.subr.bf16.mxu0 0
        %1091 = vmatpush1.bf16.msra.mxu0 0
        %1092 = vmatprep.subr.bf16.mxu0 0
        %1093 = vmatpush1.bf16.msra.mxu0 0
        %1094 = vmatprep.subr.bf16.mxu0 0
        %1095 = vmatpush1.bf16.msra.mxu0 0
        %1096 = vmatprep.subr.bf16.mxu0 0
        %1097 = vmatpush1.bf16.msra.mxu0 0
        %1098 = vmatprep.mubr.bf16.mxu0 0
        %1099 = vmatmul.mubr.bf16.gmra.mrb[0].mxu0 %v1040
        %v1100 = vpop.f32.mrb[0].mxu0
        %v1101 = vadd.f32 0.0, %v1100
        %v1102 = vpop.f32.mrb[0].mxu0
        %v1103 = vpop.f32.mrb[0].mxu0
        %v1104 = vadd.f32 0.0, %v1103
        %v1105 = vpop.f32.mrb[0].mxu0
        %1106 = vmatprep.mubr.bf16.mxu0 0
        %1107 = vmatmul.mubr.bf16.gmra.mrb[0].mxu0 %v1043
        %v1108 = vpop.f32.mrb[0].mxu0
        %v1109 = vadd.f32 0.0, %v1108
        %v1110 = vpop.f32.mrb[0].mxu0
        %v1111 = vpop.f32.mrb[0].mxu0
        %v1112 = vadd.f32 0.0, %v1111
        %v1113 = vpop.f32.mrb[0].mxu0
        %1114 = vmatprep.mubr.bf16.mxu0 0
        %1115 = vmatmul.mubr.bf16.gmra.mrb[0].mxu0 %v1046
        %v1116 = vpop.f32.mrb[0].mxu0
        %v1117 = vadd.f32 0.0, %v1116
        %v1118 = vpop.f32.mrb[0].mxu0
        %v1119 = vpop.f32.mrb[0].mxu0
        %v1120 = vadd.f32 0.0, %v1119
        %v1121 = vpop.f32.mrb[0].mxu0
        %1122 = vmatprep.mubr.bf16.mxu0 0
        %1123 = vmatmul.mubr.bf16.gmra.mrb[0].mxu0 %v1049
        %v1124 = vpop.f32.mrb[0].mxu0
        %v1125 = vadd.f32 0.0, %v1124
        %v1126 = vpop.f32.mrb[0].mxu0
        %v1127 = vpop.f32.mrb[0].mxu0
        %v1128 = vadd.f32 0.0, %v1127
        %v1129 = vpop.f32.mrb[0].mxu0
        %1130 = vmatprep.mubr.bf16.mxu0 0
        %1131 = vmatmul.mubr.bf16.gmra.mrb[0].mxu0 %v1052
        %v1132 = vpop.f32.mrb[0].mxu0
        %v1133 = vadd.f32 0.0, %v1132
        %v1134 = vpop.f32.mrb[0].mxu0
        %v1135 = vpop.f32.mrb[0].mxu0
        %v1136 = vadd.f32 0.0, %v1135
        %v1137 = vpop.f32.mrb[0].mxu0
        %1138 = vmatprep.mubr.bf16.mxu0 0
        %1139 = vmatmul.mubr.bf16.gmra.mrb[0].mxu0 %v1055
        %v1140 = vpop.f32.mrb[0].mxu0
        %v1141 = vadd.f32 0.0, %v1140
        %v1142 = vpop.f32.mrb[0].mxu0
        %v1143 = vpop.f32.mrb[0].mxu0
        %v1144 = vadd.f32 0.0, %v1143
        %v1145 = vpop.f32.mrb[0].mxu0
        %1146 = vmatprep.mubr.bf16.mxu0 0
        %1147 = vmatmul.mubr.bf16.gmra.mrb[0].mxu0 %v1058
        %v1148 = vpop.f32.mrb[0].mxu0
        %v1149 = vadd.f32 0.0, %v1148
        %v1150 = vpop.f32.mrb[0].mxu0
        %v1151 = vpop.f32.mrb[0].mxu0
        %v1152 = vadd.f32 0.0, %v1151
        %v1153 = vpop.f32.mrb[0].mxu0
        %1154 = vmatprep.mubr.bf16.mxu0 0
        %1155 = vmatmul.mubr.bf16.gmra.mrb[0].mxu0 %v1061
        %v1156 = vpop.f32.mrb[0].mxu0
        %v1157 = vadd.f32 0.0, %v1156
        %v1158 = vpop.f32.mrb[0].mxu0
        %v1159 = vpop.f32.mrb[0].mxu0
        %v1160 = vadd.f32 0.0, %v1159
        %v1161 = vpop.f32.mrb[0].mxu0
        %1162 = vmatprep.mubr.bf16.mxu0 0
        %1163 = vmatmul.mubr.bf16.gmra.mrb[0].mxu0 %v1064
        %v1164 = vpop.f32.mrb[0].mxu0
        %v1165 = vadd.f32 0.0, %v1164
        %v1166 = vpop.f32.mrb[0].mxu0
        %v1167 = vpop.f32.mrb[0].mxu0
        %v1168 = vadd.f32 0.0, %v1167
        %v1169 = vpop.f32.mrb[0].mxu0
        %1170 = vdwg.mxu0
        %v1171 = vmax.f32 %v906, %v1101
        %v1172 = vmax.f32 %v909, %v1104
        %v1173 = vmax.f32 %v914, %v1109
        %v1174 = vmax.f32 %v917, %v1112
        %v1175 = vmax.f32 %v922, %v1117
        %v1176 = vmax.f32 %v925, %v1120
        %v1177 = vmax.f32 %v930, %v1125
        %v1178 = vmax.f32 %v933, %v1128
        %v1179 = vmax.f32 %v938, %v1133
        %v1180 = vmax.f32 %v941, %v1136
        %v1181 = vmax.f32 %v946, %v1141
        %v1182 = vmax.f32 %v949, %v1144
        %v1183 = vmax.f32 %v954, %v1149
        %v1184 = vmax.f32 %v957, %v1152
        %v1185 = vmax.f32 %v962, %v1157
        %v1186 = vmax.f32 %v965, %v1160
        %v1187 = vmax.f32 %v970, %v1165
        %v1188 = vmax.f32 %v973, %v1168
        %v1189 = vmax.f32 %v763, %v1171
        %v1190 = vmax.f32 %v764, %v1172
        %v1191 = vmax.f32 %v765, %v1173
        %v1192 = vmax.f32 %v766, %v1174
        %v1193 = vmax.f32 %v767, %v1175
        %v1194 = vmax.f32 %v768, %v1176
        %v1195 = vmax.f32 %v769, %v1177
        %v1196 = vmax.f32 %v770, %v1178
        %v1197 = vmax.f32 %v771, %v1179
        %v1198 = vmax.f32 %v772, %v1180
        %v1199 = vmax.f32 %v773, %v1181
        %v1200 = vmax.f32 %v774, %v1182
        %v1201 = vmax.f32 %v775, %v1183
        %v1202 = vmax.f32 %v776, %v1184
        %v1203 = vmax.f32 %v777, %v1185
        %v1204 = vmax.f32 %v778, %v1186
        %v1205 = vmax.f32 %v779, %v1187
        %v1206 = vmax.f32 %v780, %v1188
        %v1207 = vld [vmem:[#allocation4] sm:$0x1]
        %v1209 = vlaneseq
        %v1210 = vshrl.u32 %v1209, 7
        %v1211 = vsub.s32 0, %v1210
        %v1212 = vrot.slane %v1207, %v1211
        %v1214 = vadd.f32 %v1189, %v1212
        %v1215 = vadd.f32 %v1190, %v1212
        %v1216 = vadd.f32 %v1191, %v1212
        %v1217 = vadd.f32 %v1192, %v1212
        %v1218 = vadd.f32 %v1193, %v1212
        %v1219 = vadd.f32 %v1194, %v1212
        %v1220 = vadd.f32 %v1195, %v1212
        %v1221 = vadd.f32 %v1196, %v1212
        %v1222 = vadd.f32 %v1197, %v1212
        %v1223 = vadd.f32 %v1198, %v1212
        %v1224 = vadd.f32 %v1199, %v1212
        %v1225 = vadd.f32 %v1200, %v1212
        %v1226 = vadd.f32 %v1201, %v1212
        %v1227 = vadd.f32 %v1202, %v1212
        %v1228 = vadd.f32 %v1203, %v1212
        %v1229 = vadd.f32 %v1204, %v1212
        %v1230 = vadd.f32 %v1205, %v1212
        %v1231 = vadd.f32 %v1206, %v1212
        %v1232 = vmax.f32 %v1214, 0.0
        %v1233 = vmax.f32 %v1215, 0.0
        %v1234 = vmax.f32 %v1216, 0.0
        %v1235 = vmax.f32 %v1217, 0.0
        %v1236 = vmax.f32 %v1218, 0.0
        %v1237 = vmax.f32 %v1219, 0.0
        %v1238 = vmax.f32 %v1220, 0.0
        %v1239 = vmax.f32 %v1221, 0.0
        %v1240 = vmax.f32 %v1222, 0.0
        %v1241 = vmax.f32 %v1223, 0.0
        %v1242 = vmax.f32 %v1224, 0.0
        %v1243 = vmax.f32 %v1225, 0.0
        %v1244 = vmax.f32 %v1226, 0.0
        %v1245 = vmax.f32 %v1227, 0.0
        %v1246 = vmax.f32 %v1228, 0.0
        %v1247 = vmax.f32 %v1229, 0.0
        %v1248 = vmax.f32 %v1230, 0.0
        %v1249 = vmax.f32 %v1231, 0.0
        %v1250 = vpack.c.bf16 %v1233, %v1232
        %v1251 = vpack.c.bf16 %v1235, %v1234
        %v1252 = vpack.c.bf16 %v1237, %v1236
        %v1253 = vpack.c.bf16 %v1239, %v1238
        %v1254 = vpack.c.bf16 %v1241, %v1240
        %v1255 = vpack.c.bf16 %v1243, %v1242
        %v1256 = vpack.c.bf16 %v1245, %v1244
        %v1257 = vpack.c.bf16 %v1247, %v1246
        %v1258 = vpack.c.bf16 %v1249, %v1248
        %v1268 = vunpack.c.l.b16 %v1250
        %v1269 = vunpack.c.h.b16 %v1250
        %v1270 = vunpack.c.l.b16 %v1251
        %v1271 = vunpack.c.h.b16 %v1251
        %v1272 = vunpack.c.l.b16 %v1252
        %v1273 = vunpack.c.h.b16 %v1252
        %v1274 = vunpack.c.l.b16 %v1253
        %v1275 = vunpack.c.h.b16 %v1253
        %v1276 = vunpack.c.l.b16 %v1254
        %v1277 = vunpack.c.h.b16 %v1254
        %v1278 = vunpack.c.l.b16 %v1255
        %v1279 = vunpack.c.h.b16 %v1255
        %v1280 = vunpack.c.l.b16 %v1256
        %v1281 = vunpack.c.h.b16 %v1256
        %v1282 = vunpack.c.l.b16 %v1257
        %v1283 = vunpack.c.h.b16 %v1257
        %v1284 = vunpack.c.l.b16 %v1258
        %v1285 = vunpack.c.h.b16 %v1258
        %v1286 = vpack.c.b16 %v1268, %v1268
        %v1287 = vpack.c.b16 %v1269, %v1269
        %v1288 = vpack.c.b16 %v1270, %v1270
        %v1289 = vpack.c.b16 %v1271, %v1271
        %v1290 = vpack.c.b16 %v1272, %v1272
        %v1291 = vpack.c.b16 %v1273, %v1273
        %v1292 = vpack.c.b16 %v1274, %v1274
        %v1293 = vpack.c.b16 %v1275, %v1275
        %v1294 = vpack.c.b16 %v1276, %v1276
        %v1295 = vpack.c.b16 %v1277, %v1277
        %v1296 = vpack.c.b16 %v1278, %v1278
        %v1297 = vpack.c.b16 %v1279, %v1279
        %v1298 = vpack.c.b16 %v1280, %v1280
        %v1299 = vpack.c.b16 %v1281, %v1281
        %v1300 = vpack.c.b16 %v1282, %v1282
        %v1301 = vpack.c.b16 %v1283, %v1283
        %v1302 = vpack.c.b16 %v1284, %v1284
        %v1303 = vpack.c.b16 %v1285, %v1285
        %vm1322 = vcmask 257024
        %1323 = vst.msk [vmem:[%s347] sm:$0xf] %vm1322, %v1286
        %1324 = vst.msk [vmem:[%s347 + $0x4] sm:$0xf] %vm1322, %v1287
        %1325 = vst.msk [vmem:[%s347 + $0x8] sm:$0xf] %vm1322, %v1288
        %1326 = vst.msk [vmem:[%s347 + $0xc] sm:$0xf] %vm1322, %v1289
        %1327 = vst.msk [vmem:[%s347 + $0x10] sm:$0xf] %vm1322, %v1290
        %1328 = vst.msk [vmem:[%s347 + $0x14] sm:$0xf] %vm1322, %v1291
        %1329 = vst.msk [vmem:[%s347 + $0x18] sm:$0xf] %vm1322, %v1292
        %1330 = vst.msk [vmem:[%s347 + $0x1c] sm:$0xf] %vm1322, %v1293
        %1331 = vst.msk [vmem:[%s347 + $0x20] sm:$0xf] %vm1322, %v1294
        %1332 = vst.msk [vmem:[%s347 + $0x24] sm:$0xf] %vm1322, %v1295
        %1333 = vst.msk [vmem:[%s347 + $0x28] sm:$0xf] %vm1322, %v1296
        %1334 = vst.msk [vmem:[%s347 + $0x2c] sm:$0xf] %vm1322, %v1297
        %1335 = vst.msk [vmem:[%s347 + $0x30] sm:$0xf] %vm1322, %v1298
        %1336 = vst.msk [vmem:[%s347 + $0x34] sm:$0xf] %vm1322, %v1299
        %1337 = vst.msk [vmem:[%s347 + $0x38] sm:$0xf] %vm1322, %v1300
        %1338 = vst.msk [vmem:[%s347 + $0x3c] sm:$0xf] %vm1322, %v1301
        %1339 = vst.msk [vmem:[%s347 + $0x40] sm:$0xf] %vm1322, %v1302
        %1340 = vst.msk [vmem:[%s347 + $0x44] sm:$0xf] %vm1322, %v1303
        %s1341 = smul.u32 18, %s19
        %p1342 = scmp.lt.s32.totalorder %s1341, 35
        %s1343 = scalar_select %p1342, %s1341, 35
        %s1344 = smul.addr %s1343, 4
        %s1345 = scalar_lea.vmem %s6, %s1344
        // Predicated region
        $region53: #{cnn_forward.3} parent=43 // pred_check
          %p1346 = pneg %p183
        $region54: #{cnn_forward.3} parent=43 // pred_check_branch
          %1348 = sbr.rel (%p1346) target = $region56
        $region55: #{cnn_forward.3} parent=43 // pred_region
          %s1349 = smul.u32 18, %s19
        $region56: #{cnn_forward.3} parent=43 // pred_fallthru
          _
      $region44: #{cnn_forward.3} parent=5 // pred_fallthru
        _
      %p1350 = scmp.le.s32.totalorder 2, %s14
      // Predicated region
      $region57: #{cnn_forward.3} parent=5 // pred_check
        %p1351 = pneg %p1350
      $region58: #{cnn_forward.3} parent=5 // pred_check_branch
        %1353 = sbr.rel (%p1351) target = $region60
      $region59: #{cnn_forward.3} parent=5 // pred_region
        %s1354 = ssub.s32 %s14, 2
        // Predicated region
        $region61: #{cnn_forward.3} parent=59 // pred_check
          %p1355 = pneg %p189
        $region62: #{cnn_forward.3} parent=59 // pred_check_branch
          %1357 = sbr.rel (%p1355) target = $region64
        $region63: #{cnn_forward.3} parent=59 // pred_region
          %s1358 = smul.u32 18, %s20
          %p1359 = scmp.lt.s32.totalorder %s1358, 35
          %s1360 = scalar_select %p1359, %s1358, 35
          %s1361 = smul.addr %s1360, 4
          %s1362 = scalar_lea.vmem %s6, %s1361
        $region64: #{cnn_forward.3} parent=59 // pred_fallthru
          _
      $region60: #{cnn_forward.3} parent=5 // pred_fallthru
        _
    $region6: #{cnn_forward.3} parent=1 // loop_footer
      %s18 = sadd.s32 1, %s14
    $region7: #{cnn_forward.3} parent=1 // loop_footer_branch
      %13 = sbr.rel target = $region3
    $region8: #{cnn_forward.3} parent=1 // loop_exit
      _
    %1363 = vsyncpa [#allocation3], 1
    %s1364 = scalar_lea.sflag [#allocation3], 1
    %1365 = vsyncpa %s1364, 1
    %1366 = vsyncpa [#allocation5], 1

// kernel: cnn_forward.4
$region0: #{cnn_forward.4}
  #allocation0 [shape = 'u32[]', space=smem, size = 0x4, offset = 0x4, fixed_abs, tag = 'smem constant byte address 0x4 - core index']
  #allocation1 [shape = 'u32[144,128]{1,0:T(1,128)}', space=vmem, size = 0x12000, scoped, tag = 'internal scratch']
  %s0 = inlined_call_operand.vmem [shape: bf16[32,800], index: 0, kind: input, shape index: {}]
  %s1 = inlined_call_operand.vmem [shape: bf16[32,800], index: 1, kind: input, shape index: {}]
  %s2 = inlined_call_operand.vmem [shape: bf16[32,800], index: 2, kind: input, shape index: {}]
  %s3 = inlined_call_operand.vmem [shape: bf16[32,800], index: 3, kind: input, shape index: {}]
  %s4 = inlined_call_operand.vmem [shape: bf16[800,64], index: 4, kind: input, shape index: {}]
  %s5 = inlined_call_operand.vmem [shape: f32[1,64], index: 5, kind: input, shape index: {}]
  %s6 = inlined_call_operand.vmem [shape: bf16[32,64], index: 6, kind: output, shape index: {}]
  %s7 = sld [smem:[#allocation0]]
  $region57: #{cnn_forward.4} parent=0
    _
  %s9 = ssub.s32 1, %s7
  %s10 = scalar_select 0, %s9, %s7
  loop: start=0, step=1, limit=4
  $region2: #{cnn_forward.4} parent=0 // loop_pre_header
    _
  $region3: #{cnn_forward.4} parent=0 // loop_header
    %s12 = sphi 0, %s16
    %p13 = scmp.ge.s32.totalorder %s12, 4
    %s22 = sphi 0, %s24
    %s25 = sphi 0, %s22
    %s26 = sphi 0, %s25
    %s42 = sphi 0, %s26
    %s48 = sphi 0, %s50
    %s51 = sphi 0, %s48
    %s52 = sphi 0, %s51
    %s68 = sphi 0, %s52
    %s74 = sphi 0, %s76
    %s77 = sphi 0, %s74
    %s78 = sphi 0, %s77
    %s94 = sphi 0, %s78
    %s100 = sphi 0, %s102
    %s103 = sphi 0, %s100
    %s104 = sphi 0, %s103
    %s120 = sphi 0, %s104
    %s124 = sphi 0, %s124
    %s126 = sphi 0, %s124
    %s127 = sphi 0, %s126
    %s141 = sphi 0, %s127
    %s145 = sphi 0, %s145
    %s147 = sphi 0, %s145
    %s148 = sphi 0, %s147
    %s162 = sphi 0, %s148
    %s168 = sphi 0, %s170
    %s171 = sphi 0, %s168
    %s172 = sphi 0, %s171
    %s188 = sphi 0, %s172
  $region4: #{cnn_forward.4} parent=0 // loop_header_branch
    %15 = sbr.rel (%p13) target = $region8
  $region5: #{cnn_forward.4} parent=0 // loop_body
    %s17 = ssub.s32 %s12, 1
    %s18 = ssub.s32 %s12, 2
    %s19 = sadd.s32 %s12, 1
    %s20 = ssub.s32 %s12, %s19
    %p21 = scmp.eq.s32.totalorder %s20, 0
    %s23 = sadd.s32 %s22, 1
    %s24 = scalar_select %p21, %s22, %s23
    %p27 = pneg %p21
    %p28 = scmp.eq.s32.totalorder %s12, 1
    %p29 = por %p27, %p28
    %p30 = scmp.ne.s32.totalorder %s22, %s25
    %p31 = scmp.eq.s32.totalorder %s12, 0
    %p32 = por %p30, %p31
    %p33 = scmp.ne.s32.totalorder %s22, %s25
    %p34 = scmp.eq.s32.totalorder %s17, 1
    %p35 = por %p33, %p34
    %p36 = scmp.ne.s32.totalorder %s25, %s26
    %p37 = scmp.eq.s32.totalorder %s17, 0
    %p38 = por %p36, %p37
    %p39 = scmp.ne.s32.totalorder %s25, %s26
    %p40 = scmp.eq.s32.totalorder %s18, 1
    %p41 = por %p39, %p40
    %p43 = scmp.ne.s32.totalorder %s26, %s42
    %p44 = scmp.eq.s32.totalorder %s18, 0
    %p45 = por %p43, %p44
    %s46 = ssub.s32 %s12, %s19
    %p47 = scmp.eq.s32.totalorder %s46, 0
    %s49 = sadd.s32 %s48, 1
    %s50 = scalar_select %p47, %s48, %s49
    %p53 = pneg %p47
    %p54 = scmp.eq.s32.totalorder %s12, 1
    %p55 = por %p53, %p54
    %p56 = scmp.ne.s32.totalorder %s48, %s51
    %p57 = scmp.eq.s32.totalorder %s12, 0
    %p58 = por %p56, %p57
    %p59 = scmp.ne.s32.totalorder %s48, %s51
    %p60 = scmp.eq.s32.totalorder %s17, 1
    %p61 = por %p59, %p60
    %p62 = scmp.ne.s32.totalorder %s51, %s52
    %p63 = scmp.eq.s32.totalorder %s17, 0
    %p64 = por %p62, %p63
    %p65 = scmp.ne.s32.totalorder %s51, %s52
    %p66 = scmp.eq.s32.totalorder %s18, 1
    %p67 = por %p65, %p66
    %p69 = scmp.ne.s32.totalorder %s52, %s68
    %p70 = scmp.eq.s32.totalorder %s18, 0
    %p71 = por %p69, %p70
    %s72 = ssub.s32 %s12, %s19
    %p73 = scmp.eq.s32.totalorder %s72, 0
    %s75 = sadd.s32 %s74, 1
    %s76 = scalar_select %p73, %s74, %s75
    %p79 = pneg %p73
    %p80 = scmp.eq.s32.totalorder %s12, 1
    %p81 = por %p79, %p80
    %p82 = scmp.ne.s32.totalorder %s74, %s77
    %p83 = scmp.eq.s32.totalorder %s12, 0
    %p84 = por %p82, %p83
    %p85 = scmp.ne.s32.totalorder %s74, %s77
    %p86 = scmp.eq.s32.totalorder %s17, 1
    %p87 = por %p85, %p86
    %p88 = scmp.ne.s32.totalorder %s77, %s78
    %p89 = scmp.eq.s32.totalorder %s17, 0
    %p90 = por %p88, %p89
    %p91 = scmp.ne.s32.totalorder %s77, %s78
    %p92 = scmp.eq.s32.totalorder %s18, 1
    %p93 = por %p91, %p92
    %p95 = scmp.ne.s32.totalorder %s78, %s94
    %p96 = scmp.eq.s32.totalorder %s18, 0
    %p97 = por %p95, %p96
    %s98 = ssub.s32 %s12, %s19
    %p99 = scmp.eq.s32.totalorder %s98, 0
    %s101 = sadd.s32 %s100, 1
    %s102 = scalar_select %p99, %s100, %s101
    %p105 = pneg %p99
    %p106 = scmp.eq.s32.totalorder %s12, 1
    %p107 = por %p105, %p106
    %p108 = scmp.ne.s32.totalorder %s100, %s103
    %p109 = scmp.eq.s32.totalorder %s12, 0
    %p110 = por %p108, %p109
    %p111 = scmp.ne.s32.totalorder %s100, %s103
    %p112 = scmp.eq.s32.totalorder %s17, 1
    %p113 = por %p111, %p112
    %p114 = scmp.ne.s32.totalorder %s103, %s104
    %p115 = scmp.eq.s32.totalorder %s17, 0
    %p116 = por %p114, %p115
    %p117 = scmp.ne.s32.totalorder %s103, %s104
    %p118 = scmp.eq.s32.totalorder %s18, 1
    %p119 = por %p117, %p118
    %p121 = scmp.ne.s32.totalorder %s104, %s120
    %p122 = scmp.eq.s32.totalorder %s18, 0
    %p123 = por %p121, %p122
    %s125 = sadd.s32 %s124, 1
    %p128 = scmp.eq.s32.totalorder %s12, 1
    %p129 = scmp.ne.s32.totalorder %s124, %s126
    %p130 = scmp.eq.s32.totalorder %s12, 0
    %p131 = por %p129, %p130
    %p132 = scmp.ne.s32.totalorder %s124, %s126
    %p133 = scmp.eq.s32.totalorder %s17, 1
    %p134 = por %p132, %p133
    %p135 = scmp.ne.s32.totalorder %s126, %s127
    %p136 = scmp.eq.s32.totalorder %s17, 0
    %p137 = por %p135, %p136
    %p138 = scmp.ne.s32.totalorder %s126, %s127
    %p139 = scmp.eq.s32.totalorder %s18, 1
    %p140 = por %p138, %p139
    %p142 = scmp.ne.s32.totalorder %s127, %s141
    %p143 = scmp.eq.s32.totalorder %s18, 0
    %p144 = por %p142, %p143
    %s146 = sadd.s32 %s145, 1
    %p149 = scmp.eq.s32.totalorder %s12, 1
    %p150 = scmp.ne.s32.totalorder %s145, %s147
    %p151 = scmp.eq.s32.totalorder %s12, 0
    %p152 = por %p150, %p151
    %p153 = scmp.ne.s32.totalorder %s145, %s147
    %p154 = scmp.eq.s32.totalorder %s17, 1
    %p155 = por %p153, %p154
    %p156 = scmp.ne.s32.totalorder %s147, %s148
    %p157 = scmp.eq.s32.totalorder %s17, 0
    %p158 = por %p156, %p157
    %p159 = scmp.ne.s32.totalorder %s147, %s148
    %p160 = scmp.eq.s32.totalorder %s18, 1
    %p161 = por %p159, %p160
    %p163 = scmp.ne.s32.totalorder %s148, %s162
    %p164 = scmp.eq.s32.totalorder %s18, 0
    %p165 = por %p163, %p164
    %s166 = ssub.s32 %s12, %s19
    %p167 = scmp.eq.s32.totalorder %s166, 0
    %s169 = sadd.s32 %s168, 1
    %s170 = scalar_select %p167, %s168, %s169
    %p173 = pneg %p167
    %p174 = scmp.eq.s32.totalorder %s12, 1
    %p175 = por %p173, %p174
    %p176 = scmp.ne.s32.totalorder %s168, %s171
    %p177 = scmp.eq.s32.totalorder %s12, 0
    %p178 = por %p176, %p177
    %p179 = scmp.ne.s32.totalorder %s168, %s171
    %p180 = scmp.eq.s32.totalorder %s17, 1
    %p181 = por %p179, %p180
    %p182 = scmp.ne.s32.totalorder %s171, %s172
    %p183 = scmp.eq.s32.totalorder %s17, 0
    %p184 = por %p182, %p183
    %p185 = scmp.ne.s32.totalorder %s171, %s172
    %p186 = scmp.eq.s32.totalorder %s18, 1
    %p187 = por %p185, %p186
    %p189 = scmp.ne.s32.totalorder %s172, %s188
    %p190 = scmp.eq.s32.totalorder %s18, 0
    %p191 = por %p189, %p190
    %p192 = scmp.le.s32.totalorder 1, %s12
    %p193 = scmp.lt.s32.totalorder %s12, 3
    %p194 = pnand %p192, %p193
    %p195 = pneg %p194
    // Predicated region
    $region9: #{cnn_forward.4} parent=5 // pred_check
      _
    $region10: #{cnn_forward.4} parent=5 // pred_check_branch
      %197 = sbr.rel (%p194) target = $region12
    $region11: #{cnn_forward.4} parent=5 // pred_region
      %s198 = ssub.s32 %s12, 1
      // Predicated region
      $region13: #{cnn_forward.4} parent=11 // pred_check
        %p199 = pneg %p137
      $region14: #{cnn_forward.4} parent=11 // pred_check_branch
        %201 = sbr.rel (%p199) target = $region16
      $region15: #{cnn_forward.4} parent=11 // pred_region
        _
      $region16: #{cnn_forward.4} parent=11 // pred_fallthru
        _
      // Predicated region
      $region17: #{cnn_forward.4} parent=11 // pred_check
        %p202 = pneg %p158
      $region18: #{cnn_forward.4} parent=11 // pred_check_branch
        %204 = sbr.rel (%p202) target = $region20
      $region19: #{cnn_forward.4} parent=11 // pred_region
        _
      $region20: #{cnn_forward.4} parent=11 // pred_fallthru
        _
    $region12: #{cnn_forward.4} parent=5 // pred_fallthru
      _
    %p205 = scmp.lt.s32.totalorder %s12, 2
    // Predicated region
    $region21: #{cnn_forward.4} parent=5 // pred_check
      %p206 = pneg %p205
    $region22: #{cnn_forward.4} parent=5 // pred_check_branch
      %208 = sbr.rel (%p206) target = $region24
    $region23: #{cnn_forward.4} parent=5 // pred_region
      // Predicated region
      $region25: #{cnn_forward.4} parent=23 // pred_check
        %p209 = pneg %p32
      $region26: #{cnn_forward.4} parent=23 // pred_check_branch
        %211 = sbr.rel (%p209) target = $region28
      $region27: #{cnn_forward.4} parent=23 // pred_region
        %s212 = smul.u32 2, %s12
        %p213 = scmp.lt.s32.totalorder %s212, 3
        %s214 = scalar_select %p213, %s212, 3
        %s215 = smul.addr %s214, 7
        %s216 = smul.addr %s215, 4
        %s217 = scalar_lea.vmem %s0, %s216
        %s218 = smul.u32 2, %s12
      $region28: #{cnn_forward.4} parent=23 // pred_fallthru
        _
      // Predicated region
      $region29: #{cnn_forward.4} parent=23 // pred_check
        %p219 = pneg %p58
      $region30: #{cnn_forward.4} parent=23 // pred_check_branch
        %221 = sbr.rel (%p219) target = $region32
      $region31: #{cnn_forward.4} parent=23 // pred_region
        %s222 = smul.u32 2, %s12
        %p223 = scmp.lt.s32.totalorder %s222, 3
        %s224 = scalar_select %p223, %s222, 3
        %s225 = smul.addr %s224, 7
        %s226 = smul.addr %s225, 4
        %s227 = scalar_lea.vmem %s1, %s226
        %s228 = smul.u32 2, %s12
      $region32: #{cnn_forward.4} parent=23 // pred_fallthru
        _
      // Predicated region
      $region33: #{cnn_forward.4} parent=23 // pred_check
        %p229 = pneg %p84
      $region34: #{cnn_forward.4} parent=23 // pred_check_branch
        %231 = sbr.rel (%p229) target = $region36
      $region35: #{cnn_forward.4} parent=23 // pred_region
        %s232 = smul.u32 2, %s12
        %p233 = scmp.lt.s32.totalorder %s232, 3
        %s234 = scalar_select %p233, %s232, 3
        %s235 = smul.addr %s234, 7
        %s236 = smul.addr %s235, 4
        %s237 = scalar_lea.vmem %s2, %s236
        %s238 = smul.u32 2, %s12
      $region36: #{cnn_forward.4} parent=23 // pred_fallthru
        _
      // Predicated region
      $region37: #{cnn_forward.4} parent=23 // pred_check
        %p239 = pneg %p110
      $region38: #{cnn_forward.4} parent=23 // pred_check_branch
        %241 = sbr.rel (%p239) target = $region40
      $region39: #{cnn_forward.4} parent=23 // pred_region
        %s242 = smul.u32 2, %s12
        %p243 = scmp.lt.s32.totalorder %s242, 3
        %s244 = scalar_select %p243, %s242, 3
        %s245 = smul.addr %s244, 7
        %s246 = smul.addr %s245, 4
        %s247 = scalar_lea.vmem %s3, %s246
        %s248 = smul.u32 2, %s12
      $region40: #{cnn_forward.4} parent=23 // pred_fallthru
        _
    $region24: #{cnn_forward.4} parent=5 // pred_fallthru
      _
    %p249 = scmp.le.s32.totalorder 1, %s12
    %p250 = scmp.lt.s32.totalorder %s12, 3
    %p251 = pnand %p249, %p250
    %p252 = pneg %p251
    // Predicated region
    $region41: #{cnn_forward.4} parent=5 // pred_check
      _
    $region42: #{cnn_forward.4} parent=5 // pred_check_branch
      %254 = sbr.rel (%p251) target = $region44
    $region43: #{cnn_forward.4} parent=5 // pred_region
      %s255 = ssub.s32 %s12, 1
      %s256 = smul.u32 2, %s17
      %p257 = scmp.lt.s32.totalorder %s256, 3
      %s258 = scalar_select %p257, %s256, 3
      %s259 = smul.addr %s258, 7
      %s260 = smul.addr %s259, 4
      %s261 = scalar_lea.vmem %s0, %s260
      %p262 = pneg %p38
      %p263 = pneg %p35
      %s264 = smul.u32 2, %s17
      %p265 = scmp.lt.s32.totalorder %s264, 3
      %s266 = scalar_select %p265, %s264, 3
      %s267 = smul.addr %s266, 7
      %s268 = smul.addr %s267, 4
      %s269 = scalar_lea.vmem %s1, %s268
      %p270 = pneg %p64
      %p271 = pneg %p61
      %s272 = smul.u32 2, %s17
      %p273 = scmp.lt.s32.totalorder %s272, 3
      %s274 = scalar_select %p273, %s272, 3
      %s275 = smul.addr %s274, 7
      %s276 = smul.addr %s275, 4
      %s277 = scalar_lea.vmem %s2, %s276
      %p278 = pneg %p90
      %p279 = pneg %p87
      %s280 = smul.u32 2, %s17
      %p281 = scmp.lt.s32.totalorder %s280, 3
      %s282 = scalar_select %p281, %s280, 3
      %s283 = smul.addr %s282, 7
      %s284 = smul.addr %s283, 4
      %s285 = scalar_lea.vmem %s3, %s284
      %p286 = pneg %p116
      %p287 = pneg %p113
      %p288 = pneg %p137
      %p289 = pneg %p134
      %p290 = pneg %p158
      %p291 = pneg %p155
      %p292 = pneg %p184
      %p293 = pneg %p181
      %s294 = smul.u32 2, %s17
      %p295 = scmp.lt.s32.totalorder %s294, 3
      %s296 = scalar_select %p295, %s294, 3
      %s297 = smul.addr %s296, 4
      %s298 = scalar_lea.vmem %s6, %s297
      %s299 = smul.u32 2, %s17
      %p300 = scmp.lt.s32.totalorder %s299, 3
      %s301 = scalar_select %p300, %s299, 3
      %s302 = smul.addr %s301, 7
      %s303 = smul.addr %s302, 4
      %s304 = scalar_lea.vmem %s0, %s303
      %s305 = smul.u32 2, %s17
      %s306 = smul.u32 2, %s17
      %p307 = scmp.lt.s32.totalorder %s306, 3
      %s308 = scalar_select %p307, %s306, 3
      %s309 = smul.addr %s308, 7
      %s310 = smul.addr %s309, 4
      %s311 = scalar_lea.vmem %s1, %s310
      %s312 = smul.u32 2, %s17
      %s313 = smul.u32 2, %s17
      %p314 = scmp.lt.s32.totalorder %s313, 3
      %s315 = scalar_select %p314, %s313, 3
      %s316 = smul.addr %s315, 7
      %s317 = smul.addr %s316, 4
      %s318 = scalar_lea.vmem %s2, %s317
      %s319 = smul.u32 2, %s17
      %s320 = smul.u32 2, %s17
      %p321 = scmp.lt.s32.totalorder %s320, 3
      %s322 = scalar_select %p321, %s320, 3
      %s323 = smul.addr %s322, 7
      %s324 = smul.addr %s323, 4
      %s325 = scalar_lea.vmem %s3, %s324
      %s326 = smul.u32 2, %s17
      %s327 = smul.u32 2, %s17
      %p328 = scmp.lt.s32.totalorder %s327, 3
      %s329 = scalar_select %p328, %s327, 3
      %s330 = smul.addr %s329, 4
      %s331 = scalar_lea.vmem %s6, %s330
      %s332 = smul.u32 2, %s17
      %v334 = vld [vmem:[%s4] sm:$0xf]
      %v335 = vld [vmem:[%s4 + $0x4] sm:$0xf]
      %v336 = vld [vmem:[%s4 + $0x8] sm:$0xf]
      %v337 = vld [vmem:[%s4 + $0xc] sm:$0xf]
      %v338 = vld [vmem:[%s4 + $0x10] sm:$0xf]
      %v339 = vld [vmem:[%s4 + $0x14] sm:$0xf]
      %v340 = vld [vmem:[%s4 + $0x18] sm:$0xf]
      %v341 = vld [vmem:[%s4 + $0x1c] sm:$0xf]
      %v342 = vld [vmem:[%s4 + $0x20] sm:$0xf]
      %v343 = vld [vmem:[%s4 + $0x24] sm:$0xf]
      %v344 = vld [vmem:[%s4 + $0x28] sm:$0xf]
      %v345 = vld [vmem:[%s4 + $0x2c] sm:$0xf]
      %v346 = vld [vmem:[%s4 + $0x30] sm:$0xf]
      %v347 = vld [vmem:[%s4 + $0x34] sm:$0xf]
      %v348 = vld [vmem:[%s4 + $0x38] sm:$0xf]
      %v349 = vld [vmem:[%s4 + $0x3c] sm:$0xf]
      %v350 = vld [vmem:[%s4 + $0x40] sm:$0xf]
      %v351 = vld [vmem:[%s4 + $0x44] sm:$0xf]
      %v352 = vld [vmem:[%s4 + $0x48] sm:$0xf]
      %v353 = vld [vmem:[%s4 + $0x4c] sm:$0xf]
      %v354 = vld [vmem:[%s4 + $0x50] sm:$0xf]
      %v355 = vld [vmem:[%s4 + $0x54] sm:$0xf]
      %v356 = vld [vmem:[%s4 + $0x58] sm:$0xf]
      %v357 = vld [vmem:[%s4 + $0x5c] sm:$0xf]
      %v358 = vld [vmem:[%s4 + $0x60] sm:$0xf]
      %v359 = vld [vmem:[%s4 + $0x64] sm:$0xf]
      %v360 = vld [vmem:[%s4 + $0x68] sm:$0xf]
      %v361 = vld [vmem:[%s4 + $0x6c] sm:$0xf]
      %v362 = vld [vmem:[%s4 + $0x70] sm:$0xf]
      %v363 = vld [vmem:[%s4 + $0x74] sm:$0xf]
      %v364 = vld [vmem:[%s4 + $0x78] sm:$0xf]
      %v365 = vld [vmem:[%s4 + $0x7c] sm:$0xf]
      %v366 = vld [vmem:[%s4 + $0x80] sm:$0xf]
      %v367 = vld [vmem:[%s4 + $0x84] sm:$0xf]
      %v368 = vld [vmem:[%s4 + $0x88] sm:$0xf]
      %v369 = vld [vmem:[%s4 + $0x8c] sm:$0xf]
      %v370 = vld [vmem:[%s4 + $0x90] sm:$0xf]
      %v371 = vld [vmem:[%s4 + $0x94] sm:$0xf]
      %v372 = vld [vmem:[%s4 + $0x98] sm:$0xf]
      %v373 = vld [vmem:[%s4 + $0x9c] sm:$0xf]
      %v374 = vld [vmem:[%s4 + $0xa0] sm:$0xf]
      %v375 = vld [vmem:[%s4 + $0xa4] sm:$0xf]
      %v376 = vld [vmem:[%s4 + $0xa8] sm:$0xf]
      %v377 = vld [vmem:[%s4 + $0xac] sm:$0xf]
      %v378 = vld [vmem:[%s4 + $0xb0] sm:$0xf]
      %v379 = vld [vmem:[%s4 + $0xb4] sm:$0xf]
      %v380 = vld [vmem:[%s4 + $0xb8] sm:$0xf]
      %v381 = vld [vmem:[%s4 + $0xbc] sm:$0xf]
      %v382 = vld [vmem:[%s4 + $0xc0] sm:$0xf]
      %v383 = vld [vmem:[%s4 + $0xc4] sm:$0xf]
      %v384 = vld [vmem:[%s4 + $0xc8] sm:$0xf]
      %v385 = vld [vmem:[%s4 + $0xcc] sm:$0xf]
      %v386 = vld [vmem:[%s4 + $0xd0] sm:$0xf]
      %v387 = vld [vmem:[%s4 + $0xd4] sm:$0xf]
      %v388 = vld [vmem:[%s4 + $0xd8] sm:$0xf]
      %v389 = vld [vmem:[%s4 + $0xdc] sm:$0xf]
      %v390 = vld [vmem:[%s4 + $0xe0] sm:$0xf]
      %v391 = vld [vmem:[%s4 + $0xe4] sm:$0xf]
      %v392 = vld [vmem:[%s4 + $0xe8] sm:$0xf]
      %v393 = vld [vmem:[%s4 + $0xec] sm:$0xf]
      %v394 = vld [vmem:[%s4 + $0xf0] sm:$0xf]
      %v395 = vld [vmem:[%s4 + $0xf4] sm:$0xf]
      %v396 = vld [vmem:[%s4 + $0xf8] sm:$0xf]
      %v397 = vld [vmem:[%s4 + $0xfc] sm:$0xf]
      %v398 = vld [vmem:[%s4 + $0x100] sm:$0xf]
      %v399 = vld [vmem:[%s4 + $0x104] sm:$0xf]
      %v400 = vld [vmem:[%s4 + $0x108] sm:$0xf]
      %v401 = vld [vmem:[%s4 + $0x10c] sm:$0xf]
      %v402 = vld [vmem:[%s4 + $0x110] sm:$0xf]
      %v403 = vld [vmem:[%s4 + $0x114] sm:$0xf]
      %v404 = vld [vmem:[%s4 + $0x118] sm:$0xf]
      %v405 = vld [vmem:[%s4 + $0x11c] sm:$0xf]
      %v406 = vld [vmem:[%s4 + $0x120] sm:$0xf]
      %v407 = vld [vmem:[%s4 + $0x124] sm:$0xf]
      %v408 = vld [vmem:[%s4 + $0x128] sm:$0xf]
      %v409 = vld [vmem:[%s4 + $0x12c] sm:$0xf]
      %v410 = vld [vmem:[%s4 + $0x130] sm:$0xf]
      %v411 = vld [vmem:[%s4 + $0x134] sm:$0xf]
      %v412 = vld [vmem:[%s4 + $0x138] sm:$0xf]
      %v413 = vld [vmem:[%s4 + $0x13c] sm:$0xf]
      %v414 = vld [vmem:[%s4 + $0x140] sm:$0xf]
      %v415 = vld [vmem:[%s4 + $0x144] sm:$0xf]
      %v416 = vld [vmem:[%s4 + $0x148] sm:$0xf]
      %v417 = vld [vmem:[%s4 + $0x14c] sm:$0xf]
      %v418 = vld [vmem:[%s4 + $0x150] sm:$0xf]
      %v419 = vld [vmem:[%s4 + $0x154] sm:$0xf]
      %v420 = vld [vmem:[%s4 + $0x158] sm:$0xf]
      %v421 = vld [vmem:[%s4 + $0x15c] sm:$0xf]
      %v422 = vld [vmem:[%s4 + $0x160] sm:$0xf]
      %v423 = vld [vmem:[%s4 + $0x164] sm:$0xf]
      %v424 = vld [vmem:[%s4 + $0x168] sm:$0xf]
      %v425 = vld [vmem:[%s4 + $0x16c] sm:$0xf]
      %v426 = vld [vmem:[%s4 + $0x170] sm:$0xf]
      %v427 = vld [vmem:[%s4 + $0x174] sm:$0xf]
      %v428 = vld [vmem:[%s4 + $0x178] sm:$0xf]
      %v429 = vld [vmem:[%s4 + $0x17c] sm:$0xf]
      %v430 = vld [vmem:[%s4 + $0x180] sm:$0xf]
      %v431 = vld [vmem:[%s4 + $0x184] sm:$0xf]
      %v432 = vld [vmem:[%s4 + $0x188] sm:$0xf]
      %v433 = vld [vmem:[%s4 + $0x18c] sm:$0xf]
      %v434 = vld [vmem:[%s304] sm:$0xff]
      %v435 = vld [vmem:[%s304 + $0x8] sm:$0xff]
      %v436 = vld [vmem:[%s304 + $0x10] sm:$0xff]
      %v437 = vld [vmem:[%s304 + $0x18] sm:$0xf]
      %v438 = vld [vmem:[%s304 + $0x1c] sm:$0xff]
      %v439 = vld [vmem:[%s304 + $0x24] sm:$0xff]
      %v440 = vld [vmem:[%s304 + $0x2c] sm:$0xff]
      %v441 = vld [vmem:[%s304 + $0x34] sm:$0xf]
      %v450 = vunpack.c.l.b16 %v434
      %v451 = vunpack.c.h.b16 %v434
      %v452 = vunpack.c.l.b16 %v435
      %v453 = vunpack.c.h.b16 %v435
      %v454 = vunpack.c.l.b16 %v436
      %v455 = vunpack.c.h.b16 %v436
      %v456 = vunpack.c.l.b16 %v437
      %v457 = vunpack.c.l.b16 %v438
      %v458 = vunpack.c.h.b16 %v438
      %v459 = vunpack.c.l.b16 %v439
      %v460 = vunpack.c.h.b16 %v439
      %v461 = vunpack.c.l.b16 %v440
      %v462 = vunpack.c.h.b16 %v440
      %v463 = vunpack.c.l.b16 %v441
      %v464 = vpack.c.b16 %v457, %v450
      %v465 = vpack.c.b16 %v458, %v451
      %v466 = vpack.c.b16 %v459, %v452
      %v467 = vpack.c.b16 %v460, %v453
      %v468 = vpack.c.b16 %v461, %v454
      %v469 = vpack.c.b16 %v462, %v455
      %v470 = vpack.c.b16 %v463, %v456
      %v577 = vunpack.c.l.b16 %v334
      %v578 = vunpack.c.l.b16 %v335
      %v579 = vunpack.c.l.b16 %v336
      %v580 = vunpack.c.l.b16 %v337
      %v581 = vunpack.c.l.b16 %v338
      %v582 = vunpack.c.l.b16 %v339
      %v583 = vunpack.c.l.b16 %v340
      %v584 = vunpack.c.l.b16 %v341
      %v585 = vunpack.c.l.b16 %v342
      %v586 = vunpack.c.l.b16 %v343
      %v587 = vunpack.c.l.b16 %v344
      %v588 = vunpack.c.l.b16 %v345
      %v589 = vunpack.c.l.b16 %v346
      %v590 = vunpack.c.l.b16 %v347
      %v591 = vunpack.c.l.b16 %v348
      %v592 = vunpack.c.l.b16 %v349
      %v593 = vunpack.c.l.b16 %v350
      %v594 = vunpack.c.l.b16 %v351
      %v595 = vunpack.c.l.b16 %v352
      %v596 = vunpack.c.l.b16 %v353
      %v597 = vunpack.c.l.b16 %v354
      %v598 = vunpack.c.l.b16 %v355
      %v599 = vunpack.c.l.b16 %v356
      %v600 = vunpack.c.l.b16 %v357
      %v601 = vunpack.c.l.b16 %v358
      %v602 = vunpack.c.l.b16 %v359
      %v603 = vunpack.c.l.b16 %v360
      %v604 = vunpack.c.l.b16 %v361
      %v605 = vunpack.c.l.b16 %v362
      %v606 = vunpack.c.l.b16 %v363
      %v607 = vunpack.c.l.b16 %v364
      %v608 = vunpack.c.l.b16 %v365
      %v609 = vunpack.c.l.b16 %v366
      %v610 = vunpack.c.l.b16 %v367
      %v611 = vunpack.c.l.b16 %v368
      %v612 = vunpack.c.l.b16 %v369
      %v613 = vunpack.c.l.b16 %v370
      %v614 = vunpack.c.l.b16 %v371
      %v615 = vunpack.c.l.b16 %v372
      %v616 = vunpack.c.l.b16 %v373
      %v617 = vunpack.c.l.b16 %v374
      %v618 = vunpack.c.l.b16 %v375
      %v619 = vunpack.c.l.b16 %v376
      %v620 = vunpack.c.l.b16 %v377
      %v621 = vunpack.c.l.b16 %v378
      %v622 = vunpack.c.l.b16 %v379
      %v623 = vunpack.c.l.b16 %v380
      %v624 = vunpack.c.l.b16 %v381
      %v625 = vunpack.c.l.b16 %v382
      %v626 = vunpack.c.l.b16 %v383
      %v627 = vunpack.c.l.b16 %v384
      %v628 = vunpack.c.l.b16 %v385
      %v629 = vunpack.c.l.b16 %v386
      %v630 = vunpack.c.l.b16 %v387
      %v631 = vunpack.c.l.b16 %v388
      %v632 = vunpack.c.l.b16 %v389
      %v633 = vunpack.c.l.b16 %v390
      %v634 = vunpack.c.l.b16 %v391
      %v635 = vunpack.c.l.b16 %v392
      %v636 = vunpack.c.l.b16 %v393
      %v637 = vunpack.c.l.b16 %v394
      %v638 = vunpack.c.l.b16 %v395
      %v639 = vunpack.c.l.b16 %v396
      %v640 = vunpack.c.l.b16 %v397
      %v641 = vunpack.c.l.b16 %v398
      %v642 = vunpack.c.l.b16 %v399
      %v643 = vunpack.c.l.b16 %v400
      %v644 = vunpack.c.l.b16 %v401
      %v645 = vunpack.c.l.b16 %v402
      %v646 = vunpack.c.l.b16 %v403
      %v647 = vunpack.c.l.b16 %v404
      %v648 = vunpack.c.l.b16 %v405
      %v649 = vunpack.c.l.b16 %v406
      %v650 = vunpack.c.l.b16 %v407
      %v651 = vunpack.c.l.b16 %v408
      %v652 = vunpack.c.l.b16 %v409
      %v653 = vunpack.c.l.b16 %v410
      %v654 = vunpack.c.l.b16 %v411
      %v655 = vunpack.c.l.b16 %v412
      %v656 = vunpack.c.l.b16 %v413
      %v657 = vunpack.c.l.b16 %v414
      %v658 = vunpack.c.l.b16 %v415
      %v659 = vunpack.c.l.b16 %v416
      %v660 = vunpack.c.l.b16 %v417
      %v661 = vunpack.c.l.b16 %v418
      %v662 = vunpack.c.l.b16 %v419
      %v663 = vunpack.c.l.b16 %v420
      %v664 = vunpack.c.l.b16 %v421
      %v665 = vunpack.c.l.b16 %v422
      %v666 = vunpack.c.l.b16 %v423
      %v667 = vunpack.c.l.b16 %v424
      %v668 = vunpack.c.l.b16 %v425
      %v669 = vunpack.c.l.b16 %v426
      %v670 = vunpack.c.l.b16 %v427
      %v671 = vunpack.c.l.b16 %v428
      %v672 = vunpack.c.l.b16 %v429
      %v673 = vunpack.c.l.b16 %v430
      %v674 = vunpack.c.l.b16 %v431
      %v675 = vunpack.c.l.b16 %v432
      %v676 = vunpack.c.l.b16 %v433
      %v677 = vpack.c.b16 %v578, %v577
      %v678 = vpack.c.b16 %v580, %v579
      %v679 = vpack.c.b16 %v582, %v581
      %v680 = vpack.c.b16 %v584, %v583
      %v681 = vpack.c.b16 %v586, %v585
      %v682 = vpack.c.b16 %v588, %v587
      %v683 = vpack.c.b16 %v590, %v589
      %v684 = vpack.c.b16 %v592, %v591
      %v685 = vpack.c.b16 %v594, %v593
      %v686 = vpack.c.b16 %v596, %v595
      %v687 = vpack.c.b16 %v598, %v597
      %v688 = vpack.c.b16 %v600, %v599
      %v689 = vpack.c.b16 %v602, %v601
      %v690 = vpack.c.b16 %v604, %v603
      %v691 = vpack.c.b16 %v606, %v605
      %v692 = vpack.c.b16 %v608, %v607
      %v693 = vpack.c.b16 %v610, %v609
      %v694 = vpack.c.b16 %v612, %v611
      %v695 = vpack.c.b16 %v614, %v613
      %v696 = vpack.c.b16 %v616, %v615
      %v697 = vpack.c.b16 %v618, %v617
      %v698 = vpack.c.b16 %v620, %v619
      %v699 = vpack.c.b16 %v622, %v621
      %v700 = vpack.c.b16 %v624, %v623
      %v701 = vpack.c.b16 %v626, %v625
      %v702 = vpack.c.b16 %v628, %v627
      %v703 = vpack.c.b16 %v630, %v629
      %v704 = vpack.c.b16 %v632, %v631
      %v705 = vpack.c.b16 %v634, %v633
      %v706 = vpack.c.b16 %v636, %v635
      %v707 = vpack.c.b16 %v638, %v637
      %v708 = vpack.c.b16 %v640, %v639
      %v709 = vpack.c.b16 %v642, %v641
      %v710 = vpack.c.b16 %v644, %v643
      %v711 = vpack.c.b16 %v646, %v645
      %v712 = vpack.c.b16 %v648, %v647
      %v713 = vpack.c.b16 %v650, %v649
      %v714 = vpack.c.b16 %v652, %v651
      %v715 = vpack.c.b16 %v654, %v653
      %v716 = vpack.c.b16 %v656, %v655
      %v717 = vpack.c.b16 %v658, %v657
      %v718 = vpack.c.b16 %v660, %v659
      %v719 = vpack.c.b16 %v662, %v661
      %v720 = vpack.c.b16 %v664, %v663
      %v721 = vpack.c.b16 %v666, %v665
      %v722 = vpack.c.b16 %v668, %v667
      %v723 = vpack.c.b16 %v670, %v669
      %v724 = vpack.c.b16 %v672, %v671
      %v725 = vpack.c.b16 %v674, %v673
      %v726 = vpack.c.b16 %v676, %v675
      %vm777 = vcmask 261120
      %v779 = vsel %vm777, %v470, 0
      %781 = vmatprep.subr.bf16.mxu0 0
      %782 = vmatpush1.bf16.msra.mxu0 %v677
      %783 = vmatprep.subr.bf16.mxu0 0
      %784 = vmatpush1.bf16.msra.mxu0 %v678
      %785 = vmatprep.subr.bf16.mxu0 0
      %786 = vmatpush1.bf16.msra.mxu0 %v679
      %787 = vmatprep.subr.bf16.mxu0 0
      %788 = vmatpush1.bf16.msra.mxu0 %v680
      %789 = vmatprep.subr.bf16.mxu0 0
      %790 = vmatpush1.bf16.msra.mxu0 %v681
      %791 = vmatprep.subr.bf16.mxu0 0
      %792 = vmatpush1.bf16.msra.mxu0 %v682
      %793 = vmatprep.subr.bf16.mxu0 0
      %794 = vmatpush1.bf16.msra.mxu0 %v683
      %795 = vmatprep.subr.bf16.mxu0 0
      %796 = vmatpush1.bf16.msra.mxu0 %v684
      %797 = vmatprep.subr.bf16.mxu0 0
      %798 = vmatpush1.bf16.msra.mxu0 %v685
      %799 = vmatprep.subr.bf16.mxu0 0
      %800 = vmatpush1.bf16.msra.mxu0 %v686
      %801 = vmatprep.subr.bf16.mxu0 0
      %802 = vmatpush1.bf16.msra.mxu0 %v687
      %803 = vmatprep.subr.bf16.mxu0 0
      %804 = vmatpush1.bf16.msra.mxu0 %v688
      %805 = vmatprep.subr.bf16.mxu0 0
      %806 = vmatpush1.bf16.msra.mxu0 %v689
      %807 = vmatprep.subr.bf16.mxu0 0
      %808 = vmatpush1.bf16.msra.mxu0 %v690
      %809 = vmatprep.subr.bf16.mxu0 0
      %810 = vmatpush1.bf16.msra.mxu0 %v691
      %811 = vmatprep.subr.bf16.mxu0 0
      %812 = vmatpush1.bf16.msra.mxu0 %v692
      %813 = vmatprep.mubr.bf16.mxu0 %v465
      %814 = vmatmul.mubr.bf16.gmra.mrb[0].mxu0 %v464
      %v815 = vpop.f32.mrb[0].mxu0
      %v816 = vadd.f32 0.0, %v815
      %v817 = vpop.f32.mrb[0].mxu0
      %v818 = vpop.f32.mrb[0].mxu0
      %v819 = vadd.f32 0.0, %v818
      %v820 = vpop.f32.mrb[0].mxu0
      %821 = vdwg.mxu0
      %822 = vmatprep.subr.bf16.mxu0 0
      %823 = vmatpush1.bf16.msra.mxu0 %v693
      %824 = vmatprep.subr.bf16.mxu0 0
      %825 = vmatpush1.bf16.msra.mxu0 %v694
      %826 = vmatprep.subr.bf16.mxu0 0
      %827 = vmatpush1.bf16.msra.mxu0 %v695
      %828 = vmatprep.subr.bf16.mxu0 0
      %829 = vmatpush1.bf16.msra.mxu0 %v696
      %830 = vmatprep.subr.bf16.mxu0 0
      %831 = vmatpush1.bf16.msra.mxu0 %v697
      %832 = vmatprep.subr.bf16.mxu0 0
      %833 = vmatpush1.bf16.msra.mxu0 %v698
      %834 = vmatprep.subr.bf16.mxu0 0
      %835 = vmatpush1.bf16.msra.mxu0 %v699
      %836 = vmatprep.subr.bf16.mxu0 0
      %837 = vmatpush1.bf16.msra.mxu0 %v700
      %838 = vmatprep.subr.bf16.mxu0 0
      %839 = vmatpush1.bf16.msra.mxu0 %v701
      %840 = vmatprep.subr.bf16.mxu0 0
      %841 = vmatpush1.bf16.msra.mxu0 %v702
      %842 = vmatprep.subr.bf16.mxu0 0
      %843 = vmatpush1.bf16.msra.mxu0 %v703
      %844 = vmatprep.subr.bf16.mxu0 0
      %845 = vmatpush1.bf16.msra.mxu0 %v704
      %846 = vmatprep.subr.bf16.mxu0 0
      %847 = vmatpush1.bf16.msra.mxu0 %v705
      %848 = vmatprep.subr.bf16.mxu0 0
      %849 = vmatpush1.bf16.msra.mxu0 %v706
      %850 = vmatprep.subr.bf16.mxu0 0
      %851 = vmatpush1.bf16.msra.mxu0 %v707
      %852 = vmatprep.subr.bf16.mxu0 0
      %853 = vmatpush1.bf16.msra.mxu0 %v708
      %854 = vmatprep.mubr.bf16.mxu0 %v467
      %855 = vmatmul.mubr.bf16.gmra.mrb[0].mxu0 %v466
      %v856 = vpop.f32.mrb[0].mxu0
      %v857 = vadd.f32 %v816, %v856
      %v858 = vpop.f32.mrb[0].mxu0
      %v859 = vpop.f32.mrb[0].mxu0
      %v860 = vadd.f32 %v819, %v859
      %v861 = vpop.f32.mrb[0].mxu0
      %862 = vdwg.mxu0
      %863 = vmatprep.subr.bf16.mxu0 0
      %864 = vmatpush1.bf16.msra.mxu0 %v709
      %865 = vmatprep.subr.bf16.mxu0 0
      %866 = vmatpush1.bf16.msra.mxu0 %v710
      %867 = vmatprep.subr.bf16.mxu0 0
      %868 = vmatpush1.bf16.msra.mxu0 %v711
      %869 = vmatprep.subr.bf16.mxu0 0
      %870 = vmatpush1.bf16.msra.mxu0 %v712
      %871 = vmatprep.subr.bf16.mxu0 0
      %872 = vmatpush1.bf16.msra.mxu0 %v713
      %873 = vmatprep.subr.bf16.mxu0 0
      %874 = vmatpush1.bf16.msra.mxu0 %v714
      %875 = vmatprep.subr.bf16.mxu0 0
      %876 = vmatpush1.bf16.msra.mxu0 %v715
      %877 = vmatprep.subr.bf16.mxu0 0
      %878 = vmatpush1.bf16.msra.mxu0 %v716
      %879 = vmatprep.subr.bf16.mxu0 0
      %880 = vmatpush1.bf16.msra.mxu0 %v717
      %881 = vmatprep.subr.bf16.mxu0 0
      %882 = vmatpush1.bf16.msra.mxu0 %v718
      %883 = vmatprep.subr.bf16.mxu0 0
      %884 = vmatpush1.bf16.msra.mxu0 %v719
      %885 = vmatprep.subr.bf16.mxu0 0
      %886 = vmatpush1.bf16.msra.mxu0 %v720
      %887 = vmatprep.subr.bf16.mxu0 0
      %888 = vmatpush1.bf16.msra.mxu0 %v721
      %889 = vmatprep.subr.bf16.mxu0 0
      %890 = vmatpush1.bf16.msra.mxu0 %v722
      %891 = vmatprep.subr.bf16.mxu0 0
      %892 = vmatpush1.bf16.msra.mxu0 %v723
      %893 = vmatprep.subr.bf16.mxu0 0
      %894 = vmatpush1.bf16.msra.mxu0 %v724
      %895 = vmatprep.mubr.bf16.mxu0 %v469
      %896 = vmatmul.mubr.bf16.gmra.mrb[0].mxu0 %v468
      %v897 = vpop.f32.mrb[0].mxu0
      %v898 = vadd.f32 %v857, %v897
      %v899 = vpop.f32.mrb[0].mxu0
      %v900 = vpop.f32.mrb[0].mxu0
      %v901 = vadd.f32 %v860, %v900
      %v902 = vpop.f32.mrb[0].mxu0
      %903 = vdwg.mxu0
      %904 = vmatprep.subr.bf16.mxu0 0
      %905 = vmatpush1.bf16.msra.mxu0 %v725
      %906 = vmatprep.subr.bf16.mxu0 0
      %907 = vmatpush1.bf16.msra.mxu0 %v726
      %908 = vmatprep.subr.bf16.mxu0 0
      %909 = vmatpush1.bf16.msra.mxu0 0
      %910 = vmatprep.subr.bf16.mxu0 0
      %911 = vmatpush1.bf16.msra.mxu0 0
      %912 = vmatprep.subr.bf16.mxu0 0
      %913 = vmatpush1.bf16.msra.mxu0 0
      %914 = vmatprep.subr.bf16.mxu0 0
      %915 = vmatpush1.bf16.msra.mxu0 0
      %916 = vmatprep.subr.bf16.mxu0 0
      %917 = vmatpush1.bf16.msra.mxu0 0
      %918 = vmatprep.subr.bf16.mxu0 0
      %919 = vmatpush1.bf16.msra.mxu0 0
      %920 = vmatprep.subr.bf16.mxu0 0
      %921 = vmatpush1.bf16.msra.mxu0 0
      %922 = vmatprep.subr.bf16.mxu0 0
      %923 = vmatpush1.bf16.msra.mxu0 0
      %924 = vmatprep.subr.bf16.mxu0 0
      %925 = vmatpush1.bf16.msra.mxu0 0
      %926 = vmatprep.subr.bf16.mxu0 0
      %927 = vmatpush1.bf16.msra.mxu0 0
      %928 = vmatprep.subr.bf16.mxu0 0
      %929 = vmatpush1.bf16.msra.mxu0 0
      %930 = vmatprep.subr.bf16.mxu0 0
      %931 = vmatpush1.bf16.msra.mxu0 0
      %932 = vmatprep.subr.bf16.mxu0 0
      %933 = vmatpush1.bf16.msra.mxu0 0
      %934 = vmatprep.subr.bf16.mxu0 0
      %935 = vmatpush1.bf16.msra.mxu0 0
      %936 = vmatprep.mubr.bf16.mxu0 0
      %937 = vmatmul.mubr.bf16.gmra.mrb[0].mxu0 %v779
      %v938 = vpop.f32.mrb[0].mxu0
      %v939 = vadd.f32 %v898, %v938
      %v940 = vpop.f32.mrb[0].mxu0
      %v941 = vpop.f32.mrb[0].mxu0
      %v942 = vadd.f32 %v901, %v941
      %v943 = vpop.f32.mrb[0].mxu0
      %944 = vdwg.mxu0
      %v945 = vld [vmem:[%s311] sm:$0xff]
      %v946 = vld [vmem:[%s311 + $0x8] sm:$0xff]
      %v947 = vld [vmem:[%s311 + $0x10] sm:$0xff]
      %v948 = vld [vmem:[%s311 + $0x18] sm:$0xf]
      %v949 = vld [vmem:[%s311 + $0x1c] sm:$0xff]
      %v950 = vld [vmem:[%s311 + $0x24] sm:$0xff]
      %v951 = vld [vmem:[%s311 + $0x2c] sm:$0xff]
      %v952 = vld [vmem:[%s311 + $0x34] sm:$0xf]
      %v961 = vunpack.c.l.b16 %v945
      %v962 = vunpack.c.h.b16 %v945
      %v963 = vunpack.c.l.b16 %v946
      %v964 = vunpack.c.h.b16 %v946
      %v965 = vunpack.c.l.b16 %v947
      %v966 = vunpack.c.h.b16 %v947
      %v967 = vunpack.c.l.b16 %v948
      %v968 = vunpack.c.l.b16 %v949
      %v969 = vunpack.c.h.b16 %v949
      %v970 = vunpack.c.l.b16 %v950
      %v971 = vunpack.c.h.b16 %v950
      %v972 = vunpack.c.l.b16 %v951
      %v973 = vunpack.c.h.b16 %v951
      %v974 = vunpack.c.l.b16 %v952
      %v975 = vpack.c.b16 %v968, %v961
      %v976 = vpack.c.b16 %v969, %v962
      %v977 = vpack.c.b16 %v970, %v963
      %v978 = vpack.c.b16 %v971, %v964
      %v979 = vpack.c.b16 %v972, %v965
      %v980 = vpack.c.b16 %v973, %v966
      %v981 = vpack.c.b16 %v974, %v967
      %v989 = vsel %vm777, %v981, 0
      %991 = vmatprep.subr.bf16.mxu0 0
      %992 = vmatpush1.bf16.msra.mxu0 %v677
      %993 = vmatprep.subr.bf16.mxu0 0
      %994 = vmatpush1.bf16.msra.mxu0 %v678
      %995 = vmatprep.subr.bf16.mxu0 0
      %996 = vmatpush1.bf16.msra.mxu0 %v679
      %997 = vmatprep.subr.bf16.mxu0 0
      %998 = vmatpush1.bf16.msra.mxu0 %v680
      %999 = vmatprep.subr.bf16.mxu0 0
      %1000 = vmatpush1.bf16.msra.mxu0 %v681
      %1001 = vmatprep.subr.bf16.mxu0 0
      %1002 = vmatpush1.bf16.msra.mxu0 %v682
      %1003 = vmatprep.subr.bf16.mxu0 0
      %1004 = vmatpush1.bf16.msra.mxu0 %v683
      %1005 = vmatprep.subr.bf16.mxu0 0
      %1006 = vmatpush1.bf16.msra.mxu0 %v684
      %1007 = vmatprep.subr.bf16.mxu0 0
      %1008 = vmatpush1.bf16.msra.mxu0 %v685
      %1009 = vmatprep.subr.bf16.mxu0 0
      %1010 = vmatpush1.bf16.msra.mxu0 %v686
      %1011 = vmatprep.subr.bf16.mxu0 0
      %1012 = vmatpush1.bf16.msra.mxu0 %v687
      %1013 = vmatprep.subr.bf16.mxu0 0
      %1014 = vmatpush1.bf16.msra.mxu0 %v688
      %1015 = vmatprep.subr.bf16.mxu0 0
      %1016 = vmatpush1.bf16.msra.mxu0 %v689
      %1017 = vmatprep.subr.bf16.mxu0 0
      %1018 = vmatpush1.bf16.msra.mxu0 %v690
      %1019 = vmatprep.subr.bf16.mxu0 0
      %1020 = vmatpush1.bf16.msra.mxu0 %v691
      %1021 = vmatprep.subr.bf16.mxu0 0
      %1022 = vmatpush1.bf16.msra.mxu0 %v692
      %1023 = vmatprep.mubr.bf16.mxu0 %v976
      %1024 = vmatmul.mubr.bf16.gmra.mrb[0].mxu0 %v975
      %v1025 = vpop.f32.mrb[0].mxu0
      %v1026 = vadd.f32 0.0, %v1025
      %v1027 = vpop.f32.mrb[0].mxu0
      %v1028 = vpop.f32.mrb[0].mxu0
      %v1029 = vadd.f32 0.0, %v1028
      %v1030 = vpop.f32.mrb[0].mxu0
      %1031 = vdwg.mxu0
      %1032 = vmatprep.subr.bf16.mxu0 0
      %1033 = vmatpush1.bf16.msra.mxu0 %v693
      %1034 = vmatprep.subr.bf16.mxu0 0
      %1035 = vmatpush1.bf16.msra.mxu0 %v694
      %1036 = vmatprep.subr.bf16.mxu0 0
      %1037 = vmatpush1.bf16.msra.mxu0 %v695
      %1038 = vmatprep.subr.bf16.mxu0 0
      %1039 = vmatpush1.bf16.msra.mxu0 %v696
      %1040 = vmatprep.subr.bf16.mxu0 0
      %1041 = vmatpush1.bf16.msra.mxu0 %v697
      %1042 = vmatprep.subr.bf16.mxu0 0
      %1043 = vmatpush1.bf16.msra.mxu0 %v698
      %1044 = vmatprep.subr.bf16.mxu0 0
      %1045 = vmatpush1.bf16.msra.mxu0 %v699
      %1046 = vmatprep.subr.bf16.mxu0 0
      %1047 = vmatpush1.bf16.msra.mxu0 %v700
      %1048 = vmatprep.subr.bf16.mxu0 0
      %1049 = vmatpush1.bf16.msra.mxu0 %v701
      %1050 = vmatprep.subr.bf16.mxu0 0
      %1051 = vmatpush1.bf16.msra.mxu0 %v702
      %1052 = vmatprep.subr.bf16.mxu0 0
      %1053 = vmatpush1.bf16.msra.mxu0 %v703
      %1054 = vmatprep.subr.bf16.mxu0 0
      %1055 = vmatpush1.bf16.msra.mxu0 %v704
      %1056 = vmatprep.subr.bf16.mxu0 0
      %1057 = vmatpush1.bf16.msra.mxu0 %v705
      %1058 = vmatprep.subr.bf16.mxu0 0
      %1059 = vmatpush1.bf16.msra.mxu0 %v706
      %1060 = vmatprep.subr.bf16.mxu0 0
      %1061 = vmatpush1.bf16.msra.mxu0 %v707
      %1062 = vmatprep.subr.bf16.mxu0 0
      %1063 = vmatpush1.bf16.msra.mxu0 %v708
      %1064 = vmatprep.mubr.bf16.mxu0 %v978
      %1065 = vmatmul.mubr.bf16.gmra.mrb[0].mxu0 %v977
      %v1066 = vpop.f32.mrb[0].mxu0
      %v1067 = vadd.f32 %v1026, %v1066
      %v1068 = vpop.f32.mrb[0].mxu0
      %v1069 = vpop.f32.mrb[0].mxu0
      %v1070 = vadd.f32 %v1029, %v1069
      %v1071 = vpop.f32.mrb[0].mxu0
      %1072 = vdwg.mxu0
      %1073 = vmatprep.subr.bf16.mxu0 0
      %1074 = vmatpush1.bf16.msra.mxu0 %v709
      %1075 = vmatprep.subr.bf16.mxu0 0
      %1076 = vmatpush1.bf16.msra.mxu0 %v710
      %1077 = vmatprep.subr.bf16.mxu0 0
      %1078 = vmatpush1.bf16.msra.mxu0 %v711
      %1079 = vmatprep.subr.bf16.mxu0 0
      %1080 = vmatpush1.bf16.msra.mxu0 %v712
      %1081 = vmatprep.subr.bf16.mxu0 0
      %1082 = vmatpush1.bf16.msra.mxu0 %v713
      %1083 = vmatprep.subr.bf16.mxu0 0
      %1084 = vmatpush1.bf16.msra.mxu0 %v714
      %1085 = vmatprep.subr.bf16.mxu0 0
      %1086 = vmatpush1.bf16.msra.mxu0 %v715
      %1087 = vmatprep.subr.bf16.mxu0 0
      %1088 = vmatpush1.bf16.msra.mxu0 %v716
      %1089 = vmatprep.subr.bf16.mxu0 0
      %1090 = vmatpush1.bf16.msra.mxu0 %v717
      %1091 = vmatprep.subr.bf16.mxu0 0
      %1092 = vmatpush1.bf16.msra.mxu0 %v718
      %1093 = vmatprep.subr.bf16.mxu0 0
      %1094 = vmatpush1.bf16.msra.mxu0 %v719
      %1095 = vmatprep.subr.bf16.mxu0 0
      %1096 = vmatpush1.bf16.msra.mxu0 %v720
      %1097 = vmatprep.subr.bf16.mxu0 0
      %1098 = vmatpush1.bf16.msra.mxu0 %v721
      %1099 = vmatprep.subr.bf16.mxu0 0
      %1100 = vmatpush1.bf16.msra.mxu0 %v722
      %1101 = vmatprep.subr.bf16.mxu0 0
      %1102 = vmatpush1.bf16.msra.mxu0 %v723
      %1103 = vmatprep.subr.bf16.mxu0 0
      %1104 = vmatpush1.bf16.msra.mxu0 %v724
      %1105 = vmatprep.mubr.bf16.mxu0 %v980
      %1106 = vmatmul.mubr.bf16.gmra.mrb[0].mxu0 %v979
      %v1107 = vpop.f32.mrb[0].mxu0
      %v1108 = vadd.f32 %v1067, %v1107
      %v1109 = vpop.f32.mrb[0].mxu0
      %v1110 = vpop.f32.mrb[0].mxu0
      %v1111 = vadd.f32 %v1070, %v1110
      %v1112 = vpop.f32.mrb[0].mxu0
      %1113 = vdwg.mxu0
      %1114 = vmatprep.subr.bf16.mxu0 0
      %1115 = vmatpush1.bf16.msra.mxu0 %v725
      %1116 = vmatprep.subr.bf16.mxu0 0
      %1117 = vmatpush1.bf16.msra.mxu0 %v726
      %1118 = vmatprep.subr.bf16.mxu0 0
      %1119 = vmatpush1.bf16.msra.mxu0 0
      %1120 = vmatprep.subr.bf16.mxu0 0
      %1121 = vmatpush1.bf16.msra.mxu0 0
      %1122 = vmatprep.subr.bf16.mxu0 0
      %1123 = vmatpush1.bf16.msra.mxu0 0
      %1124 = vmatprep.subr.bf16.mxu0 0
      %1125 = vmatpush1.bf16.msra.mxu0 0
      %1126 = vmatprep.subr.bf16.mxu0 0
      %1127 = vmatpush1.bf16.msra.mxu0 0
      %1128 = vmatprep.subr.bf16.mxu0 0
      %1129 = vmatpush1.bf16.msra.mxu0 0
      %1130 = vmatprep.subr.bf16.mxu0 0
      %1131 = vmatpush1.bf16.msra.mxu0 0
      %1132 = vmatprep.subr.bf16.mxu0 0
      %1133 = vmatpush1.bf16.msra.mxu0 0
      %1134 = vmatprep.subr.bf16.mxu0 0
      %1135 = vmatpush1.bf16.msra.mxu0 0
      %1136 = vmatprep.subr.bf16.mxu0 0
      %1137 = vmatpush1.bf16.msra.mxu0 0
      %1138 = vmatprep.subr.bf16.mxu0 0
      %1139 = vmatpush1.bf16.msra.mxu0 0
      %1140 = vmatprep.subr.bf16.mxu0 0
      %1141 = vmatpush1.bf16.msra.mxu0 0
      %1142 = vmatprep.subr.bf16.mxu0 0
      %1143 = vmatpush1.bf16.msra.mxu0 0
      %1144 = vmatprep.subr.bf16.mxu0 0
      %1145 = vmatpush1.bf16.msra.mxu0 0
      %1146 = vmatprep.mubr.bf16.mxu0 0
      %1147 = vmatmul.mubr.bf16.gmra.mrb[0].mxu0 %v989
      %v1148 = vpop.f32.mrb[0].mxu0
      %v1149 = vadd.f32 %v1108, %v1148
      %v1150 = vpop.f32.mrb[0].mxu0
      %v1151 = vpop.f32.mrb[0].mxu0
      %v1152 = vadd.f32 %v1111, %v1151
      %v1153 = vpop.f32.mrb[0].mxu0
      %1154 = vdwg.mxu0
      %v1155 = vmax.f32 %v939, %v1149
      %v1156 = vmax.f32 %v942, %v1152
      %v1157 = vld [vmem:[%s318] sm:$0xff]
      %v1158 = vld [vmem:[%s318 + $0x8] sm:$0xff]
      %v1159 = vld [vmem:[%s318 + $0x10] sm:$0xff]
      %v1160 = vld [vmem:[%s318 + $0x18] sm:$0xf]
      %v1161 = vld [vmem:[%s318 + $0x1c] sm:$0xff]
      %v1162 = vld [vmem:[%s318 + $0x24] sm:$0xff]
      %v1163 = vld [vmem:[%s318 + $0x2c] sm:$0xff]
      %v1164 = vld [vmem:[%s318 + $0x34] sm:$0xf]
      %v1173 = vunpack.c.l.b16 %v1157
      %v1174 = vunpack.c.h.b16 %v1157
      %v1175 = vunpack.c.l.b16 %v1158
      %v1176 = vunpack.c.h.b16 %v1158
      %v1177 = vunpack.c.l.b16 %v1159
      %v1178 = vunpack.c.h.b16 %v1159
      %v1179 = vunpack.c.l.b16 %v1160
      %v1180 = vunpack.c.l.b16 %v1161
      %v1181 = vunpack.c.h.b16 %v1161
      %v1182 = vunpack.c.l.b16 %v1162
      %v1183 = vunpack.c.h.b16 %v1162
      %v1184 = vunpack.c.l.b16 %v1163
      %v1185 = vunpack.c.h.b16 %v1163
      %v1186 = vunpack.c.l.b16 %v1164
      %v1187 = vpack.c.b16 %v1180, %v1173
      %v1188 = vpack.c.b16 %v1181, %v1174
      %v1189 = vpack.c.b16 %v1182, %v1175
      %v1190 = vpack.c.b16 %v1183, %v1176
      %v1191 = vpack.c.b16 %v1184, %v1177
      %v1192 = vpack.c.b16 %v1185, %v1178
      %v1193 = vpack.c.b16 %v1186, %v1179
      %v1201 = vsel %vm777, %v1193, 0
      %1203 = vmatprep.subr.bf16.mxu0 0
      %1204 = vmatpush1.bf16.msra.mxu0 %v677
      %1205 = vmatprep.subr.bf16.mxu0 0
      %1206 = vmatpush1.bf16.msra.mxu0 %v678
      %1207 = vmatprep.subr.bf16.mxu0 0
      %1208 = vmatpush1.bf16.msra.mxu0 %v679
      %1209 = vmatprep.subr.bf16.mxu0 0
      %1210 = vmatpush1.bf16.msra.mxu0 %v680
      %1211 = vmatprep.subr.bf16.mxu0 0
      %1212 = vmatpush1.bf16.msra.mxu0 %v681
      %1213 = vmatprep.subr.bf16.mxu0 0
      %1214 = vmatpush1.bf16.msra.mxu0 %v682
      %1215 = vmatprep.subr.bf16.mxu0 0
      %1216 = vmatpush1.bf16.msra.mxu0 %v683
      %1217 = vmatprep.subr.bf16.mxu0 0
      %1218 = vmatpush1.bf16.msra.mxu0 %v684
      %1219 = vmatprep.subr.bf16.mxu0 0
      %1220 = vmatpush1.bf16.msra.mxu0 %v685
      %1221 = vmatprep.subr.bf16.mxu0 0
      %1222 = vmatpush1.bf16.msra.mxu0 %v686
      %1223 = vmatprep.subr.bf16.mxu0 0
      %1224 = vmatpush1.bf16.msra.mxu0 %v687
      %1225 = vmatprep.subr.bf16.mxu0 0
      %1226 = vmatpush1.bf16.msra.mxu0 %v688
      %1227 = vmatprep.subr.bf16.mxu0 0
      %1228 = vmatpush1.bf16.msra.mxu0 %v689
      %1229 = vmatprep.subr.bf16.mxu0 0
      %1230 = vmatpush1.bf16.msra.mxu0 %v690
      %1231 = vmatprep.subr.bf16.mxu0 0
      %1232 = vmatpush1.bf16.msra.mxu0 %v691
      %1233 = vmatprep.subr.bf16.mxu0 0
      %1234 = vmatpush1.bf16.msra.mxu0 %v692
      %1235 = vmatprep.mubr.bf16.mxu0 %v1188
      %1236 = vmatmul.mubr.bf16.gmra.mrb[0].mxu0 %v1187
      %v1237 = vpop.f32.mrb[0].mxu0
      %v1238 = vadd.f32 0.0, %v1237
      %v1239 = vpop.f32.mrb[0].mxu0
      %v1240 = vpop.f32.mrb[0].mxu0
      %v1241 = vadd.f32 0.0, %v1240
      %v1242 = vpop.f32.mrb[0].mxu0
      %1243 = vdwg.mxu0
      %1244 = vmatprep.subr.bf16.mxu0 0
      %1245 = vmatpush1.bf16.msra.mxu0 %v693
      %1246 = vmatprep.subr.bf16.mxu0 0
      %1247 = vmatpush1.bf16.msra.mxu0 %v694
      %1248 = vmatprep.subr.bf16.mxu0 0
      %1249 = vmatpush1.bf16.msra.mxu0 %v695
      %1250 = vmatprep.subr.bf16.mxu0 0
      %1251 = vmatpush1.bf16.msra.mxu0 %v696
      %1252 = vmatprep.subr.bf16.mxu0 0
      %1253 = vmatpush1.bf16.msra.mxu0 %v697
      %1254 = vmatprep.subr.bf16.mxu0 0
      %1255 = vmatpush1.bf16.msra.mxu0 %v698
      %1256 = vmatprep.subr.bf16.mxu0 0
      %1257 = vmatpush1.bf16.msra.mxu0 %v699
      %1258 = vmatprep.subr.bf16.mxu0 0
      %1259 = vmatpush1.bf16.msra.mxu0 %v700
      %1260 = vmatprep.subr.bf16.mxu0 0
      %1261 = vmatpush1.bf16.msra.mxu0 %v701
      %1262 = vmatprep.subr.bf16.mxu0 0
      %1263 = vmatpush1.bf16.msra.mxu0 %v702
      %1264 = vmatprep.subr.bf16.mxu0 0
      %1265 = vmatpush1.bf16.msra.mxu0 %v703
      %1266 = vmatprep.subr.bf16.mxu0 0
      %1267 = vmatpush1.bf16.msra.mxu0 %v704
      %1268 = vmatprep.subr.bf16.mxu0 0
      %1269 = vmatpush1.bf16.msra.mxu0 %v705
      %1270 = vmatprep.subr.bf16.mxu0 0
      %1271 = vmatpush1.bf16.msra.mxu0 %v706
      %1272 = vmatprep.subr.bf16.mxu0 0
      %1273 = vmatpush1.bf16.msra.mxu0 %v707
      %1274 = vmatprep.subr.bf16.mxu0 0
      %1275 = vmatpush1.bf16.msra.mxu0 %v708
      %1276 = vmatprep.mubr.bf16.mxu0 %v1190
      %1277 = vmatmul.mubr.bf16.gmra.mrb[0].mxu0 %v1189
      %v1278 = vpop.f32.mrb[0].mxu0
      %v1279 = vadd.f32 %v1238, %v1278
      %v1280 = vpop.f32.mrb[0].mxu0
      %v1281 = vpop.f32.mrb[0].mxu0
      %v1282 = vadd.f32 %v1241, %v1281
      %v1283 = vpop.f32.mrb[0].mxu0
      %1284 = vdwg.mxu0
      %1285 = vmatprep.subr.bf16.mxu0 0
      %1286 = vmatpush1.bf16.msra.mxu0 %v709
      %1287 = vmatprep.subr.bf16.mxu0 0
      %1288 = vmatpush1.bf16.msra.mxu0 %v710
      %1289 = vmatprep.subr.bf16.mxu0 0
      %1290 = vmatpush1.bf16.msra.mxu0 %v711
      %1291 = vmatprep.subr.bf16.mxu0 0
      %1292 = vmatpush1.bf16.msra.mxu0 %v712
      %1293 = vmatprep.subr.bf16.mxu0 0
      %1294 = vmatpush1.bf16.msra.mxu0 %v713
      %1295 = vmatprep.subr.bf16.mxu0 0
      %1296 = vmatpush1.bf16.msra.mxu0 %v714
      %1297 = vmatprep.subr.bf16.mxu0 0
      %1298 = vmatpush1.bf16.msra.mxu0 %v715
      %1299 = vmatprep.subr.bf16.mxu0 0
      %1300 = vmatpush1.bf16.msra.mxu0 %v716
      %1301 = vmatprep.subr.bf16.mxu0 0
      %1302 = vmatpush1.bf16.msra.mxu0 %v717
      %1303 = vmatprep.subr.bf16.mxu0 0
      %1304 = vmatpush1.bf16.msra.mxu0 %v718
      %1305 = vmatprep.subr.bf16.mxu0 0
      %1306 = vmatpush1.bf16.msra.mxu0 %v719
      %1307 = vmatprep.subr.bf16.mxu0 0
      %1308 = vmatpush1.bf16.msra.mxu0 %v720
      %1309 = vmatprep.subr.bf16.mxu0 0
      %1310 = vmatpush1.bf16.msra.mxu0 %v721
      %1311 = vmatprep.subr.bf16.mxu0 0
      %1312 = vmatpush1.bf16.msra.mxu0 %v722
      %1313 = vmatprep.subr.bf16.mxu0 0
      %1314 = vmatpush1.bf16.msra.mxu0 %v723
      %1315 = vmatprep.subr.bf16.mxu0 0
      %1316 = vmatpush1.bf16.msra.mxu0 %v724
      %1317 = vmatprep.mubr.bf16.mxu0 %v1192
      %1318 = vmatmul.mubr.bf16.gmra.mrb[0].mxu0 %v1191
      %v1319 = vpop.f32.mrb[0].mxu0
      %v1320 = vadd.f32 %v1279, %v1319
      %v1321 = vpop.f32.mrb[0].mxu0
      %v1322 = vpop.f32.mrb[0].mxu0
      %v1323 = vadd.f32 %v1282, %v1322
      %v1324 = vpop.f32.mrb[0].mxu0
      %1325 = vdwg.mxu0
      %1326 = vmatprep.subr.bf16.mxu0 0
      %1327 = vmatpush1.bf16.msra.mxu0 %v725
      %1328 = vmatprep.subr.bf16.mxu0 0
      %1329 = vmatpush1.bf16.msra.mxu0 %v726
      %1330 = vmatprep.subr.bf16.mxu0 0
      %1331 = vmatpush1.bf16.msra.mxu0 0
      %1332 = vmatprep.subr.bf16.mxu0 0
      %1333 = vmatpush1.bf16.msra.mxu0 0
      %1334 = vmatprep.subr.bf16.mxu0 0
      %1335 = vmatpush1.bf16.msra.mxu0 0
      %1336 = vmatprep.subr.bf16.mxu0 0
      %1337 = vmatpush1.bf16.msra.mxu0 0
      %1338 = vmatprep.subr.bf16.mxu0 0
      %1339 = vmatpush1.bf16.msra.mxu0 0
      %1340 = vmatprep.subr.bf16.mxu0 0
      %1341 = vmatpush1.bf16.msra.mxu0 0
      %1342 = vmatprep.subr.bf16.mxu0 0
      %1343 = vmatpush1.bf16.msra.mxu0 0
      %1344 = vmatprep.subr.bf16.mxu0 0
      %1345 = vmatpush1.bf16.msra.mxu0 0
      %1346 = vmatprep.subr.bf16.mxu0 0
      %1347 = vmatpush1.bf16.msra.mxu0 0
      %1348 = vmatprep.subr.bf16.mxu0 0
      %1349 = vmatpush1.bf16.msra.mxu0 0
      %1350 = vmatprep.subr.bf16.mxu0 0
      %1351 = vmatpush1.bf16.msra.mxu0 0
      %1352 = vmatprep.subr.bf16.mxu0 0
      %1353 = vmatpush1.bf16.msra.mxu0 0
      %1354 = vmatprep.subr.bf16.mxu0 0
      %1355 = vmatpush1.bf16.msra.mxu0 0
      %1356 = vmatprep.subr.bf16.mxu0 0
      %1357 = vmatpush1.bf16.msra.mxu0 0
      %1358 = vmatprep.mubr.bf16.mxu0 0
      %1359 = vmatmul.mubr.bf16.gmra.mrb[0].mxu0 %v1201
      %v1360 = vpop.f32.mrb[0].mxu0
      %v1361 = vadd.f32 %v1320, %v1360
      %v1362 = vpop.f32.mrb[0].mxu0
      %v1363 = vpop.f32.mrb[0].mxu0
      %v1364 = vadd.f32 %v1323, %v1363
      %v1365 = vpop.f32.mrb[0].mxu0
      %1366 = vdwg.mxu0
      %v1367 = vld [vmem:[%s325] sm:$0xff]
      %v1368 = vld [vmem:[%s325 + $0x8] sm:$0xff]
      %v1369 = vld [vmem:[%s325 + $0x10] sm:$0xff]
      %v1370 = vld [vmem:[%s325 + $0x18] sm:$0xf]
      %v1371 = vld [vmem:[%s325 + $0x1c] sm:$0xff]
      %v1372 = vld [vmem:[%s325 + $0x24] sm:$0xff]
      %v1373 = vld [vmem:[%s325 + $0x2c] sm:$0xff]
      %v1374 = vld [vmem:[%s325 + $0x34] sm:$0xf]
      %v1383 = vunpack.c.l.b16 %v1367
      %v1384 = vunpack.c.h.b16 %v1367
      %v1385 = vunpack.c.l.b16 %v1368
      %v1386 = vunpack.c.h.b16 %v1368
      %v1387 = vunpack.c.l.b16 %v1369
      %v1388 = vunpack.c.h.b16 %v1369
      %v1389 = vunpack.c.l.b16 %v1370
      %v1390 = vunpack.c.l.b16 %v1371
      %v1391 = vunpack.c.h.b16 %v1371
      %v1392 = vunpack.c.l.b16 %v1372
      %v1393 = vunpack.c.h.b16 %v1372
      %v1394 = vunpack.c.l.b16 %v1373
      %v1395 = vunpack.c.h.b16 %v1373
      %v1396 = vunpack.c.l.b16 %v1374
      %v1397 = vpack.c.b16 %v1390, %v1383
      %v1398 = vpack.c.b16 %v1391, %v1384
      %v1399 = vpack.c.b16 %v1392, %v1385
      %v1400 = vpack.c.b16 %v1393, %v1386
      %v1401 = vpack.c.b16 %v1394, %v1387
      %v1402 = vpack.c.b16 %v1395, %v1388
      %v1403 = vpack.c.b16 %v1396, %v1389
      %v1411 = vsel %vm777, %v1403, 0
      %1413 = vmatprep.subr.bf16.mxu0 0
      %1414 = vmatpush1.bf16.msra.mxu0 %v677
      %1415 = vmatprep.subr.bf16.mxu0 0
      %1416 = vmatpush1.bf16.msra.mxu0 %v678
      %1417 = vmatprep.subr.bf16.mxu0 0
      %1418 = vmatpush1.bf16.msra.mxu0 %v679
      %1419 = vmatprep.subr.bf16.mxu0 0
      %1420 = vmatpush1.bf16.msra.mxu0 %v680
      %1421 = vmatprep.subr.bf16.mxu0 0
      %1422 = vmatpush1.bf16.msra.mxu0 %v681
      %1423 = vmatprep.subr.bf16.mxu0 0
      %1424 = vmatpush1.bf16.msra.mxu0 %v682
      %1425 = vmatprep.subr.bf16.mxu0 0
      %1426 = vmatpush1.bf16.msra.mxu0 %v683
      %1427 = vmatprep.subr.bf16.mxu0 0
      %1428 = vmatpush1.bf16.msra.mxu0 %v684
      %1429 = vmatprep.subr.bf16.mxu0 0
      %1430 = vmatpush1.bf16.msra.mxu0 %v685
      %1431 = vmatprep.subr.bf16.mxu0 0
      %1432 = vmatpush1.bf16.msra.mxu0 %v686
      %1433 = vmatprep.subr.bf16.mxu0 0
      %1434 = vmatpush1.bf16.msra.mxu0 %v687
      %1435 = vmatprep.subr.bf16.mxu0 0
      %1436 = vmatpush1.bf16.msra.mxu0 %v688
      %1437 = vmatprep.subr.bf16.mxu0 0
      %1438 = vmatpush1.bf16.msra.mxu0 %v689
      %1439 = vmatprep.subr.bf16.mxu0 0
      %1440 = vmatpush1.bf16.msra.mxu0 %v690
      %1441 = vmatprep.subr.bf16.mxu0 0
      %1442 = vmatpush1.bf16.msra.mxu0 %v691
      %1443 = vmatprep.subr.bf16.mxu0 0
      %1444 = vmatpush1.bf16.msra.mxu0 %v692
      %1445 = vmatprep.mubr.bf16.mxu0 %v1398
      %1446 = vmatmul.mubr.bf16.gmra.mrb[0].mxu0 %v1397
      %v1447 = vpop.f32.mrb[0].mxu0
      %v1448 = vadd.f32 0.0, %v1447
      %v1449 = vpop.f32.mrb[0].mxu0
      %v1450 = vpop.f32.mrb[0].mxu0
      %v1451 = vadd.f32 0.0, %v1450
      %v1452 = vpop.f32.mrb[0].mxu0
      %1453 = vdwg.mxu0
      %1454 = vmatprep.subr.bf16.mxu0 0
      %1455 = vmatpush1.bf16.msra.mxu0 %v693
      %1456 = vmatprep.subr.bf16.mxu0 0
      %1457 = vmatpush1.bf16.msra.mxu0 %v694
      %1458 = vmatprep.subr.bf16.mxu0 0
      %1459 = vmatpush1.bf16.msra.mxu0 %v695
      %1460 = vmatprep.subr.bf16.mxu0 0
      %1461 = vmatpush1.bf16.msra.mxu0 %v696
      %1462 = vmatprep.subr.bf16.mxu0 0
      %1463 = vmatpush1.bf16.msra.mxu0 %v697
      %1464 = vmatprep.subr.bf16.mxu0 0
      %1465 = vmatpush1.bf16.msra.mxu0 %v698
      %1466 = vmatprep.subr.bf16.mxu0 0
      %1467 = vmatpush1.bf16.msra.mxu0 %v699
      %1468 = vmatprep.subr.bf16.mxu0 0
      %1469 = vmatpush1.bf16.msra.mxu0 %v700
      %1470 = vmatprep.subr.bf16.mxu0 0
      %1471 = vmatpush1.bf16.msra.mxu0 %v701
      %1472 = vmatprep.subr.bf16.mxu0 0
      %1473 = vmatpush1.bf16.msra.mxu0 %v702
      %1474 = vmatprep.subr.bf16.mxu0 0
      %1475 = vmatpush1.bf16.msra.mxu0 %v703
      %1476 = vmatprep.subr.bf16.mxu0 0
      %1477 = vmatpush1.bf16.msra.mxu0 %v704
      %1478 = vmatprep.subr.bf16.mxu0 0
      %1479 = vmatpush1.bf16.msra.mxu0 %v705
      %1480 = vmatprep.subr.bf16.mxu0 0
      %1481 = vmatpush1.bf16.msra.mxu0 %v706
      %1482 = vmatprep.subr.bf16.mxu0 0
      %1483 = vmatpush1.bf16.msra.mxu0 %v707
      %1484 = vmatprep.subr.bf16.mxu0 0
      %1485 = vmatpush1.bf16.msra.mxu0 %v708
      %1486 = vmatprep.mubr.bf16.mxu0 %v1400
      %1487 = vmatmul.mubr.bf16.gmra.mrb[0].mxu0 %v1399
      %v1488 = vpop.f32.mrb[0].mxu0
      %v1489 = vadd.f32 %v1448, %v1488
      %v1490 = vpop.f32.mrb[0].mxu0
      %v1491 = vpop.f32.mrb[0].mxu0
      %v1492 = vadd.f32 %v1451, %v1491
      %v1493 = vpop.f32.mrb[0].mxu0
      %1494 = vdwg.mxu0
      %1495 = vmatprep.subr.bf16.mxu0 0
      %1496 = vmatpush1.bf16.msra.mxu0 %v709
      %1497 = vmatprep.subr.bf16.mxu0 0
      %1498 = vmatpush1.bf16.msra.mxu0 %v710
      %1499 = vmatprep.subr.bf16.mxu0 0
      %1500 = vmatpush1.bf16.msra.mxu0 %v711
      %1501 = vmatprep.subr.bf16.mxu0 0
      %1502 = vmatpush1.bf16.msra.mxu0 %v712
      %1503 = vmatprep.subr.bf16.mxu0 0
      %1504 = vmatpush1.bf16.msra.mxu0 %v713
      %1505 = vmatprep.subr.bf16.mxu0 0
      %1506 = vmatpush1.bf16.msra.mxu0 %v714
      %1507 = vmatprep.subr.bf16.mxu0 0
      %1508 = vmatpush1.bf16.msra.mxu0 %v715
      %1509 = vmatprep.subr.bf16.mxu0 0
      %1510 = vmatpush1.bf16.msra.mxu0 %v716
      %1511 = vmatprep.subr.bf16.mxu0 0
      %1512 = vmatpush1.bf16.msra.mxu0 %v717
      %1513 = vmatprep.subr.bf16.mxu0 0
      %1514 = vmatpush1.bf16.msra.mxu0 %v718
      %1515 = vmatprep.subr.bf16.mxu0 0
      %1516 = vmatpush1.bf16.msra.mxu0 %v719
      %1517 = vmatprep.subr.bf16.mxu0 0
      %1518 = vmatpush1.bf16.msra.mxu0 %v720
      %1519 = vmatprep.subr.bf16.mxu0 0
      %1520 = vmatpush1.bf16.msra.mxu0 %v721
      %1521 = vmatprep.subr.bf16.mxu0 0
      %1522 = vmatpush1.bf16.msra.mxu0 %v722
      %1523 = vmatprep.subr.bf16.mxu0 0
      %1524 = vmatpush1.bf16.msra.mxu0 %v723
      %1525 = vmatprep.subr.bf16.mxu0 0
      %1526 = vmatpush1.bf16.msra.mxu0 %v724
      %1527 = vmatprep.mubr.bf16.mxu0 %v1402
      %1528 = vmatmul.mubr.bf16.gmra.mrb[0].mxu0 %v1401
      %v1529 = vpop.f32.mrb[0].mxu0
      %v1530 = vadd.f32 %v1489, %v1529
      %v1531 = vpop.f32.mrb[0].mxu0
      %v1532 = vpop.f32.mrb[0].mxu0
      %v1533 = vadd.f32 %v1492, %v1532
      %v1534 = vpop.f32.mrb[0].mxu0
      %1535 = vdwg.mxu0
      %1536 = vmatprep.subr.bf16.mxu0 0
      %1537 = vmatpush1.bf16.msra.mxu0 %v725
      %1538 = vmatprep.subr.bf16.mxu0 0
      %1539 = vmatpush1.bf16.msra.mxu0 %v726
      %1540 = vmatprep.subr.bf16.mxu0 0
      %1541 = vmatpush1.bf16.msra.mxu0 0
      %1542 = vmatprep.subr.bf16.mxu0 0
      %1543 = vmatpush1.bf16.msra.mxu0 0
      %1544 = vmatprep.subr.bf16.mxu0 0
      %1545 = vmatpush1.bf16.msra.mxu0 0
      %1546 = vmatprep.subr.bf16.mxu0 0
      %1547 = vmatpush1.bf16.msra.mxu0 0
      %1548 = vmatprep.subr.bf16.mxu0 0
      %1549 = vmatpush1.bf16.msra.mxu0 0
      %1550 = vmatprep.subr.bf16.mxu0 0
      %1551 = vmatpush1.bf16.msra.mxu0 0
      %1552 = vmatprep.subr.bf16.mxu0 0
      %1553 = vmatpush1.bf16.msra.mxu0 0
      %1554 = vmatprep.subr.bf16.mxu0 0
      %1555 = vmatpush1.bf16.msra.mxu0 0
      %1556 = vmatprep.subr.bf16.mxu0 0
      %1557 = vmatpush1.bf16.msra.mxu0 0
      %1558 = vmatprep.subr.bf16.mxu0 0
      %1559 = vmatpush1.bf16.msra.mxu0 0
      %1560 = vmatprep.subr.bf16.mxu0 0
      %1561 = vmatpush1.bf16.msra.mxu0 0
      %1562 = vmatprep.subr.bf16.mxu0 0
      %1563 = vmatpush1.bf16.msra.mxu0 0
      %1564 = vmatprep.subr.bf16.mxu0 0
      %1565 = vmatpush1.bf16.msra.mxu0 0
      %1566 = vmatprep.subr.bf16.mxu0 0
      %1567 = vmatpush1.bf16.msra.mxu0 0
      %1568 = vmatprep.mubr.bf16.mxu0 0
      %1569 = vmatmul.mubr.bf16.gmra.mrb[0].mxu0 %v1411
      %v1570 = vpop.f32.mrb[0].mxu0
      %v1571 = vadd.f32 %v1530, %v1570
      %v1572 = vpop.f32.mrb[0].mxu0
      %v1573 = vpop.f32.mrb[0].mxu0
      %v1574 = vadd.f32 %v1533, %v1573
      %v1575 = vpop.f32.mrb[0].mxu0
      %1576 = vdwg.mxu0
      %v1577 = vmax.f32 %v1361, %v1571
      %v1578 = vmax.f32 %v1364, %v1574
      %v1579 = vmax.f32 %v1155, %v1577
      %v1580 = vmax.f32 %v1156, %v1578
      %v1581 = vld [vmem:[%s5] sm:$0x1]
      %v1583 = vlaneseq
      %v1584 = vshrl.u32 %v1583, 7
      %v1585 = vsub.s32 0, %v1584
      %v1586 = vrot.slane %v1581, %v1585
      %v1588 = vadd.f32 %v1579, %v1586
      %v1589 = vadd.f32 %v1580, %v1586
      %v1590 = vmax.f32 %v1588, 0.0
      %v1591 = vmax.f32 %v1589, 0.0
      %v1592 = vpack.c.bf16 %v1591, %v1590
      %v1594 = vunpack.c.l.b16 %v1592
      %v1595 = vunpack.c.h.b16 %v1592
      %v1596 = vpack.c.b16 %v1594, %v1594
      %v1597 = vpack.c.b16 %v1595, %v1595
      %vm1600 = vcmask 519168
      %1601 = vst.msk [vmem:[%s331] sm:$0xf] %vm1600, %v1596
      %1602 = vst.msk [vmem:[%s331 + $0x4] sm:$0xf] %vm1600, %v1597
      %s1603 = smul.u32 2, %s17
      %p1604 = scmp.lt.s32.totalorder %s1603, 3
      %s1605 = scalar_select %p1604, %s1603, 3
      %s1606 = smul.addr %s1605, 4
      %s1607 = scalar_lea.vmem %s6, %s1606
      // Predicated region
      $region45: #{cnn_forward.4} parent=43 // pred_check
        %p1608 = pneg %p181
      $region46: #{cnn_forward.4} parent=43 // pred_check_branch
        %1610 = sbr.rel (%p1608) target = $region48
      $region47: #{cnn_forward.4} parent=43 // pred_region
        %s1611 = smul.u32 2, %s17
      $region48: #{cnn_forward.4} parent=43 // pred_fallthru
        _
    $region44: #{cnn_forward.4} parent=5 // pred_fallthru
      _
    %p1612 = scmp.le.s32.totalorder 2, %s12
    // Predicated region
    $region49: #{cnn_forward.4} parent=5 // pred_check
      %p1613 = pneg %p1612
    $region50: #{cnn_forward.4} parent=5 // pred_check_branch
      %1615 = sbr.rel (%p1613) target = $region52
    $region51: #{cnn_forward.4} parent=5 // pred_region
      %s1616 = ssub.s32 %s12, 2
      // Predicated region
      $region53: #{cnn_forward.4} parent=51 // pred_check
        %p1617 = pneg %p187
      $region54: #{cnn_forward.4} parent=51 // pred_check_branch
        %1619 = sbr.rel (%p1617) target = $region56
      $region55: #{cnn_forward.4} parent=51 // pred_region
        %s1620 = smul.u32 2, %s18
        %p1621 = scmp.lt.s32.totalorder %s1620, 3
        %s1622 = scalar_select %p1621, %s1620, 3
        %s1623 = smul.addr %s1622, 4
        %s1624 = scalar_lea.vmem %s6, %s1623
      $region56: #{cnn_forward.4} parent=51 // pred_fallthru
        _
    $region52: #{cnn_forward.4} parent=5 // pred_fallthru
      _
  $region6: #{cnn_forward.4} parent=0 // loop_footer
    %s16 = sadd.s32 1, %s12
  $region7: #{cnn_forward.4} parent=0 // loop_footer_branch
    %11 = sbr.rel target = $region3
  $region8: #{cnn_forward.4} parent=0 // loop_exit
    _

// kernel: cnn_forward.5
$region0: #{cnn_forward.5}
  #allocation0 [shape = 'u32[]', space=smem, size = 0x4, offset = 0x4, fixed_abs, tag = 'smem constant byte address 0x4 - core index']
  #allocation1 [shape = 'u32[144,128]{1,0:T(1,128)}', space=vmem, size = 0x12000, scoped, tag = 'internal scratch']
  %s0 = inlined_call_operand.vmem [shape: bf16[2,1024], index: 0, kind: input, shape index: {}]
  %s1 = inlined_call_operand.vmem [shape: bf16[1024,1024], index: 1, kind: input, shape index: {}]
  %s2 = inlined_call_operand.vmem [shape: f32[1,1024], index: 2, kind: input, shape index: {}]
  %s3 = inlined_call_operand.vmem [shape: bf16[1024,128], index: 3, kind: input, shape index: {}]
  %s4 = inlined_call_operand.vmem [shape: f32[1,128], index: 4, kind: input, shape index: {}]
  %s5 = inlined_call_operand.hbm [shape: f32[2,128], index: 5, kind: output, shape index: {}]
  %s6 = sld [smem:[#allocation0]]
  $region30: #{cnn_forward.5} parent=0
    _
  %s8 = ssub.s32 1, %s6
  %s9 = scalar_select 0, %s8, %s6
  $region1: #{cnn_forward.5} parent=0
    #allocation2 [shape = 'u8[1024]{0}', space=vmem, size = 0x400, scoped, tag = 'output window, operand 0, single buffered']
    #allocation3 [shape = 's32[1]{0}', space=sflag, size = 0x4, scoped, tag = 'scoped memory for cnn_forward.5']
    %10 = vsyncpa [#allocation3], 0
    // Predicated region
    $region2: #{cnn_forward.5} parent=1 // pred_check
      _
    $region3: #{cnn_forward.5} parent=1 // pred_check_branch
      %12 = sbr.rel (0) target = $region5
    $region4: #{cnn_forward.5} parent=1 // pred_region
      _
    $region5: #{cnn_forward.5} parent=1 // pred_fallthru
      _
    // Predicated region
    $region6: #{cnn_forward.5} parent=1 // pred_check
      _
    $region7: #{cnn_forward.5} parent=1 // pred_check_branch
      %14 = sbr.rel (0) target = $region9
    $region8: #{cnn_forward.5} parent=1 // pred_region
      _
    $region9: #{cnn_forward.5} parent=1 // pred_fallthru
      _
    // Predicated region
    $region10: #{cnn_forward.5} parent=1 // pred_check
      _
    $region11: #{cnn_forward.5} parent=1 // pred_check_branch
      %16 = sbr.rel (0) target = $region13
    $region12: #{cnn_forward.5} parent=1 // pred_region
      _
    $region13: #{cnn_forward.5} parent=1 // pred_fallthru
      _
    // Predicated region
    $region14: #{cnn_forward.5} parent=1 // pred_check
      _
    $region15: #{cnn_forward.5} parent=1 // pred_check_branch
      %18 = sbr.rel (0) target = $region17
    $region16: #{cnn_forward.5} parent=1 // pred_region
      _
    $region17: #{cnn_forward.5} parent=1 // pred_fallthru
      _
    // Predicated region
    $region18: #{cnn_forward.5} parent=1 // pred_check
      _
    $region19: #{cnn_forward.5} parent=1 // pred_check_branch
      %20 = sbr.rel (0) target = $region21
    $region20: #{cnn_forward.5} parent=1 // pred_region
      _
    $region21: #{cnn_forward.5} parent=1 // pred_fallthru
      _
    %v22 = vld [vmem:[%s0] sm:$0xff]
    %v23 = vld [vmem:[%s1] sm:$0xff]
    %v24 = vld [vmem:[%s1 + $0x8] sm:$0xff]
    %v25 = vld [vmem:[%s1 + $0x10] sm:$0xff]
    %v26 = vld [vmem:[%s1 + $0x18] sm:$0xff]
    %v27 = vld [vmem:[%s1 + $0x20] sm:$0xff]
    %v28 = vld [vmem:[%s1 + $0x28] sm:$0xff]
    %v29 = vld [vmem:[%s1 + $0x30] sm:$0xff]
    %v30 = vld [vmem:[%s1 + $0x38] sm:$0xff]
    %v31 = vld [vmem:[%s1 + $0x40] sm:$0xff]
    %v32 = vld [vmem:[%s1 + $0x48] sm:$0xff]
    %v33 = vld [vmem:[%s1 + $0x50] sm:$0xff]
    %v34 = vld [vmem:[%s1 + $0x58] sm:$0xff]
    %v35 = vld [vmem:[%s1 + $0x60] sm:$0xff]
    %v36 = vld [vmem:[%s1 + $0x68] sm:$0xff]
    %v37 = vld [vmem:[%s1 + $0x70] sm:$0xff]
    %v38 = vld [vmem:[%s1 + $0x78] sm:$0xff]
    %v39 = vld [vmem:[%s1 + $0x80] sm:$0xff]
    %v40 = vld [vmem:[%s1 + $0x88] sm:$0xff]
    %v41 = vld [vmem:[%s1 + $0x90] sm:$0xff]
    %v42 = vld [vmem:[%s1 + $0x98] sm:$0xff]
    %v43 = vld [vmem:[%s1 + $0xa0] sm:$0xff]
    %v44 = vld [vmem:[%s1 + $0xa8] sm:$0xff]
    %v45 = vld [vmem:[%s1 + $0xb0] sm:$0xff]
    %v46 = vld [vmem:[%s1 + $0xb8] sm:$0xff]
    %v47 = vld [vmem:[%s1 + $0xc0] sm:$0xff]
    %v48 = vld [vmem:[%s1 + $0xc8] sm:$0xff]
    %v49 = vld [vmem:[%s1 + $0xd0] sm:$0xff]
    %v50 = vld [vmem:[%s1 + $0xd8] sm:$0xff]
    %v51 = vld [vmem:[%s1 + $0xe0] sm:$0xff]
    %v52 = vld [vmem:[%s1 + $0xe8] sm:$0xff]
    %v53 = vld [vmem:[%s1 + $0xf0] sm:$0xff]
    %v54 = vld [vmem:[%s1 + $0xf8] sm:$0xff]
    %v55 = vld [vmem:[%s1 + $0x100] sm:$0xff]
    %v56 = vld [vmem:[%s1 + $0x108] sm:$0xff]
    %v57 = vld [vmem:[%s1 + $0x110] sm:$0xff]
    %v58 = vld [vmem:[%s1 + $0x118] sm:$0xff]
    %v59 = vld [vmem:[%s1 + $0x120] sm:$0xff]
    %v60 = vld [vmem:[%s1 + $0x128] sm:$0xff]
    %v61 = vld [vmem:[%s1 + $0x130] sm:$0xff]
    %v62 = vld [vmem:[%s1 + $0x138] sm:$0xff]
    %v63 = vld [vmem:[%s1 + $0x140] sm:$0xff]
    %v64 = vld [vmem:[%s1 + $0x148] sm:$0xff]
    %v65 = vld [vmem:[%s1 + $0x150] sm:$0xff]
    %v66 = vld [vmem:[%s1 + $0x158] sm:$0xff]
    %v67 = vld [vmem:[%s1 + $0x160] sm:$0xff]
    %v68 = vld [vmem:[%s1 + $0x168] sm:$0xff]
    %v69 = vld [vmem:[%s1 + $0x170] sm:$0xff]
    %v70 = vld [vmem:[%s1 + $0x178] sm:$0xff]
    %v71 = vld [vmem:[%s1 + $0x180] sm:$0xff]
    %v72 = vld [vmem:[%s1 + $0x188] sm:$0xff]
    %v73 = vld [vmem:[%s1 + $0x190] sm:$0xff]
    %v74 = vld [vmem:[%s1 + $0x198] sm:$0xff]
    %v75 = vld [vmem:[%s1 + $0x1a0] sm:$0xff]
    %v76 = vld [vmem:[%s1 + $0x1a8] sm:$0xff]
    %v77 = vld [vmem:[%s1 + $0x1b0] sm:$0xff]
    %v78 = vld [vmem:[%s1 + $0x1b8] sm:$0xff]
    %v79 = vld [vmem:[%s1 + $0x1c0] sm:$0xff]
    %v80 = vld [vmem:[%s1 + $0x1c8] sm:$0xff]
    %v81 = vld [vmem:[%s1 + $0x1d0] sm:$0xff]
    %v82 = vld [vmem:[%s1 + $0x1d8] sm:$0xff]
    %v83 = vld [vmem:[%s1 + $0x1e0] sm:$0xff]
    %v84 = vld [vmem:[%s1 + $0x1e8] sm:$0xff]
    %v85 = vld [vmem:[%s1 + $0x1f0] sm:$0xff]
    %v86 = vld [vmem:[%s1 + $0x1f8] sm:$0xff]
    %v87 = vld [vmem:[%s1 + $0x200] sm:$0xff]
    %v88 = vld [vmem:[%s1 + $0x208] sm:$0xff]
    %v89 = vld [vmem:[%s1 + $0x210] sm:$0xff]
    %v90 = vld [vmem:[%s1 + $0x218] sm:$0xff]
    %v91 = vld [vmem:[%s1 + $0x220] sm:$0xff]
    %v92 = vld [vmem:[%s1 + $0x228] sm:$0xff]
    %v93 = vld [vmem:[%s1 + $0x230] sm:$0xff]
    %v94 = vld [vmem:[%s1 + $0x238] sm:$0xff]
    %v95 = vld [vmem:[%s1 + $0x240] sm:$0xff]
    %v96 = vld [vmem:[%s1 + $0x248] sm:$0xff]
    %v97 = vld [vmem:[%s1 + $0x250] sm:$0xff]
    %v98 = vld [vmem:[%s1 + $0x258] sm:$0xff]
    %v99 = vld [vmem:[%s1 + $0x260] sm:$0xff]
    %v100 = vld [vmem:[%s1 + $0x268] sm:$0xff]
    %v101 = vld [vmem:[%s1 + $0x270] sm:$0xff]
    %v102 = vld [vmem:[%s1 + $0x278] sm:$0xff]
    %v103 = vld [vmem:[%s1 + $0x280] sm:$0xff]
    %v104 = vld [vmem:[%s1 + $0x288] sm:$0xff]
    %v105 = vld [vmem:[%s1 + $0x290] sm:$0xff]
    %v106 = vld [vmem:[%s1 + $0x298] sm:$0xff]
    %v107 = vld [vmem:[%s1 + $0x2a0] sm:$0xff]
    %v108 = vld [vmem:[%s1 + $0x2a8] sm:$0xff]
    %v109 = vld [vmem:[%s1 + $0x2b0] sm:$0xff]
    %v110 = vld [vmem:[%s1 + $0x2b8] sm:$0xff]
    %v111 = vld [vmem:[%s1 + $0x2c0] sm:$0xff]
    %v112 = vld [vmem:[%s1 + $0x2c8] sm:$0xff]
    %v113 = vld [vmem:[%s1 + $0x2d0] sm:$0xff]
    %v114 = vld [vmem:[%s1 + $0x2d8] sm:$0xff]
    %v115 = vld [vmem:[%s1 + $0x2e0] sm:$0xff]
    %v116 = vld [vmem:[%s1 + $0x2e8] sm:$0xff]
    %v117 = vld [vmem:[%s1 + $0x2f0] sm:$0xff]
    %v118 = vld [vmem:[%s1 + $0x2f8] sm:$0xff]
    %v119 = vld [vmem:[%s1 + $0x300] sm:$0xff]
    %v120 = vld [vmem:[%s1 + $0x308] sm:$0xff]
    %v121 = vld [vmem:[%s1 + $0x310] sm:$0xff]
    %v122 = vld [vmem:[%s1 + $0x318] sm:$0xff]
    %v123 = vld [vmem:[%s1 + $0x320] sm:$0xff]
    %v124 = vld [vmem:[%s1 + $0x328] sm:$0xff]
    %v125 = vld [vmem:[%s1 + $0x330] sm:$0xff]
    %v126 = vld [vmem:[%s1 + $0x338] sm:$0xff]
    %v127 = vld [vmem:[%s1 + $0x340] sm:$0xff]
    %v128 = vld [vmem:[%s1 + $0x348] sm:$0xff]
    %v129 = vld [vmem:[%s1 + $0x350] sm:$0xff]
    %v130 = vld [vmem:[%s1 + $0x358] sm:$0xff]
    %v131 = vld [vmem:[%s1 + $0x360] sm:$0xff]
    %v132 = vld [vmem:[%s1 + $0x368] sm:$0xff]
    %v133 = vld [vmem:[%s1 + $0x370] sm:$0xff]
    %v134 = vld [vmem:[%s1 + $0x378] sm:$0xff]
    %v135 = vld [vmem:[%s1 + $0x380] sm:$0xff]
    %v136 = vld [vmem:[%s1 + $0x388] sm:$0xff]
    %v137 = vld [vmem:[%s1 + $0x390] sm:$0xff]
    %v138 = vld [vmem:[%s1 + $0x398] sm:$0xff]
    %v139 = vld [vmem:[%s1 + $0x3a0] sm:$0xff]
    %v140 = vld [vmem:[%s1 + $0x3a8] sm:$0xff]
    %v141 = vld [vmem:[%s1 + $0x3b0] sm:$0xff]
    %v142 = vld [vmem:[%s1 + $0x3b8] sm:$0xff]
    %v143 = vld [vmem:[%s1 + $0x3c0] sm:$0xff]
    %v144 = vld [vmem:[%s1 + $0x3c8] sm:$0xff]
    %v145 = vld [vmem:[%s1 + $0x3d0] sm:$0xff]
    %v146 = vld [vmem:[%s1 + $0x3d8] sm:$0xff]
    %v147 = vld [vmem:[%s1 + $0x3e0] sm:$0xff]
    %v148 = vld [vmem:[%s1 + $0x3e8] sm:$0xff]
    %v149 = vld [vmem:[%s1 + $0x3f0] sm:$0xff]
    %v150 = vld [vmem:[%s1 + $0x3f8] sm:$0xff]
    %v151 = vld [vmem:[%s1 + $0x400] sm:$0xff]
    %v152 = vld [vmem:[%s1 + $0x408] sm:$0xff]
    %v153 = vld [vmem:[%s1 + $0x410] sm:$0xff]
    %v154 = vld [vmem:[%s1 + $0x418] sm:$0xff]
    %v155 = vld [vmem:[%s1 + $0x420] sm:$0xff]
    %v156 = vld [vmem:[%s1 + $0x428] sm:$0xff]
    %v157 = vld [vmem:[%s1 + $0x430] sm:$0xff]
    %v158 = vld [vmem:[%s1 + $0x438] sm:$0xff]
    %v159 = vld [vmem:[%s1 + $0x440] sm:$0xff]
    %v160 = vld [vmem:[%s1 + $0x448] sm:$0xff]
    %v161 = vld [vmem:[%s1 + $0x450] sm:$0xff]
    %v162 = vld [vmem:[%s1 + $0x458] sm:$0xff]
    %v163 = vld [vmem:[%s1 + $0x460] sm:$0xff]
    %v164 = vld [vmem:[%s1 + $0x468] sm:$0xff]
    %v165 = vld [vmem:[%s1 + $0x470] sm:$0xff]
    %v166 = vld [vmem:[%s1 + $0x478] sm:$0xff]
    %v167 = vld [vmem:[%s1 + $0x480] sm:$0xff]
    %v168 = vld [vmem:[%s1 + $0x488] sm:$0xff]
    %v169 = vld [vmem:[%s1 + $0x490] sm:$0xff]
    %v170 = vld [vmem:[%s1 + $0x498] sm:$0xff]
    %v171 = vld [vmem:[%s1 + $0x4a0] sm:$0xff]
    %v172 = vld [vmem:[%s1 + $0x4a8] sm:$0xff]
    %v173 = vld [vmem:[%s1 + $0x4b0] sm:$0xff]
    %v174 = vld [vmem:[%s1 + $0x4b8] sm:$0xff]
    %v175 = vld [vmem:[%s1 + $0x4c0] sm:$0xff]
    %v176 = vld [vmem:[%s1 + $0x4c8] sm:$0xff]
    %v177 = vld [vmem:[%s1 + $0x4d0] sm:$0xff]
    %v178 = vld [vmem:[%s1 + $0x4d8] sm:$0xff]
    %v179 = vld [vmem:[%s1 + $0x4e0] sm:$0xff]
    %v180 = vld [vmem:[%s1 + $0x4e8] sm:$0xff]
    %v181 = vld [vmem:[%s1 + $0x4f0] sm:$0xff]
    %v182 = vld [vmem:[%s1 + $0x4f8] sm:$0xff]
    %v183 = vld [vmem:[%s1 + $0x500] sm:$0xff]
    %v184 = vld [vmem:[%s1 + $0x508] sm:$0xff]
    %v185 = vld [vmem:[%s1 + $0x510] sm:$0xff]
    %v186 = vld [vmem:[%s1 + $0x518] sm:$0xff]
    %v187 = vld [vmem:[%s1 + $0x520] sm:$0xff]
    %v188 = vld [vmem:[%s1 + $0x528] sm:$0xff]
    %v189 = vld [vmem:[%s1 + $0x530] sm:$0xff]
    %v190 = vld [vmem:[%s1 + $0x538] sm:$0xff]
    %v191 = vld [vmem:[%s1 + $0x540] sm:$0xff]
    %v192 = vld [vmem:[%s1 + $0x548] sm:$0xff]
    %v193 = vld [vmem:[%s1 + $0x550] sm:$0xff]
    %v194 = vld [vmem:[%s1 + $0x558] sm:$0xff]
    %v195 = vld [vmem:[%s1 + $0x560] sm:$0xff]
    %v196 = vld [vmem:[%s1 + $0x568] sm:$0xff]
    %v197 = vld [vmem:[%s1 + $0x570] sm:$0xff]
    %v198 = vld [vmem:[%s1 + $0x578] sm:$0xff]
    %v199 = vld [vmem:[%s1 + $0x580] sm:$0xff]
    %v200 = vld [vmem:[%s1 + $0x588] sm:$0xff]
    %v201 = vld [vmem:[%s1 + $0x590] sm:$0xff]
    %v202 = vld [vmem:[%s1 + $0x598] sm:$0xff]
    %v203 = vld [vmem:[%s1 + $0x5a0] sm:$0xff]
    %v204 = vld [vmem:[%s1 + $0x5a8] sm:$0xff]
    %v205 = vld [vmem:[%s1 + $0x5b0] sm:$0xff]
    %v206 = vld [vmem:[%s1 + $0x5b8] sm:$0xff]
    %v207 = vld [vmem:[%s1 + $0x5c0] sm:$0xff]
    %v208 = vld [vmem:[%s1 + $0x5c8] sm:$0xff]
    %v209 = vld [vmem:[%s1 + $0x5d0] sm:$0xff]
    %v210 = vld [vmem:[%s1 + $0x5d8] sm:$0xff]
    %v211 = vld [vmem:[%s1 + $0x5e0] sm:$0xff]
    %v212 = vld [vmem:[%s1 + $0x5e8] sm:$0xff]
    %v213 = vld [vmem:[%s1 + $0x5f0] sm:$0xff]
    %v214 = vld [vmem:[%s1 + $0x5f8] sm:$0xff]
    %v215 = vld [vmem:[%s1 + $0x600] sm:$0xff]
    %v216 = vld [vmem:[%s1 + $0x608] sm:$0xff]
    %v217 = vld [vmem:[%s1 + $0x610] sm:$0xff]
    %v218 = vld [vmem:[%s1 + $0x618] sm:$0xff]
    %v219 = vld [vmem:[%s1 + $0x620] sm:$0xff]
    %v220 = vld [vmem:[%s1 + $0x628] sm:$0xff]
    %v221 = vld [vmem:[%s1 + $0x630] sm:$0xff]
    %v222 = vld [vmem:[%s1 + $0x638] sm:$0xff]
    %v223 = vld [vmem:[%s1 + $0x640] sm:$0xff]
    %v224 = vld [vmem:[%s1 + $0x648] sm:$0xff]
    %v225 = vld [vmem:[%s1 + $0x650] sm:$0xff]
    %v226 = vld [vmem:[%s1 + $0x658] sm:$0xff]
    %v227 = vld [vmem:[%s1 + $0x660] sm:$0xff]
    %v228 = vld [vmem:[%s1 + $0x668] sm:$0xff]
    %v229 = vld [vmem:[%s1 + $0x670] sm:$0xff]
    %v230 = vld [vmem:[%s1 + $0x678] sm:$0xff]
    %v231 = vld [vmem:[%s1 + $0x680] sm:$0xff]
    %v232 = vld [vmem:[%s1 + $0x688] sm:$0xff]
    %v233 = vld [vmem:[%s1 + $0x690] sm:$0xff]
    %v234 = vld [vmem:[%s1 + $0x698] sm:$0xff]
    %v235 = vld [vmem:[%s1 + $0x6a0] sm:$0xff]
    %v236 = vld [vmem:[%s1 + $0x6a8] sm:$0xff]
    %v237 = vld [vmem:[%s1 + $0x6b0] sm:$0xff]
    %v238 = vld [vmem:[%s1 + $0x6b8] sm:$0xff]
    %v239 = vld [vmem:[%s1 + $0x6c0] sm:$0xff]
    %v240 = vld [vmem:[%s1 + $0x6c8] sm:$0xff]
    %v241 = vld [vmem:[%s1 + $0x6d0] sm:$0xff]
    %v242 = vld [vmem:[%s1 + $0x6d8] sm:$0xff]
    %v243 = vld [vmem:[%s1 + $0x6e0] sm:$0xff]
    %v244 = vld [vmem:[%s1 + $0x6e8] sm:$0xff]
    %v245 = vld [vmem:[%s1 + $0x6f0] sm:$0xff]
    %v246 = vld [vmem:[%s1 + $0x6f8] sm:$0xff]
    %v247 = vld [vmem:[%s1 + $0x700] sm:$0xff]
    %v248 = vld [vmem:[%s1 + $0x708] sm:$0xff]
    %v249 = vld [vmem:[%s1 + $0x710] sm:$0xff]
    %v250 = vld [vmem:[%s1 + $0x718] sm:$0xff]
    %v251 = vld [vmem:[%s1 + $0x720] sm:$0xff]
    %v252 = vld [vmem:[%s1 + $0x728] sm:$0xff]
    %v253 = vld [vmem:[%s1 + $0x730] sm:$0xff]
    %v254 = vld [vmem:[%s1 + $0x738] sm:$0xff]
    %v255 = vld [vmem:[%s1 + $0x740] sm:$0xff]
    %v256 = vld [vmem:[%s1 + $0x748] sm:$0xff]
    %v257 = vld [vmem:[%s1 + $0x750] sm:$0xff]
    %v258 = vld [vmem:[%s1 + $0x758] sm:$0xff]
    %v259 = vld [vmem:[%s1 + $0x760] sm:$0xff]
    %v260 = vld [vmem:[%s1 + $0x768] sm:$0xff]
    %v261 = vld [vmem:[%s1 + $0x770] sm:$0xff]
    %v262 = vld [vmem:[%s1 + $0x778] sm:$0xff]
    %v263 = vld [vmem:[%s1 + $0x780] sm:$0xff]
    %v264 = vld [vmem:[%s1 + $0x788] sm:$0xff]
    %v265 = vld [vmem:[%s1 + $0x790] sm:$0xff]
    %v266 = vld [vmem:[%s1 + $0x798] sm:$0xff]
    %v267 = vld [vmem:[%s1 + $0x7a0] sm:$0xff]
    %v268 = vld [vmem:[%s1 + $0x7a8] sm:$0xff]
    %v269 = vld [vmem:[%s1 + $0x7b0] sm:$0xff]
    %v270 = vld [vmem:[%s1 + $0x7b8] sm:$0xff]
    %v271 = vld [vmem:[%s1 + $0x7c0] sm:$0xff]
    %v272 = vld [vmem:[%s1 + $0x7c8] sm:$0xff]
    %v273 = vld [vmem:[%s1 + $0x7d0] sm:$0xff]
    %v274 = vld [vmem:[%s1 + $0x7d8] sm:$0xff]
    %v275 = vld [vmem:[%s1 + $0x7e0] sm:$0xff]
    %v276 = vld [vmem:[%s1 + $0x7e8] sm:$0xff]
    %v277 = vld [vmem:[%s1 + $0x7f0] sm:$0xff]
    %v278 = vld [vmem:[%s1 + $0x7f8] sm:$0xff]
    %v279 = vld [vmem:[%s1 + $0x800] sm:$0xff]
    %v280 = vld [vmem:[%s1 + $0x808] sm:$0xff]
    %v281 = vld [vmem:[%s1 + $0x810] sm:$0xff]
    %v282 = vld [vmem:[%s1 + $0x818] sm:$0xff]
    %v283 = vld [vmem:[%s1 + $0x820] sm:$0xff]
    %v284 = vld [vmem:[%s1 + $0x828] sm:$0xff]
    %v285 = vld [vmem:[%s1 + $0x830] sm:$0xff]
    %v286 = vld [vmem:[%s1 + $0x838] sm:$0xff]
    %v287 = vld [vmem:[%s1 + $0x840] sm:$0xff]
    %v288 = vld [vmem:[%s1 + $0x848] sm:$0xff]
    %v289 = vld [vmem:[%s1 + $0x850] sm:$0xff]
    %v290 = vld [vmem:[%s1 + $0x858] sm:$0xff]
    %v291 = vld [vmem:[%s1 + $0x860] sm:$0xff]
    %v292 = vld [vmem:[%s1 + $0x868] sm:$0xff]
    %v293 = vld [vmem:[%s1 + $0x870] sm:$0xff]
    %v294 = vld [vmem:[%s1 + $0x878] sm:$0xff]
    %v295 = vld [vmem:[%s1 + $0x880] sm:$0xff]
    %v296 = vld [vmem:[%s1 + $0x888] sm:$0xff]
    %v297 = vld [vmem:[%s1 + $0x890] sm:$0xff]
    %v298 = vld [vmem:[%s1 + $0x898] sm:$0xff]
    %v299 = vld [vmem:[%s1 + $0x8a0] sm:$0xff]
    %v300 = vld [vmem:[%s1 + $0x8a8] sm:$0xff]
    %v301 = vld [vmem:[%s1 + $0x8b0] sm:$0xff]
    %v302 = vld [vmem:[%s1 + $0x8b8] sm:$0xff]
    %v303 = vld [vmem:[%s1 + $0x8c0] sm:$0xff]
    %v304 = vld [vmem:[%s1 + $0x8c8] sm:$0xff]
    %v305 = vld [vmem:[%s1 + $0x8d0] sm:$0xff]
    %v306 = vld [vmem:[%s1 + $0x8d8] sm:$0xff]
    %v307 = vld [vmem:[%s1 + $0x8e0] sm:$0xff]
    %v308 = vld [vmem:[%s1 + $0x8e8] sm:$0xff]
    %v309 = vld [vmem:[%s1 + $0x8f0] sm:$0xff]
    %v310 = vld [vmem:[%s1 + $0x8f8] sm:$0xff]
    %v311 = vld [vmem:[%s1 + $0x900] sm:$0xff]
    %v312 = vld [vmem:[%s1 + $0x908] sm:$0xff]
    %v313 = vld [vmem:[%s1 + $0x910] sm:$0xff]
    %v314 = vld [vmem:[%s1 + $0x918] sm:$0xff]
    %v315 = vld [vmem:[%s1 + $0x920] sm:$0xff]
    %v316 = vld [vmem:[%s1 + $0x928] sm:$0xff]
    %v317 = vld [vmem:[%s1 + $0x930] sm:$0xff]
    %v318 = vld [vmem:[%s1 + $0x938] sm:$0xff]
    %v319 = vld [vmem:[%s1 + $0x940] sm:$0xff]
    %v320 = vld [vmem:[%s1 + $0x948] sm:$0xff]
    %v321 = vld [vmem:[%s1 + $0x950] sm:$0xff]
    %v322 = vld [vmem:[%s1 + $0x958] sm:$0xff]
    %v323 = vld [vmem:[%s1 + $0x960] sm:$0xff]
    %v324 = vld [vmem:[%s1 + $0x968] sm:$0xff]
    %v325 = vld [vmem:[%s1 + $0x970] sm:$0xff]
    %v326 = vld [vmem:[%s1 + $0x978] sm:$0xff]
    %v327 = vld [vmem:[%s1 + $0x980] sm:$0xff]
    %v328 = vld [vmem:[%s1 + $0x988] sm:$0xff]
    %v329 = vld [vmem:[%s1 + $0x990] sm:$0xff]
    %v330 = vld [vmem:[%s1 + $0x998] sm:$0xff]
    %v331 = vld [vmem:[%s1 + $0x9a0] sm:$0xff]
    %v332 = vld [vmem:[%s1 + $0x9a8] sm:$0xff]
    %v333 = vld [vmem:[%s1 + $0x9b0] sm:$0xff]
    %v334 = vld [vmem:[%s1 + $0x9b8] sm:$0xff]
    %v335 = vld [vmem:[%s1 + $0x9c0] sm:$0xff]
    %v336 = vld [vmem:[%s1 + $0x9c8] sm:$0xff]
    %v337 = vld [vmem:[%s1 + $0x9d0] sm:$0xff]
    %v338 = vld [vmem:[%s1 + $0x9d8] sm:$0xff]
    %v339 = vld [vmem:[%s1 + $0x9e0] sm:$0xff]
    %v340 = vld [vmem:[%s1 + $0x9e8] sm:$0xff]
    %v341 = vld [vmem:[%s1 + $0x9f0] sm:$0xff]
    %v342 = vld [vmem:[%s1 + $0x9f8] sm:$0xff]
    %v343 = vld [vmem:[%s1 + $0xa00] sm:$0xff]
    %v344 = vld [vmem:[%s1 + $0xa08] sm:$0xff]
    %v345 = vld [vmem:[%s1 + $0xa10] sm:$0xff]
    %v346 = vld [vmem:[%s1 + $0xa18] sm:$0xff]
    %v347 = vld [vmem:[%s1 + $0xa20] sm:$0xff]
    %v348 = vld [vmem:[%s1 + $0xa28] sm:$0xff]
    %v349 = vld [vmem:[%s1 + $0xa30] sm:$0xff]
    %v350 = vld [vmem:[%s1 + $0xa38] sm:$0xff]
    %v351 = vld [vmem:[%s1 + $0xa40] sm:$0xff]
    %v352 = vld [vmem:[%s1 + $0xa48] sm:$0xff]
    %v353 = vld [vmem:[%s1 + $0xa50] sm:$0xff]
    %v354 = vld [vmem:[%s1 + $0xa58] sm:$0xff]
    %v355 = vld [vmem:[%s1 + $0xa60] sm:$0xff]
    %v356 = vld [vmem:[%s1 + $0xa68] sm:$0xff]
    %v357 = vld [vmem:[%s1 + $0xa70] sm:$0xff]
    %v358 = vld [vmem:[%s1 + $0xa78] sm:$0xff]
    %v359 = vld [vmem:[%s1 + $0xa80] sm:$0xff]
    %v360 = vld [vmem:[%s1 + $0xa88] sm:$0xff]
    %v361 = vld [vmem:[%s1 + $0xa90] sm:$0xff]
    %v362 = vld [vmem:[%s1 + $0xa98] sm:$0xff]
    %v363 = vld [vmem:[%s1 + $0xaa0] sm:$0xff]
    %v364 = vld [vmem:[%s1 + $0xaa8] sm:$0xff]
    %v365 = vld [vmem:[%s1 + $0xab0] sm:$0xff]
    %v366 = vld [vmem:[%s1 + $0xab8] sm:$0xff]
    %v367 = vld [vmem:[%s1 + $0xac0] sm:$0xff]
    %v368 = vld [vmem:[%s1 + $0xac8] sm:$0xff]
    %v369 = vld [vmem:[%s1 + $0xad0] sm:$0xff]
    %v370 = vld [vmem:[%s1 + $0xad8] sm:$0xff]
    %v371 = vld [vmem:[%s1 + $0xae0] sm:$0xff]
    %v372 = vld [vmem:[%s1 + $0xae8] sm:$0xff]
    %v373 = vld [vmem:[%s1 + $0xaf0] sm:$0xff]
    %v374 = vld [vmem:[%s1 + $0xaf8] sm:$0xff]
    %v375 = vld [vmem:[%s1 + $0xb00] sm:$0xff]
    %v376 = vld [vmem:[%s1 + $0xb08] sm:$0xff]
    %v377 = vld [vmem:[%s1 + $0xb10] sm:$0xff]
    %v378 = vld [vmem:[%s1 + $0xb18] sm:$0xff]
    %v379 = vld [vmem:[%s1 + $0xb20] sm:$0xff]
    %v380 = vld [vmem:[%s1 + $0xb28] sm:$0xff]
    %v381 = vld [vmem:[%s1 + $0xb30] sm:$0xff]
    %v382 = vld [vmem:[%s1 + $0xb38] sm:$0xff]
    %v383 = vld [vmem:[%s1 + $0xb40] sm:$0xff]
    %v384 = vld [vmem:[%s1 + $0xb48] sm:$0xff]
    %v385 = vld [vmem:[%s1 + $0xb50] sm:$0xff]
    %v386 = vld [vmem:[%s1 + $0xb58] sm:$0xff]
    %v387 = vld [vmem:[%s1 + $0xb60] sm:$0xff]
    %v388 = vld [vmem:[%s1 + $0xb68] sm:$0xff]
    %v389 = vld [vmem:[%s1 + $0xb70] sm:$0xff]
    %v390 = vld [vmem:[%s1 + $0xb78] sm:$0xff]
    %v391 = vld [vmem:[%s1 + $0xb80] sm:$0xff]
    %v392 = vld [vmem:[%s1 + $0xb88] sm:$0xff]
    %v393 = vld [vmem:[%s1 + $0xb90] sm:$0xff]
    %v394 = vld [vmem:[%s1 + $0xb98] sm:$0xff]
    %v395 = vld [vmem:[%s1 + $0xba0] sm:$0xff]
    %v396 = vld [vmem:[%s1 + $0xba8] sm:$0xff]
    %v397 = vld [vmem:[%s1 + $0xbb0] sm:$0xff]
    %v398 = vld [vmem:[%s1 + $0xbb8] sm:$0xff]
    %v399 = vld [vmem:[%s1 + $0xbc0] sm:$0xff]
    %v400 = vld [vmem:[%s1 + $0xbc8] sm:$0xff]
    %v401 = vld [vmem:[%s1 + $0xbd0] sm:$0xff]
    %v402 = vld [vmem:[%s1 + $0xbd8] sm:$0xff]
    %v403 = vld [vmem:[%s1 + $0xbe0] sm:$0xff]
    %v404 = vld [vmem:[%s1 + $0xbe8] sm:$0xff]
    %v405 = vld [vmem:[%s1 + $0xbf0] sm:$0xff]
    %v406 = vld [vmem:[%s1 + $0xbf8] sm:$0xff]
    %v407 = vld [vmem:[%s1 + $0xc00] sm:$0xff]
    %v408 = vld [vmem:[%s1 + $0xc08] sm:$0xff]
    %v409 = vld [vmem:[%s1 + $0xc10] sm:$0xff]
    %v410 = vld [vmem:[%s1 + $0xc18] sm:$0xff]
    %v411 = vld [vmem:[%s1 + $0xc20] sm:$0xff]
    %v412 = vld [vmem:[%s1 + $0xc28] sm:$0xff]
    %v413 = vld [vmem:[%s1 + $0xc30] sm:$0xff]
    %v414 = vld [vmem:[%s1 + $0xc38] sm:$0xff]
    %v415 = vld [vmem:[%s1 + $0xc40] sm:$0xff]
    %v416 = vld [vmem:[%s1 + $0xc48] sm:$0xff]
    %v417 = vld [vmem:[%s1 + $0xc50] sm:$0xff]
    %v418 = vld [vmem:[%s1 + $0xc58] sm:$0xff]
    %v419 = vld [vmem:[%s1 + $0xc60] sm:$0xff]
    %v420 = vld [vmem:[%s1 + $0xc68] sm:$0xff]
    %v421 = vld [vmem:[%s1 + $0xc70] sm:$0xff]
    %v422 = vld [vmem:[%s1 + $0xc78] sm:$0xff]
    %v423 = vld [vmem:[%s1 + $0xc80] sm:$0xff]
    %v424 = vld [vmem:[%s1 + $0xc88] sm:$0xff]
    %v425 = vld [vmem:[%s1 + $0xc90] sm:$0xff]
    %v426 = vld [vmem:[%s1 + $0xc98] sm:$0xff]
    %v427 = vld [vmem:[%s1 + $0xca0] sm:$0xff]
    %v428 = vld [vmem:[%s1 + $0xca8] sm:$0xff]
    %v429 = vld [vmem:[%s1 + $0xcb0] sm:$0xff]
    %v430 = vld [vmem:[%s1 + $0xcb8] sm:$0xff]
    %v431 = vld [vmem:[%s1 + $0xcc0] sm:$0xff]
    %v432 = vld [vmem:[%s1 + $0xcc8] sm:$0xff]
    %v433 = vld [vmem:[%s1 + $0xcd0] sm:$0xff]
    %v434 = vld [vmem:[%s1 + $0xcd8] sm:$0xff]
    %v435 = vld [vmem:[%s1 + $0xce0] sm:$0xff]
    %v436 = vld [vmem:[%s1 + $0xce8] sm:$0xff]
    %v437 = vld [vmem:[%s1 + $0xcf0] sm:$0xff]
    %v438 = vld [vmem:[%s1 + $0xcf8] sm:$0xff]
    %v439 = vld [vmem:[%s1 + $0xd00] sm:$0xff]
    %v440 = vld [vmem:[%s1 + $0xd08] sm:$0xff]
    %v441 = vld [vmem:[%s1 + $0xd10] sm:$0xff]
    %v442 = vld [vmem:[%s1 + $0xd18] sm:$0xff]
    %v443 = vld [vmem:[%s1 + $0xd20] sm:$0xff]
    %v444 = vld [vmem:[%s1 + $0xd28] sm:$0xff]
    %v445 = vld [vmem:[%s1 + $0xd30] sm:$0xff]
    %v446 = vld [vmem:[%s1 + $0xd38] sm:$0xff]
    %v447 = vld [vmem:[%s1 + $0xd40] sm:$0xff]
    %v448 = vld [vmem:[%s1 + $0xd48] sm:$0xff]
    %v449 = vld [vmem:[%s1 + $0xd50] sm:$0xff]
    %v450 = vld [vmem:[%s1 + $0xd58] sm:$0xff]
    %v451 = vld [vmem:[%s1 + $0xd60] sm:$0xff]
    %v452 = vld [vmem:[%s1 + $0xd68] sm:$0xff]
    %v453 = vld [vmem:[%s1 + $0xd70] sm:$0xff]
    %v454 = vld [vmem:[%s1 + $0xd78] sm:$0xff]
    %v455 = vld [vmem:[%s1 + $0xd80] sm:$0xff]
    %v456 = vld [vmem:[%s1 + $0xd88] sm:$0xff]
    %v457 = vld [vmem:[%s1 + $0xd90] sm:$0xff]
    %v458 = vld [vmem:[%s1 + $0xd98] sm:$0xff]
    %v459 = vld [vmem:[%s1 + $0xda0] sm:$0xff]
    %v460 = vld [vmem:[%s1 + $0xda8] sm:$0xff]
    %v461 = vld [vmem:[%s1 + $0xdb0] sm:$0xff]
    %v462 = vld [vmem:[%s1 + $0xdb8] sm:$0xff]
    %v463 = vld [vmem:[%s1 + $0xdc0] sm:$0xff]
    %v464 = vld [vmem:[%s1 + $0xdc8] sm:$0xff]
    %v465 = vld [vmem:[%s1 + $0xdd0] sm:$0xff]
    %v466 = vld [vmem:[%s1 + $0xdd8] sm:$0xff]
    %v467 = vld [vmem:[%s1 + $0xde0] sm:$0xff]
    %v468 = vld [vmem:[%s1 + $0xde8] sm:$0xff]
    %v469 = vld [vmem:[%s1 + $0xdf0] sm:$0xff]
    %v470 = vld [vmem:[%s1 + $0xdf8] sm:$0xff]
    %v471 = vld [vmem:[%s1 + $0xe00] sm:$0xff]
    %v472 = vld [vmem:[%s1 + $0xe08] sm:$0xff]
    %v473 = vld [vmem:[%s1 + $0xe10] sm:$0xff]
    %v474 = vld [vmem:[%s1 + $0xe18] sm:$0xff]
    %v475 = vld [vmem:[%s1 + $0xe20] sm:$0xff]
    %v476 = vld [vmem:[%s1 + $0xe28] sm:$0xff]
    %v477 = vld [vmem:[%s1 + $0xe30] sm:$0xff]
    %v478 = vld [vmem:[%s1 + $0xe38] sm:$0xff]
    %v479 = vld [vmem:[%s1 + $0xe40] sm:$0xff]
    %v480 = vld [vmem:[%s1 + $0xe48] sm:$0xff]
    %v481 = vld [vmem:[%s1 + $0xe50] sm:$0xff]
    %v482 = vld [vmem:[%s1 + $0xe58] sm:$0xff]
    %v483 = vld [vmem:[%s1 + $0xe60] sm:$0xff]
    %v484 = vld [vmem:[%s1 + $0xe68] sm:$0xff]
    %v485 = vld [vmem:[%s1 + $0xe70] sm:$0xff]
    %v486 = vld [vmem:[%s1 + $0xe78] sm:$0xff]
    %v487 = vld [vmem:[%s1 + $0xe80] sm:$0xff]
    %v488 = vld [vmem:[%s1 + $0xe88] sm:$0xff]
    %v489 = vld [vmem:[%s1 + $0xe90] sm:$0xff]
    %v490 = vld [vmem:[%s1 + $0xe98] sm:$0xff]
    %v491 = vld [vmem:[%s1 + $0xea0] sm:$0xff]
    %v492 = vld [vmem:[%s1 + $0xea8] sm:$0xff]
    %v493 = vld [vmem:[%s1 + $0xeb0] sm:$0xff]
    %v494 = vld [vmem:[%s1 + $0xeb8] sm:$0xff]
    %v495 = vld [vmem:[%s1 + $0xec0] sm:$0xff]
    %v496 = vld [vmem:[%s1 + $0xec8] sm:$0xff]
    %v497 = vld [vmem:[%s1 + $0xed0] sm:$0xff]
    %v498 = vld [vmem:[%s1 + $0xed8] sm:$0xff]
    %v499 = vld [vmem:[%s1 + $0xee0] sm:$0xff]
    %v500 = vld [vmem:[%s1 + $0xee8] sm:$0xff]
    %v501 = vld [vmem:[%s1 + $0xef0] sm:$0xff]
    %v502 = vld [vmem:[%s1 + $0xef8] sm:$0xff]
    %v503 = vld [vmem:[%s1 + $0xf00] sm:$0xff]
    %v504 = vld [vmem:[%s1 + $0xf08] sm:$0xff]
    %v505 = vld [vmem:[%s1 + $0xf10] sm:$0xff]
    %v506 = vld [vmem:[%s1 + $0xf18] sm:$0xff]
    %v507 = vld [vmem:[%s1 + $0xf20] sm:$0xff]
    %v508 = vld [vmem:[%s1 + $0xf28] sm:$0xff]
    %v509 = vld [vmem:[%s1 + $0xf30] sm:$0xff]
    %v510 = vld [vmem:[%s1 + $0xf38] sm:$0xff]
    %v511 = vld [vmem:[%s1 + $0xf40] sm:$0xff]
    %v512 = vld [vmem:[%s1 + $0xf48] sm:$0xff]
    %v513 = vld [vmem:[%s1 + $0xf50] sm:$0xff]
    %v514 = vld [vmem:[%s1 + $0xf58] sm:$0xff]
    %v515 = vld [vmem:[%s1 + $0xf60] sm:$0xff]
    %v516 = vld [vmem:[%s1 + $0xf68] sm:$0xff]
    %v517 = vld [vmem:[%s1 + $0xf70] sm:$0xff]
    %v518 = vld [vmem:[%s1 + $0xf78] sm:$0xff]
    %v519 = vld [vmem:[%s1 + $0xf80] sm:$0xff]
    %v520 = vld [vmem:[%s1 + $0xf88] sm:$0xff]
    %v521 = vld [vmem:[%s1 + $0xf90] sm:$0xff]
    %v522 = vld [vmem:[%s1 + $0xf98] sm:$0xff]
    %v523 = vld [vmem:[%s1 + $0xfa0] sm:$0xff]
    %v524 = vld [vmem:[%s1 + $0xfa8] sm:$0xff]
    %v525 = vld [vmem:[%s1 + $0xfb0] sm:$0xff]
    %v526 = vld [vmem:[%s1 + $0xfb8] sm:$0xff]
    %v527 = vld [vmem:[%s1 + $0xfc0] sm:$0xff]
    %v528 = vld [vmem:[%s1 + $0xfc8] sm:$0xff]
    %v529 = vld [vmem:[%s1 + $0xfd0] sm:$0xff]
    %v530 = vld [vmem:[%s1 + $0xfd8] sm:$0xff]
    %v531 = vld [vmem:[%s1 + $0xfe0] sm:$0xff]
    %v532 = vld [vmem:[%s1 + $0xfe8] sm:$0xff]
    %v533 = vld [vmem:[%s1 + $0xff0] sm:$0xff]
    %v534 = vld [vmem:[%s1 + $0xff8] sm:$0xff]
    %v535 = vld [vmem:[%s2] sm:$0xff]
    %v537 = vlaneseq
    %v538 = vshrl.u32 %v537, 7
    %v539 = vsub.s32 0, %v538
    %v540 = vrot.slane %v535, %v539
    %v541 = vlaneseq
    %v542 = vshrl.u32 %v541, 7
    %v543 = vsub.s32 1, %v542
    %v544 = vrot.slane %v535, %v543
    %v545 = vlaneseq
    %v546 = vshrl.u32 %v545, 7
    %v547 = vsub.s32 2, %v546
    %v548 = vrot.slane %v535, %v547
    %v549 = vlaneseq
    %v550 = vshrl.u32 %v549, 7
    %v551 = vsub.s32 3, %v550
    %v552 = vrot.slane %v535, %v551
    %v553 = vlaneseq
    %v554 = vshrl.u32 %v553, 7
    %v555 = vsub.s32 4, %v554
    %v556 = vrot.slane %v535, %v555
    %v557 = vlaneseq
    %v558 = vshrl.u32 %v557, 7
    %v559 = vsub.s32 5, %v558
    %v560 = vrot.slane %v535, %v559
    %v561 = vlaneseq
    %v562 = vshrl.u32 %v561, 7
    %v563 = vsub.s32 6, %v562
    %v564 = vrot.slane %v535, %v563
    %v565 = vlaneseq
    %v566 = vshrl.u32 %v565, 7
    %v567 = vsub.s32 7, %v566
    %v568 = vrot.slane %v535, %v567
    %v578 = vcombine.high %v22, %v22
    %v580 = vunpack.c.l.s4 1966171168
    %v581 = vunpack.c.0.s8 %v580
    %v582 = vlaneseq
    %v583 = vshrl.u32 %v582, 7
    %v584 = vsub.s32 %v581, %v583
    %v585 = vrot.slane %v22, %v584
    %v587 = vunpack.c.l.s4 1966171168
    %v588 = vunpack.c.0.s8 %v587
    %v589 = vlaneseq
    %v590 = vshrl.u32 %v589, 7
    %v591 = vsub.s32 %v588, %v590
    %v592 = vrot.slane %v578, %v591
    %v593 = vcombine.high %v585, %v585
    %v594 = vcombine.high %v592, %v592
    %v596 = vunpack.c.l.s4 1966171168
    %v597 = vunpack.c.0.s8 %v596
    %v598 = vlaneseq
    %v599 = vshrl.u32 %v598, 7
    %v600 = vsub.s32 %v597, %v599
    %v601 = vrot.slane %v585, %v600
    %v603 = vunpack.c.l.s4 1966171168
    %v604 = vunpack.c.0.s8 %v603
    %v605 = vlaneseq
    %v606 = vshrl.u32 %v605, 7
    %v607 = vsub.s32 %v604, %v606
    %v608 = vrot.slane %v592, %v607
    %v610 = vunpack.c.l.s4 1966171168
    %v611 = vunpack.c.0.s8 %v610
    %v612 = vlaneseq
    %v613 = vshrl.u32 %v612, 7
    %v614 = vsub.s32 %v611, %v613
    %v615 = vrot.slane %v593, %v614
    %v617 = vunpack.c.l.s4 1966171168
    %v618 = vunpack.c.0.s8 %v617
    %v619 = vlaneseq
    %v620 = vshrl.u32 %v619, 7
    %v621 = vsub.s32 %v618, %v620
    %v622 = vrot.slane %v594, %v621
    %v623 = vcombine.high %v601, %v601
    %v624 = vcombine.high %v608, %v608
    %v625 = vcombine.high %v615, %v615
    %v626 = vcombine.high %v622, %v622
    %v1147 = vunpack.c.l.b16 %v23
    %v1148 = vunpack.c.h.b16 %v23
    %v1149 = vunpack.c.l.b16 %v24
    %v1150 = vunpack.c.h.b16 %v24
    %v1151 = vunpack.c.l.b16 %v25
    %v1152 = vunpack.c.h.b16 %v25
    %v1153 = vunpack.c.l.b16 %v26
    %v1154 = vunpack.c.h.b16 %v26
    %v1155 = vunpack.c.l.b16 %v27
    %v1156 = vunpack.c.h.b16 %v27
    %v1157 = vunpack.c.l.b16 %v28
    %v1158 = vunpack.c.h.b16 %v28
    %v1159 = vunpack.c.l.b16 %v29
    %v1160 = vunpack.c.h.b16 %v29
    %v1161 = vunpack.c.l.b16 %v30
    %v1162 = vunpack.c.h.b16 %v30
    %v1163 = vunpack.c.l.b16 %v31
    %v1164 = vunpack.c.h.b16 %v31
    %v1165 = vunpack.c.l.b16 %v32
    %v1166 = vunpack.c.h.b16 %v32
    %v1167 = vunpack.c.l.b16 %v33
    %v1168 = vunpack.c.h.b16 %v33
    %v1169 = vunpack.c.l.b16 %v34
    %v1170 = vunpack.c.h.b16 %v34
    %v1171 = vunpack.c.l.b16 %v35
    %v1172 = vunpack.c.h.b16 %v35
    %v1173 = vunpack.c.l.b16 %v36
    %v1174 = vunpack.c.h.b16 %v36
    %v1175 = vunpack.c.l.b16 %v37
    %v1176 = vunpack.c.h.b16 %v37
    %v1177 = vunpack.c.l.b16 %v38
    %v1178 = vunpack.c.h.b16 %v38
    %v1179 = vunpack.c.l.b16 %v39
    %v1180 = vunpack.c.h.b16 %v39
    %v1181 = vunpack.c.l.b16 %v40
    %v1182 = vunpack.c.h.b16 %v40
    %v1183 = vunpack.c.l.b16 %v41
    %v1184 = vunpack.c.h.b16 %v41
    %v1185 = vunpack.c.l.b16 %v42
    %v1186 = vunpack.c.h.b16 %v42
    %v1187 = vunpack.c.l.b16 %v43
    %v1188 = vunpack.c.h.b16 %v43
    %v1189 = vunpack.c.l.b16 %v44
    %v1190 = vunpack.c.h.b16 %v44
    %v1191 = vunpack.c.l.b16 %v45
    %v1192 = vunpack.c.h.b16 %v45
    %v1193 = vunpack.c.l.b16 %v46
    %v1194 = vunpack.c.h.b16 %v46
    %v1195 = vunpack.c.l.b16 %v47
    %v1196 = vunpack.c.h.b16 %v47
    %v1197 = vunpack.c.l.b16 %v48
    %v1198 = vunpack.c.h.b16 %v48
    %v1199 = vunpack.c.l.b16 %v49
    %v1200 = vunpack.c.h.b16 %v49
    %v1201 = vunpack.c.l.b16 %v50
    %v1202 = vunpack.c.h.b16 %v50
    %v1203 = vunpack.c.l.b16 %v51
    %v1204 = vunpack.c.h.b16 %v51
    %v1205 = vunpack.c.l.b16 %v52
    %v1206 = vunpack.c.h.b16 %v52
    %v1207 = vunpack.c.l.b16 %v53
    %v1208 = vunpack.c.h.b16 %v53
    %v1209 = vunpack.c.l.b16 %v54
    %v1210 = vunpack.c.h.b16 %v54
    %v1211 = vunpack.c.l.b16 %v55
    %v1212 = vunpack.c.h.b16 %v55
    %v1213 = vunpack.c.l.b16 %v56
    %v1214 = vunpack.c.h.b16 %v56
    %v1215 = vunpack.c.l.b16 %v57
    %v1216 = vunpack.c.h.b16 %v57
    %v1217 = vunpack.c.l.b16 %v58
    %v1218 = vunpack.c.h.b16 %v58
    %v1219 = vunpack.c.l.b16 %v59
    %v1220 = vunpack.c.h.b16 %v59
    %v1221 = vunpack.c.l.b16 %v60
    %v1222 = vunpack.c.h.b16 %v60
    %v1223 = vunpack.c.l.b16 %v61
    %v1224 = vunpack.c.h.b16 %v61
    %v1225 = vunpack.c.l.b16 %v62
    %v1226 = vunpack.c.h.b16 %v62
    %v1227 = vunpack.c.l.b16 %v63
    %v1228 = vunpack.c.h.b16 %v63
    %v1229 = vunpack.c.l.b16 %v64
    %v1230 = vunpack.c.h.b16 %v64
    %v1231 = vunpack.c.l.b16 %v65
    %v1232 = vunpack.c.h.b16 %v65
    %v1233 = vunpack.c.l.b16 %v66
    %v1234 = vunpack.c.h.b16 %v66
    %v1235 = vunpack.c.l.b16 %v67
    %v1236 = vunpack.c.h.b16 %v67
    %v1237 = vunpack.c.l.b16 %v68
    %v1238 = vunpack.c.h.b16 %v68
    %v1239 = vunpack.c.l.b16 %v69
    %v1240 = vunpack.c.h.b16 %v69
    %v1241 = vunpack.c.l.b16 %v70
    %v1242 = vunpack.c.h.b16 %v70
    %v1243 = vunpack.c.l.b16 %v71
    %v1244 = vunpack.c.h.b16 %v71
    %v1245 = vunpack.c.l.b16 %v72
    %v1246 = vunpack.c.h.b16 %v72
    %v1247 = vunpack.c.l.b16 %v73
    %v1248 = vunpack.c.h.b16 %v73
    %v1249 = vunpack.c.l.b16 %v74
    %v1250 = vunpack.c.h.b16 %v74
    %v1251 = vunpack.c.l.b16 %v75
    %v1252 = vunpack.c.h.b16 %v75
    %v1253 = vunpack.c.l.b16 %v76
    %v1254 = vunpack.c.h.b16 %v76
    %v1255 = vunpack.c.l.b16 %v77
    %v1256 = vunpack.c.h.b16 %v77
    %v1257 = vunpack.c.l.b16 %v78
    %v1258 = vunpack.c.h.b16 %v78
    %v1259 = vunpack.c.l.b16 %v79
    %v1260 = vunpack.c.h.b16 %v79
    %v1261 = vunpack.c.l.b16 %v80
    %v1262 = vunpack.c.h.b16 %v80
    %v1263 = vunpack.c.l.b16 %v81
    %v1264 = vunpack.c.h.b16 %v81
    %v1265 = vunpack.c.l.b16 %v82
    %v1266 = vunpack.c.h.b16 %v82
    %v1267 = vunpack.c.l.b16 %v83
    %v1268 = vunpack.c.h.b16 %v83
    %v1269 = vunpack.c.l.b16 %v84
    %v1270 = vunpack.c.h.b16 %v84
    %v1271 = vunpack.c.l.b16 %v85
    %v1272 = vunpack.c.h.b16 %v85
    %v1273 = vunpack.c.l.b16 %v86
    %v1274 = vunpack.c.h.b16 %v86
    %v1275 = vunpack.c.l.b16 %v87
    %v1276 = vunpack.c.h.b16 %v87
    %v1277 = vunpack.c.l.b16 %v88
    %v1278 = vunpack.c.h.b16 %v88
    %v1279 = vunpack.c.l.b16 %v89
    %v1280 = vunpack.c.h.b16 %v89
    %v1281 = vunpack.c.l.b16 %v90
    %v1282 = vunpack.c.h.b16 %v90
    %v1283 = vunpack.c.l.b16 %v91
    %v1284 = vunpack.c.h.b16 %v91
    %v1285 = vunpack.c.l.b16 %v92
    %v1286 = vunpack.c.h.b16 %v92
    %v1287 = vunpack.c.l.b16 %v93
    %v1288 = vunpack.c.h.b16 %v93
    %v1289 = vunpack.c.l.b16 %v94
    %v1290 = vunpack.c.h.b16 %v94
    %v1291 = vunpack.c.l.b16 %v95
    %v1292 = vunpack.c.h.b16 %v95
    %v1293 = vunpack.c.l.b16 %v96
    %v1294 = vunpack.c.h.b16 %v96
    %v1295 = vunpack.c.l.b16 %v97
    %v1296 = vunpack.c.h.b16 %v97
    %v1297 = vunpack.c.l.b16 %v98
    %v1298 = vunpack.c.h.b16 %v98
    %v1299 = vunpack.c.l.b16 %v99
    %v1300 = vunpack.c.h.b16 %v99
    %v1301 = vunpack.c.l.b16 %v100
    %v1302 = vunpack.c.h.b16 %v100
    %v1303 = vunpack.c.l.b16 %v101
    %v1304 = vunpack.c.h.b16 %v101
    %v1305 = vunpack.c.l.b16 %v102
    %v1306 = vunpack.c.h.b16 %v102
    %v1307 = vunpack.c.l.b16 %v103
    %v1308 = vunpack.c.h.b16 %v103
    %v1309 = vunpack.c.l.b16 %v104
    %v1310 = vunpack.c.h.b16 %v104
    %v1311 = vunpack.c.l.b16 %v105
    %v1312 = vunpack.c.h.b16 %v105
    %v1313 = vunpack.c.l.b16 %v106
    %v1314 = vunpack.c.h.b16 %v106
    %v1315 = vunpack.c.l.b16 %v107
    %v1316 = vunpack.c.h.b16 %v107
    %v1317 = vunpack.c.l.b16 %v108
    %v1318 = vunpack.c.h.b16 %v108
    %v1319 = vunpack.c.l.b16 %v109
    %v1320 = vunpack.c.h.b16 %v109
    %v1321 = vunpack.c.l.b16 %v110
    %v1322 = vunpack.c.h.b16 %v110
    %v1323 = vunpack.c.l.b16 %v111
    %v1324 = vunpack.c.h.b16 %v111
    %v1325 = vunpack.c.l.b16 %v112
    %v1326 = vunpack.c.h.b16 %v112
    %v1327 = vunpack.c.l.b16 %v113
    %v1328 = vunpack.c.h.b16 %v113
    %v1329 = vunpack.c.l.b16 %v114
    %v1330 = vunpack.c.h.b16 %v114
    %v1331 = vunpack.c.l.b16 %v115
    %v1332 = vunpack.c.h.b16 %v115
    %v1333 = vunpack.c.l.b16 %v116
    %v1334 = vunpack.c.h.b16 %v116
    %v1335 = vunpack.c.l.b16 %v117
    %v1336 = vunpack.c.h.b16 %v117
    %v1337 = vunpack.c.l.b16 %v118
    %v1338 = vunpack.c.h.b16 %v118
    %v1339 = vunpack.c.l.b16 %v119
    %v1340 = vunpack.c.h.b16 %v119
    %v1341 = vunpack.c.l.b16 %v120
    %v1342 = vunpack.c.h.b16 %v120
    %v1343 = vunpack.c.l.b16 %v121
    %v1344 = vunpack.c.h.b16 %v121
    %v1345 = vunpack.c.l.b16 %v122
    %v1346 = vunpack.c.h.b16 %v122
    %v1347 = vunpack.c.l.b16 %v123
    %v1348 = vunpack.c.h.b16 %v123
    %v1349 = vunpack.c.l.b16 %v124
    %v1350 = vunpack.c.h.b16 %v124
    %v1351 = vunpack.c.l.b16 %v125
    %v1352 = vunpack.c.h.b16 %v125
    %v1353 = vunpack.c.l.b16 %v126
    %v1354 = vunpack.c.h.b16 %v126
    %v1355 = vunpack.c.l.b16 %v127
    %v1356 = vunpack.c.h.b16 %v127
    %v1357 = vunpack.c.l.b16 %v128
    %v1358 = vunpack.c.h.b16 %v128
    %v1359 = vunpack.c.l.b16 %v129
    %v1360 = vunpack.c.h.b16 %v129
    %v1361 = vunpack.c.l.b16 %v130
    %v1362 = vunpack.c.h.b16 %v130
    %v1363 = vunpack.c.l.b16 %v131
    %v1364 = vunpack.c.h.b16 %v131
    %v1365 = vunpack.c.l.b16 %v132
    %v1366 = vunpack.c.h.b16 %v132
    %v1367 = vunpack.c.l.b16 %v133
    %v1368 = vunpack.c.h.b16 %v133
    %v1369 = vunpack.c.l.b16 %v134
    %v1370 = vunpack.c.h.b16 %v134
    %v1371 = vunpack.c.l.b16 %v135
    %v1372 = vunpack.c.h.b16 %v135
    %v1373 = vunpack.c.l.b16 %v136
    %v1374 = vunpack.c.h.b16 %v136
    %v1375 = vunpack.c.l.b16 %v137
    %v1376 = vunpack.c.h.b16 %v137
    %v1377 = vunpack.c.l.b16 %v138
    %v1378 = vunpack.c.h.b16 %v138
    %v1379 = vunpack.c.l.b16 %v139
    %v1380 = vunpack.c.h.b16 %v139
    %v1381 = vunpack.c.l.b16 %v140
    %v1382 = vunpack.c.h.b16 %v140
    %v1383 = vunpack.c.l.b16 %v141
    %v1384 = vunpack.c.h.b16 %v141
    %v1385 = vunpack.c.l.b16 %v142
    %v1386 = vunpack.c.h.b16 %v142
    %v1387 = vunpack.c.l.b16 %v143
    %v1388 = vunpack.c.h.b16 %v143
    %v1389 = vunpack.c.l.b16 %v144
    %v1390 = vunpack.c.h.b16 %v144
    %v1391 = vunpack.c.l.b16 %v145
    %v1392 = vunpack.c.h.b16 %v145
    %v1393 = vunpack.c.l.b16 %v146
    %v1394 = vunpack.c.h.b16 %v146
    %v1395 = vunpack.c.l.b16 %v147
    %v1396 = vunpack.c.h.b16 %v147
    %v1397 = vunpack.c.l.b16 %v148
    %v1398 = vunpack.c.h.b16 %v148
    %v1399 = vunpack.c.l.b16 %v149
    %v1400 = vunpack.c.h.b16 %v149
    %v1401 = vunpack.c.l.b16 %v150
    %v1402 = vunpack.c.h.b16 %v150
    %v1403 = vunpack.c.l.b16 %v151
    %v1404 = vunpack.c.h.b16 %v151
    %v1405 = vunpack.c.l.b16 %v152
    %v1406 = vunpack.c.h.b16 %v152
    %v1407 = vunpack.c.l.b16 %v153
    %v1408 = vunpack.c.h.b16 %v153
    %v1409 = vunpack.c.l.b16 %v154
    %v1410 = vunpack.c.h.b16 %v154
    %v1411 = vunpack.c.l.b16 %v155
    %v1412 = vunpack.c.h.b16 %v155
    %v1413 = vunpack.c.l.b16 %v156
    %v1414 = vunpack.c.h.b16 %v156
    %v1415 = vunpack.c.l.b16 %v157
    %v1416 = vunpack.c.h.b16 %v157
    %v1417 = vunpack.c.l.b16 %v158
    %v1418 = vunpack.c.h.b16 %v158
    %v1419 = vunpack.c.l.b16 %v159
    %v1420 = vunpack.c.h.b16 %v159
    %v1421 = vunpack.c.l.b16 %v160
    %v1422 = vunpack.c.h.b16 %v160
    %v1423 = vunpack.c.l.b16 %v161
    %v1424 = vunpack.c.h.b16 %v161
    %v1425 = vunpack.c.l.b16 %v162
    %v1426 = vunpack.c.h.b16 %v162
    %v1427 = vunpack.c.l.b16 %v163
    %v1428 = vunpack.c.h.b16 %v163
    %v1429 = vunpack.c.l.b16 %v164
    %v1430 = vunpack.c.h.b16 %v164
    %v1431 = vunpack.c.l.b16 %v165
    %v1432 = vunpack.c.h.b16 %v165
    %v1433 = vunpack.c.l.b16 %v166
    %v1434 = vunpack.c.h.b16 %v166
    %v1435 = vunpack.c.l.b16 %v167
    %v1436 = vunpack.c.h.b16 %v167
    %v1437 = vunpack.c.l.b16 %v168
    %v1438 = vunpack.c.h.b16 %v168
    %v1439 = vunpack.c.l.b16 %v169
    %v1440 = vunpack.c.h.b16 %v169
    %v1441 = vunpack.c.l.b16 %v170
    %v1442 = vunpack.c.h.b16 %v170
    %v1443 = vunpack.c.l.b16 %v171
    %v1444 = vunpack.c.h.b16 %v171
    %v1445 = vunpack.c.l.b16 %v172
    %v1446 = vunpack.c.h.b16 %v172
    %v1447 = vunpack.c.l.b16 %v173
    %v1448 = vunpack.c.h.b16 %v173
    %v1449 = vunpack.c.l.b16 %v174
    %v1450 = vunpack.c.h.b16 %v174
    %v1451 = vunpack.c.l.b16 %v175
    %v1452 = vunpack.c.h.b16 %v175
    %v1453 = vunpack.c.l.b16 %v176
    %v1454 = vunpack.c.h.b16 %v176
    %v1455 = vunpack.c.l.b16 %v177
    %v1456 = vunpack.c.h.b16 %v177
    %v1457 = vunpack.c.l.b16 %v178
    %v1458 = vunpack.c.h.b16 %v178
    %v1459 = vunpack.c.l.b16 %v179
    %v1460 = vunpack.c.h.b16 %v179
    %v1461 = vunpack.c.l.b16 %v180
    %v1462 = vunpack.c.h.b16 %v180
    %v1463 = vunpack.c.l.b16 %v181
    %v1464 = vunpack.c.h.b16 %v181
    %v1465 = vunpack.c.l.b16 %v182
    %v1466 = vunpack.c.h.b16 %v182
    %v1467 = vunpack.c.l.b16 %v183
    %v1468 = vunpack.c.h.b16 %v183
    %v1469 = vunpack.c.l.b16 %v184
    %v1470 = vunpack.c.h.b16 %v184
    %v1471 = vunpack.c.l.b16 %v185
    %v1472 = vunpack.c.h.b16 %v185
    %v1473 = vunpack.c.l.b16 %v186
    %v1474 = vunpack.c.h.b16 %v186
    %v1475 = vunpack.c.l.b16 %v187
    %v1476 = vunpack.c.h.b16 %v187
    %v1477 = vunpack.c.l.b16 %v188
    %v1478 = vunpack.c.h.b16 %v188
    %v1479 = vunpack.c.l.b16 %v189
    %v1480 = vunpack.c.h.b16 %v189
    %v1481 = vunpack.c.l.b16 %v190
    %v1482 = vunpack.c.h.b16 %v190
    %v1483 = vunpack.c.l.b16 %v191
    %v1484 = vunpack.c.h.b16 %v191
    %v1485 = vunpack.c.l.b16 %v192
    %v1486 = vunpack.c.h.b16 %v192
    %v1487 = vunpack.c.l.b16 %v193
    %v1488 = vunpack.c.h.b16 %v193
    %v1489 = vunpack.c.l.b16 %v194
    %v1490 = vunpack.c.h.b16 %v194
    %v1491 = vunpack.c.l.b16 %v195
    %v1492 = vunpack.c.h.b16 %v195
    %v1493 = vunpack.c.l.b16 %v196
    %v1494 = vunpack.c.h.b16 %v196
    %v1495 = vunpack.c.l.b16 %v197
    %v1496 = vunpack.c.h.b16 %v197
    %v1497 = vunpack.c.l.b16 %v198
    %v1498 = vunpack.c.h.b16 %v198
    %v1499 = vunpack.c.l.b16 %v199
    %v1500 = vunpack.c.h.b16 %v199
    %v1501 = vunpack.c.l.b16 %v200
    %v1502 = vunpack.c.h.b16 %v200
    %v1503 = vunpack.c.l.b16 %v201
    %v1504 = vunpack.c.h.b16 %v201
    %v1505 = vunpack.c.l.b16 %v202
    %v1506 = vunpack.c.h.b16 %v202
    %v1507 = vunpack.c.l.b16 %v203
    %v1508 = vunpack.c.h.b16 %v203
    %v1509 = vunpack.c.l.b16 %v204
    %v1510 = vunpack.c.h.b16 %v204
    %v1511 = vunpack.c.l.b16 %v205
    %v1512 = vunpack.c.h.b16 %v205
    %v1513 = vunpack.c.l.b16 %v206
    %v1514 = vunpack.c.h.b16 %v206
    %v1515 = vunpack.c.l.b16 %v207
    %v1516 = vunpack.c.h.b16 %v207
    %v1517 = vunpack.c.l.b16 %v208
    %v1518 = vunpack.c.h.b16 %v208
    %v1519 = vunpack.c.l.b16 %v209
    %v1520 = vunpack.c.h.b16 %v209
    %v1521 = vunpack.c.l.b16 %v210
    %v1522 = vunpack.c.h.b16 %v210
    %v1523 = vunpack.c.l.b16 %v211
    %v1524 = vunpack.c.h.b16 %v211
    %v1525 = vunpack.c.l.b16 %v212
    %v1526 = vunpack.c.h.b16 %v212
    %v1527 = vunpack.c.l.b16 %v213
    %v1528 = vunpack.c.h.b16 %v213
    %v1529 = vunpack.c.l.b16 %v214
    %v1530 = vunpack.c.h.b16 %v214
    %v1531 = vunpack.c.l.b16 %v215
    %v1532 = vunpack.c.h.b16 %v215
    %v1533 = vunpack.c.l.b16 %v216
    %v1534 = vunpack.c.h.b16 %v216
    %v1535 = vunpack.c.l.b16 %v217
    %v1536 = vunpack.c.h.b16 %v217
    %v1537 = vunpack.c.l.b16 %v218
    %v1538 = vunpack.c.h.b16 %v218
    %v1539 = vunpack.c.l.b16 %v219
    %v1540 = vunpack.c.h.b16 %v219
    %v1541 = vunpack.c.l.b16 %v220
    %v1542 = vunpack.c.h.b16 %v220
    %v1543 = vunpack.c.l.b16 %v221
    %v1544 = vunpack.c.h.b16 %v221
    %v1545 = vunpack.c.l.b16 %v222
    %v1546 = vunpack.c.h.b16 %v222
    %v1547 = vunpack.c.l.b16 %v223
    %v1548 = vunpack.c.h.b16 %v223
    %v1549 = vunpack.c.l.b16 %v224
    %v1550 = vunpack.c.h.b16 %v224
    %v1551 = vunpack.c.l.b16 %v225
    %v1552 = vunpack.c.h.b16 %v225
    %v1553 = vunpack.c.l.b16 %v226
    %v1554 = vunpack.c.h.b16 %v226
    %v1555 = vunpack.c.l.b16 %v227
    %v1556 = vunpack.c.h.b16 %v227
    %v1557 = vunpack.c.l.b16 %v228
    %v1558 = vunpack.c.h.b16 %v228
    %v1559 = vunpack.c.l.b16 %v229
    %v1560 = vunpack.c.h.b16 %v229
    %v1561 = vunpack.c.l.b16 %v230
    %v1562 = vunpack.c.h.b16 %v230
    %v1563 = vunpack.c.l.b16 %v231
    %v1564 = vunpack.c.h.b16 %v231
    %v1565 = vunpack.c.l.b16 %v232
    %v1566 = vunpack.c.h.b16 %v232
    %v1567 = vunpack.c.l.b16 %v233
    %v1568 = vunpack.c.h.b16 %v233
    %v1569 = vunpack.c.l.b16 %v234
    %v1570 = vunpack.c.h.b16 %v234
    %v1571 = vunpack.c.l.b16 %v235
    %v1572 = vunpack.c.h.b16 %v235
    %v1573 = vunpack.c.l.b16 %v236
    %v1574 = vunpack.c.h.b16 %v236
    %v1575 = vunpack.c.l.b16 %v237
    %v1576 = vunpack.c.h.b16 %v237
    %v1577 = vunpack.c.l.b16 %v238
    %v1578 = vunpack.c.h.b16 %v238
    %v1579 = vunpack.c.l.b16 %v239
    %v1580 = vunpack.c.h.b16 %v239
    %v1581 = vunpack.c.l.b16 %v240
    %v1582 = vunpack.c.h.b16 %v240
    %v1583 = vunpack.c.l.b16 %v241
    %v1584 = vunpack.c.h.b16 %v241
    %v1585 = vunpack.c.l.b16 %v242
    %v1586 = vunpack.c.h.b16 %v242
    %v1587 = vunpack.c.l.b16 %v243
    %v1588 = vunpack.c.h.b16 %v243
    %v1589 = vunpack.c.l.b16 %v244
    %v1590 = vunpack.c.h.b16 %v244
    %v1591 = vunpack.c.l.b16 %v245
    %v1592 = vunpack.c.h.b16 %v245
    %v1593 = vunpack.c.l.b16 %v246
    %v1594 = vunpack.c.h.b16 %v246
    %v1595 = vunpack.c.l.b16 %v247
    %v1596 = vunpack.c.h.b16 %v247
    %v1597 = vunpack.c.l.b16 %v248
    %v1598 = vunpack.c.h.b16 %v248
    %v1599 = vunpack.c.l.b16 %v249
    %v1600 = vunpack.c.h.b16 %v249
    %v1601 = vunpack.c.l.b16 %v250
    %v1602 = vunpack.c.h.b16 %v250
    %v1603 = vunpack.c.l.b16 %v251
    %v1604 = vunpack.c.h.b16 %v251
    %v1605 = vunpack.c.l.b16 %v252
    %v1606 = vunpack.c.h.b16 %v252
    %v1607 = vunpack.c.l.b16 %v253
    %v1608 = vunpack.c.h.b16 %v253
    %v1609 = vunpack.c.l.b16 %v254
    %v1610 = vunpack.c.h.b16 %v254
    %v1611 = vunpack.c.l.b16 %v255
    %v1612 = vunpack.c.h.b16 %v255
    %v1613 = vunpack.c.l.b16 %v256
    %v1614 = vunpack.c.h.b16 %v256
    %v1615 = vunpack.c.l.b16 %v257
    %v1616 = vunpack.c.h.b16 %v257
    %v1617 = vunpack.c.l.b16 %v258
    %v1618 = vunpack.c.h.b16 %v258
    %v1619 = vunpack.c.l.b16 %v259
    %v1620 = vunpack.c.h.b16 %v259
    %v1621 = vunpack.c.l.b16 %v260
    %v1622 = vunpack.c.h.b16 %v260
    %v1623 = vunpack.c.l.b16 %v261
    %v1624 = vunpack.c.h.b16 %v261
    %v1625 = vunpack.c.l.b16 %v262
    %v1626 = vunpack.c.h.b16 %v262
    %v1627 = vunpack.c.l.b16 %v263
    %v1628 = vunpack.c.h.b16 %v263
    %v1629 = vunpack.c.l.b16 %v264
    %v1630 = vunpack.c.h.b16 %v264
    %v1631 = vunpack.c.l.b16 %v265
    %v1632 = vunpack.c.h.b16 %v265
    %v1633 = vunpack.c.l.b16 %v266
    %v1634 = vunpack.c.h.b16 %v266
    %v1635 = vunpack.c.l.b16 %v267
    %v1636 = vunpack.c.h.b16 %v267
    %v1637 = vunpack.c.l.b16 %v268
    %v1638 = vunpack.c.h.b16 %v268
    %v1639 = vunpack.c.l.b16 %v269
    %v1640 = vunpack.c.h.b16 %v269
    %v1641 = vunpack.c.l.b16 %v270
    %v1642 = vunpack.c.h.b16 %v270
    %v1643 = vunpack.c.l.b16 %v271
    %v1644 = vunpack.c.h.b16 %v271
    %v1645 = vunpack.c.l.b16 %v272
    %v1646 = vunpack.c.h.b16 %v272
    %v1647 = vunpack.c.l.b16 %v273
    %v1648 = vunpack.c.h.b16 %v273
    %v1649 = vunpack.c.l.b16 %v274
    %v1650 = vunpack.c.h.b16 %v274
    %v1651 = vunpack.c.l.b16 %v275
    %v1652 = vunpack.c.h.b16 %v275
    %v1653 = vunpack.c.l.b16 %v276
    %v1654 = vunpack.c.h.b16 %v276
    %v1655 = vunpack.c.l.b16 %v277
    %v1656 = vunpack.c.h.b16 %v277
    %v1657 = vunpack.c.l.b16 %v278
    %v1658 = vunpack.c.h.b16 %v278
    %v1659 = vunpack.c.l.b16 %v279
    %v1660 = vunpack.c.h.b16 %v279
    %v1661 = vunpack.c.l.b16 %v280
    %v1662 = vunpack.c.h.b16 %v280
    %v1663 = vunpack.c.l.b16 %v281
    %v1664 = vunpack.c.h.b16 %v281
    %v1665 = vunpack.c.l.b16 %v282
    %v1666 = vunpack.c.h.b16 %v282
    %v1667 = vunpack.c.l.b16 %v283
    %v1668 = vunpack.c.h.b16 %v283
    %v1669 = vunpack.c.l.b16 %v284
    %v1670 = vunpack.c.h.b16 %v284
    %v1671 = vunpack.c.l.b16 %v285
    %v1672 = vunpack.c.h.b16 %v285
    %v1673 = vunpack.c.l.b16 %v286
    %v1674 = vunpack.c.h.b16 %v286
    %v1675 = vunpack.c.l.b16 %v287
    %v1676 = vunpack.c.h.b16 %v287
    %v1677 = vunpack.c.l.b16 %v288
    %v1678 = vunpack.c.h.b16 %v288
    %v1679 = vunpack.c.l.b16 %v289
    %v1680 = vunpack.c.h.b16 %v289
    %v1681 = vunpack.c.l.b16 %v290
    %v1682 = vunpack.c.h.b16 %v290
    %v1683 = vunpack.c.l.b16 %v291
    %v1684 = vunpack.c.h.b16 %v291
    %v1685 = vunpack.c.l.b16 %v292
    %v1686 = vunpack.c.h.b16 %v292
    %v1687 = vunpack.c.l.b16 %v293
    %v1688 = vunpack.c.h.b16 %v293
    %v1689 = vunpack.c.l.b16 %v294
    %v1690 = vunpack.c.h.b16 %v294
    %v1691 = vunpack.c.l.b16 %v295
    %v1692 = vunpack.c.h.b16 %v295
    %v1693 = vunpack.c.l.b16 %v296
    %v1694 = vunpack.c.h.b16 %v296
    %v1695 = vunpack.c.l.b16 %v297
    %v1696 = vunpack.c.h.b16 %v297
    %v1697 = vunpack.c.l.b16 %v298
    %v1698 = vunpack.c.h.b16 %v298
    %v1699 = vunpack.c.l.b16 %v299
    %v1700 = vunpack.c.h.b16 %v299
    %v1701 = vunpack.c.l.b16 %v300
    %v1702 = vunpack.c.h.b16 %v300
    %v1703 = vunpack.c.l.b16 %v301
    %v1704 = vunpack.c.h.b16 %v301
    %v1705 = vunpack.c.l.b16 %v302
    %v1706 = vunpack.c.h.b16 %v302
    %v1707 = vunpack.c.l.b16 %v303
    %v1708 = vunpack.c.h.b16 %v303
    %v1709 = vunpack.c.l.b16 %v304
    %v1710 = vunpack.c.h.b16 %v304
    %v1711 = vunpack.c.l.b16 %v305
    %v1712 = vunpack.c.h.b16 %v305
    %v1713 = vunpack.c.l.b16 %v306
    %v1714 = vunpack.c.h.b16 %v306
    %v1715 = vunpack.c.l.b16 %v307
    %v1716 = vunpack.c.h.b16 %v307
    %v1717 = vunpack.c.l.b16 %v308
    %v1718 = vunpack.c.h.b16 %v308
    %v1719 = vunpack.c.l.b16 %v309
    %v1720 = vunpack.c.h.b16 %v309
    %v1721 = vunpack.c.l.b16 %v310
    %v1722 = vunpack.c.h.b16 %v310
    %v1723 = vunpack.c.l.b16 %v311
    %v1724 = vunpack.c.h.b16 %v311
    %v1725 = vunpack.c.l.b16 %v312
    %v1726 = vunpack.c.h.b16 %v312
    %v1727 = vunpack.c.l.b16 %v313
    %v1728 = vunpack.c.h.b16 %v313
    %v1729 = vunpack.c.l.b16 %v314
    %v1730 = vunpack.c.h.b16 %v314
    %v1731 = vunpack.c.l.b16 %v315
    %v1732 = vunpack.c.h.b16 %v315
    %v1733 = vunpack.c.l.b16 %v316
    %v1734 = vunpack.c.h.b16 %v316
    %v1735 = vunpack.c.l.b16 %v317
    %v1736 = vunpack.c.h.b16 %v317
    %v1737 = vunpack.c.l.b16 %v318
    %v1738 = vunpack.c.h.b16 %v318
    %v1739 = vunpack.c.l.b16 %v319
    %v1740 = vunpack.c.h.b16 %v319
    %v1741 = vunpack.c.l.b16 %v320
    %v1742 = vunpack.c.h.b16 %v320
    %v1743 = vunpack.c.l.b16 %v321
    %v1744 = vunpack.c.h.b16 %v321
    %v1745 = vunpack.c.l.b16 %v322
    %v1746 = vunpack.c.h.b16 %v322
    %v1747 = vunpack.c.l.b16 %v323
    %v1748 = vunpack.c.h.b16 %v323
    %v1749 = vunpack.c.l.b16 %v324
    %v1750 = vunpack.c.h.b16 %v324
    %v1751 = vunpack.c.l.b16 %v325
    %v1752 = vunpack.c.h.b16 %v325
    %v1753 = vunpack.c.l.b16 %v326
    %v1754 = vunpack.c.h.b16 %v326
    %v1755 = vunpack.c.l.b16 %v327
    %v1756 = vunpack.c.h.b16 %v327
    %v1757 = vunpack.c.l.b16 %v328
    %v1758 = vunpack.c.h.b16 %v328
    %v1759 = vunpack.c.l.b16 %v329
    %v1760 = vunpack.c.h.b16 %v329
    %v1761 = vunpack.c.l.b16 %v330
    %v1762 = vunpack.c.h.b16 %v330
    %v1763 = vunpack.c.l.b16 %v331
    %v1764 = vunpack.c.h.b16 %v331
    %v1765 = vunpack.c.l.b16 %v332
    %v1766 = vunpack.c.h.b16 %v332
    %v1767 = vunpack.c.l.b16 %v333
    %v1768 = vunpack.c.h.b16 %v333
    %v1769 = vunpack.c.l.b16 %v334
    %v1770 = vunpack.c.h.b16 %v334
    %v1771 = vunpack.c.l.b16 %v335
    %v1772 = vunpack.c.h.b16 %v335
    %v1773 = vunpack.c.l.b16 %v336
    %v1774 = vunpack.c.h.b16 %v336
    %v1775 = vunpack.c.l.b16 %v337
    %v1776 = vunpack.c.h.b16 %v337
    %v1777 = vunpack.c.l.b16 %v338
    %v1778 = vunpack.c.h.b16 %v338
    %v1779 = vunpack.c.l.b16 %v339
    %v1780 = vunpack.c.h.b16 %v339
    %v1781 = vunpack.c.l.b16 %v340
    %v1782 = vunpack.c.h.b16 %v340
    %v1783 = vunpack.c.l.b16 %v341
    %v1784 = vunpack.c.h.b16 %v341
    %v1785 = vunpack.c.l.b16 %v342
    %v1786 = vunpack.c.h.b16 %v342
    %v1787 = vunpack.c.l.b16 %v343
    %v1788 = vunpack.c.h.b16 %v343
    %v1789 = vunpack.c.l.b16 %v344
    %v1790 = vunpack.c.h.b16 %v344
    %v1791 = vunpack.c.l.b16 %v345
    %v1792 = vunpack.c.h.b16 %v345
    %v1793 = vunpack.c.l.b16 %v346
    %v1794 = vunpack.c.h.b16 %v346
    %v1795 = vunpack.c.l.b16 %v347
    %v1796 = vunpack.c.h.b16 %v347
    %v1797 = vunpack.c.l.b16 %v348
    %v1798 = vunpack.c.h.b16 %v348
    %v1799 = vunpack.c.l.b16 %v349
    %v1800 = vunpack.c.h.b16 %v349
    %v1801 = vunpack.c.l.b16 %v350
    %v1802 = vunpack.c.h.b16 %v350
    %v1803 = vunpack.c.l.b16 %v351
    %v1804 = vunpack.c.h.b16 %v351
    %v1805 = vunpack.c.l.b16 %v352
    %v1806 = vunpack.c.h.b16 %v352
    %v1807 = vunpack.c.l.b16 %v353
    %v1808 = vunpack.c.h.b16 %v353
    %v1809 = vunpack.c.l.b16 %v354
    %v1810 = vunpack.c.h.b16 %v354
    %v1811 = vunpack.c.l.b16 %v355
    %v1812 = vunpack.c.h.b16 %v355
    %v1813 = vunpack.c.l.b16 %v356
    %v1814 = vunpack.c.h.b16 %v356
    %v1815 = vunpack.c.l.b16 %v357
    %v1816 = vunpack.c.h.b16 %v357
    %v1817 = vunpack.c.l.b16 %v358
    %v1818 = vunpack.c.h.b16 %v358
    %v1819 = vunpack.c.l.b16 %v359
    %v1820 = vunpack.c.h.b16 %v359
    %v1821 = vunpack.c.l.b16 %v360
    %v1822 = vunpack.c.h.b16 %v360
    %v1823 = vunpack.c.l.b16 %v361
    %v1824 = vunpack.c.h.b16 %v361
    %v1825 = vunpack.c.l.b16 %v362
    %v1826 = vunpack.c.h.b16 %v362
    %v1827 = vunpack.c.l.b16 %v363
    %v1828 = vunpack.c.h.b16 %v363
    %v1829 = vunpack.c.l.b16 %v364
    %v1830 = vunpack.c.h.b16 %v364
    %v1831 = vunpack.c.l.b16 %v365
    %v1832 = vunpack.c.h.b16 %v365
    %v1833 = vunpack.c.l.b16 %v366
    %v1834 = vunpack.c.h.b16 %v366
    %v1835 = vunpack.c.l.b16 %v367
    %v1836 = vunpack.c.h.b16 %v367
    %v1837 = vunpack.c.l.b16 %v368
    %v1838 = vunpack.c.h.b16 %v368
    %v1839 = vunpack.c.l.b16 %v369
    %v1840 = vunpack.c.h.b16 %v369
    %v1841 = vunpack.c.l.b16 %v370
    %v1842 = vunpack.c.h.b16 %v370
    %v1843 = vunpack.c.l.b16 %v371
    %v1844 = vunpack.c.h.b16 %v371
    %v1845 = vunpack.c.l.b16 %v372
    %v1846 = vunpack.c.h.b16 %v372
    %v1847 = vunpack.c.l.b16 %v373
    %v1848 = vunpack.c.h.b16 %v373
    %v1849 = vunpack.c.l.b16 %v374
    %v1850 = vunpack.c.h.b16 %v374
    %v1851 = vunpack.c.l.b16 %v375
    %v1852 = vunpack.c.h.b16 %v375
    %v1853 = vunpack.c.l.b16 %v376
    %v1854 = vunpack.c.h.b16 %v376
    %v1855 = vunpack.c.l.b16 %v377
    %v1856 = vunpack.c.h.b16 %v377
    %v1857 = vunpack.c.l.b16 %v378
    %v1858 = vunpack.c.h.b16 %v378
    %v1859 = vunpack.c.l.b16 %v379
    %v1860 = vunpack.c.h.b16 %v379
    %v1861 = vunpack.c.l.b16 %v380
    %v1862 = vunpack.c.h.b16 %v380
    %v1863 = vunpack.c.l.b16 %v381
    %v1864 = vunpack.c.h.b16 %v381
    %v1865 = vunpack.c.l.b16 %v382
    %v1866 = vunpack.c.h.b16 %v382
    %v1867 = vunpack.c.l.b16 %v383
    %v1868 = vunpack.c.h.b16 %v383
    %v1869 = vunpack.c.l.b16 %v384
    %v1870 = vunpack.c.h.b16 %v384
    %v1871 = vunpack.c.l.b16 %v385
    %v1872 = vunpack.c.h.b16 %v385
    %v1873 = vunpack.c.l.b16 %v386
    %v1874 = vunpack.c.h.b16 %v386
    %v1875 = vunpack.c.l.b16 %v387
    %v1876 = vunpack.c.h.b16 %v387
    %v1877 = vunpack.c.l.b16 %v388
    %v1878 = vunpack.c.h.b16 %v388
    %v1879 = vunpack.c.l.b16 %v389
    %v1880 = vunpack.c.h.b16 %v389
    %v1881 = vunpack.c.l.b16 %v390
    %v1882 = vunpack.c.h.b16 %v390
    %v1883 = vunpack.c.l.b16 %v391
    %v1884 = vunpack.c.h.b16 %v391
    %v1885 = vunpack.c.l.b16 %v392
    %v1886 = vunpack.c.h.b16 %v392
    %v1887 = vunpack.c.l.b16 %v393
    %v1888 = vunpack.c.h.b16 %v393
    %v1889 = vunpack.c.l.b16 %v394
    %v1890 = vunpack.c.h.b16 %v394
    %v1891 = vunpack.c.l.b16 %v395
    %v1892 = vunpack.c.h.b16 %v395
    %v1893 = vunpack.c.l.b16 %v396
    %v1894 = vunpack.c.h.b16 %v396
    %v1895 = vunpack.c.l.b16 %v397
    %v1896 = vunpack.c.h.b16 %v397
    %v1897 = vunpack.c.l.b16 %v398
    %v1898 = vunpack.c.h.b16 %v398
    %v1899 = vunpack.c.l.b16 %v399
    %v1900 = vunpack.c.h.b16 %v399
    %v1901 = vunpack.c.l.b16 %v400
    %v1902 = vunpack.c.h.b16 %v400
    %v1903 = vunpack.c.l.b16 %v401
    %v1904 = vunpack.c.h.b16 %v401
    %v1905 = vunpack.c.l.b16 %v402
    %v1906 = vunpack.c.h.b16 %v402
    %v1907 = vunpack.c.l.b16 %v403
    %v1908 = vunpack.c.h.b16 %v403
    %v1909 = vunpack.c.l.b16 %v404
    %v1910 = vunpack.c.h.b16 %v404
    %v1911 = vunpack.c.l.b16 %v405
    %v1912 = vunpack.c.h.b16 %v405
    %v1913 = vunpack.c.l.b16 %v406
    %v1914 = vunpack.c.h.b16 %v406
    %v1915 = vunpack.c.l.b16 %v407
    %v1916 = vunpack.c.h.b16 %v407
    %v1917 = vunpack.c.l.b16 %v408
    %v1918 = vunpack.c.h.b16 %v408
    %v1919 = vunpack.c.l.b16 %v409
    %v1920 = vunpack.c.h.b16 %v409
    %v1921 = vunpack.c.l.b16 %v410
    %v1922 = vunpack.c.h.b16 %v410
    %v1923 = vunpack.c.l.b16 %v411
    %v1924 = vunpack.c.h.b16 %v411
    %v1925 = vunpack.c.l.b16 %v412
    %v1926 = vunpack.c.h.b16 %v412
    %v1927 = vunpack.c.l.b16 %v413
    %v1928 = vunpack.c.h.b16 %v413
    %v1929 = vunpack.c.l.b16 %v414
    %v1930 = vunpack.c.h.b16 %v414
    %v1931 = vunpack.c.l.b16 %v415
    %v1932 = vunpack.c.h.b16 %v415
    %v1933 = vunpack.c.l.b16 %v416
    %v1934 = vunpack.c.h.b16 %v416
    %v1935 = vunpack.c.l.b16 %v417
    %v1936 = vunpack.c.h.b16 %v417
    %v1937 = vunpack.c.l.b16 %v418
    %v1938 = vunpack.c.h.b16 %v418
    %v1939 = vunpack.c.l.b16 %v419
    %v1940 = vunpack.c.h.b16 %v419
    %v1941 = vunpack.c.l.b16 %v420
    %v1942 = vunpack.c.h.b16 %v420
    %v1943 = vunpack.c.l.b16 %v421
    %v1944 = vunpack.c.h.b16 %v421
    %v1945 = vunpack.c.l.b16 %v422
    %v1946 = vunpack.c.h.b16 %v422
    %v1947 = vunpack.c.l.b16 %v423
    %v1948 = vunpack.c.h.b16 %v423
    %v1949 = vunpack.c.l.b16 %v424
    %v1950 = vunpack.c.h.b16 %v424
    %v1951 = vunpack.c.l.b16 %v425
    %v1952 = vunpack.c.h.b16 %v425
    %v1953 = vunpack.c.l.b16 %v426
    %v1954 = vunpack.c.h.b16 %v426
    %v1955 = vunpack.c.l.b16 %v427
    %v1956 = vunpack.c.h.b16 %v427
    %v1957 = vunpack.c.l.b16 %v428
    %v1958 = vunpack.c.h.b16 %v428
    %v1959 = vunpack.c.l.b16 %v429
    %v1960 = vunpack.c.h.b16 %v429
    %v1961 = vunpack.c.l.b16 %v430
    %v1962 = vunpack.c.h.b16 %v430
    %v1963 = vunpack.c.l.b16 %v431
    %v1964 = vunpack.c.h.b16 %v431
    %v1965 = vunpack.c.l.b16 %v432
    %v1966 = vunpack.c.h.b16 %v432
    %v1967 = vunpack.c.l.b16 %v433
    %v1968 = vunpack.c.h.b16 %v433
    %v1969 = vunpack.c.l.b16 %v434
    %v1970 = vunpack.c.h.b16 %v434
    %v1971 = vunpack.c.l.b16 %v435
    %v1972 = vunpack.c.h.b16 %v435
    %v1973 = vunpack.c.l.b16 %v436
    %v1974 = vunpack.c.h.b16 %v436
    %v1975 = vunpack.c.l.b16 %v437
    %v1976 = vunpack.c.h.b16 %v437
    %v1977 = vunpack.c.l.b16 %v438
    %v1978 = vunpack.c.h.b16 %v438
    %v1979 = vunpack.c.l.b16 %v439
    %v1980 = vunpack.c.h.b16 %v439
    %v1981 = vunpack.c.l.b16 %v440
    %v1982 = vunpack.c.h.b16 %v440
    %v1983 = vunpack.c.l.b16 %v441
    %v1984 = vunpack.c.h.b16 %v441
    %v1985 = vunpack.c.l.b16 %v442
    %v1986 = vunpack.c.h.b16 %v442
    %v1987 = vunpack.c.l.b16 %v443
    %v1988 = vunpack.c.h.b16 %v443
    %v1989 = vunpack.c.l.b16 %v444
    %v1990 = vunpack.c.h.b16 %v444
    %v1991 = vunpack.c.l.b16 %v445
    %v1992 = vunpack.c.h.b16 %v445
    %v1993 = vunpack.c.l.b16 %v446
    %v1994 = vunpack.c.h.b16 %v446
    %v1995 = vunpack.c.l.b16 %v447
    %v1996 = vunpack.c.h.b16 %v447
    %v1997 = vunpack.c.l.b16 %v448
    %v1998 = vunpack.c.h.b16 %v448
    %v1999 = vunpack.c.l.b16 %v449
    %v2000 = vunpack.c.h.b16 %v449
    %v2001 = vunpack.c.l.b16 %v450
    %v2002 = vunpack.c.h.b16 %v450
    %v2003 = vunpack.c.l.b16 %v451
    %v2004 = vunpack.c.h.b16 %v451
    %v2005 = vunpack.c.l.b16 %v452
    %v2006 = vunpack.c.h.b16 %v452
    %v2007 = vunpack.c.l.b16 %v453
    %v2008 = vunpack.c.h.b16 %v453
    %v2009 = vunpack.c.l.b16 %v454
    %v2010 = vunpack.c.h.b16 %v454
    %v2011 = vunpack.c.l.b16 %v455
    %v2012 = vunpack.c.h.b16 %v455
    %v2013 = vunpack.c.l.b16 %v456
    %v2014 = vunpack.c.h.b16 %v456
    %v2015 = vunpack.c.l.b16 %v457
    %v2016 = vunpack.c.h.b16 %v457
    %v2017 = vunpack.c.l.b16 %v458
    %v2018 = vunpack.c.h.b16 %v458
    %v2019 = vunpack.c.l.b16 %v459
    %v2020 = vunpack.c.h.b16 %v459
    %v2021 = vunpack.c.l.b16 %v460
    %v2022 = vunpack.c.h.b16 %v460
    %v2023 = vunpack.c.l.b16 %v461
    %v2024 = vunpack.c.h.b16 %v461
    %v2025 = vunpack.c.l.b16 %v462
    %v2026 = vunpack.c.h.b16 %v462
    %v2027 = vunpack.c.l.b16 %v463
    %v2028 = vunpack.c.h.b16 %v463
    %v2029 = vunpack.c.l.b16 %v464
    %v2030 = vunpack.c.h.b16 %v464
    %v2031 = vunpack.c.l.b16 %v465
    %v2032 = vunpack.c.h.b16 %v465
    %v2033 = vunpack.c.l.b16 %v466
    %v2034 = vunpack.c.h.b16 %v466
    %v2035 = vunpack.c.l.b16 %v467
    %v2036 = vunpack.c.h.b16 %v467
    %v2037 = vunpack.c.l.b16 %v468
    %v2038 = vunpack.c.h.b16 %v468
    %v2039 = vunpack.c.l.b16 %v469
    %v2040 = vunpack.c.h.b16 %v469
    %v2041 = vunpack.c.l.b16 %v470
    %v2042 = vunpack.c.h.b16 %v470
    %v2043 = vunpack.c.l.b16 %v471
    %v2044 = vunpack.c.h.b16 %v471
    %v2045 = vunpack.c.l.b16 %v472
    %v2046 = vunpack.c.h.b16 %v472
    %v2047 = vunpack.c.l.b16 %v473
    %v2048 = vunpack.c.h.b16 %v473
    %v2049 = vunpack.c.l.b16 %v474
    %v2050 = vunpack.c.h.b16 %v474
    %v2051 = vunpack.c.l.b16 %v475
    %v2052 = vunpack.c.h.b16 %v475
    %v2053 = vunpack.c.l.b16 %v476
    %v2054 = vunpack.c.h.b16 %v476
    %v2055 = vunpack.c.l.b16 %v477
    %v2056 = vunpack.c.h.b16 %v477
    %v2057 = vunpack.c.l.b16 %v478
    %v2058 = vunpack.c.h.b16 %v478
    %v2059 = vunpack.c.l.b16 %v479
    %v2060 = vunpack.c.h.b16 %v479
    %v2061 = vunpack.c.l.b16 %v480
    %v2062 = vunpack.c.h.b16 %v480
    %v2063 = vunpack.c.l.b16 %v481
    %v2064 = vunpack.c.h.b16 %v481
    %v2065 = vunpack.c.l.b16 %v482
    %v2066 = vunpack.c.h.b16 %v482
    %v2067 = vunpack.c.l.b16 %v483
    %v2068 = vunpack.c.h.b16 %v483
    %v2069 = vunpack.c.l.b16 %v484
    %v2070 = vunpack.c.h.b16 %v484
    %v2071 = vunpack.c.l.b16 %v485
    %v2072 = vunpack.c.h.b16 %v485
    %v2073 = vunpack.c.l.b16 %v486
    %v2074 = vunpack.c.h.b16 %v486
    %v2075 = vunpack.c.l.b16 %v487
    %v2076 = vunpack.c.h.b16 %v487
    %v2077 = vunpack.c.l.b16 %v488
    %v2078 = vunpack.c.h.b16 %v488
    %v2079 = vunpack.c.l.b16 %v489
    %v2080 = vunpack.c.h.b16 %v489
    %v2081 = vunpack.c.l.b16 %v490
    %v2082 = vunpack.c.h.b16 %v490
    %v2083 = vunpack.c.l.b16 %v491
    %v2084 = vunpack.c.h.b16 %v491
    %v2085 = vunpack.c.l.b16 %v492
    %v2086 = vunpack.c.h.b16 %v492
    %v2087 = vunpack.c.l.b16 %v493
    %v2088 = vunpack.c.h.b16 %v493
    %v2089 = vunpack.c.l.b16 %v494
    %v2090 = vunpack.c.h.b16 %v494
    %v2091 = vunpack.c.l.b16 %v495
    %v2092 = vunpack.c.h.b16 %v495
    %v2093 = vunpack.c.l.b16 %v496
    %v2094 = vunpack.c.h.b16 %v496
    %v2095 = vunpack.c.l.b16 %v497
    %v2096 = vunpack.c.h.b16 %v497
    %v2097 = vunpack.c.l.b16 %v498
    %v2098 = vunpack.c.h.b16 %v498
    %v2099 = vunpack.c.l.b16 %v499
    %v2100 = vunpack.c.h.b16 %v499
    %v2101 = vunpack.c.l.b16 %v500
    %v2102 = vunpack.c.h.b16 %v500
    %v2103 = vunpack.c.l.b16 %v501
    %v2104 = vunpack.c.h.b16 %v501
    %v2105 = vunpack.c.l.b16 %v502
    %v2106 = vunpack.c.h.b16 %v502
    %v2107 = vunpack.c.l.b16 %v503
    %v2108 = vunpack.c.h.b16 %v503
    %v2109 = vunpack.c.l.b16 %v504
    %v2110 = vunpack.c.h.b16 %v504
    %v2111 = vunpack.c.l.b16 %v505
    %v2112 = vunpack.c.h.b16 %v505
    %v2113 = vunpack.c.l.b16 %v506
    %v2114 = vunpack.c.h.b16 %v506
    %v2115 = vunpack.c.l.b16 %v507
    %v2116 = vunpack.c.h.b16 %v507
    %v2117 = vunpack.c.l.b16 %v508
    %v2118 = vunpack.c.h.b16 %v508
    %v2119 = vunpack.c.l.b16 %v509
    %v2120 = vunpack.c.h.b16 %v509
    %v2121 = vunpack.c.l.b16 %v510
    %v2122 = vunpack.c.h.b16 %v510
    %v2123 = vunpack.c.l.b16 %v511
    %v2124 = vunpack.c.h.b16 %v511
    %v2125 = vunpack.c.l.b16 %v512
    %v2126 = vunpack.c.h.b16 %v512
    %v2127 = vunpack.c.l.b16 %v513
    %v2128 = vunpack.c.h.b16 %v513
    %v2129 = vunpack.c.l.b16 %v514
    %v2130 = vunpack.c.h.b16 %v514
    %v2131 = vunpack.c.l.b16 %v515
    %v2132 = vunpack.c.h.b16 %v515
    %v2133 = vunpack.c.l.b16 %v516
    %v2134 = vunpack.c.h.b16 %v516
    %v2135 = vunpack.c.l.b16 %v517
    %v2136 = vunpack.c.h.b16 %v517
    %v2137 = vunpack.c.l.b16 %v518
    %v2138 = vunpack.c.h.b16 %v518
    %v2139 = vunpack.c.l.b16 %v519
    %v2140 = vunpack.c.h.b16 %v519
    %v2141 = vunpack.c.l.b16 %v520
    %v2142 = vunpack.c.h.b16 %v520
    %v2143 = vunpack.c.l.b16 %v521
    %v2144 = vunpack.c.h.b16 %v521
    %v2145 = vunpack.c.l.b16 %v522
    %v2146 = vunpack.c.h.b16 %v522
    %v2147 = vunpack.c.l.b16 %v523
    %v2148 = vunpack.c.h.b16 %v523
    %v2149 = vunpack.c.l.b16 %v524
    %v2150 = vunpack.c.h.b16 %v524
    %v2151 = vunpack.c.l.b16 %v525
    %v2152 = vunpack.c.h.b16 %v525
    %v2153 = vunpack.c.l.b16 %v526
    %v2154 = vunpack.c.h.b16 %v526
    %v2155 = vunpack.c.l.b16 %v527
    %v2156 = vunpack.c.h.b16 %v527
    %v2157 = vunpack.c.l.b16 %v528
    %v2158 = vunpack.c.h.b16 %v528
    %v2159 = vunpack.c.l.b16 %v529
    %v2160 = vunpack.c.h.b16 %v529
    %v2161 = vunpack.c.l.b16 %v530
    %v2162 = vunpack.c.h.b16 %v530
    %v2163 = vunpack.c.l.b16 %v531
    %v2164 = vunpack.c.h.b16 %v531
    %v2165 = vunpack.c.l.b16 %v532
    %v2166 = vunpack.c.h.b16 %v532
    %v2167 = vunpack.c.l.b16 %v533
    %v2168 = vunpack.c.h.b16 %v533
    %v2169 = vunpack.c.l.b16 %v534
    %v2170 = vunpack.c.h.b16 %v534
    %v2171 = vpack.c.b16 %v1155, %v1147
    %v2172 = vpack.c.b16 %v1156, %v1148
    %v2173 = vpack.c.b16 %v1157, %v1149
    %v2174 = vpack.c.b16 %v1158, %v1150
    %v2175 = vpack.c.b16 %v1159, %v1151
    %v2176 = vpack.c.b16 %v1160, %v1152
    %v2177 = vpack.c.b16 %v1161, %v1153
    %v2178 = vpack.c.b16 %v1162, %v1154
    %v2179 = vpack.c.b16 %v1171, %v1163
    %v2180 = vpack.c.b16 %v1172, %v1164
    %v2181 = vpack.c.b16 %v1173, %v1165
    %v2182 = vpack.c.b16 %v1174, %v1166
    %v2183 = vpack.c.b16 %v1175, %v1167
    %v2184 = vpack.c.b16 %v1176, %v1168
    %v2185 = vpack.c.b16 %v1177, %v1169
    %v2186 = vpack.c.b16 %v1178, %v1170
    %v2187 = vpack.c.b16 %v1187, %v1179
    %v2188 = vpack.c.b16 %v1188, %v1180
    %v2189 = vpack.c.b16 %v1189, %v1181
    %v2190 = vpack.c.b16 %v1190, %v1182
    %v2191 = vpack.c.b16 %v1191, %v1183
    %v2192 = vpack.c.b16 %v1192, %v1184
    %v2193 = vpack.c.b16 %v1193, %v1185
    %v2194 = vpack.c.b16 %v1194, %v1186
    %v2195 = vpack.c.b16 %v1203, %v1195
    %v2196 = vpack.c.b16 %v1204, %v1196
    %v2197 = vpack.c.b16 %v1205, %v1197
    %v2198 = vpack.c.b16 %v1206, %v1198
    %v2199 = vpack.c.b16 %v1207, %v1199
    %v2200 = vpack.c.b16 %v1208, %v1200
    %v2201 = vpack.c.b16 %v1209, %v1201
    %v2202 = vpack.c.b16 %v1210, %v1202
    %v2203 = vpack.c.b16 %v1219, %v1211
    %v2204 = vpack.c.b16 %v1220, %v1212
    %v2205 = vpack.c.b16 %v1221, %v1213
    %v2206 = vpack.c.b16 %v1222, %v1214
    %v2207 = vpack.c.b16 %v1223, %v1215
    %v2208 = vpack.c.b16 %v1224, %v1216
    %v2209 = vpack.c.b16 %v1225, %v1217
    %v2210 = vpack.c.b16 %v1226, %v1218
    %v2211 = vpack.c.b16 %v1235, %v1227
    %v2212 = vpack.c.b16 %v1236, %v1228
    %v2213 = vpack.c.b16 %v1237, %v1229
    %v2214 = vpack.c.b16 %v1238, %v1230
    %v2215 = vpack.c.b16 %v1239, %v1231
    %v2216 = vpack.c.b16 %v1240, %v1232
    %v2217 = vpack.c.b16 %v1241, %v1233
    %v2218 = vpack.c.b16 %v1242, %v1234
    %v2219 = vpack.c.b16 %v1251, %v1243
    %v2220 = vpack.c.b16 %v1252, %v1244
    %v2221 = vpack.c.b16 %v1253, %v1245
    %v2222 = vpack.c.b16 %v1254, %v1246
    %v2223 = vpack.c.b16 %v1255, %v1247
    %v2224 = vpack.c.b16 %v1256, %v1248
    %v2225 = vpack.c.b16 %v1257, %v1249
    %v2226 = vpack.c.b16 %v1258, %v1250
    %v2227 = vpack.c.b16 %v1267, %v1259
    %v2228 = vpack.c.b16 %v1268, %v1260
    %v2229 = vpack.c.b16 %v1269, %v1261
    %v2230 = vpack.c.b16 %v1270, %v1262
    %v2231 = vpack.c.b16 %v1271, %v1263
    %v2232 = vpack.c.b16 %v1272, %v1264
    %v2233 = vpack.c.b16 %v1273, %v1265
    %v2234 = vpack.c.b16 %v1274, %v1266
    %v2235 = vpack.c.b16 %v1283, %v1275
    %v2236 = vpack.c.b16 %v1284, %v1276
    %v2237 = vpack.c.b16 %v1285, %v1277
    %v2238 = vpack.c.b16 %v1286, %v1278
    %v2239 = vpack.c.b16 %v1287, %v1279
    %v2240 = vpack.c.b16 %v1288, %v1280
    %v2241 = vpack.c.b16 %v1289, %v1281
    %v2242 = vpack.c.b16 %v1290, %v1282
    %v2243 = vpack.c.b16 %v1299, %v1291
    %v2244 = vpack.c.b16 %v1300, %v1292
    %v2245 = vpack.c.b16 %v1301, %v1293
    %v2246 = vpack.c.b16 %v1302, %v1294
    %v2247 = vpack.c.b16 %v1303, %v1295
    %v2248 = vpack.c.b16 %v1304, %v1296
    %v2249 = vpack.c.b16 %v1305, %v1297
    %v2250 = vpack.c.b16 %v1306, %v1298
    %v2251 = vpack.c.b16 %v1315, %v1307
    %v2252 = vpack.c.b16 %v1316, %v1308
    %v2253 = vpack.c.b16 %v1317, %v1309
    %v2254 = vpack.c.b16 %v1318, %v1310
    %v2255 = vpack.c.b16 %v1319, %v1311
    %v2256 = vpack.c.b16 %v1320, %v1312
    %v2257 = vpack.c.b16 %v1321, %v1313
    %v2258 = vpack.c.b16 %v1322, %v1314
    %v2259 = vpack.c.b16 %v1331, %v1323
    %v2260 = vpack.c.b16 %v1332, %v1324
    %v2261 = vpack.c.b16 %v1333, %v1325
    %v2262 = vpack.c.b16 %v1334, %v1326
    %v2263 = vpack.c.b16 %v1335, %v1327
    %v2264 = vpack.c.b16 %v1336, %v1328
    %v2265 = vpack.c.b16 %v1337, %v1329
    %v2266 = vpack.c.b16 %v1338, %v1330
    %v2267 = vpack.c.b16 %v1347, %v1339
    %v2268 = vpack.c.b16 %v1348, %v1340
    %v2269 = vpack.c.b16 %v1349, %v1341
    %v2270 = vpack.c.b16 %v1350, %v1342
    %v2271 = vpack.c.b16 %v1351, %v1343
    %v2272 = vpack.c.b16 %v1352, %v1344
    %v2273 = vpack.c.b16 %v1353, %v1345
    %v2274 = vpack.c.b16 %v1354, %v1346
    %v2275 = vpack.c.b16 %v1363, %v1355
    %v2276 = vpack.c.b16 %v1364, %v1356
    %v2277 = vpack.c.b16 %v1365, %v1357
    %v2278 = vpack.c.b16 %v1366, %v1358
    %v2279 = vpack.c.b16 %v1367, %v1359
    %v2280 = vpack.c.b16 %v1368, %v1360
    %v2281 = vpack.c.b16 %v1369, %v1361
    %v2282 = vpack.c.b16 %v1370, %v1362
    %v2283 = vpack.c.b16 %v1379, %v1371
    %v2284 = vpack.c.b16 %v1380, %v1372
    %v2285 = vpack.c.b16 %v1381, %v1373
    %v2286 = vpack.c.b16 %v1382, %v1374
    %v2287 = vpack.c.b16 %v1383, %v1375
    %v2288 = vpack.c.b16 %v1384, %v1376
    %v2289 = vpack.c.b16 %v1385, %v1377
    %v2290 = vpack.c.b16 %v1386, %v1378
    %v2291 = vpack.c.b16 %v1395, %v1387
    %v2292 = vpack.c.b16 %v1396, %v1388
    %v2293 = vpack.c.b16 %v1397, %v1389
    %v2294 = vpack.c.b16 %v1398, %v1390
    %v2295 = vpack.c.b16 %v1399, %v1391
    %v2296 = vpack.c.b16 %v1400, %v1392
    %v2297 = vpack.c.b16 %v1401, %v1393
    %v2298 = vpack.c.b16 %v1402, %v1394
    %v2299 = vpack.c.b16 %v1411, %v1403
    %v2300 = vpack.c.b16 %v1412, %v1404
    %v2301 = vpack.c.b16 %v1413, %v1405
    %v2302 = vpack.c.b16 %v1414, %v1406
    %v2303 = vpack.c.b16 %v1415, %v1407
    %v2304 = vpack.c.b16 %v1416, %v1408
    %v2305 = vpack.c.b16 %v1417, %v1409
    %v2306 = vpack.c.b16 %v1418, %v1410
    %v2307 = vpack.c.b16 %v1427, %v1419
    %v2308 = vpack.c.b16 %v1428, %v1420
    %v2309 = vpack.c.b16 %v1429, %v1421
    %v2310 = vpack.c.b16 %v1430, %v1422
    %v2311 = vpack.c.b16 %v1431, %v1423
    %v2312 = vpack.c.b16 %v1432, %v1424
    %v2313 = vpack.c.b16 %v1433, %v1425
    %v2314 = vpack.c.b16 %v1434, %v1426
    %v2315 = vpack.c.b16 %v1443, %v1435
    %v2316 = vpack.c.b16 %v1444, %v1436
    %v2317 = vpack.c.b16 %v1445, %v1437
    %v2318 = vpack.c.b16 %v1446, %v1438
    %v2319 = vpack.c.b16 %v1447, %v1439
    %v2320 = vpack.c.b16 %v1448, %v1440
    %v2321 = vpack.c.b16 %v1449, %v1441
    %v2322 = vpack.c.b16 %v1450, %v1442
    %v2323 = vpack.c.b16 %v1459, %v1451
    %v2324 = vpack.c.b16 %v1460, %v1452
    %v2325 = vpack.c.b16 %v1461, %v1453
    %v2326 = vpack.c.b16 %v1462, %v1454
    %v2327 = vpack.c.b16 %v1463, %v1455
    %v2328 = vpack.c.b16 %v1464, %v1456
    %v2329 = vpack.c.b16 %v1465, %v1457
    %v2330 = vpack.c.b16 %v1466, %v1458
    %v2331 = vpack.c.b16 %v1475, %v1467
    %v2332 = vpack.c.b16 %v1476, %v1468
    %v2333 = vpack.c.b16 %v1477, %v1469
    %v2334 = vpack.c.b16 %v1478, %v1470
    %v2335 = vpack.c.b16 %v1479, %v1471
    %v2336 = vpack.c.b16 %v1480, %v1472
    %v2337 = vpack.c.b16 %v1481, %v1473
    %v2338 = vpack.c.b16 %v1482, %v1474
    %v2339 = vpack.c.b16 %v1491, %v1483
    %v2340 = vpack.c.b16 %v1492, %v1484
    %v2341 = vpack.c.b16 %v1493, %v1485
    %v2342 = vpack.c.b16 %v1494, %v1486
    %v2343 = vpack.c.b16 %v1495, %v1487
    %v2344 = vpack.c.b16 %v1496, %v1488
    %v2345 = vpack.c.b16 %v1497, %v1489
    %v2346 = vpack.c.b16 %v1498, %v1490
    %v2347 = vpack.c.b16 %v1507, %v1499
    %v2348 = vpack.c.b16 %v1508, %v1500
    %v2349 = vpack.c.b16 %v1509, %v1501
    %v2350 = vpack.c.b16 %v1510, %v1502
    %v2351 = vpack.c.b16 %v1511, %v1503
    %v2352 = vpack.c.b16 %v1512, %v1504
    %v2353 = vpack.c.b16 %v1513, %v1505
    %v2354 = vpack.c.b16 %v1514, %v1506
    %v2355 = vpack.c.b16 %v1523, %v1515
    %v2356 = vpack.c.b16 %v1524, %v1516
    %v2357 = vpack.c.b16 %v1525, %v1517
    %v2358 = vpack.c.b16 %v1526, %v1518
    %v2359 = vpack.c.b16 %v1527, %v1519
    %v2360 = vpack.c.b16 %v1528, %v1520
    %v2361 = vpack.c.b16 %v1529, %v1521
    %v2362 = vpack.c.b16 %v1530, %v1522
    %v2363 = vpack.c.b16 %v1539, %v1531
    %v2364 = vpack.c.b16 %v1540, %v1532
    %v2365 = vpack.c.b16 %v1541, %v1533
    %v2366 = vpack.c.b16 %v1542, %v1534
    %v2367 = vpack.c.b16 %v1543, %v1535
    %v2368 = vpack.c.b16 %v1544, %v1536
    %v2369 = vpack.c.b16 %v1545, %v1537
    %v2370 = vpack.c.b16 %v1546, %v1538
    %v2371 = vpack.c.b16 %v1555, %v1547
    %v2372 = vpack.c.b16 %v1556, %v1548
    %v2373 = vpack.c.b16 %v1557, %v1549
    %v2374 = vpack.c.b16 %v1558, %v1550
    %v2375 = vpack.c.b16 %v1559, %v1551
    %v2376 = vpack.c.b16 %v1560, %v1552
    %v2377 = vpack.c.b16 %v1561, %v1553
    %v2378 = vpack.c.b16 %v1562, %v1554
    %v2379 = vpack.c.b16 %v1571, %v1563
    %v2380 = vpack.c.b16 %v1572, %v1564
    %v2381 = vpack.c.b16 %v1573, %v1565
    %v2382 = vpack.c.b16 %v1574, %v1566
    %v2383 = vpack.c.b16 %v1575, %v1567
    %v2384 = vpack.c.b16 %v1576, %v1568
    %v2385 = vpack.c.b16 %v1577, %v1569
    %v2386 = vpack.c.b16 %v1578, %v1570
    %v2387 = vpack.c.b16 %v1587, %v1579
    %v2388 = vpack.c.b16 %v1588, %v1580
    %v2389 = vpack.c.b16 %v1589, %v1581
    %v2390 = vpack.c.b16 %v1590, %v1582
    %v2391 = vpack.c.b16 %v1591, %v1583
    %v2392 = vpack.c.b16 %v1592, %v1584
    %v2393 = vpack.c.b16 %v1593, %v1585
    %v2394 = vpack.c.b16 %v1594, %v1586
    %v2395 = vpack.c.b16 %v1603, %v1595
    %v2396 = vpack.c.b16 %v1604, %v1596
    %v2397 = vpack.c.b16 %v1605, %v1597
    %v2398 = vpack.c.b16 %v1606, %v1598
    %v2399 = vpack.c.b16 %v1607, %v1599
    %v2400 = vpack.c.b16 %v1608, %v1600
    %v2401 = vpack.c.b16 %v1609, %v1601
    %v2402 = vpack.c.b16 %v1610, %v1602
    %v2403 = vpack.c.b16 %v1619, %v1611
    %v2404 = vpack.c.b16 %v1620, %v1612
    %v2405 = vpack.c.b16 %v1621, %v1613
    %v2406 = vpack.c.b16 %v1622, %v1614
    %v2407 = vpack.c.b16 %v1623, %v1615
    %v2408 = vpack.c.b16 %v1624, %v1616
    %v2409 = vpack.c.b16 %v1625, %v1617
    %v2410 = vpack.c.b16 %v1626, %v1618
    %v2411 = vpack.c.b16 %v1635, %v1627
    %v2412 = vpack.c.b16 %v1636, %v1628
    %v2413 = vpack.c.b16 %v1637, %v1629
    %v2414 = vpack.c.b16 %v1638, %v1630
    %v2415 = vpack.c.b16 %v1639, %v1631
    %v2416 = vpack.c.b16 %v1640, %v1632
    %v2417 = vpack.c.b16 %v1641, %v1633
    %v2418 = vpack.c.b16 %v1642, %v1634
    %v2419 = vpack.c.b16 %v1651, %v1643
    %v2420 = vpack.c.b16 %v1652, %v1644
    %v2421 = vpack.c.b16 %v1653, %v1645
    %v2422 = vpack.c.b16 %v1654, %v1646
    %v2423 = vpack.c.b16 %v1655, %v1647
    %v2424 = vpack.c.b16 %v1656, %v1648
    %v2425 = vpack.c.b16 %v1657, %v1649
    %v2426 = vpack.c.b16 %v1658, %v1650
    %v2427 = vpack.c.b16 %v1667, %v1659
    %v2428 = vpack.c.b16 %v1668, %v1660
    %v2429 = vpack.c.b16 %v1669, %v1661
    %v2430 = vpack.c.b16 %v1670, %v1662
    %v2431 = vpack.c.b16 %v1671, %v1663
    %v2432 = vpack.c.b16 %v1672, %v1664
    %v2433 = vpack.c.b16 %v1673, %v1665
    %v2434 = vpack.c.b16 %v1674, %v1666
    %v2435 = vpack.c.b16 %v1683, %v1675
    %v2436 = vpack.c.b16 %v1684, %v1676
    %v2437 = vpack.c.b16 %v1685, %v1677
    %v2438 = vpack.c.b16 %v1686, %v1678
    %v2439 = vpack.c.b16 %v1687, %v1679
    %v2440 = vpack.c.b16 %v1688, %v1680
    %v2441 = vpack.c.b16 %v1689, %v1681
    %v2442 = vpack.c.b16 %v1690, %v1682
    %v2443 = vpack.c.b16 %v1699, %v1691
    %v2444 = vpack.c.b16 %v1700, %v1692
    %v2445 = vpack.c.b16 %v1701, %v1693
    %v2446 = vpack.c.b16 %v1702, %v1694
    %v2447 = vpack.c.b16 %v1703, %v1695
    %v2448 = vpack.c.b16 %v1704, %v1696
    %v2449 = vpack.c.b16 %v1705, %v1697
    %v2450 = vpack.c.b16 %v1706, %v1698
    %v2451 = vpack.c.b16 %v1715, %v1707
    %v2452 = vpack.c.b16 %v1716, %v1708
    %v2453 = vpack.c.b16 %v1717, %v1709
    %v2454 = vpack.c.b16 %v1718, %v1710
    %v2455 = vpack.c.b16 %v1719, %v1711
    %v2456 = vpack.c.b16 %v1720, %v1712
    %v2457 = vpack.c.b16 %v1721, %v1713
    %v2458 = vpack.c.b16 %v1722, %v1714
    %v2459 = vpack.c.b16 %v1731, %v1723
    %v2460 = vpack.c.b16 %v1732, %v1724
    %v2461 = vpack.c.b16 %v1733, %v1725
    %v2462 = vpack.c.b16 %v1734, %v1726
    %v2463 = vpack.c.b16 %v1735, %v1727
    %v2464 = vpack.c.b16 %v1736, %v1728
    %v2465 = vpack.c.b16 %v1737, %v1729
    %v2466 = vpack.c.b16 %v1738, %v1730
    %v2467 = vpack.c.b16 %v1747, %v1739
    %v2468 = vpack.c.b16 %v1748, %v1740
    %v2469 = vpack.c.b16 %v1749, %v1741
    %v2470 = vpack.c.b16 %v1750, %v1742
    %v2471 = vpack.c.b16 %v1751, %v1743
    %v2472 = vpack.c.b16 %v1752, %v1744
    %v2473 = vpack.c.b16 %v1753, %v1745
    %v2474 = vpack.c.b16 %v1754, %v1746
    %v2475 = vpack.c.b16 %v1763, %v1755
    %v2476 = vpack.c.b16 %v1764, %v1756
    %v2477 = vpack.c.b16 %v1765, %v1757
    %v2478 = vpack.c.b16 %v1766, %v1758
    %v2479 = vpack.c.b16 %v1767, %v1759
    %v2480 = vpack.c.b16 %v1768, %v1760
    %v2481 = vpack.c.b16 %v1769, %v1761
    %v2482 = vpack.c.b16 %v1770, %v1762
    %v2483 = vpack.c.b16 %v1779, %v1771
    %v2484 = vpack.c.b16 %v1780, %v1772
    %v2485 = vpack.c.b16 %v1781, %v1773
    %v2486 = vpack.c.b16 %v1782, %v1774
    %v2487 = vpack.c.b16 %v1783, %v1775
    %v2488 = vpack.c.b16 %v1784, %v1776
    %v2489 = vpack.c.b16 %v1785, %v1777
    %v2490 = vpack.c.b16 %v1786, %v1778
    %v2491 = vpack.c.b16 %v1795, %v1787
    %v2492 = vpack.c.b16 %v1796, %v1788
    %v2493 = vpack.c.b16 %v1797, %v1789
    %v2494 = vpack.c.b16 %v1798, %v1790
    %v2495 = vpack.c.b16 %v1799, %v1791
    %v2496 = vpack.c.b16 %v1800, %v1792
    %v2497 = vpack.c.b16 %v1801, %v1793
    %v2498 = vpack.c.b16 %v1802, %v1794
    %v2499 = vpack.c.b16 %v1811, %v1803
    %v2500 = vpack.c.b16 %v1812, %v1804
    %v2501 = vpack.c.b16 %v1813, %v1805
    %v2502 = vpack.c.b16 %v1814, %v1806
    %v2503 = vpack.c.b16 %v1815, %v1807
    %v2504 = vpack.c.b16 %v1816, %v1808
    %v2505 = vpack.c.b16 %v1817, %v1809
    %v2506 = vpack.c.b16 %v1818, %v1810
    %v2507 = vpack.c.b16 %v1827, %v1819
    %v2508 = vpack.c.b16 %v1828, %v1820
    %v2509 = vpack.c.b16 %v1829, %v1821
    %v2510 = vpack.c.b16 %v1830, %v1822
    %v2511 = vpack.c.b16 %v1831, %v1823
    %v2512 = vpack.c.b16 %v1832, %v1824
    %v2513 = vpack.c.b16 %v1833, %v1825
    %v2514 = vpack.c.b16 %v1834, %v1826
    %v2515 = vpack.c.b16 %v1843, %v1835
    %v2516 = vpack.c.b16 %v1844, %v1836
    %v2517 = vpack.c.b16 %v1845, %v1837
    %v2518 = vpack.c.b16 %v1846, %v1838
    %v2519 = vpack.c.b16 %v1847, %v1839
    %v2520 = vpack.c.b16 %v1848, %v1840
    %v2521 = vpack.c.b16 %v1849, %v1841
    %v2522 = vpack.c.b16 %v1850, %v1842
    %v2523 = vpack.c.b16 %v1859, %v1851
    %v2524 = vpack.c.b16 %v1860, %v1852
    %v2525 = vpack.c.b16 %v1861, %v1853
    %v2526 = vpack.c.b16 %v1862, %v1854
    %v2527 = vpack.c.b16 %v1863, %v1855
    %v2528 = vpack.c.b16 %v1864, %v1856
    %v2529 = vpack.c.b16 %v1865, %v1857
    %v2530 = vpack.c.b16 %v1866, %v1858
    %v2531 = vpack.c.b16 %v1875, %v1867
    %v2532 = vpack.c.b16 %v1876, %v1868
    %v2533 = vpack.c.b16 %v1877, %v1869
    %v2534 = vpack.c.b16 %v1878, %v1870
    %v2535 = vpack.c.b16 %v1879, %v1871
    %v2536 = vpack.c.b16 %v1880, %v1872
    %v2537 = vpack.c.b16 %v1881, %v1873
    %v2538 = vpack.c.b16 %v1882, %v1874
    %v2539 = vpack.c.b16 %v1891, %v1883
    %v2540 = vpack.c.b16 %v1892, %v1884
    %v2541 = vpack.c.b16 %v1893, %v1885
    %v2542 = vpack.c.b16 %v1894, %v1886
    %v2543 = vpack.c.b16 %v1895, %v1887
    %v2544 = vpack.c.b16 %v1896, %v1888
    %v2545 = vpack.c.b16 %v1897, %v1889
    %v2546 = vpack.c.b16 %v1898, %v1890
    %v2547 = vpack.c.b16 %v1907, %v1899
    %v2548 = vpack.c.b16 %v1908, %v1900
    %v2549 = vpack.c.b16 %v1909, %v1901
    %v2550 = vpack.c.b16 %v1910, %v1902
    %v2551 = vpack.c.b16 %v1911, %v1903
    %v2552 = vpack.c.b16 %v1912, %v1904
    %v2553 = vpack.c.b16 %v1913, %v1905
    %v2554 = vpack.c.b16 %v1914, %v1906
    %v2555 = vpack.c.b16 %v1923, %v1915
    %v2556 = vpack.c.b16 %v1924, %v1916
    %v2557 = vpack.c.b16 %v1925, %v1917
    %v2558 = vpack.c.b16 %v1926, %v1918
    %v2559 = vpack.c.b16 %v1927, %v1919
    %v2560 = vpack.c.b16 %v1928, %v1920
    %v2561 = vpack.c.b16 %v1929, %v1921
    %v2562 = vpack.c.b16 %v1930, %v1922
    %v2563 = vpack.c.b16 %v1939, %v1931
    %v2564 = vpack.c.b16 %v1940, %v1932
    %v2565 = vpack.c.b16 %v1941, %v1933
    %v2566 = vpack.c.b16 %v1942, %v1934
    %v2567 = vpack.c.b16 %v1943, %v1935
    %v2568 = vpack.c.b16 %v1944, %v1936
    %v2569 = vpack.c.b16 %v1945, %v1937
    %v2570 = vpack.c.b16 %v1946, %v1938
    %v2571 = vpack.c.b16 %v1955, %v1947
    %v2572 = vpack.c.b16 %v1956, %v1948
    %v2573 = vpack.c.b16 %v1957, %v1949
    %v2574 = vpack.c.b16 %v1958, %v1950
    %v2575 = vpack.c.b16 %v1959, %v1951
    %v2576 = vpack.c.b16 %v1960, %v1952
    %v2577 = vpack.c.b16 %v1961, %v1953
    %v2578 = vpack.c.b16 %v1962, %v1954
    %v2579 = vpack.c.b16 %v1971, %v1963
    %v2580 = vpack.c.b16 %v1972, %v1964
    %v2581 = vpack.c.b16 %v1973, %v1965
    %v2582 = vpack.c.b16 %v1974, %v1966
    %v2583 = vpack.c.b16 %v1975, %v1967
    %v2584 = vpack.c.b16 %v1976, %v1968
    %v2585 = vpack.c.b16 %v1977, %v1969
    %v2586 = vpack.c.b16 %v1978, %v1970
    %v2587 = vpack.c.b16 %v1987, %v1979
    %v2588 = vpack.c.b16 %v1988, %v1980
    %v2589 = vpack.c.b16 %v1989, %v1981
    %v2590 = vpack.c.b16 %v1990, %v1982
    %v2591 = vpack.c.b16 %v1991, %v1983
    %v2592 = vpack.c.b16 %v1992, %v1984
    %v2593 = vpack.c.b16 %v1993, %v1985
    %v2594 = vpack.c.b16 %v1994, %v1986
    %v2595 = vpack.c.b16 %v2003, %v1995
    %v2596 = vpack.c.b16 %v2004, %v1996
    %v2597 = vpack.c.b16 %v2005, %v1997
    %v2598 = vpack.c.b16 %v2006, %v1998
    %v2599 = vpack.c.b16 %v2007, %v1999
    %v2600 = vpack.c.b16 %v2008, %v2000
    %v2601 = vpack.c.b16 %v2009, %v2001
    %v2602 = vpack.c.b16 %v2010, %v2002
    %v2603 = vpack.c.b16 %v2019, %v2011
    %v2604 = vpack.c.b16 %v2020, %v2012
    %v2605 = vpack.c.b16 %v2021, %v2013
    %v2606 = vpack.c.b16 %v2022, %v2014
    %v2607 = vpack.c.b16 %v2023, %v2015
    %v2608 = vpack.c.b16 %v2024, %v2016
    %v2609 = vpack.c.b16 %v2025, %v2017
    %v2610 = vpack.c.b16 %v2026, %v2018
    %v2611 = vpack.c.b16 %v2035, %v2027
    %v2612 = vpack.c.b16 %v2036, %v2028
    %v2613 = vpack.c.b16 %v2037, %v2029
    %v2614 = vpack.c.b16 %v2038, %v2030
    %v2615 = vpack.c.b16 %v2039, %v2031
    %v2616 = vpack.c.b16 %v2040, %v2032
    %v2617 = vpack.c.b16 %v2041, %v2033
    %v2618 = vpack.c.b16 %v2042, %v2034
    %v2619 = vpack.c.b16 %v2051, %v2043
    %v2620 = vpack.c.b16 %v2052, %v2044
    %v2621 = vpack.c.b16 %v2053, %v2045
    %v2622 = vpack.c.b16 %v2054, %v2046
    %v2623 = vpack.c.b16 %v2055, %v2047
    %v2624 = vpack.c.b16 %v2056, %v2048
    %v2625 = vpack.c.b16 %v2057, %v2049
    %v2626 = vpack.c.b16 %v2058, %v2050
    %v2627 = vpack.c.b16 %v2067, %v2059
    %v2628 = vpack.c.b16 %v2068, %v2060
    %v2629 = vpack.c.b16 %v2069, %v2061
    %v2630 = vpack.c.b16 %v2070, %v2062
    %v2631 = vpack.c.b16 %v2071, %v2063
    %v2632 = vpack.c.b16 %v2072, %v2064
    %v2633 = vpack.c.b16 %v2073, %v2065
    %v2634 = vpack.c.b16 %v2074, %v2066
    %v2635 = vpack.c.b16 %v2083, %v2075
    %v2636 = vpack.c.b16 %v2084, %v2076
    %v2637 = vpack.c.b16 %v2085, %v2077
    %v2638 = vpack.c.b16 %v2086, %v2078
    %v2639 = vpack.c.b16 %v2087, %v2079
    %v2640 = vpack.c.b16 %v2088, %v2080
    %v2641 = vpack.c.b16 %v2089, %v2081
    %v2642 = vpack.c.b16 %v2090, %v2082
    %v2643 = vpack.c.b16 %v2099, %v2091
    %v2644 = vpack.c.b16 %v2100, %v2092
    %v2645 = vpack.c.b16 %v2101, %v2093
    %v2646 = vpack.c.b16 %v2102, %v2094
    %v2647 = vpack.c.b16 %v2103, %v2095
    %v2648 = vpack.c.b16 %v2104, %v2096
    %v2649 = vpack.c.b16 %v2105, %v2097
    %v2650 = vpack.c.b16 %v2106, %v2098
    %v2651 = vpack.c.b16 %v2115, %v2107
    %v2652 = vpack.c.b16 %v2116, %v2108
    %v2653 = vpack.c.b16 %v2117, %v2109
    %v2654 = vpack.c.b16 %v2118, %v2110
    %v2655 = vpack.c.b16 %v2119, %v2111
    %v2656 = vpack.c.b16 %v2120, %v2112
    %v2657 = vpack.c.b16 %v2121, %v2113
    %v2658 = vpack.c.b16 %v2122, %v2114
    %v2659 = vpack.c.b16 %v2131, %v2123
    %v2660 = vpack.c.b16 %v2132, %v2124
    %v2661 = vpack.c.b16 %v2133, %v2125
    %v2662 = vpack.c.b16 %v2134, %v2126
    %v2663 = vpack.c.b16 %v2135, %v2127
    %v2664 = vpack.c.b16 %v2136, %v2128
    %v2665 = vpack.c.b16 %v2137, %v2129
    %v2666 = vpack.c.b16 %v2138, %v2130
    %v2667 = vpack.c.b16 %v2147, %v2139
    %v2668 = vpack.c.b16 %v2148, %v2140
    %v2669 = vpack.c.b16 %v2149, %v2141
    %v2670 = vpack.c.b16 %v2150, %v2142
    %v2671 = vpack.c.b16 %v2151, %v2143
    %v2672 = vpack.c.b16 %v2152, %v2144
    %v2673 = vpack.c.b16 %v2153, %v2145
    %v2674 = vpack.c.b16 %v2154, %v2146
    %v2675 = vpack.c.b16 %v2163, %v2155
    %v2676 = vpack.c.b16 %v2164, %v2156
    %v2677 = vpack.c.b16 %v2165, %v2157
    %v2678 = vpack.c.b16 %v2166, %v2158
    %v2679 = vpack.c.b16 %v2167, %v2159
    %v2680 = vpack.c.b16 %v2168, %v2160
    %v2681 = vpack.c.b16 %v2169, %v2161
    %v2682 = vpack.c.b16 %v2170, %v2162
    %3195 = vmatprep.subr.bf16.mxu0 %v2172
    %3196 = vmatpush1.bf16.msra.mxu0 %v2171
    %3197 = vmatprep.subr.bf16.mxu0 %v2180
    %3198 = vmatpush1.bf16.msra.mxu0 %v2179
    %3199 = vmatprep.subr.bf16.mxu0 %v2188
    %3200 = vmatpush1.bf16.msra.mxu0 %v2187
    %3201 = vmatprep.subr.bf16.mxu0 %v2196
    %3202 = vmatpush1.bf16.msra.mxu0 %v2195
    %3203 = vmatprep.subr.bf16.mxu0 %v2204
    %3204 = vmatpush1.bf16.msra.mxu0 %v2203
    %3205 = vmatprep.subr.bf16.mxu0 %v2212
    %3206 = vmatpush1.bf16.msra.mxu0 %v2211
    %3207 = vmatprep.subr.bf16.mxu0 %v2220
    %3208 = vmatpush1.bf16.msra.mxu0 %v2219
    %3209 = vmatprep.subr.bf16.mxu0 %v2228
    %3210 = vmatpush1.bf16.msra.mxu0 %v2227
    %3211 = vmatprep.subr.bf16.mxu0 %v2236
    %3212 = vmatpush1.bf16.msra.mxu0 %v2235
    %3213 = vmatprep.subr.bf16.mxu0 %v2244
    %3214 = vmatpush1.bf16.msra.mxu0 %v2243
    %3215 = vmatprep.subr.bf16.mxu0 %v2252
    %3216 = vmatpush1.bf16.msra.mxu0 %v2251
    %3217 = vmatprep.subr.bf16.mxu0 %v2260
    %3218 = vmatpush1.bf16.msra.mxu0 %v2259
    %3219 = vmatprep.subr.bf16.mxu0 %v2268
    %3220 = vmatpush1.bf16.msra.mxu0 %v2267
    %3221 = vmatprep.subr.bf16.mxu0 %v2276
    %3222 = vmatpush1.bf16.msra.mxu0 %v2275
    %3223 = vmatprep.subr.bf16.mxu0 %v2284
    %3224 = vmatpush1.bf16.msra.mxu0 %v2283
    %3225 = vmatprep.subr.bf16.mxu0 %v2292
    %3226 = vmatpush1.bf16.msra.mxu0 %v2291
    %3227 = vmatprep.mubr.bf16.mxu0 %v615
    %3228 = vmatmul.mubr.bf16.gmra.mrb[0].mxu0 %v601
    %v3229 = vpop.f32.mrb[0].mxu0
    %v3230 = vadd.f32 %v540, %v3229
    %v3231 = vpop.f32.mrb[0].mxu0
    %v3232 = vadd.f32 %v544, %v3231
    %v3233 = vpop.f32.mrb[0].mxu0
    %v3234 = vpop.f32.mrb[0].mxu0
    %3235 = vdwg.mxu0
    %3236 = vmatprep.subr.bf16.mxu0 %v2300
    %3237 = vmatpush1.bf16.msra.mxu0 %v2299
    %3238 = vmatprep.subr.bf16.mxu0 %v2308
    %3239 = vmatpush1.bf16.msra.mxu0 %v2307
    %3240 = vmatprep.subr.bf16.mxu0 %v2316
    %3241 = vmatpush1.bf16.msra.mxu0 %v2315
    %3242 = vmatprep.subr.bf16.mxu0 %v2324
    %3243 = vmatpush1.bf16.msra.mxu0 %v2323
    %3244 = vmatprep.subr.bf16.mxu0 %v2332
    %3245 = vmatpush1.bf16.msra.mxu0 %v2331
    %3246 = vmatprep.subr.bf16.mxu0 %v2340
    %3247 = vmatpush1.bf16.msra.mxu0 %v2339
    %3248 = vmatprep.subr.bf16.mxu0 %v2348
    %3249 = vmatpush1.bf16.msra.mxu0 %v2347
    %3250 = vmatprep.subr.bf16.mxu0 %v2356
    %3251 = vmatpush1.bf16.msra.mxu0 %v2355
    %3252 = vmatprep.subr.bf16.mxu0 %v2364
    %3253 = vmatpush1.bf16.msra.mxu0 %v2363
    %3254 = vmatprep.subr.bf16.mxu0 %v2372
    %3255 = vmatpush1.bf16.msra.mxu0 %v2371
    %3256 = vmatprep.subr.bf16.mxu0 %v2380
    %3257 = vmatpush1.bf16.msra.mxu0 %v2379
    %3258 = vmatprep.subr.bf16.mxu0 %v2388
    %3259 = vmatpush1.bf16.msra.mxu0 %v2387
    %3260 = vmatprep.subr.bf16.mxu0 %v2396
    %3261 = vmatpush1.bf16.msra.mxu0 %v2395
    %3262 = vmatprep.subr.bf16.mxu0 %v2404
    %3263 = vmatpush1.bf16.msra.mxu0 %v2403
    %3264 = vmatprep.subr.bf16.mxu0 %v2412
    %3265 = vmatpush1.bf16.msra.mxu0 %v2411
    %3266 = vmatprep.subr.bf16.mxu0 %v2420
    %3267 = vmatpush1.bf16.msra.mxu0 %v2419
    %3268 = vmatprep.mubr.bf16.mxu0 %v625
    %3269 = vmatmul.mubr.bf16.gmra.mrb[0].mxu0 %v623
    %v3270 = vpop.f32.mrb[0].mxu0
    %v3271 = vadd.f32 %v3230, %v3270
    %v3272 = vpop.f32.mrb[0].mxu0
    %v3273 = vadd.f32 %v3232, %v3272
    %v3274 = vpop.f32.mrb[0].mxu0
    %v3275 = vpop.f32.mrb[0].mxu0
    %3276 = vdwg.mxu0
    %3277 = vmatprep.subr.bf16.mxu0 %v2428
    %3278 = vmatpush1.bf16.msra.mxu0 %v2427
    %3279 = vmatprep.subr.bf16.mxu0 %v2436
    %3280 = vmatpush1.bf16.msra.mxu0 %v2435
    %3281 = vmatprep.subr.bf16.mxu0 %v2444
    %3282 = vmatpush1.bf16.msra.mxu0 %v2443
    %3283 = vmatprep.subr.bf16.mxu0 %v2452
    %3284 = vmatpush1.bf16.msra.mxu0 %v2451
    %3285 = vmatprep.subr.bf16.mxu0 %v2460
    %3286 = vmatpush1.bf16.msra.mxu0 %v2459
    %3287 = vmatprep.subr.bf16.mxu0 %v2468
    %3288 = vmatpush1.bf16.msra.mxu0 %v2467
    %3289 = vmatprep.subr.bf16.mxu0 %v2476
    %3290 = vmatpush1.bf16.msra.mxu0 %v2475
    %3291 = vmatprep.subr.bf16.mxu0 %v2484
    %3292 = vmatpush1.bf16.msra.mxu0 %v2483
    %3293 = vmatprep.subr.bf16.mxu0 %v2492
    %3294 = vmatpush1.bf16.msra.mxu0 %v2491
    %3295 = vmatprep.subr.bf16.mxu0 %v2500
    %3296 = vmatpush1.bf16.msra.mxu0 %v2499
    %3297 = vmatprep.subr.bf16.mxu0 %v2508
    %3298 = vmatpush1.bf16.msra.mxu0 %v2507
    %3299 = vmatprep.subr.bf16.mxu0 %v2516
    %3300 = vmatpush1.bf16.msra.mxu0 %v2515
    %3301 = vmatprep.subr.bf16.mxu0 %v2524
    %3302 = vmatpush1.bf16.msra.mxu0 %v2523
    %3303 = vmatprep.subr.bf16.mxu0 %v2532
    %3304 = vmatpush1.bf16.msra.mxu0 %v2531
    %3305 = vmatprep.subr.bf16.mxu0 %v2540
    %3306 = vmatpush1.bf16.msra.mxu0 %v2539
    %3307 = vmatprep.subr.bf16.mxu0 %v2548
    %3308 = vmatpush1.bf16.msra.mxu0 %v2547
    %3309 = vmatprep.mubr.bf16.mxu0 %v622
    %3310 = vmatmul.mubr.bf16.gmra.mrb[0].mxu0 %v608
    %v3311 = vpop.f32.mrb[0].mxu0
    %v3312 = vadd.f32 %v3271, %v3311
    %v3313 = vpop.f32.mrb[0].mxu0
    %v3314 = vadd.f32 %v3273, %v3313
    %v3315 = vpop.f32.mrb[0].mxu0
    %v3316 = vpop.f32.mrb[0].mxu0
    %3317 = vdwg.mxu0
    %3318 = vmatprep.subr.bf16.mxu0 %v2556
    %3319 = vmatpush1.bf16.msra.mxu0 %v2555
    %3320 = vmatprep.subr.bf16.mxu0 %v2564
    %3321 = vmatpush1.bf16.msra.mxu0 %v2563
    %3322 = vmatprep.subr.bf16.mxu0 %v2572
    %3323 = vmatpush1.bf16.msra.mxu0 %v2571
    %3324 = vmatprep.subr.bf16.mxu0 %v2580
    %3325 = vmatpush1.bf16.msra.mxu0 %v2579
    %3326 = vmatprep.subr.bf16.mxu0 %v2588
    %3327 = vmatpush1.bf16.msra.mxu0 %v2587
    %3328 = vmatprep.subr.bf16.mxu0 %v2596
    %3329 = vmatpush1.bf16.msra.mxu0 %v2595
    %3330 = vmatprep.subr.bf16.mxu0 %v2604
    %3331 = vmatpush1.bf16.msra.mxu0 %v2603
    %3332 = vmatprep.subr.bf16.mxu0 %v2612
    %3333 = vmatpush1.bf16.msra.mxu0 %v2611
    %3334 = vmatprep.subr.bf16.mxu0 %v2620
    %3335 = vmatpush1.bf16.msra.mxu0 %v2619
    %3336 = vmatprep.subr.bf16.mxu0 %v2628
    %3337 = vmatpush1.bf16.msra.mxu0 %v2627
    %3338 = vmatprep.subr.bf16.mxu0 %v2636
    %3339 = vmatpush1.bf16.msra.mxu0 %v2635
    %3340 = vmatprep.subr.bf16.mxu0 %v2644
    %3341 = vmatpush1.bf16.msra.mxu0 %v2643
    %3342 = vmatprep.subr.bf16.mxu0 %v2652
    %3343 = vmatpush1.bf16.msra.mxu0 %v2651
    %3344 = vmatprep.subr.bf16.mxu0 %v2660
    %3345 = vmatpush1.bf16.msra.mxu0 %v2659
    %3346 = vmatprep.subr.bf16.mxu0 %v2668
    %3347 = vmatpush1.bf16.msra.mxu0 %v2667
    %3348 = vmatprep.subr.bf16.mxu0 %v2676
    %3349 = vmatpush1.bf16.msra.mxu0 %v2675
    %3350 = vmatprep.mubr.bf16.mxu0 %v626
    %3351 = vmatmul.mubr.bf16.gmra.mrb[0].mxu0 %v624
    %v3352 = vpop.f32.mrb[0].mxu0
    %v3353 = vadd.f32 %v3312, %v3352
    %v3354 = vpop.f32.mrb[0].mxu0
    %v3355 = vadd.f32 %v3314, %v3354
    %v3356 = vpop.f32.mrb[0].mxu0
    %v3357 = vpop.f32.mrb[0].mxu0
    %3358 = vdwg.mxu0
    %3359 = vmatprep.subr.bf16.mxu0 %v2174
    %3360 = vmatpush1.bf16.msra.mxu0 %v2173
    %3361 = vmatprep.subr.bf16.mxu0 %v2182
    %3362 = vmatpush1.bf16.msra.mxu0 %v2181
    %3363 = vmatprep.subr.bf16.mxu0 %v2190
    %3364 = vmatpush1.bf16.msra.mxu0 %v2189
    %3365 = vmatprep.subr.bf16.mxu0 %v2198
    %3366 = vmatpush1.bf16.msra.mxu0 %v2197
    %3367 = vmatprep.subr.bf16.mxu0 %v2206
    %3368 = vmatpush1.bf16.msra.mxu0 %v2205
    %3369 = vmatprep.subr.bf16.mxu0 %v2214
    %3370 = vmatpush1.bf16.msra.mxu0 %v2213
    %3371 = vmatprep.subr.bf16.mxu0 %v2222
    %3372 = vmatpush1.bf16.msra.mxu0 %v2221
    %3373 = vmatprep.subr.bf16.mxu0 %v2230
    %3374 = vmatpush1.bf16.msra.mxu0 %v2229
    %3375 = vmatprep.subr.bf16.mxu0 %v2238
    %3376 = vmatpush1.bf16.msra.mxu0 %v2237
    %3377 = vmatprep.subr.bf16.mxu0 %v2246
    %3378 = vmatpush1.bf16.msra.mxu0 %v2245
    %3379 = vmatprep.subr.bf16.mxu0 %v2254
    %3380 = vmatpush1.bf16.msra.mxu0 %v2253
    %3381 = vmatprep.subr.bf16.mxu0 %v2262
    %3382 = vmatpush1.bf16.msra.mxu0 %v2261
    %3383 = vmatprep.subr.bf16.mxu0 %v2270
    %3384 = vmatpush1.bf16.msra.mxu0 %v2269
    %3385 = vmatprep.subr.bf16.mxu0 %v2278
    %3386 = vmatpush1.bf16.msra.mxu0 %v2277
    %3387 = vmatprep.subr.bf16.mxu0 %v2286
    %3388 = vmatpush1.bf16.msra.mxu0 %v2285
    %3389 = vmatprep.subr.bf16.mxu0 %v2294
    %3390 = vmatpush1.bf16.msra.mxu0 %v2293
    %3391 = vmatprep.mubr.bf16.mxu0 %v615
    %3392 = vmatmul.mubr.bf16.gmra.mrb[0].mxu0 %v601
    %v3393 = vpop.f32.mrb[0].mxu0
    %v3394 = vadd.f32 %v548, %v3393
    %v3395 = vpop.f32.mrb[0].mxu0
    %v3396 = vadd.f32 %v552, %v3395
    %v3397 = vpop.f32.mrb[0].mxu0
    %v3398 = vpop.f32.mrb[0].mxu0
    %3399 = vdwg.mxu0
    %3400 = vmatprep.subr.bf16.mxu0 %v2302
    %3401 = vmatpush1.bf16.msra.mxu0 %v2301
    %3402 = vmatprep.subr.bf16.mxu0 %v2310
    %3403 = vmatpush1.bf16.msra.mxu0 %v2309
    %3404 = vmatprep.subr.bf16.mxu0 %v2318
    %3405 = vmatpush1.bf16.msra.mxu0 %v2317
    %3406 = vmatprep.subr.bf16.mxu0 %v2326
    %3407 = vmatpush1.bf16.msra.mxu0 %v2325
    %3408 = vmatprep.subr.bf16.mxu0 %v2334
    %3409 = vmatpush1.bf16.msra.mxu0 %v2333
    %3410 = vmatprep.subr.bf16.mxu0 %v2342
    %3411 = vmatpush1.bf16.msra.mxu0 %v2341
    %3412 = vmatprep.subr.bf16.mxu0 %v2350
    %3413 = vmatpush1.bf16.msra.mxu0 %v2349
    %3414 = vmatprep.subr.bf16.mxu0 %v2358
    %3415 = vmatpush1.bf16.msra.mxu0 %v2357
    %3416 = vmatprep.subr.bf16.mxu0 %v2366
    %3417 = vmatpush1.bf16.msra.mxu0 %v2365
    %3418 = vmatprep.subr.bf16.mxu0 %v2374
    %3419 = vmatpush1.bf16.msra.mxu0 %v2373
    %3420 = vmatprep.subr.bf16.mxu0 %v2382
    %3421 = vmatpush1.bf16.msra.mxu0 %v2381
    %3422 = vmatprep.subr.bf16.mxu0 %v2390
    %3423 = vmatpush1.bf16.msra.mxu0 %v2389
    %3424 = vmatprep.subr.bf16.mxu0 %v2398
    %3425 = vmatpush1.bf16.msra.mxu0 %v2397
    %3426 = vmatprep.subr.bf16.mxu0 %v2406
    %3427 = vmatpush1.bf16.msra.mxu0 %v2405
    %3428 = vmatprep.subr.bf16.mxu0 %v2414
    %3429 = vmatpush1.bf16.msra.mxu0 %v2413
    %3430 = vmatprep.subr.bf16.mxu0 %v2422
    %3431 = vmatpush1.bf16.msra.mxu0 %v2421
    %3432 = vmatprep.mubr.bf16.mxu0 %v625
    %3433 = vmatmul.mubr.bf16.gmra.mrb[0].mxu0 %v623
    %v3434 = vpop.f32.mrb[0].mxu0
    %v3435 = vadd.f32 %v3394, %v3434
    %v3436 = vpop.f32.mrb[0].mxu0
    %v3437 = vadd.f32 %v3396, %v3436
    %v3438 = vpop.f32.mrb[0].mxu0
    %v3439 = vpop.f32.mrb[0].mxu0
    %3440 = vdwg.mxu0
    %3441 = vmatprep.subr.bf16.mxu0 %v2430
    %3442 = vmatpush1.bf16.msra.mxu0 %v2429
    %3443 = vmatprep.subr.bf16.mxu0 %v2438
    %3444 = vmatpush1.bf16.msra.mxu0 %v2437
    %3445 = vmatprep.subr.bf16.mxu0 %v2446
    %3446 = vmatpush1.bf16.msra.mxu0 %v2445
    %3447 = vmatprep.subr.bf16.mxu0 %v2454
    %3448 = vmatpush1.bf16.msra.mxu0 %v2453
    %3449 = vmatprep.subr.bf16.mxu0 %v2462
    %3450 = vmatpush1.bf16.msra.mxu0 %v2461
    %3451 = vmatprep.subr.bf16.mxu0 %v2470
    %3452 = vmatpush1.bf16.msra.mxu0 %v2469
    %3453 = vmatprep.subr.bf16.mxu0 %v2478
    %3454 = vmatpush1.bf16.msra.mxu0 %v2477
    %3455 = vmatprep.subr.bf16.mxu0 %v2486
    %3456 = vmatpush1.bf16.msra.mxu0 %v2485
    %3457 = vmatprep.subr.bf16.mxu0 %v2494
    %3458 = vmatpush1.bf16.msra.mxu0 %v2493
    %3459 = vmatprep.subr.bf16.mxu0 %v2502
    %3460 = vmatpush1.bf16.msra.mxu0 %v2501
    %3461 = vmatprep.subr.bf16.mxu0 %v2510
    %3462 = vmatpush1.bf16.msra.mxu0 %v2509
    %3463 = vmatprep.subr.bf16.mxu0 %v2518
    %3464 = vmatpush1.bf16.msra.mxu0 %v2517
    %3465 = vmatprep.subr.bf16.mxu0 %v2526
    %3466 = vmatpush1.bf16.msra.mxu0 %v2525
    %3467 = vmatprep.subr.bf16.mxu0 %v2534
    %3468 = vmatpush1.bf16.msra.mxu0 %v2533
    %3469 = vmatprep.subr.bf16.mxu0 %v2542
    %3470 = vmatpush1.bf16.msra.mxu0 %v2541
    %3471 = vmatprep.subr.bf16.mxu0 %v2550
    %3472 = vmatpush1.bf16.msra.mxu0 %v2549
    %3473 = vmatprep.mubr.bf16.mxu0 %v622
    %3474 = vmatmul.mubr.bf16.gmra.mrb[0].mxu0 %v608
    %v3475 = vpop.f32.mrb[0].mxu0
    %v3476 = vadd.f32 %v3435, %v3475
    %v3477 = vpop.f32.mrb[0].mxu0
    %v3478 = vadd.f32 %v3437, %v3477
    %v3479 = vpop.f32.mrb[0].mxu0
    %v3480 = vpop.f32.mrb[0].mxu0
    %3481 = vdwg.mxu0
    %3482 = vmatprep.subr.bf16.mxu0 %v2558
    %3483 = vmatpush1.bf16.msra.mxu0 %v2557
    %3484 = vmatprep.subr.bf16.mxu0 %v2566
    %3485 = vmatpush1.bf16.msra.mxu0 %v2565
    %3486 = vmatprep.subr.bf16.mxu0 %v2574
    %3487 = vmatpush1.bf16.msra.mxu0 %v2573
    %3488 = vmatprep.subr.bf16.mxu0 %v2582
    %3489 = vmatpush1.bf16.msra.mxu0 %v2581
    %3490 = vmatprep.subr.bf16.mxu0 %v2590
    %3491 = vmatpush1.bf16.msra.mxu0 %v2589
    %3492 = vmatprep.subr.bf16.mxu0 %v2598
    %3493 = vmatpush1.bf16.msra.mxu0 %v2597
    %3494 = vmatprep.subr.bf16.mxu0 %v2606
    %3495 = vmatpush1.bf16.msra.mxu0 %v2605
    %3496 = vmatprep.subr.bf16.mxu0 %v2614
    %3497 = vmatpush1.bf16.msra.mxu0 %v2613
    %3498 = vmatprep.subr.bf16.mxu0 %v2622
    %3499 = vmatpush1.bf16.msra.mxu0 %v2621
    %3500 = vmatprep.subr.bf16.mxu0 %v2630
    %3501 = vmatpush1.bf16.msra.mxu0 %v2629
    %3502 = vmatprep.subr.bf16.mxu0 %v2638
    %3503 = vmatpush1.bf16.msra.mxu0 %v2637
    %3504 = vmatprep.subr.bf16.mxu0 %v2646
    %3505 = vmatpush1.bf16.msra.mxu0 %v2645
    %3506 = vmatprep.subr.bf16.mxu0 %v2654
    %3507 = vmatpush1.bf16.msra.mxu0 %v2653
    %3508 = vmatprep.subr.bf16.mxu0 %v2662
    %3509 = vmatpush1.bf16.msra.mxu0 %v2661
    %3510 = vmatprep.subr.bf16.mxu0 %v2670
    %3511 = vmatpush1.bf16.msra.mxu0 %v2669
    %3512 = vmatprep.subr.bf16.mxu0 %v2678
    %3513 = vmatpush1.bf16.msra.mxu0 %v2677
    %3514 = vmatprep.mubr.bf16.mxu0 %v626
    %3515 = vmatmul.mubr.bf16.gmra.mrb[0].mxu0 %v624
    %v3516 = vpop.f32.mrb[0].mxu0
    %v3517 = vadd.f32 %v3476, %v3516
    %v3518 = vpop.f32.mrb[0].mxu0
    %v3519 = vadd.f32 %v3478, %v3518
    %v3520 = vpop.f32.mrb[0].mxu0
    %v3521 = vpop.f32.mrb[0].mxu0
    %3522 = vdwg.mxu0
    %3523 = vmatprep.subr.bf16.mxu0 %v2176
    %3524 = vmatpush1.bf16.msra.mxu0 %v2175
    %3525 = vmatprep.subr.bf16.mxu0 %v2184
    %3526 = vmatpush1.bf16.msra.mxu0 %v2183
    %3527 = vmatprep.subr.bf16.mxu0 %v2192
    %3528 = vmatpush1.bf16.msra.mxu0 %v2191
    %3529 = vmatprep.subr.bf16.mxu0 %v2200
    %3530 = vmatpush1.bf16.msra.mxu0 %v2199
    %3531 = vmatprep.subr.bf16.mxu0 %v2208
    %3532 = vmatpush1.bf16.msra.mxu0 %v2207
    %3533 = vmatprep.subr.bf16.mxu0 %v2216
    %3534 = vmatpush1.bf16.msra.mxu0 %v2215
    %3535 = vmatprep.subr.bf16.mxu0 %v2224
    %3536 = vmatpush1.bf16.msra.mxu0 %v2223
    %3537 = vmatprep.subr.bf16.mxu0 %v2232
    %3538 = vmatpush1.bf16.msra.mxu0 %v2231
    %3539 = vmatprep.subr.bf16.mxu0 %v2240
    %3540 = vmatpush1.bf16.msra.mxu0 %v2239
    %3541 = vmatprep.subr.bf16.mxu0 %v2248
    %3542 = vmatpush1.bf16.msra.mxu0 %v2247
    %3543 = vmatprep.subr.bf16.mxu0 %v2256
    %3544 = vmatpush1.bf16.msra.mxu0 %v2255
    %3545 = vmatprep.subr.bf16.mxu0 %v2264
    %3546 = vmatpush1.bf16.msra.mxu0 %v2263
    %3547 = vmatprep.subr.bf16.mxu0 %v2272
    %3548 = vmatpush1.bf16.msra.mxu0 %v2271
    %3549 = vmatprep.subr.bf16.mxu0 %v2280
    %3550 = vmatpush1.bf16.msra.mxu0 %v2279
    %3551 = vmatprep.subr.bf16.mxu0 %v2288
    %3552 = vmatpush1.bf16.msra.mxu0 %v2287
    %3553 = vmatprep.subr.bf16.mxu0 %v2296
    %3554 = vmatpush1.bf16.msra.mxu0 %v2295
    %3555 = vmatprep.mubr.bf16.mxu0 %v615
    %3556 = vmatmul.mubr.bf16.gmra.mrb[0].mxu0 %v601
    %v3557 = vpop.f32.mrb[0].mxu0
    %v3558 = vadd.f32 %v556, %v3557
    %v3559 = vpop.f32.mrb[0].mxu0
    %v3560 = vadd.f32 %v560, %v3559
    %v3561 = vpop.f32.mrb[0].mxu0
    %v3562 = vpop.f32.mrb[0].mxu0
    %3563 = vdwg.mxu0
    %3564 = vmatprep.subr.bf16.mxu0 %v2304
    %3565 = vmatpush1.bf16.msra.mxu0 %v2303
    %3566 = vmatprep.subr.bf16.mxu0 %v2312
    %3567 = vmatpush1.bf16.msra.mxu0 %v2311
    %3568 = vmatprep.subr.bf16.mxu0 %v2320
    %3569 = vmatpush1.bf16.msra.mxu0 %v2319
    %3570 = vmatprep.subr.bf16.mxu0 %v2328
    %3571 = vmatpush1.bf16.msra.mxu0 %v2327
    %3572 = vmatprep.subr.bf16.mxu0 %v2336
    %3573 = vmatpush1.bf16.msra.mxu0 %v2335
    %3574 = vmatprep.subr.bf16.mxu0 %v2344
    %3575 = vmatpush1.bf16.msra.mxu0 %v2343
    %3576 = vmatprep.subr.bf16.mxu0 %v2352
    %3577 = vmatpush1.bf16.msra.mxu0 %v2351
    %3578 = vmatprep.subr.bf16.mxu0 %v2360
    %3579 = vmatpush1.bf16.msra.mxu0 %v2359
    %3580 = vmatprep.subr.bf16.mxu0 %v2368
    %3581 = vmatpush1.bf16.msra.mxu0 %v2367
    %3582 = vmatprep.subr.bf16.mxu0 %v2376
    %3583 = vmatpush1.bf16.msra.mxu0 %v2375
    %3584 = vmatprep.subr.bf16.mxu0 %v2384
    %3585 = vmatpush1.bf16.msra.mxu0 %v2383
    %3586 = vmatprep.subr.bf16.mxu0 %v2392
    %3587 = vmatpush1.bf16.msra.mxu0 %v2391
    %3588 = vmatprep.subr.bf16.mxu0 %v2400
    %3589 = vmatpush1.bf16.msra.mxu0 %v2399
    %3590 = vmatprep.subr.bf16.mxu0 %v2408
    %3591 = vmatpush1.bf16.msra.mxu0 %v2407
    %3592 = vmatprep.subr.bf16.mxu0 %v2416
    %3593 = vmatpush1.bf16.msra.mxu0 %v2415
    %3594 = vmatprep.subr.bf16.mxu0 %v2424
    %3595 = vmatpush1.bf16.msra.mxu0 %v2423
    %3596 = vmatprep.mubr.bf16.mxu0 %v625
    %3597 = vmatmul.mubr.bf16.gmra.mrb[0].mxu0 %v623
    %v3598 = vpop.f32.mrb[0].mxu0
    %v3599 = vadd.f32 %v3558, %v3598
    %v3600 = vpop.f32.mrb[0].mxu0
    %v3601 = vadd.f32 %v3560, %v3600
    %v3602 = vpop.f32.mrb[0].mxu0
    %v3603 = vpop.f32.mrb[0].mxu0
    %3604 = vdwg.mxu0
    %3605 = vmatprep.subr.bf16.mxu0 %v2432
    %3606 = vmatpush1.bf16.msra.mxu0 %v2431
    %3607 = vmatprep.subr.bf16.mxu0 %v2440
    %3608 = vmatpush1.bf16.msra.mxu0 %v2439
    %3609 = vmatprep.subr.bf16.mxu0 %v2448
    %3610 = vmatpush1.bf16.msra.mxu0 %v2447
    %3611 = vmatprep.subr.bf16.mxu0 %v2456
    %3612 = vmatpush1.bf16.msra.mxu0 %v2455
    %3613 = vmatprep.subr.bf16.mxu0 %v2464
    %3614 = vmatpush1.bf16.msra.mxu0 %v2463
    %3615 = vmatprep.subr.bf16.mxu0 %v2472
    %3616 = vmatpush1.bf16.msra.mxu0 %v2471
    %3617 = vmatprep.subr.bf16.mxu0 %v2480
    %3618 = vmatpush1.bf16.msra.mxu0 %v2479
    %3619 = vmatprep.subr.bf16.mxu0 %v2488
    %3620 = vmatpush1.bf16.msra.mxu0 %v2487
    %3621 = vmatprep.subr.bf16.mxu0 %v2496
    %3622 = vmatpush1.bf16.msra.mxu0 %v2495
    %3623 = vmatprep.subr.bf16.mxu0 %v2504
    %3624 = vmatpush1.bf16.msra.mxu0 %v2503
    %3625 = vmatprep.subr.bf16.mxu0 %v2512
    %3626 = vmatpush1.bf16.msra.mxu0 %v2511
    %3627 = vmatprep.subr.bf16.mxu0 %v2520
    %3628 = vmatpush1.bf16.msra.mxu0 %v2519
    %3629 = vmatprep.subr.bf16.mxu0 %v2528
    %3630 = vmatpush1.bf16.msra.mxu0 %v2527
    %3631 = vmatprep.subr.bf16.mxu0 %v2536
    %3632 = vmatpush1.bf16.msra.mxu0 %v2535
    %3633 = vmatprep.subr.bf16.mxu0 %v2544
    %3634 = vmatpush1.bf16.msra.mxu0 %v2543
    %3635 = vmatprep.subr.bf16.mxu0 %v2552
    %3636 = vmatpush1.bf16.msra.mxu0 %v2551
    %3637 = vmatprep.mubr.bf16.mxu0 %v622
    %3638 = vmatmul.mubr.bf16.gmra.mrb[0].mxu0 %v608
    %v3639 = vpop.f32.mrb[0].mxu0
    %v3640 = vadd.f32 %v3599, %v3639
    %v3641 = vpop.f32.mrb[0].mxu0
    %v3642 = vadd.f32 %v3601, %v3641
    %v3643 = vpop.f32.mrb[0].mxu0
    %v3644 = vpop.f32.mrb[0].mxu0
    %3645 = vdwg.mxu0
    %3646 = vmatprep.subr.bf16.mxu0 %v2560
    %3647 = vmatpush1.bf16.msra.mxu0 %v2559
    %3648 = vmatprep.subr.bf16.mxu0 %v2568
    %3649 = vmatpush1.bf16.msra.mxu0 %v2567
    %3650 = vmatprep.subr.bf16.mxu0 %v2576
    %3651 = vmatpush1.bf16.msra.mxu0 %v2575
    %3652 = vmatprep.subr.bf16.mxu0 %v2584
    %3653 = vmatpush1.bf16.msra.mxu0 %v2583
    %3654 = vmatprep.subr.bf16.mxu0 %v2592
    %3655 = vmatpush1.bf16.msra.mxu0 %v2591
    %3656 = vmatprep.subr.bf16.mxu0 %v2600
    %3657 = vmatpush1.bf16.msra.mxu0 %v2599
    %3658 = vmatprep.subr.bf16.mxu0 %v2608
    %3659 = vmatpush1.bf16.msra.mxu0 %v2607
    %3660 = vmatprep.subr.bf16.mxu0 %v2616
    %3661 = vmatpush1.bf16.msra.mxu0 %v2615
    %3662 = vmatprep.subr.bf16.mxu0 %v2624
    %3663 = vmatpush1.bf16.msra.mxu0 %v2623
    %3664 = vmatprep.subr.bf16.mxu0 %v2632
    %3665 = vmatpush1.bf16.msra.mxu0 %v2631
    %3666 = vmatprep.subr.bf16.mxu0 %v2640
    %3667 = vmatpush1.bf16.msra.mxu0 %v2639
    %3668 = vmatprep.subr.bf16.mxu0 %v2648
    %3669 = vmatpush1.bf16.msra.mxu0 %v2647
    %3670 = vmatprep.subr.bf16.mxu0 %v2656
    %3671 = vmatpush1.bf16.msra.mxu0 %v2655
    %3672 = vmatprep.subr.bf16.mxu0 %v2664
    %3673 = vmatpush1.bf16.msra.mxu0 %v2663
    %3674 = vmatprep.subr.bf16.mxu0 %v2672
    %3675 = vmatpush1.bf16.msra.mxu0 %v2671
    %3676 = vmatprep.subr.bf16.mxu0 %v2680
    %3677 = vmatpush1.bf16.msra.mxu0 %v2679
    %3678 = vmatprep.mubr.bf16.mxu0 %v626
    %3679 = vmatmul.mubr.bf16.gmra.mrb[0].mxu0 %v624
    %v3680 = vpop.f32.mrb[0].mxu0
    %v3681 = vadd.f32 %v3640, %v3680
    %v3682 = vpop.f32.mrb[0].mxu0
    %v3683 = vadd.f32 %v3642, %v3682
    %v3684 = vpop.f32.mrb[0].mxu0
    %v3685 = vpop.f32.mrb[0].mxu0
    %3686 = vdwg.mxu0
    %3687 = vmatprep.subr.bf16.mxu0 %v2178
    %3688 = vmatpush1.bf16.msra.mxu0 %v2177
    %3689 = vmatprep.subr.bf16.mxu0 %v2186
    %3690 = vmatpush1.bf16.msra.mxu0 %v2185
    %3691 = vmatprep.subr.bf16.mxu0 %v2194
    %3692 = vmatpush1.bf16.msra.mxu0 %v2193
    %3693 = vmatprep.subr.bf16.mxu0 %v2202
    %3694 = vmatpush1.bf16.msra.mxu0 %v2201
    %3695 = vmatprep.subr.bf16.mxu0 %v2210
    %3696 = vmatpush1.bf16.msra.mxu0 %v2209
    %3697 = vmatprep.subr.bf16.mxu0 %v2218
    %3698 = vmatpush1.bf16.msra.mxu0 %v2217
    %3699 = vmatprep.subr.bf16.mxu0 %v2226
    %3700 = vmatpush1.bf16.msra.mxu0 %v2225
    %3701 = vmatprep.subr.bf16.mxu0 %v2234
    %3702 = vmatpush1.bf16.msra.mxu0 %v2233
    %3703 = vmatprep.subr.bf16.mxu0 %v2242
    %3704 = vmatpush1.bf16.msra.mxu0 %v2241
    %3705 = vmatprep.subr.bf16.mxu0 %v2250
    %3706 = vmatpush1.bf16.msra.mxu0 %v2249
    %3707 = vmatprep.subr.bf16.mxu0 %v2258
    %3708 = vmatpush1.bf16.msra.mxu0 %v2257
    %3709 = vmatprep.subr.bf16.mxu0 %v2266
    %3710 = vmatpush1.bf16.msra.mxu0 %v2265
    %3711 = vmatprep.subr.bf16.mxu0 %v2274
    %3712 = vmatpush1.bf16.msra.mxu0 %v2273
    %3713 = vmatprep.subr.bf16.mxu0 %v2282
    %3714 = vmatpush1.bf16.msra.mxu0 %v2281
    %3715 = vmatprep.subr.bf16.mxu0 %v2290
    %3716 = vmatpush1.bf16.msra.mxu0 %v2289
    %3717 = vmatprep.subr.bf16.mxu0 %v2298
    %3718 = vmatpush1.bf16.msra.mxu0 %v2297
    %3719 = vmatprep.mubr.bf16.mxu0 %v615
    %3720 = vmatmul.mubr.bf16.gmra.mrb[0].mxu0 %v601
    %v3721 = vpop.f32.mrb[0].mxu0
    %v3722 = vadd.f32 %v564, %v3721
    %v3723 = vpop.f32.mrb[0].mxu0
    %v3724 = vadd.f32 %v568, %v3723
    %v3725 = vpop.f32.mrb[0].mxu0
    %v3726 = vpop.f32.mrb[0].mxu0
    %3727 = vdwg.mxu0
    %3728 = vmatprep.subr.bf16.mxu0 %v2306
    %3729 = vmatpush1.bf16.msra.mxu0 %v2305
    %3730 = vmatprep.subr.bf16.mxu0 %v2314
    %3731 = vmatpush1.bf16.msra.mxu0 %v2313
    %3732 = vmatprep.subr.bf16.mxu0 %v2322
    %3733 = vmatpush1.bf16.msra.mxu0 %v2321
    %3734 = vmatprep.subr.bf16.mxu0 %v2330
    %3735 = vmatpush1.bf16.msra.mxu0 %v2329
    %3736 = vmatprep.subr.bf16.mxu0 %v2338
    %3737 = vmatpush1.bf16.msra.mxu0 %v2337
    %3738 = vmatprep.subr.bf16.mxu0 %v2346
    %3739 = vmatpush1.bf16.msra.mxu0 %v2345
    %3740 = vmatprep.subr.bf16.mxu0 %v2354
    %3741 = vmatpush1.bf16.msra.mxu0 %v2353
    %3742 = vmatprep.subr.bf16.mxu0 %v2362
    %3743 = vmatpush1.bf16.msra.mxu0 %v2361
    %3744 = vmatprep.subr.bf16.mxu0 %v2370
    %3745 = vmatpush1.bf16.msra.mxu0 %v2369
    %3746 = vmatprep.subr.bf16.mxu0 %v2378
    %3747 = vmatpush1.bf16.msra.mxu0 %v2377
    %3748 = vmatprep.subr.bf16.mxu0 %v2386
    %3749 = vmatpush1.bf16.msra.mxu0 %v2385
    %3750 = vmatprep.subr.bf16.mxu0 %v2394
    %3751 = vmatpush1.bf16.msra.mxu0 %v2393
    %3752 = vmatprep.subr.bf16.mxu0 %v2402
    %3753 = vmatpush1.bf16.msra.mxu0 %v2401
    %3754 = vmatprep.subr.bf16.mxu0 %v2410
    %3755 = vmatpush1.bf16.msra.mxu0 %v2409
    %3756 = vmatprep.subr.bf16.mxu0 %v2418
    %3757 = vmatpush1.bf16.msra.mxu0 %v2417
    %3758 = vmatprep.subr.bf16.mxu0 %v2426
    %3759 = vmatpush1.bf16.msra.mxu0 %v2425
    %3760 = vmatprep.mubr.bf16.mxu0 %v625
    %3761 = vmatmul.mubr.bf16.gmra.mrb[0].mxu0 %v623
    %v3762 = vpop.f32.mrb[0].mxu0
    %v3763 = vadd.f32 %v3722, %v3762
    %v3764 = vpop.f32.mrb[0].mxu0
    %v3765 = vadd.f32 %v3724, %v3764
    %v3766 = vpop.f32.mrb[0].mxu0
    %v3767 = vpop.f32.mrb[0].mxu0
    %3768 = vdwg.mxu0
    %3769 = vmatprep.subr.bf16.mxu0 %v2434
    %3770 = vmatpush1.bf16.msra.mxu0 %v2433
    %3771 = vmatprep.subr.bf16.mxu0 %v2442
    %3772 = vmatpush1.bf16.msra.mxu0 %v2441
    %3773 = vmatprep.subr.bf16.mxu0 %v2450
    %3774 = vmatpush1.bf16.msra.mxu0 %v2449
    %3775 = vmatprep.subr.bf16.mxu0 %v2458
    %3776 = vmatpush1.bf16.msra.mxu0 %v2457
    %3777 = vmatprep.subr.bf16.mxu0 %v2466
    %3778 = vmatpush1.bf16.msra.mxu0 %v2465
    %3779 = vmatprep.subr.bf16.mxu0 %v2474
    %3780 = vmatpush1.bf16.msra.mxu0 %v2473
    %3781 = vmatprep.subr.bf16.mxu0 %v2482
    %3782 = vmatpush1.bf16.msra.mxu0 %v2481
    %3783 = vmatprep.subr.bf16.mxu0 %v2490
    %3784 = vmatpush1.bf16.msra.mxu0 %v2489
    %3785 = vmatprep.subr.bf16.mxu0 %v2498
    %3786 = vmatpush1.bf16.msra.mxu0 %v2497
    %3787 = vmatprep.subr.bf16.mxu0 %v2506
    %3788 = vmatpush1.bf16.msra.mxu0 %v2505
    %3789 = vmatprep.subr.bf16.mxu0 %v2514
    %3790 = vmatpush1.bf16.msra.mxu0 %v2513
    %3791 = vmatprep.subr.bf16.mxu0 %v2522
    %3792 = vmatpush1.bf16.msra.mxu0 %v2521
    %3793 = vmatprep.subr.bf16.mxu0 %v2530
    %3794 = vmatpush1.bf16.msra.mxu0 %v2529
    %3795 = vmatprep.subr.bf16.mxu0 %v2538
    %3796 = vmatpush1.bf16.msra.mxu0 %v2537
    %3797 = vmatprep.subr.bf16.mxu0 %v2546
    %3798 = vmatpush1.bf16.msra.mxu0 %v2545
    %3799 = vmatprep.subr.bf16.mxu0 %v2554
    %3800 = vmatpush1.bf16.msra.mxu0 %v2553
    %3801 = vmatprep.mubr.bf16.mxu0 %v622
    %3802 = vmatmul.mubr.bf16.gmra.mrb[0].mxu0 %v608
    %v3803 = vpop.f32.mrb[0].mxu0
    %v3804 = vadd.f32 %v3763, %v3803
    %v3805 = vpop.f32.mrb[0].mxu0
    %v3806 = vadd.f32 %v3765, %v3805
    %v3807 = vpop.f32.mrb[0].mxu0
    %v3808 = vpop.f32.mrb[0].mxu0
    %3809 = vdwg.mxu0
    %3810 = vmatprep.subr.bf16.mxu0 %v2562
    %3811 = vmatpush1.bf16.msra.mxu0 %v2561
    %3812 = vmatprep.subr.bf16.mxu0 %v2570
    %3813 = vmatpush1.bf16.msra.mxu0 %v2569
    %3814 = vmatprep.subr.bf16.mxu0 %v2578
    %3815 = vmatpush1.bf16.msra.mxu0 %v2577
    %3816 = vmatprep.subr.bf16.mxu0 %v2586
    %3817 = vmatpush1.bf16.msra.mxu0 %v2585
    %3818 = vmatprep.subr.bf16.mxu0 %v2594
    %3819 = vmatpush1.bf16.msra.mxu0 %v2593
    %3820 = vmatprep.subr.bf16.mxu0 %v2602
    %3821 = vmatpush1.bf16.msra.mxu0 %v2601
    %3822 = vmatprep.subr.bf16.mxu0 %v2610
    %3823 = vmatpush1.bf16.msra.mxu0 %v2609
    %3824 = vmatprep.subr.bf16.mxu0 %v2618
    %3825 = vmatpush1.bf16.msra.mxu0 %v2617
    %3826 = vmatprep.subr.bf16.mxu0 %v2626
    %3827 = vmatpush1.bf16.msra.mxu0 %v2625
    %3828 = vmatprep.subr.bf16.mxu0 %v2634
    %3829 = vmatpush1.bf16.msra.mxu0 %v2633
    %3830 = vmatprep.subr.bf16.mxu0 %v2642
    %3831 = vmatpush1.bf16.msra.mxu0 %v2641
    %3832 = vmatprep.subr.bf16.mxu0 %v2650
    %3833 = vmatpush1.bf16.msra.mxu0 %v2649
    %3834 = vmatprep.subr.bf16.mxu0 %v2658
    %3835 = vmatpush1.bf16.msra.mxu0 %v2657
    %3836 = vmatprep.subr.bf16.mxu0 %v2666
    %3837 = vmatpush1.bf16.msra.mxu0 %v2665
    %3838 = vmatprep.subr.bf16.mxu0 %v2674
    %3839 = vmatpush1.bf16.msra.mxu0 %v2673
    %3840 = vmatprep.subr.bf16.mxu0 %v2682
    %3841 = vmatpush1.bf16.msra.mxu0 %v2681
    %3842 = vmatprep.mubr.bf16.mxu0 %v626
    %3843 = vmatmul.mubr.bf16.gmra.mrb[0].mxu0 %v624
    %v3844 = vpop.f32.mrb[0].mxu0
    %v3845 = vadd.f32 %v3804, %v3844
    %v3846 = vpop.f32.mrb[0].mxu0
    %v3847 = vadd.f32 %v3806, %v3846
    %v3848 = vpop.f32.mrb[0].mxu0
    %v3849 = vpop.f32.mrb[0].mxu0
    %3850 = vdwg.mxu0
    %v3851 = vmax.f32 %v3353, 0.0
    %v3852 = vmax.f32 %v3355, 0.0
    %v3853 = vmax.f32 %v3517, 0.0
    %v3854 = vmax.f32 %v3519, 0.0
    %v3855 = vmax.f32 %v3681, 0.0
    %v3856 = vmax.f32 %v3683, 0.0
    %v3857 = vmax.f32 %v3845, 0.0
    %v3858 = vmax.f32 %v3847, 0.0
    %v3859 = vpack.c.bf16 %v3851, %v3851
    %v3860 = vpack.c.bf16 %v3852, %v3852
    %v3861 = vpack.c.bf16 %v3853, %v3853
    %v3862 = vpack.c.bf16 %v3854, %v3854
    %v3863 = vpack.c.bf16 %v3855, %v3855
    %v3864 = vpack.c.bf16 %v3856, %v3856
    %v3865 = vpack.c.bf16 %v3857, %v3857
    %v3866 = vpack.c.bf16 %v3858, %v3858
    %v3867 = vld [vmem:[%s3] sm:$0xf]
    %v3868 = vld [vmem:[%s3 + $0x4] sm:$0xf]
    %v3869 = vld [vmem:[%s3 + $0x8] sm:$0xf]
    %v3870 = vld [vmem:[%s3 + $0xc] sm:$0xf]
    %v3871 = vld [vmem:[%s3 + $0x10] sm:$0xf]
    %v3872 = vld [vmem:[%s3 + $0x14] sm:$0xf]
    %v3873 = vld [vmem:[%s3 + $0x18] sm:$0xf]
    %v3874 = vld [vmem:[%s3 + $0x1c] sm:$0xf]
    %v3875 = vld [vmem:[%s3 + $0x20] sm:$0xf]
    %v3876 = vld [vmem:[%s3 + $0x24] sm:$0xf]
    %v3877 = vld [vmem:[%s3 + $0x28] sm:$0xf]
    %v3878 = vld [vmem:[%s3 + $0x2c] sm:$0xf]
    %v3879 = vld [vmem:[%s3 + $0x30] sm:$0xf]
    %v3880 = vld [vmem:[%s3 + $0x34] sm:$0xf]
    %v3881 = vld [vmem:[%s3 + $0x38] sm:$0xf]
    %v3882 = vld [vmem:[%s3 + $0x3c] sm:$0xf]
    %v3883 = vld [vmem:[%s3 + $0x40] sm:$0xf]
    %v3884 = vld [vmem:[%s3 + $0x44] sm:$0xf]
    %v3885 = vld [vmem:[%s3 + $0x48] sm:$0xf]
    %v3886 = vld [vmem:[%s3 + $0x4c] sm:$0xf]
    %v3887 = vld [vmem:[%s3 + $0x50] sm:$0xf]
    %v3888 = vld [vmem:[%s3 + $0x54] sm:$0xf]
    %v3889 = vld [vmem:[%s3 + $0x58] sm:$0xf]
    %v3890 = vld [vmem:[%s3 + $0x5c] sm:$0xf]
    %v3891 = vld [vmem:[%s3 + $0x60] sm:$0xf]
    %v3892 = vld [vmem:[%s3 + $0x64] sm:$0xf]
    %v3893 = vld [vmem:[%s3 + $0x68] sm:$0xf]
    %v3894 = vld [vmem:[%s3 + $0x6c] sm:$0xf]
    %v3895 = vld [vmem:[%s3 + $0x70] sm:$0xf]
    %v3896 = vld [vmem:[%s3 + $0x74] sm:$0xf]
    %v3897 = vld [vmem:[%s3 + $0x78] sm:$0xf]
    %v3898 = vld [vmem:[%s3 + $0x7c] sm:$0xf]
    %v3899 = vld [vmem:[%s3 + $0x80] sm:$0xf]
    %v3900 = vld [vmem:[%s3 + $0x84] sm:$0xf]
    %v3901 = vld [vmem:[%s3 + $0x88] sm:$0xf]
    %v3902 = vld [vmem:[%s3 + $0x8c] sm:$0xf]
    %v3903 = vld [vmem:[%s3 + $0x90] sm:$0xf]
    %v3904 = vld [vmem:[%s3 + $0x94] sm:$0xf]
    %v3905 = vld [vmem:[%s3 + $0x98] sm:$0xf]
    %v3906 = vld [vmem:[%s3 + $0x9c] sm:$0xf]
    %v3907 = vld [vmem:[%s3 + $0xa0] sm:$0xf]
    %v3908 = vld [vmem:[%s3 + $0xa4] sm:$0xf]
    %v3909 = vld [vmem:[%s3 + $0xa8] sm:$0xf]
    %v3910 = vld [vmem:[%s3 + $0xac] sm:$0xf]
    %v3911 = vld [vmem:[%s3 + $0xb0] sm:$0xf]
    %v3912 = vld [vmem:[%s3 + $0xb4] sm:$0xf]
    %v3913 = vld [vmem:[%s3 + $0xb8] sm:$0xf]
    %v3914 = vld [vmem:[%s3 + $0xbc] sm:$0xf]
    %v3915 = vld [vmem:[%s3 + $0xc0] sm:$0xf]
    %v3916 = vld [vmem:[%s3 + $0xc4] sm:$0xf]
    %v3917 = vld [vmem:[%s3 + $0xc8] sm:$0xf]
    %v3918 = vld [vmem:[%s3 + $0xcc] sm:$0xf]
    %v3919 = vld [vmem:[%s3 + $0xd0] sm:$0xf]
    %v3920 = vld [vmem:[%s3 + $0xd4] sm:$0xf]
    %v3921 = vld [vmem:[%s3 + $0xd8] sm:$0xf]
    %v3922 = vld [vmem:[%s3 + $0xdc] sm:$0xf]
    %v3923 = vld [vmem:[%s3 + $0xe0] sm:$0xf]
    %v3924 = vld [vmem:[%s3 + $0xe4] sm:$0xf]
    %v3925 = vld [vmem:[%s3 + $0xe8] sm:$0xf]
    %v3926 = vld [vmem:[%s3 + $0xec] sm:$0xf]
    %v3927 = vld [vmem:[%s3 + $0xf0] sm:$0xf]
    %v3928 = vld [vmem:[%s3 + $0xf4] sm:$0xf]
    %v3929 = vld [vmem:[%s3 + $0xf8] sm:$0xf]
    %v3930 = vld [vmem:[%s3 + $0xfc] sm:$0xf]
    %v3931 = vld [vmem:[%s3 + $0x100] sm:$0xf]
    %v3932 = vld [vmem:[%s3 + $0x104] sm:$0xf]
    %v3933 = vld [vmem:[%s3 + $0x108] sm:$0xf]
    %v3934 = vld [vmem:[%s3 + $0x10c] sm:$0xf]
    %v3935 = vld [vmem:[%s3 + $0x110] sm:$0xf]
    %v3936 = vld [vmem:[%s3 + $0x114] sm:$0xf]
    %v3937 = vld [vmem:[%s3 + $0x118] sm:$0xf]
    %v3938 = vld [vmem:[%s3 + $0x11c] sm:$0xf]
    %v3939 = vld [vmem:[%s3 + $0x120] sm:$0xf]
    %v3940 = vld [vmem:[%s3 + $0x124] sm:$0xf]
    %v3941 = vld [vmem:[%s3 + $0x128] sm:$0xf]
    %v3942 = vld [vmem:[%s3 + $0x12c] sm:$0xf]
    %v3943 = vld [vmem:[%s3 + $0x130] sm:$0xf]
    %v3944 = vld [vmem:[%s3 + $0x134] sm:$0xf]
    %v3945 = vld [vmem:[%s3 + $0x138] sm:$0xf]
    %v3946 = vld [vmem:[%s3 + $0x13c] sm:$0xf]
    %v3947 = vld [vmem:[%s3 + $0x140] sm:$0xf]
    %v3948 = vld [vmem:[%s3 + $0x144] sm:$0xf]
    %v3949 = vld [vmem:[%s3 + $0x148] sm:$0xf]
    %v3950 = vld [vmem:[%s3 + $0x14c] sm:$0xf]
    %v3951 = vld [vmem:[%s3 + $0x150] sm:$0xf]
    %v3952 = vld [vmem:[%s3 + $0x154] sm:$0xf]
    %v3953 = vld [vmem:[%s3 + $0x158] sm:$0xf]
    %v3954 = vld [vmem:[%s3 + $0x15c] sm:$0xf]
    %v3955 = vld [vmem:[%s3 + $0x160] sm:$0xf]
    %v3956 = vld [vmem:[%s3 + $0x164] sm:$0xf]
    %v3957 = vld [vmem:[%s3 + $0x168] sm:$0xf]
    %v3958 = vld [vmem:[%s3 + $0x16c] sm:$0xf]
    %v3959 = vld [vmem:[%s3 + $0x170] sm:$0xf]
    %v3960 = vld [vmem:[%s3 + $0x174] sm:$0xf]
    %v3961 = vld [vmem:[%s3 + $0x178] sm:$0xf]
    %v3962 = vld [vmem:[%s3 + $0x17c] sm:$0xf]
    %v3963 = vld [vmem:[%s3 + $0x180] sm:$0xf]
    %v3964 = vld [vmem:[%s3 + $0x184] sm:$0xf]
    %v3965 = vld [vmem:[%s3 + $0x188] sm:$0xf]
    %v3966 = vld [vmem:[%s3 + $0x18c] sm:$0xf]
    %v3967 = vld [vmem:[%s3 + $0x190] sm:$0xf]
    %v3968 = vld [vmem:[%s3 + $0x194] sm:$0xf]
    %v3969 = vld [vmem:[%s3 + $0x198] sm:$0xf]
    %v3970 = vld [vmem:[%s3 + $0x19c] sm:$0xf]
    %v3971 = vld [vmem:[%s3 + $0x1a0] sm:$0xf]
    %v3972 = vld [vmem:[%s3 + $0x1a4] sm:$0xf]
    %v3973 = vld [vmem:[%s3 + $0x1a8] sm:$0xf]
    %v3974 = vld [vmem:[%s3 + $0x1ac] sm:$0xf]
    %v3975 = vld [vmem:[%s3 + $0x1b0] sm:$0xf]
    %v3976 = vld [vmem:[%s3 + $0x1b4] sm:$0xf]
    %v3977 = vld [vmem:[%s3 + $0x1b8] sm:$0xf]
    %v3978 = vld [vmem:[%s3 + $0x1bc] sm:$0xf]
    %v3979 = vld [vmem:[%s3 + $0x1c0] sm:$0xf]
    %v3980 = vld [vmem:[%s3 + $0x1c4] sm:$0xf]
    %v3981 = vld [vmem:[%s3 + $0x1c8] sm:$0xf]
    %v3982 = vld [vmem:[%s3 + $0x1cc] sm:$0xf]
    %v3983 = vld [vmem:[%s3 + $0x1d0] sm:$0xf]
    %v3984 = vld [vmem:[%s3 + $0x1d4] sm:$0xf]
    %v3985 = vld [vmem:[%s3 + $0x1d8] sm:$0xf]
    %v3986 = vld [vmem:[%s3 + $0x1dc] sm:$0xf]
    %v3987 = vld [vmem:[%s3 + $0x1e0] sm:$0xf]
    %v3988 = vld [vmem:[%s3 + $0x1e4] sm:$0xf]
    %v3989 = vld [vmem:[%s3 + $0x1e8] sm:$0xf]
    %v3990 = vld [vmem:[%s3 + $0x1ec] sm:$0xf]
    %v3991 = vld [vmem:[%s3 + $0x1f0] sm:$0xf]
    %v3992 = vld [vmem:[%s3 + $0x1f4] sm:$0xf]
    %v3993 = vld [vmem:[%s3 + $0x1f8] sm:$0xf]
    %v3994 = vld [vmem:[%s3 + $0x1fc] sm:$0xf]
    %v3995 = vld [vmem:[%s4] sm:$0x1]
    %v3997 = vlaneseq
    %v3998 = vshrl.u32 %v3997, 7
    %v3999 = vsub.s32 0, %v3998
    %v4000 = vrot.slane %v3995, %v3999
    %v4130 = vunpack.c.l.b16 %v3867
    %v4131 = vunpack.c.l.b16 %v3868
    %v4132 = vunpack.c.l.b16 %v3869
    %v4133 = vunpack.c.l.b16 %v3870
    %v4134 = vunpack.c.l.b16 %v3871
    %v4135 = vunpack.c.l.b16 %v3872
    %v4136 = vunpack.c.l.b16 %v3873
    %v4137 = vunpack.c.l.b16 %v3874
    %v4138 = vunpack.c.l.b16 %v3875
    %v4139 = vunpack.c.l.b16 %v3876
    %v4140 = vunpack.c.l.b16 %v3877
    %v4141 = vunpack.c.l.b16 %v3878
    %v4142 = vunpack.c.l.b16 %v3879
    %v4143 = vunpack.c.l.b16 %v3880
    %v4144 = vunpack.c.l.b16 %v3881
    %v4145 = vunpack.c.l.b16 %v3882
    %v4146 = vunpack.c.l.b16 %v3883
    %v4147 = vunpack.c.l.b16 %v3884
    %v4148 = vunpack.c.l.b16 %v3885
    %v4149 = vunpack.c.l.b16 %v3886
    %v4150 = vunpack.c.l.b16 %v3887
    %v4151 = vunpack.c.l.b16 %v3888
    %v4152 = vunpack.c.l.b16 %v3889
    %v4153 = vunpack.c.l.b16 %v3890
    %v4154 = vunpack.c.l.b16 %v3891
    %v4155 = vunpack.c.l.b16 %v3892
    %v4156 = vunpack.c.l.b16 %v3893
    %v4157 = vunpack.c.l.b16 %v3894
    %v4158 = vunpack.c.l.b16 %v3895
    %v4159 = vunpack.c.l.b16 %v3896
    %v4160 = vunpack.c.l.b16 %v3897
    %v4161 = vunpack.c.l.b16 %v3898
    %v4162 = vunpack.c.l.b16 %v3899
    %v4163 = vunpack.c.l.b16 %v3900
    %v4164 = vunpack.c.l.b16 %v3901
    %v4165 = vunpack.c.l.b16 %v3902
    %v4166 = vunpack.c.l.b16 %v3903
    %v4167 = vunpack.c.l.b16 %v3904
    %v4168 = vunpack.c.l.b16 %v3905
    %v4169 = vunpack.c.l.b16 %v3906
    %v4170 = vunpack.c.l.b16 %v3907
    %v4171 = vunpack.c.l.b16 %v3908
    %v4172 = vunpack.c.l.b16 %v3909
    %v4173 = vunpack.c.l.b16 %v3910
    %v4174 = vunpack.c.l.b16 %v3911
    %v4175 = vunpack.c.l.b16 %v3912
    %v4176 = vunpack.c.l.b16 %v3913
    %v4177 = vunpack.c.l.b16 %v3914
    %v4178 = vunpack.c.l.b16 %v3915
    %v4179 = vunpack.c.l.b16 %v3916
    %v4180 = vunpack.c.l.b16 %v3917
    %v4181 = vunpack.c.l.b16 %v3918
    %v4182 = vunpack.c.l.b16 %v3919
    %v4183 = vunpack.c.l.b16 %v3920
    %v4184 = vunpack.c.l.b16 %v3921
    %v4185 = vunpack.c.l.b16 %v3922
    %v4186 = vunpack.c.l.b16 %v3923
    %v4187 = vunpack.c.l.b16 %v3924
    %v4188 = vunpack.c.l.b16 %v3925
    %v4189 = vunpack.c.l.b16 %v3926
    %v4190 = vunpack.c.l.b16 %v3927
    %v4191 = vunpack.c.l.b16 %v3928
    %v4192 = vunpack.c.l.b16 %v3929
    %v4193 = vunpack.c.l.b16 %v3930
    %v4194 = vunpack.c.l.b16 %v3931
    %v4195 = vunpack.c.l.b16 %v3932
    %v4196 = vunpack.c.l.b16 %v3933
    %v4197 = vunpack.c.l.b16 %v3934
    %v4198 = vunpack.c.l.b16 %v3935
    %v4199 = vunpack.c.l.b16 %v3936
    %v4200 = vunpack.c.l.b16 %v3937
    %v4201 = vunpack.c.l.b16 %v3938
    %v4202 = vunpack.c.l.b16 %v3939
    %v4203 = vunpack.c.l.b16 %v3940
    %v4204 = vunpack.c.l.b16 %v3941
    %v4205 = vunpack.c.l.b16 %v3942
    %v4206 = vunpack.c.l.b16 %v3943
    %v4207 = vunpack.c.l.b16 %v3944
    %v4208 = vunpack.c.l.b16 %v3945
    %v4209 = vunpack.c.l.b16 %v3946
    %v4210 = vunpack.c.l.b16 %v3947
    %v4211 = vunpack.c.l.b16 %v3948
    %v4212 = vunpack.c.l.b16 %v3949
    %v4213 = vunpack.c.l.b16 %v3950
    %v4214 = vunpack.c.l.b16 %v3951
    %v4215 = vunpack.c.l.b16 %v3952
    %v4216 = vunpack.c.l.b16 %v3953
    %v4217 = vunpack.c.l.b16 %v3954
    %v4218 = vunpack.c.l.b16 %v3955
    %v4219 = vunpack.c.l.b16 %v3956
    %v4220 = vunpack.c.l.b16 %v3957
    %v4221 = vunpack.c.l.b16 %v3958
    %v4222 = vunpack.c.l.b16 %v3959
    %v4223 = vunpack.c.l.b16 %v3960
    %v4224 = vunpack.c.l.b16 %v3961
    %v4225 = vunpack.c.l.b16 %v3962
    %v4226 = vunpack.c.l.b16 %v3963
    %v4227 = vunpack.c.l.b16 %v3964
    %v4228 = vunpack.c.l.b16 %v3965
    %v4229 = vunpack.c.l.b16 %v3966
    %v4230 = vunpack.c.l.b16 %v3967
    %v4231 = vunpack.c.l.b16 %v3968
    %v4232 = vunpack.c.l.b16 %v3969
    %v4233 = vunpack.c.l.b16 %v3970
    %v4234 = vunpack.c.l.b16 %v3971
    %v4235 = vunpack.c.l.b16 %v3972
    %v4236 = vunpack.c.l.b16 %v3973
    %v4237 = vunpack.c.l.b16 %v3974
    %v4238 = vunpack.c.l.b16 %v3975
    %v4239 = vunpack.c.l.b16 %v3976
    %v4240 = vunpack.c.l.b16 %v3977
    %v4241 = vunpack.c.l.b16 %v3978
    %v4242 = vunpack.c.l.b16 %v3979
    %v4243 = vunpack.c.l.b16 %v3980
    %v4244 = vunpack.c.l.b16 %v3981
    %v4245 = vunpack.c.l.b16 %v3982
    %v4246 = vunpack.c.l.b16 %v3983
    %v4247 = vunpack.c.l.b16 %v3984
    %v4248 = vunpack.c.l.b16 %v3985
    %v4249 = vunpack.c.l.b16 %v3986
    %v4250 = vunpack.c.l.b16 %v3987
    %v4251 = vunpack.c.l.b16 %v3988
    %v4252 = vunpack.c.l.b16 %v3989
    %v4253 = vunpack.c.l.b16 %v3990
    %v4254 = vunpack.c.l.b16 %v3991
    %v4255 = vunpack.c.l.b16 %v3992
    %v4256 = vunpack.c.l.b16 %v3993
    %v4257 = vunpack.c.l.b16 %v3994
    %v4258 = vpack.c.b16 %v4131, %v4130
    %v4259 = vpack.c.b16 %v4133, %v4132
    %v4260 = vpack.c.b16 %v4135, %v4134
    %v4261 = vpack.c.b16 %v4137, %v4136
    %v4262 = vpack.c.b16 %v4139, %v4138
    %v4263 = vpack.c.b16 %v4141, %v4140
    %v4264 = vpack.c.b16 %v4143, %v4142
    %v4265 = vpack.c.b16 %v4145, %v4144
    %v4266 = vpack.c.b16 %v4147, %v4146
    %v4267 = vpack.c.b16 %v4149, %v4148
    %v4268 = vpack.c.b16 %v4151, %v4150
    %v4269 = vpack.c.b16 %v4153, %v4152
    %v4270 = vpack.c.b16 %v4155, %v4154
    %v4271 = vpack.c.b16 %v4157, %v4156
    %v4272 = vpack.c.b16 %v4159, %v4158
    %v4273 = vpack.c.b16 %v4161, %v4160
    %v4274 = vpack.c.b16 %v4163, %v4162
    %v4275 = vpack.c.b16 %v4165, %v4164
    %v4276 = vpack.c.b16 %v4167, %v4166
    %v4277 = vpack.c.b16 %v4169, %v4168
    %v4278 = vpack.c.b16 %v4171, %v4170
    %v4279 = vpack.c.b16 %v4173, %v4172
    %v4280 = vpack.c.b16 %v4175, %v4174
    %v4281 = vpack.c.b16 %v4177, %v4176
    %v4282 = vpack.c.b16 %v4179, %v4178
    %v4283 = vpack.c.b16 %v4181, %v4180
    %v4284 = vpack.c.b16 %v4183, %v4182
    %v4285 = vpack.c.b16 %v4185, %v4184
    %v4286 = vpack.c.b16 %v4187, %v4186
    %v4287 = vpack.c.b16 %v4189, %v4188
    %v4288 = vpack.c.b16 %v4191, %v4190
    %v4289 = vpack.c.b16 %v4193, %v4192
    %v4290 = vpack.c.b16 %v4195, %v4194
    %v4291 = vpack.c.b16 %v4197, %v4196
    %v4292 = vpack.c.b16 %v4199, %v4198
    %v4293 = vpack.c.b16 %v4201, %v4200
    %v4294 = vpack.c.b16 %v4203, %v4202
    %v4295 = vpack.c.b16 %v4205, %v4204
    %v4296 = vpack.c.b16 %v4207, %v4206
    %v4297 = vpack.c.b16 %v4209, %v4208
    %v4298 = vpack.c.b16 %v4211, %v4210
    %v4299 = vpack.c.b16 %v4213, %v4212
    %v4300 = vpack.c.b16 %v4215, %v4214
    %v4301 = vpack.c.b16 %v4217, %v4216
    %v4302 = vpack.c.b16 %v4219, %v4218
    %v4303 = vpack.c.b16 %v4221, %v4220
    %v4304 = vpack.c.b16 %v4223, %v4222
    %v4305 = vpack.c.b16 %v4225, %v4224
    %v4306 = vpack.c.b16 %v4227, %v4226
    %v4307 = vpack.c.b16 %v4229, %v4228
    %v4308 = vpack.c.b16 %v4231, %v4230
    %v4309 = vpack.c.b16 %v4233, %v4232
    %v4310 = vpack.c.b16 %v4235, %v4234
    %v4311 = vpack.c.b16 %v4237, %v4236
    %v4312 = vpack.c.b16 %v4239, %v4238
    %v4313 = vpack.c.b16 %v4241, %v4240
    %v4314 = vpack.c.b16 %v4243, %v4242
    %v4315 = vpack.c.b16 %v4245, %v4244
    %v4316 = vpack.c.b16 %v4247, %v4246
    %v4317 = vpack.c.b16 %v4249, %v4248
    %v4318 = vpack.c.b16 %v4251, %v4250
    %v4319 = vpack.c.b16 %v4253, %v4252
    %v4320 = vpack.c.b16 %v4255, %v4254
    %v4321 = vpack.c.b16 %v4257, %v4256
    %4386 = vmatprep.subr.bf16.mxu0 0
    %4387 = vmatpush1.bf16.msra.mxu0 %v4258
    %4388 = vmatprep.subr.bf16.mxu0 0
    %4389 = vmatpush1.bf16.msra.mxu0 %v4259
    %4390 = vmatprep.subr.bf16.mxu0 0
    %4391 = vmatpush1.bf16.msra.mxu0 %v4260
    %4392 = vmatprep.subr.bf16.mxu0 0
    %4393 = vmatpush1.bf16.msra.mxu0 %v4261
    %4394 = vmatprep.subr.bf16.mxu0 0
    %4395 = vmatpush1.bf16.msra.mxu0 %v4262
    %4396 = vmatprep.subr.bf16.mxu0 0
    %4397 = vmatpush1.bf16.msra.mxu0 %v4263
    %4398 = vmatprep.subr.bf16.mxu0 0
    %4399 = vmatpush1.bf16.msra.mxu0 %v4264
    %4400 = vmatprep.subr.bf16.mxu0 0
    %4401 = vmatpush1.bf16.msra.mxu0 %v4265
    %4402 = vmatprep.subr.bf16.mxu0 0
    %4403 = vmatpush1.bf16.msra.mxu0 %v4266
    %4404 = vmatprep.subr.bf16.mxu0 0
    %4405 = vmatpush1.bf16.msra.mxu0 %v4267
    %4406 = vmatprep.subr.bf16.mxu0 0
    %4407 = vmatpush1.bf16.msra.mxu0 %v4268
    %4408 = vmatprep.subr.bf16.mxu0 0
    %4409 = vmatpush1.bf16.msra.mxu0 %v4269
    %4410 = vmatprep.subr.bf16.mxu0 0
    %4411 = vmatpush1.bf16.msra.mxu0 %v4270
    %4412 = vmatprep.subr.bf16.mxu0 0
    %4413 = vmatpush1.bf16.msra.mxu0 %v4271
    %4414 = vmatprep.subr.bf16.mxu0 0
    %4415 = vmatpush1.bf16.msra.mxu0 %v4272
    %4416 = vmatprep.subr.bf16.mxu0 0
    %4417 = vmatpush1.bf16.msra.mxu0 %v4273
    %4418 = vmatprep.mubr.bf16.mxu0 %v3860
    %4419 = vmatmul.mubr.bf16.gmra.mrb[0].mxu0 %v3859
    %v4420 = vpop.f32.mrb[0].mxu0
    %v4421 = vadd.f32 %v4000, %v4420
    %v4422 = vpop.f32.mrb[0].mxu0
    %v4423 = vpop.f32.mrb[0].mxu0
    %v4424 = vpop.f32.mrb[0].mxu0
    %4425 = vdwg.mxu0
    %4426 = vmatprep.subr.bf16.mxu0 0
    %4427 = vmatpush1.bf16.msra.mxu0 %v4274
    %4428 = vmatprep.subr.bf16.mxu0 0
    %4429 = vmatpush1.bf16.msra.mxu0 %v4275
    %4430 = vmatprep.subr.bf16.mxu0 0
    %4431 = vmatpush1.bf16.msra.mxu0 %v4276
    %4432 = vmatprep.subr.bf16.mxu0 0
    %4433 = vmatpush1.bf16.msra.mxu0 %v4277
    %4434 = vmatprep.subr.bf16.mxu0 0
    %4435 = vmatpush1.bf16.msra.mxu0 %v4278
    %4436 = vmatprep.subr.bf16.mxu0 0
    %4437 = vmatpush1.bf16.msra.mxu0 %v4279
    %4438 = vmatprep.subr.bf16.mxu0 0
    %4439 = vmatpush1.bf16.msra.mxu0 %v4280
    %4440 = vmatprep.subr.bf16.mxu0 0
    %4441 = vmatpush1.bf16.msra.mxu0 %v4281
    %4442 = vmatprep.subr.bf16.mxu0 0
    %4443 = vmatpush1.bf16.msra.mxu0 %v4282
    %4444 = vmatprep.subr.bf16.mxu0 0
    %4445 = vmatpush1.bf16.msra.mxu0 %v4283
    %4446 = vmatprep.subr.bf16.mxu0 0
    %4447 = vmatpush1.bf16.msra.mxu0 %v4284
    %4448 = vmatprep.subr.bf16.mxu0 0
    %4449 = vmatpush1.bf16.msra.mxu0 %v4285
    %4450 = vmatprep.subr.bf16.mxu0 0
    %4451 = vmatpush1.bf16.msra.mxu0 %v4286
    %4452 = vmatprep.subr.bf16.mxu0 0
    %4453 = vmatpush1.bf16.msra.mxu0 %v4287
    %4454 = vmatprep.subr.bf16.mxu0 0
    %4455 = vmatpush1.bf16.msra.mxu0 %v4288
    %4456 = vmatprep.subr.bf16.mxu0 0
    %4457 = vmatpush1.bf16.msra.mxu0 %v4289
    %4458 = vmatprep.mubr.bf16.mxu0 %v3862
    %4459 = vmatmul.mubr.bf16.gmra.mrb[0].mxu0 %v3861
    %v4460 = vpop.f32.mrb[0].mxu0
    %v4461 = vadd.f32 %v4421, %v4460
    %v4462 = vpop.f32.mrb[0].mxu0
    %v4463 = vpop.f32.mrb[0].mxu0
    %v4464 = vpop.f32.mrb[0].mxu0
    %4465 = vdwg.mxu0
    %4466 = vmatprep.subr.bf16.mxu0 0
    %4467 = vmatpush1.bf16.msra.mxu0 %v4290
    %4468 = vmatprep.subr.bf16.mxu0 0
    %4469 = vmatpush1.bf16.msra.mxu0 %v4291
    %4470 = vmatprep.subr.bf16.mxu0 0
    %4471 = vmatpush1.bf16.msra.mxu0 %v4292
    %4472 = vmatprep.subr.bf16.mxu0 0
    %4473 = vmatpush1.bf16.msra.mxu0 %v4293
    %4474 = vmatprep.subr.bf16.mxu0 0
    %4475 = vmatpush1.bf16.msra.mxu0 %v4294
    %4476 = vmatprep.subr.bf16.mxu0 0
    %4477 = vmatpush1.bf16.msra.mxu0 %v4295
    %4478 = vmatprep.subr.bf16.mxu0 0
    %4479 = vmatpush1.bf16.msra.mxu0 %v4296
    %4480 = vmatprep.subr.bf16.mxu0 0
    %4481 = vmatpush1.bf16.msra.mxu0 %v4297
    %4482 = vmatprep.subr.bf16.mxu0 0
    %4483 = vmatpush1.bf16.msra.mxu0 %v4298
    %4484 = vmatprep.subr.bf16.mxu0 0
    %4485 = vmatpush1.bf16.msra.mxu0 %v4299
    %4486 = vmatprep.subr.bf16.mxu0 0
    %4487 = vmatpush1.bf16.msra.mxu0 %v4300
    %4488 = vmatprep.subr.bf16.mxu0 0
    %4489 = vmatpush1.bf16.msra.mxu0 %v4301
    %4490 = vmatprep.subr.bf16.mxu0 0
    %4491 = vmatpush1.bf16.msra.mxu0 %v4302
    %4492 = vmatprep.subr.bf16.mxu0 0
    %4493 = vmatpush1.bf16.msra.mxu0 %v4303
    %4494 = vmatprep.subr.bf16.mxu0 0
    %4495 = vmatpush1.bf16.msra.mxu0 %v4304
    %4496 = vmatprep.subr.bf16.mxu0 0
    %4497 = vmatpush1.bf16.msra.mxu0 %v4305
    %4498 = vmatprep.mubr.bf16.mxu0 %v3864
    %4499 = vmatmul.mubr.bf16.gmra.mrb[0].mxu0 %v3863
    %v4500 = vpop.f32.mrb[0].mxu0
    %v4501 = vadd.f32 %v4461, %v4500
    %v4502 = vpop.f32.mrb[0].mxu0
    %v4503 = vpop.f32.mrb[0].mxu0
    %v4504 = vpop.f32.mrb[0].mxu0
    %4505 = vdwg.mxu0
    %4506 = vmatprep.subr.bf16.mxu0 0
    %4507 = vmatpush1.bf16.msra.mxu0 %v4306
    %4508 = vmatprep.subr.bf16.mxu0 0
    %4509 = vmatpush1.bf16.msra.mxu0 %v4307
    %4510 = vmatprep.subr.bf16.mxu0 0
    %4511 = vmatpush1.bf16.msra.mxu0 %v4308
    %4512 = vmatprep.subr.bf16.mxu0 0
    %4513 = vmatpush1.bf16.msra.mxu0 %v4309
    %4514 = vmatprep.subr.bf16.mxu0 0
    %4515 = vmatpush1.bf16.msra.mxu0 %v4310
    %4516 = vmatprep.subr.bf16.mxu0 0
    %4517 = vmatpush1.bf16.msra.mxu0 %v4311
    %4518 = vmatprep.subr.bf16.mxu0 0
    %4519 = vmatpush1.bf16.msra.mxu0 %v4312
    %4520 = vmatprep.subr.bf16.mxu0 0
    %4521 = vmatpush1.bf16.msra.mxu0 %v4313
    %4522 = vmatprep.subr.bf16.mxu0 0
    %4523 = vmatpush1.bf16.msra.mxu0 %v4314
    %4524 = vmatprep.subr.bf16.mxu0 0
    %4525 = vmatpush1.bf16.msra.mxu0 %v4315
    %4526 = vmatprep.subr.bf16.mxu0 0
    %4527 = vmatpush1.bf16.msra.mxu0 %v4316
    %4528 = vmatprep.subr.bf16.mxu0 0
    %4529 = vmatpush1.bf16.msra.mxu0 %v4317
    %4530 = vmatprep.subr.bf16.mxu0 0
    %4531 = vmatpush1.bf16.msra.mxu0 %v4318
    %4532 = vmatprep.subr.bf16.mxu0 0
    %4533 = vmatpush1.bf16.msra.mxu0 %v4319
    %4534 = vmatprep.subr.bf16.mxu0 0
    %4535 = vmatpush1.bf16.msra.mxu0 %v4320
    %4536 = vmatprep.subr.bf16.mxu0 0
    %4537 = vmatpush1.bf16.msra.mxu0 %v4321
    %4538 = vmatprep.mubr.bf16.mxu0 %v3866
    %4539 = vmatmul.mubr.bf16.gmra.mrb[0].mxu0 %v3865
    %v4540 = vpop.f32.mrb[0].mxu0
    %v4541 = vadd.f32 %v4501, %v4540
    %v4542 = vpop.f32.mrb[0].mxu0
    %v4543 = vpop.f32.mrb[0].mxu0
    %v4544 = vpop.f32.mrb[0].mxu0
    %4545 = vdwg.mxu0
    %4546 = vst [vmem:[#allocation2] sm:$0x3] %v4541
    // Predicated region
    $region22: #{cnn_forward.5} parent=1 // pred_check
      _
    $region23: #{cnn_forward.5} parent=1 // pred_check_branch
      %4548 = sbr.rel (0) target = $region25
    $region24: #{cnn_forward.5} parent=1 // pred_region
      %s4550 = ssub.s32 32, 32
      %4551 = vsyncadd [#allocation3], %s4550
      %s4553 = sshll.u32 [#allocation2], 4
      %s4554 = int_to_ptr.vmem [resolvable:$true] %s4553
      %4556 = dma.vmem_to_hbm [thread:$0]  %s4554, 32, %s5, [#allocation3]
    $region25: #{cnn_forward.5} parent=1 // pred_fallthru
      _
    // Predicated region
    $region26: #{cnn_forward.5} parent=1 // pred_check
      _
    $region27: #{cnn_forward.5} parent=1 // pred_check_branch
      %4558 = sbr.rel (0) target = $region29
    $region28: #{cnn_forward.5} parent=1 // pred_region
      %4559 = dma.done [#allocation3], 32
    $region29: #{cnn_forward.5} parent=1 // pred_fallthru
      _
    %4560 = vsyncpa [#allocation3], 1

</llo_original>
